<compile_context>
chip_gen: v6e
topology: v6e:2x2x1
jax: 0.10.0
libtpu: 0.0.40
codegen_flags: <defaults>
</compile_context>

<pallas_src>
import jax
import jax.numpy as jnp
from jax.experimental import pallas as pl
from jax.experimental.pallas import tpu as pltpu

# ----------------------------- mini config ---------------------------------
CONV_DIM   = 32
CONV_K     = (10, 3, 3, 3, 3, 2, 2)   # same kernels/strides as wav2vec2-base
CONV_S     = (5, 2, 2, 2, 2, 2, 2)
HIDDEN     = 32
NUM_HEADS  = 4
HEAD_DIM   = HIDDEN // NUM_HEADS
FFN_DIM    = 64
NUM_LAYERS = 2
POS_K      = 16                        # positional conv kernel (real model: 128)
POS_GROUPS = 4                         # (real model: 16)
POS_PAD    = POS_K // 2
LN_EPS     = 1e-5


# ------------------------------ helpers -------------------------------------
def _gelu(x):
    # TODO(synk): HF Wav2Vec2 uses exact erf-GELU; tanh approximation used here
    # to guarantee Mosaic lowering.
    c = 0.7978845608028654  # sqrt(2/pi)
    return 0.5 * x * (1.0 + jnp.tanh(c * (x + 0.044715 * x * x * x)))


def _ln(x, g, b):
    mu = jnp.mean(x, axis=-1, keepdims=True)
    var = jnp.mean((x - mu) ** 2, axis=-1, keepdims=True)
    return (x - mu) * jax.lax.rsqrt(var + LN_EPS) * g + b


# ------------- kernel 1: wave-norm + conv0 + GroupNorm + GELU ---------------
def _wavenorm_conv0_gn_gelu_kernel(x_ref, wa_ref, wb_ref, g_ref, b_ref, o_ref):
    # x_ref: (1, 5, 400) strided view of the raw waveform: x_ref[0, j, r] == x[5r + j]
    x = x_ref[0]                                                      # (5, 400) f32
    # per-utterance zero-mean unit-var (processor), f32 statistics, two-step reduce
    mu = jnp.mean(jnp.mean(x, axis=1, keepdims=True), axis=0, keepdims=True)
    d = x - mu
    var = jnp.mean(jnp.mean(d * d, axis=1, keepdims=True), axis=0, keepdims=True)
    xn = (d * jax.lax.rsqrt(var + 1e-7)).astype(jnp.bfloat16)
    # conv0 (kernel 10, stride 5, no bias): two K=5 matmuls over shifted strided views
    y = jnp.dot(wa_ref[...], xn[:, 0:399], preferred_element_type=jnp.float32)
    y = y + jnp.dot(wb_ref[...], xn[:, 1:400], preferred_element_type=jnp.float32)
    # GroupNorm(num_groups=C): per-(sample,channel) stats over time, affine, GELU
    mu_c = jnp.mean(y, axis=1, keepdims=True)
    var_c = jnp.mean((y - mu_c) ** 2, axis=1, keepdims=True)
    y = (y - mu_c) * jax.lax.rsqrt(var_c + LN_EPS) * g_ref[...] + b_ref[...]
    o_ref[0] = _gelu(y)                                               # (32, 399)


def wavenorm_conv0(x, prep):
    B, T = x.shape
    assert T % CONV_S[0] == 0
    R = T // CONV_S[0]                                   # 400
    L_out = (T - CONV_K[0]) // CONV_S[0] + 1             # 399
    x5t = x.reshape(B, R, CONV_S[0]).transpose(0, 2, 1)  # (B, 5, 400), plain-JAX glue
    return pl.pallas_call(
        _wavenorm_conv0_gn_gelu_kernel,
        out_shape=jax.ShapeDtypeStruct((B, CONV_DIM, L_out), jnp.float32),
        grid=(B,),
        in_specs=[pl.BlockSpec((1, CONV_S[0], R), lambda b: (b, 0, 0)),
                  pl.BlockSpec((CONV_DIM, CONV_S[0]), lambda b: (0, 0)),
                  pl.BlockSpec((CONV_DIM, CONV_S[0]), lambda b: (0, 0)),
                  pl.BlockSpec((CONV_DIM, 1), lambda b: (0, 0)),
                  pl.BlockSpec((CONV_DIM, 1), lambda b: (0, 0))],
        out_specs=pl.BlockSpec((1, CONV_DIM, L_out), lambda b: (b, 0, 0)),
        compiler_params=pltpu.CompilerParams(dimension_semantics=("parallel",)),
    )(x5t.astype(jnp.float32), prep['conv0_wa'], prep['conv0_wb'],
      prep['gn_g2'], prep['gn_b2'])


# --------------- kernel 2: conv layers 1..6 (matmul + GELU) -----------------
def _convT_gelu_kernel(p_ref, w_ref, o_ref):
    # (C_out, C_in*K) bf16  @  (C_in*K, L_out) bf16  -> (C_out, L_out) f32 (lane-dense)
    o_ref[0] = _gelu(jnp.dot(w_ref[...], p_ref[0],
                             preferred_element_type=jnp.float32))


def conv_gelu(h, w2_bf16, ksize, stride):
    # h: (B, C_in, L) f32 ; w2_bf16: (C_out, C_in*K) bf16 (prepared at init), no bias.
    B, C, L = h.shape
    C_out = w2_bf16.shape[0]
    L_out = (L - ksize) // stride + 1
    # TODO(synk): im2col patch gather stays in plain JAX (strided in-kernel windows
    # would remove the K x copy but risk Mosaic lowering at these shapes).
    idx = jnp.arange(L_out)[:, None] * stride + jnp.arange(ksize)[None, :]
    patches = h[:, :, idx].transpose(0, 1, 3, 2).reshape(B, C * ksize, L_out)
    return pl.pallas_call(
        _convT_gelu_kernel,
        out_shape=jax.ShapeDtypeStruct((B, C_out, L_out), jnp.float32),
        grid=(B,),
        in_specs=[pl.BlockSpec((1, C * ksize, L_out), lambda b: (b, 0, 0)),
                  pl.BlockSpec((C_out, C * ksize), lambda b: (0, 0))],
        out_specs=pl.BlockSpec((1, C_out, L_out), lambda b: (b, 0, 0)),
        compiler_params=pltpu.CompilerParams(dimension_semantics=("parallel",)),
    )(patches.astype(jnp.bfloat16), w2_bf16)


# --------------- kernel 3: feature projection (LayerNorm + Linear) ----------
def _featproj_kernel(x_ref, g_ref, b_ref, w_ref, wb_ref, o_ref):
    x = x_ref[0]                                                      # (T', C) f32
    xn = _ln(x, g_ref[...], b_ref[...])
    o_ref[0] = jnp.dot(xn.astype(jnp.bfloat16), w_ref[...],
                       preferred_element_type=jnp.float32) + wb_ref[...]


def feature_projection(extract, prep):
    B, T, C = extract.shape
    return pl.pallas_call(
        _featproj_kernel,
        out_shape=jax.ShapeDtypeStruct((B, T, HIDDEN), jnp.float32),
        grid=(B,),
        in_specs=[pl.BlockSpec((1, T, C), lambda b: (b, 0, 0)),
                  pl.BlockSpec((1, C), lambda b: (0, 0)),
                  pl.BlockSpec((1, C), lambda b: (0, 0)),
                  pl.BlockSpec((C, HIDDEN), lambda b: (0, 0)),
                  pl.BlockSpec((1, HIDDEN), lambda b: (0, 0))],
        out_specs=pl.BlockSpec((1, T, HIDDEN), lambda b: (b, 0, 0)),
        compiler_params=pltpu.CompilerParams(dimension_semantics=("parallel",)),
    )(extract, prep['fp_ln_g2'], prep['fp_ln_b2'], prep['fp_w'], prep['fp_b2'])


# --- kernel 4: pos-conv + encoder LN + ALL transformer layers + mean pool ---
def _encoder_kernel(hs_ref, pp_ref, posw_ref, posb_ref, elng_ref, elnb_ref,
                    wqkv_ref, bqkv_ref, wo_ref, bo_ref, ln1g_ref, ln1b_ref,
                    ff1w_ref, ff1b_ref, ff2w_ref, ff2b_ref, ln2g_ref, ln2b_ref,
                    pooled_ref, h_ref):
    l = pl.program_id(1)

    @pl.when(l == 0)
    def _():
        # positional grouped conv as ONE block-diagonal (K*H, H) matmul, GELU,
        # residual add, encoder LayerNorm; result seeds the VMEM hidden-state carry.
        x = hs_ref[0]                                                 # (T, H) f32
        pos = jnp.dot(pp_ref[0], posw_ref[...],
                      preferred_element_type=jnp.float32) + posb_ref[...]
        x = x + _gelu(pos)
        h_ref[...] = _ln(x, elng_ref[...], elnb_ref[...])

    x = h_ref[...]                                                    # (T, H) f32

    # fused QKV projection (scale pre-folded into the Q columns at prepare-time)
    qkv = jnp.dot(x.astype(jnp.bfloat16), wqkv_ref[0],
                  preferred_element_type=jnp.float32) + bqkv_ref[0]
    qkvb = qkv.astype(jnp.bfloat16)

    def split_heads(v):  # (T, H) -> (NH, T, dH), heads on a leading batch axis
        return jnp.stack([v[:, h * HEAD_DIM:(h + 1) * HEAD_DIM]
                          for h in range(NUM_HEADS)], axis=0)

    qh = split_heads(qkvb[:, :HIDDEN])
    kh = split_heads(qkvb[:, HIDDEN:2 * HIDDEN])
    vh = split_heads(qkvb[:, 2 * HIDDEN:])

    # head-batched attention (f32 softmax statistics, approx reciprocal)
    s = jnp.einsum('htd,hsd->hts', qh, kh, preferred_element_type=jnp.float32)
    s = s - jnp.max(s, axis=-1, keepdims=True)
    p = jnp.exp(s)
    p = p * pl.reciprocal(jnp.sum(p, axis=-1, keepdims=True), approx=True)
    ctx = jnp.einsum('hts,hsd->htd', p.astype(jnp.bfloat16), vh,
                     preferred_element_type=jnp.float32)
    # batched per-head output projection, accumulated over heads
    attn = jnp.einsum('htd,hdo->hto', ctx.astype(jnp.bfloat16), wo_ref[0],
                      preferred_element_type=jnp.float32)
    attn = jnp.sum(attn, axis=0) + bo_ref[0]

    # residual + LayerNorm 1 (post-LN, base model)
    h1 = _ln(x + attn, ln1g_ref[0], ln1b_ref[0])

    # FFN (intermediate + GELU, output dense) + residual + LayerNorm 2
    ff = _gelu(jnp.dot(h1.astype(jnp.bfloat16), ff1w_ref[0],
                       preferred_element_type=jnp.float32) + ff1b_ref[0])
    ff = jnp.dot(ff.astype(jnp.bfloat16), ff2w_ref[0],
                 preferred_element_type=jnp.float32) + ff2b_ref[0]
    out = _ln(h1 + ff, ln2g_ref[0], ln2b_ref[0])
    h_ref[...] = out

    @pl.when(l == pl.num_programs(1) - 1)
    def _():
        # AdaptiveAvgPool1d(1) over time fused into the last layer
        pooled_ref[0] = jnp.mean(out, axis=0, keepdims=True)


def encoder_forward(hs, prep):
    B, T, H = hs.shape
    # positional-conv input windows (SamePad drops last output -> exactly T windows)
    hs_pad = jnp.pad(hs, ((0, 0), (POS_PAD, POS_PAD), (0, 0)))
    pp = jnp.stack([hs_pad[:, k:k + T, :] for k in range(POS_K)], axis=2)
    pp = pp.reshape(B, T, POS_K * H).astype(jnp.bfloat16)

    def layer_spec(shape):
        n = len(shape)
        return pl.BlockSpec((1,) + tuple(shape), lambda b, l, _n=n: (l,) + (0,) * _n)

    def batch_spec(shape):
        n = len(shape)
        return pl.BlockSpec((1,) + tuple(shape), lambda b, l, _n=n: (b,) + (0,) * _n)

    def full_spec(shape):
        n = len(shape)
        return pl.BlockSpec(tuple(shape), lambda b, l, _n=n: (0,) * _n)

    pooled = pl.pallas_call(
        _encoder_kernel,
        out_shape=jax.ShapeDtypeStruct((B, 1, H), jnp.float32),
        grid=(B, NUM_LAYERS),
        in_specs=[
            batch_spec((T, H)),                      # hs
            batch_spec((T, POS_K * H)),              # pos-conv patches (bf16)
            full_spec((POS_K * H, H)),               # pos block-diagonal weight (bf16)
            full_spec((1, H)),                       # pos bias
            full_spec((1, H)), full_spec((1, H)),    # encoder LN g/b
            layer_spec((H, 3 * H)),                  # wqkv (bf16, scale folded)
            layer_spec((1, 3 * H)),                  # bqkv
            layer_spec((NUM_HEADS, HEAD_DIM, H)),    # wo per head (bf16)
            layer_spec((1, H)),                      # bo
            layer_spec((1, H)), layer_spec((1, H)),  # ln1 g/b
            layer_spec((H, FFN_DIM)),                # ff1_w (bf16)
            layer_spec((1, FFN_DIM)),                # ff1_b
            layer_spec((FFN_DIM, H)),                # ff2_w (bf16)
            layer_spec((1, H)),                      # ff2_b
            layer_spec((1, H)), layer_spec((1, H)),  # ln2 g/b
        ],
        out_specs=pl.BlockSpec((1, 1, H), lambda b, l: (b, 0, 0)),
        scratch_shapes=[pltpu.VMEM((T, H), jnp.float32)],
        compiler_params=pltpu.CompilerParams(
            dimension_semantics=("parallel", "arbitrary")),
    )(hs, pp, prep['pos_w_bd'], prep['pos_b2'], prep['enc_ln_g2'], prep['enc_ln_b2'],
      prep['wqkv'], prep['bqkv'], prep['wo_h'], prep['bo'],
      prep['ln1_g'], prep['ln1_b'], prep['ff1_w'], prep['ff1_b'],
      prep['ff2_w'], prep['ff2_b'], prep['ln2_g'], prep['ln2_b'])
    return pooled[:, 0, :]


# ------------------------------ forward -------------------------------------
def wav2vec2_forward(x, prep, return_features=False):
    # conv feature extractor (layer 0 fused with processor wave-norm + GN + GELU)
    h = wavenorm_conv0(x, prep)                              # (B, 32, 399)
    for i in range(1, len(CONV_K)):
        h = conv_gelu(h, prep['conv_w2'][i - 1], CONV_K[i], CONV_S[i])
    extract = h.transpose(0, 2, 1)                           # (B, T', C)

    hs = feature_projection(extract, prep)                   # (B, T', H)
    pooled = encoder_forward(hs, prep)                       # (B, H)
    if return_features:
        return pooled, pooled                                # matches reference module
    return pooled


# ------------------------------ params --------------------------------------
def init_params(key):
    keys = iter(jax.random.split(key, 64))

    def nrm(shape, scale=0.05):
        return scale * jax.random.normal(next(keys), shape, dtype=jnp.float32)

    params = {}
    conv_w, c_in = [], 1
    for k in CONV_K:                                     # Conv1d weights (C_out, C_in, K), no bias
        conv_w.append(nrm((CONV_DIM, c_in, k)))
        c_in = CONV_DIM
    params['conv_w'] = conv_w
    params['gn_g'] = jnp.ones((CONV_DIM,), jnp.float32)
    params['gn_b'] = jnp.zeros((CONV_DIM,), jnp.float32)
    params['fp_ln_g'] = jnp.ones((CONV_DIM,), jnp.float32)
    params['fp_ln_b'] = jnp.zeros((CONV_DIM,), jnp.float32)
    params['fp_w'] = nrm((CONV_DIM, HIDDEN))
    params['fp_b'] = jnp.zeros((HIDDEN,), jnp.float32)
    params['pos_w'] = nrm((HIDDEN, HIDDEN // POS_GROUPS, POS_K))   # grouped conv weight
    params['pos_b'] = jnp.zeros((HIDDEN,), jnp.float32)
    params['enc_ln_g'] = jnp.ones((HIDDEN,), jnp.float32)
    params['enc_ln_b'] = jnp.zeros((HIDDEN,), jnp.float32)
    layers = []
    for _ in range(NUM_LAYERS):
        layers.append(dict(
            q_w=nrm((HIDDEN, HIDDEN)), q_b=jnp.zeros((HIDDEN,), jnp.float32),
            k_w=nrm((HIDDEN, HIDDEN)), k_b=jnp.zeros((HIDDEN,), jnp.float32),
            v_w=nrm((HIDDEN, HIDDEN)), v_b=jnp.zeros((HIDDEN,), jnp.float32),
            o_w=nrm((HIDDEN, HIDDEN)), o_b=jnp.zeros((HIDDEN,), jnp.float32),
            ln1_g=jnp.ones((HIDDEN,), jnp.float32), ln1_b=jnp.zeros((HIDDEN,), jnp.float32),
            ff1_w=nrm((HIDDEN, FFN_DIM)), ff1_b=jnp.zeros((FFN_DIM,), jnp.float32),
            ff2_w=nrm((FFN_DIM, HIDDEN)), ff2_b=jnp.zeros((HIDDEN,), jnp.float32),
            ln2_g=jnp.ones((HIDDEN,), jnp.float32), ln2_b=jnp.zeros((HIDDEN,), jnp.float32),
        ))
    params['layers'] = layers
    return params


def prepare_params(params):
    """One-time parameter prep: bf16 weight casts, fused/stacked layouts, scale folding."""
    prep = {}
    # conv0: split the (32, 1, 10) stride-5 kernel into two K=5 matmuls
    w0 = params['conv_w'][0][:, 0, :]                                  # (32, 10)
    prep['conv0_wa'] = w0[:, :CONV_S[0]].astype(jnp.bfloat16)          # (32, 5)
    prep['conv0_wb'] = w0[:, CONV_S[0]:].astype(jnp.bfloat16)          # (32, 5)
    prep['gn_g2'] = params['gn_g'].reshape(CONV_DIM, 1)
    prep['gn_b2'] = params['gn_b'].reshape(CONV_DIM, 1)
    # conv 1..6: (C_out, C_in*K) bf16
    prep['conv_w2'] = [w.reshape(w.shape[0], -1).astype(jnp.bfloat16)
                       for w in params['conv_w'][1:]]
    # feature projection
    prep['fp_ln_g2'] = params['fp_ln_g'].reshape(1, CONV_DIM)
    prep['fp_ln_b2'] = params['fp_ln_b'].reshape(1, CONV_DIM)
    prep['fp_w'] = params['fp_w'].astype(jnp.bfloat16)
    prep['fp_b2'] = params['fp_b'].reshape(1, HIDDEN)
    # positional grouped conv -> one block-diagonal (K*H, H) weight, k-major rows
    gsz = HIDDEN // POS_GROUPS
    w_r = jnp.zeros((POS_K, HIDDEN, HIDDEN), jnp.float32)
    for g in range(POS_GROUPS):
        blk = params['pos_w'][g * gsz:(g + 1) * gsz]                   # (gsz, gsz, K)
        w_r = w_r.at[:, g * gsz:(g + 1) * gsz, g * gsz:(g + 1) * gsz].set(
            jnp.transpose(blk, (2, 1, 0)))                             # (k, c_in, c_out)
    prep['pos_w_bd'] = w_r.reshape(POS_K * HIDDEN, HIDDEN).astype(jnp.bfloat16)
    prep['pos_b2'] = params['pos_b'].reshape(1, HIDDEN)
    prep['enc_ln_g2'] = params['enc_ln_g'].reshape(1, HIDDEN)
    prep['enc_ln_b2'] = params['enc_ln_b'].reshape(1, HIDDEN)
    # encoder layers stacked along a leading layer axis; attention scale folded into Q
    scale = HEAD_DIM ** -0.5

    def stack(fn):
        return jnp.stack([fn(p) for p in params['layers']], axis=0)

    prep['wqkv'] = stack(lambda p: jnp.concatenate(
        [p['q_w'] * scale, p['k_w'], p['v_w']], axis=1)).astype(jnp.bfloat16)
    prep['bqkv'] = stack(lambda p: jnp.concatenate(
        [p['q_b'] * scale, p['k_b'], p['v_b']]).reshape(1, 3 * HIDDEN))
    prep['wo_h'] = stack(lambda p: p['o_w'].reshape(NUM_HEADS, HEAD_DIM, HIDDEN)
                         ).astype(jnp.bfloat16)
    prep['bo'] = stack(lambda p: p['o_b'].reshape(1, HIDDEN))
    prep['ln1_g'] = stack(lambda p: p['ln1_g'].reshape(1, HIDDEN))
    prep['ln1_b'] = stack(lambda p: p['ln1_b'].reshape(1, HIDDEN))
    prep['ff1_w'] = stack(lambda p: p['ff1_w']).astype(jnp.bfloat16)
    prep['ff1_b'] = stack(lambda p: p['ff1_b'].reshape(1, FFN_DIM))
    prep['ff2_w'] = stack(lambda p: p['ff2_w']).astype(jnp.bfloat16)
    prep['ff2_b'] = stack(lambda p: p['ff2_b'].reshape(1, HIDDEN))
    prep['ln2_g'] = stack(lambda p: p['ln2_g'].reshape(1, HIDDEN))
    prep['ln2_b'] = stack(lambda p: p['ln2_b'].reshape(1, HIDDEN))
    return prep


# ------------------------------ main -----------------------------------------
if __name__ == "__main__":
    key = jax.random.PRNGKey(0)
    pkey, xkey = jax.random.split(key)
    params = init_params(pkey)
    prep = prepare_params(params)

    B, T = 2, 2000                                       # waveform batch; T' becomes 6 frames
    x = jax.random.normal(xkey, (B, T), dtype=jnp.float32)

    fwd = jax.jit(wav2vec2_forward)
    out = jax.block_until_ready(fwd(x, prep))
    assert out.shape == (B, HIDDEN) and out.dtype == jnp.float32
    assert bool(jnp.all(jnp.isfinite(out)))
    print("KERNEL_OK")
</pallas_src>

<mosaic_0001>
module attributes {stable_mosaic.version = 11 : i64} {
  func.func @_wavenorm_conv0_gn_gelu_kernel(%arg0: i32, %arg1: memref<1x5x400xf32, #tpu.memory_space<vmem>>, %arg2: memref<32x5xbf16, #tpu.memory_space<vmem>>, %arg3: memref<32x5xbf16, #tpu.memory_space<vmem>>, %arg4: memref<32x1xf32, #tpu.memory_space<vmem>>, %arg5: memref<32x1xf32, #tpu.memory_space<vmem>>, %arg6: memref<1x32x399xf32, #tpu.memory_space<vmem>>) attributes {dimension_semantics = [#tpu.dimension_semantics<parallel>], iteration_bounds = array<i64: 2>, scalar_prefetch = 0 : i64, scratch_operands = 0 : i64, tpu.core_type = #tpu.core_type<tc>, window_params = [{transform_indices = @transform_0, window_bounds = array<i64: 1, 5, 400>}, {pipeline_mode = #tpu.pipeline_mode<synchronous>, transform_indices = @transform_1, window_bounds = array<i64: 32, 5>}, {pipeline_mode = #tpu.pipeline_mode<synchronous>, transform_indices = @transform_2, window_bounds = array<i64: 32, 5>}, {pipeline_mode = #tpu.pipeline_mode<synchronous>, transform_indices = @transform_3, window_bounds = array<i64: 32, 1>}, {pipeline_mode = #tpu.pipeline_mode<synchronous>, transform_indices = @transform_4, window_bounds = array<i64: 32, 1>}, {transform_indices = @transform_5, window_bounds = array<i64: 1, 32, 399>}]} {
    %c0 = arith.constant 0 : index
    %c0_0 = arith.constant 0 : index
    %c0_1 = arith.constant 0 : index
    %0 = vector.load %arg1[%c0, %c0_0, %c0_1] : memref<1x5x400xf32, #tpu.memory_space<vmem>>, vector<1x5x400xf32>
    %1 = vector.shape_cast %0 : vector<1x5x400xf32> to vector<5x400xf32>
    %cst = arith.constant dense<0.000000e+00> : vector<5xf32>
    %2 = vector.multi_reduction <add>, %1, %cst [1] : vector<5x400xf32> to vector<5xf32>
    %3 = vector.shape_cast %2 : vector<5xf32> to vector<5x1xf32>
    %cst_2 = arith.constant 4.000000e+02 : f32
    %4 = vector.broadcast %cst_2 : f32 to vector<5x1xf32>
    %5 = arith.divf %3, %4 : vector<5x1xf32>
    %cst_3 = arith.constant dense<0.000000e+00> : vector<1xf32>
    %6 = vector.multi_reduction <add>, %5, %cst_3 [0] : vector<5x1xf32> to vector<1xf32>
    %7 = vector.shape_cast %6 : vector<1xf32> to vector<1x1xf32>
    %cst_4 = arith.constant 5.000000e+00 : f32
    %8 = vector.broadcast %cst_4 : f32 to vector<1x1xf32>
    %9 = arith.divf %7, %8 : vector<1x1xf32>
    %10 = vector.broadcast %9 : vector<1x1xf32> to vector<5x400xf32>
    %11 = arith.subf %1, %10 : vector<5x400xf32>
    %12 = arith.mulf %11, %11 : vector<5x400xf32>
    %cst_5 = arith.constant dense<0.000000e+00> : vector<5xf32>
    %13 = vector.multi_reduction <add>, %12, %cst_5 [1] : vector<5x400xf32> to vector<5xf32>
    %14 = vector.shape_cast %13 : vector<5xf32> to vector<5x1xf32>
    %cst_6 = arith.constant 4.000000e+02 : f32
    %15 = vector.broadcast %cst_6 : f32 to vector<5x1xf32>
    %16 = arith.divf %14, %15 : vector<5x1xf32>
    %cst_7 = arith.constant dense<0.000000e+00> : vector<1xf32>
    %17 = vector.multi_reduction <add>, %16, %cst_7 [0] : vector<5x1xf32> to vector<1xf32>
    %18 = vector.shape_cast %17 : vector<1xf32> to vector<1x1xf32>
    %cst_8 = arith.constant 5.000000e+00 : f32
    %19 = vector.broadcast %cst_8 : f32 to vector<1x1xf32>
    %20 = arith.divf %18, %19 : vector<1x1xf32>
    %cst_9 = arith.constant 1.000000e-07 : f32
    %21 = vector.broadcast %cst_9 : f32 to vector<1x1xf32>
    %22 = arith.addf %20, %21 : vector<1x1xf32>
    %23 = math.rsqrt %22 : vector<1x1xf32>
    %24 = vector.broadcast %23 : vector<1x1xf32> to vector<5x400xf32>
    %25 = arith.mulf %11, %24 : vector<5x400xf32>
    %26 = arith.truncf %25 : vector<5x400xf32> to vector<5x400xbf16>
    %c0_10 = arith.constant 0 : index
    %c0_11 = arith.constant 0 : index
    %27 = vector.load %arg2[%c0_10, %c0_11] : memref<32x5xbf16, #tpu.memory_space<vmem>>, vector<32x5xbf16>
    %28 = vector.extract_strided_slice %26 {offsets = [0, 0], sizes = [5, 399], strides = [1, 1]} : vector<5x400xbf16> to vector<5x399xbf16>
    %cst_12 = arith.constant dense<0.000000e+00> : vector<32x399xf32>
    %29 = tpu.matmul %27, %28, %cst_12 {dimension_numbers = #tpu.dot_dimension_numbers<[1], [0], [0], [1], [0, 0, 1, 1], [], []>} : vector<32x5xbf16>, vector<5x399xbf16>, vector<32x399xf32> -> vector<32x399xf32>
    %c0_13 = arith.constant 0 : index
    %c0_14 = arith.constant 0 : index
    %30 = vector.load %arg3[%c0_13, %c0_14] : memref<32x5xbf16, #tpu.memory_space<vmem>>, vector<32x5xbf16>
    %31 = vector.extract_strided_slice %26 {offsets = [0, 1], sizes = [5, 399], strides = [1, 1]} : vector<5x400xbf16> to vector<5x399xbf16>
    %cst_15 = arith.constant dense<0.000000e+00> : vector<32x399xf32>
    %32 = tpu.matmul %30, %31, %cst_15 {dimension_numbers = #tpu.dot_dimension_numbers<[1], [0], [0], [1], [0, 0, 1, 1], [], []>} : vector<32x5xbf16>, vector<5x399xbf16>, vector<32x399xf32> -> vector<32x399xf32>
    %33 = arith.addf %29, %32 : vector<32x399xf32>
    %cst_16 = arith.constant dense<0.000000e+00> : vector<32xf32>
    %34 = vector.multi_reduction <add>, %33, %cst_16 [1] : vector<32x399xf32> to vector<32xf32>
    %35 = vector.shape_cast %34 : vector<32xf32> to vector<32x1xf32>
    %cst_17 = arith.constant 3.990000e+02 : f32
    %36 = vector.broadcast %cst_17 : f32 to vector<32x1xf32>
    %37 = arith.divf %35, %36 : vector<32x1xf32>
    %38 = vector.broadcast %37 : vector<32x1xf32> to vector<32x399xf32>
    %39 = arith.subf %33, %38 : vector<32x399xf32>
    %40 = arith.mulf %39, %39 : vector<32x399xf32>
    %cst_18 = arith.constant dense<0.000000e+00> : vector<32xf32>
    %41 = vector.multi_reduction <add>, %40, %cst_18 [1] : vector<32x399xf32> to vector<32xf32>
    %42 = vector.shape_cast %41 : vector<32xf32> to vector<32x1xf32>
    %cst_19 = arith.constant 3.990000e+02 : f32
    %43 = vector.broadcast %cst_19 : f32 to vector<32x1xf32>
    %44 = arith.divf %42, %43 : vector<32x1xf32>
    %45 = vector.broadcast %37 : vector<32x1xf32> to vector<32x399xf32>
    %46 = arith.subf %33, %45 : vector<32x399xf32>
    %cst_20 = arith.constant 9.99999974E-6 : f32
    %47 = vector.broadcast %cst_20 : f32 to vector<32x1xf32>
    %48 = arith.addf %44, %47 : vector<32x1xf32>
    %49 = math.rsqrt %48 : vector<32x1xf32>
    %50 = vector.broadcast %49 : vector<32x1xf32> to vector<32x399xf32>
    %51 = arith.mulf %46, %50 : vector<32x399xf32>
    %c0_21 = arith.constant 0 : index
    %c0_22 = arith.constant 0 : index
    %52 = vector.load %arg4[%c0_21, %c0_22] : memref<32x1xf32, #tpu.memory_space<vmem>>, vector<32x1xf32>
    %53 = vector.broadcast %52 : vector<32x1xf32> to vector<32x399xf32>
    %54 = arith.mulf %51, %53 : vector<32x399xf32>
    %c0_23 = arith.constant 0 : index
    %c0_24 = arith.constant 0 : index
    %55 = vector.load %arg5[%c0_23, %c0_24] : memref<32x1xf32, #tpu.memory_space<vmem>>, vector<32x1xf32>
    %56 = vector.broadcast %55 : vector<32x1xf32> to vector<32x399xf32>
    %57 = arith.addf %54, %56 : vector<32x399xf32>
    %cst_25 = arith.constant 5.000000e-01 : f32
    %58 = vector.broadcast %cst_25 : f32 to vector<32x399xf32>
    %59 = arith.mulf %58, %57 : vector<32x399xf32>
    %cst_26 = arith.constant 4.471500e-02 : f32
    %60 = vector.broadcast %cst_26 : f32 to vector<32x399xf32>
    %61 = arith.mulf %60, %57 : vector<32x399xf32>
    %62 = arith.mulf %61, %57 : vector<32x399xf32>
    %63 = arith.mulf %62, %57 : vector<32x399xf32>
    %64 = arith.addf %57, %63 : vector<32x399xf32>
    %cst_27 = arith.constant 0.797884583 : f32
    %65 = vector.broadcast %cst_27 : f32 to vector<32x399xf32>
    %66 = arith.mulf %65, %64 : vector<32x399xf32>
    %67 = math.tanh %66 : vector<32x399xf32>
    %cst_28 = arith.constant 1.000000e+00 : f32
    %68 = vector.broadcast %cst_28 : f32 to vector<32x399xf32>
    %69 = arith.addf %68, %67 : vector<32x399xf32>
    %70 = arith.mulf %59, %69 : vector<32x399xf32>
    %c0_29 = arith.constant 0 : index
    %c0_30 = arith.constant 0 : index
    %c0_31 = arith.constant 0 : index
    %71 = vector.load %arg6[%c0_29, %c0_30, %c0_31] : memref<1x32x399xf32, #tpu.memory_space<vmem>>, vector<1x32x399xf32>
    %72 = vector.shape_cast %71 : vector<1x32x399xf32> to vector<32x399xf32>
    %73 = vector.shape_cast %70 : vector<32x399xf32> to vector<1x32x399xf32>
    tpu.vector_store %arg6[%c0_29, %c0_30, %c0_31], %73 {strides = array<i32>} : memref<1x32x399xf32, #tpu.memory_space<vmem>>, vector<1x32x399xf32>,
    return
  }
  func.func @transform_0(%arg0: i32) -> (i32, i32, i32) {
    %c0_i32 = arith.constant 0 : i32
    %c0_i32_0 = arith.constant 0 : i32
    %c0_i32_1 = arith.constant 0 : i32
    return %arg0, %c0_i32, %c0_i32_0 : i32, i32, i32
  }
  func.func @transform_1(%arg0: i32) -> (i32, i32) {
    %c0_i32 = arith.constant 0 : i32
    %c0_i32_0 = arith.constant 0 : i32
    %c0_i32_1 = arith.constant 0 : i32
    return %c0_i32, %c0_i32_0 : i32, i32
  }
  func.func @transform_2(%arg0: i32) -> (i32, i32) {
    %c0_i32 = arith.constant 0 : i32
    %c0_i32_0 = arith.constant 0 : i32
    %c0_i32_1 = arith.constant 0 : i32
    return %c0_i32, %c0_i32_0 : i32, i32
  }
  func.func @transform_3(%arg0: i32) -> (i32, i32) {
    %c0_i32 = arith.constant 0 : i32
    %c0_i32_0 = arith.constant 0 : i32
    %c0_i32_1 = arith.constant 0 : i32
    return %c0_i32, %c0_i32_0 : i32, i32
  }
  func.func @transform_4(%arg0: i32) -> (i32, i32) {
    %c0_i32 = arith.constant 0 : i32
    %c0_i32_0 = arith.constant 0 : i32
    %c0_i32_1 = arith.constant 0 : i32
    return %c0_i32, %c0_i32_0 : i32, i32
  }
  func.func @transform_5(%arg0: i32) -> (i32, i32, i32) {
    %c0_i32 = arith.constant 0 : i32
    %c0_i32_0 = arith.constant 0 : i32
    %c0_i32_1 = arith.constant 0 : i32
    return %arg0, %c0_i32, %c0_i32_0 : i32, i32, i32
  }
}

module attributes {stable_mosaic.version = 11 : i64} {
  func.func @_convT_gelu_kernel(%arg0: i32, %arg1: memref<1x96x199xbf16, #tpu.memory_space<vmem>>, %arg2: memref<32x96xbf16, #tpu.memory_space<vmem>>, %arg3: memref<1x32x199xf32, #tpu.memory_space<vmem>>) attributes {dimension_semantics = [#tpu.dimension_semantics<parallel>], iteration_bounds = array<i64: 2>, scalar_prefetch = 0 : i64, scratch_operands = 0 : i64, tpu.core_type = #tpu.core_type<tc>, window_params = [{transform_indices = @transform_0, window_bounds = array<i64: 1, 96, 199>}, {pipeline_mode = #tpu.pipeline_mode<synchronous>, transform_indices = @transform_1, window_bounds = array<i64: 32, 96>}, {transform_indices = @transform_2, window_bounds = array<i64: 1, 32, 199>}]} {
    %c0 = arith.constant 0 : index
    %c0_0 = arith.constant 0 : index
    %0 = vector.load %arg2[%c0, %c0_0] : memref<32x96xbf16, #tpu.memory_space<vmem>>, vector<32x96xbf16>
    %c0_1 = arith.constant 0 : index
    %c0_2 = arith.constant 0 : index
    %c0_3 = arith.constant 0 : index
    %1 = vector.load %arg1[%c0_1, %c0_2, %c0_3] : memref<1x96x199xbf16, #tpu.memory_space<vmem>>, vector<1x96x199xbf16>
    %2 = vector.shape_cast %1 : vector<1x96x199xbf16> to vector<96x199xbf16>
    %cst = arith.constant dense<0.000000e+00> : vector<32x199xf32>
    %3 = tpu.matmul %0, %2, %cst {dimension_numbers = #tpu.dot_dimension_numbers<[1], [0], [0], [1], [0, 0, 1, 1], [], []>} : vector<32x96xbf16>, vector<96x199xbf16>, vector<32x199xf32> -> vector<32x199xf32>
    %cst_4 = arith.constant 5.000000e-01 : f32
    %4 = vector.broadcast %cst_4 : f32 to vector<32x199xf32>
    %5 = arith.mulf %4, %3 : vector<32x199xf32>
    %cst_5 = arith.constant 4.471500e-02 : f32
    %6 = vector.broadcast %cst_5 : f32 to vector<32x199xf32>
    %7 = arith.mulf %6, %3 : vector<32x199xf32>
    %8 = arith.mulf %7, %3 : vector<32x199xf32>
    %9 = arith.mulf %8, %3 : vector<32x199xf32>
    %10 = arith.addf %3, %9 : vector<32x199xf32>
    %cst_6 = arith.constant 0.797884583 : f32
    %11 = vector.broadcast %cst_6 : f32 to vector<32x199xf32>
    %12 = arith.mulf %11, %10 : vector<32x199xf32>
    %13 = math.tanh %12 : vector<32x199xf32>
    %cst_7 = arith.constant 1.000000e+00 : f32
    %14 = vector.broadcast %cst_7 : f32 to vector<32x199xf32>
    %15 = arith.addf %14, %13 : vector<32x199xf32>
    %16 = arith.mulf %5, %15 : vector<32x199xf32>
    %c0_8 = arith.constant 0 : index
    %c0_9 = arith.constant 0 : index
    %c0_10 = arith.constant 0 : index
    %17 = vector.load %arg3[%c0_8, %c0_9, %c0_10] : memref<1x32x199xf32, #tpu.memory_space<vmem>>, vector<1x32x199xf32>
    %18 = vector.shape_cast %17 : vector<1x32x199xf32> to vector<32x199xf32>
    %19 = vector.shape_cast %16 : vector<32x199xf32> to vector<1x32x199xf32>
    tpu.vector_store %arg3[%c0_8, %c0_9, %c0_10], %19 {strides = array<i32>} : memref<1x32x199xf32, #tpu.memory_space<vmem>>, vector<1x32x199xf32>,
    return
  }
  func.func @transform_0(%arg0: i32) -> (i32, i32, i32) {
    %c0_i32 = arith.constant 0 : i32
    %c0_i32_0 = arith.constant 0 : i32
    %c0_i32_1 = arith.constant 0 : i32
    return %arg0, %c0_i32, %c0_i32_0 : i32, i32, i32
  }
  func.func @transform_1(%arg0: i32) -> (i32, i32) {
    %c0_i32 = arith.constant 0 : i32
    %c0_i32_0 = arith.constant 0 : i32
    %c0_i32_1 = arith.constant 0 : i32
    return %c0_i32, %c0_i32_0 : i32, i32
  }
  func.func @transform_2(%arg0: i32) -> (i32, i32, i32) {
    %c0_i32 = arith.constant 0 : i32
    %c0_i32_0 = arith.constant 0 : i32
    %c0_i32_1 = arith.constant 0 : i32
    return %arg0, %c0_i32, %c0_i32_0 : i32, i32, i32
  }
}

module attributes {stable_mosaic.version = 11 : i64} {
  func.func @_convT_gelu_kernel(%arg0: i32, %arg1: memref<1x96x99xbf16, #tpu.memory_space<vmem>>, %arg2: memref<32x96xbf16, #tpu.memory_space<vmem>>, %arg3: memref<1x32x99xf32, #tpu.memory_space<vmem>>) attributes {dimension_semantics = [#tpu.dimension_semantics<parallel>], iteration_bounds = array<i64: 2>, scalar_prefetch = 0 : i64, scratch_operands = 0 : i64, tpu.core_type = #tpu.core_type<tc>, window_params = [{transform_indices = @transform_0, window_bounds = array<i64: 1, 96, 99>}, {pipeline_mode = #tpu.pipeline_mode<synchronous>, transform_indices = @transform_1, window_bounds = array<i64: 32, 96>}, {transform_indices = @transform_2, window_bounds = array<i64: 1, 32, 99>}]} {
    %c0 = arith.constant 0 : index
    %c0_0 = arith.constant 0 : index
    %0 = vector.load %arg2[%c0, %c0_0] : memref<32x96xbf16, #tpu.memory_space<vmem>>, vector<32x96xbf16>
    %c0_1 = arith.constant 0 : index
    %c0_2 = arith.constant 0 : index
    %c0_3 = arith.constant 0 : index
    %1 = vector.load %arg1[%c0_1, %c0_2, %c0_3] : memref<1x96x99xbf16, #tpu.memory_space<vmem>>, vector<1x96x99xbf16>
    %2 = vector.shape_cast %1 : vector<1x96x99xbf16> to vector<96x99xbf16>
    %cst = arith.constant dense<0.000000e+00> : vector<32x99xf32>
    %3 = tpu.matmul %0, %2, %cst {dimension_numbers = #tpu.dot_dimension_numbers<[1], [0], [0], [1], [0, 0, 1, 1], [], []>} : vector<32x96xbf16>, vector<96x99xbf16>, vector<32x99xf32> -> vector<32x99xf32>
    %cst_4 = arith.constant 5.000000e-01 : f32
    %4 = vector.broadcast %cst_4 : f32 to vector<32x99xf32>
    %5 = arith.mulf %4, %3 : vector<32x99xf32>
    %cst_5 = arith.constant 4.471500e-02 : f32
    %6 = vector.broadcast %cst_5 : f32 to vector<32x99xf32>
    %7 = arith.mulf %6, %3 : vector<32x99xf32>
    %8 = arith.mulf %7, %3 : vector<32x99xf32>
    %9 = arith.mulf %8, %3 : vector<32x99xf32>
    %10 = arith.addf %3, %9 : vector<32x99xf32>
    %cst_6 = arith.constant 0.797884583 : f32
    %11 = vector.broadcast %cst_6 : f32 to vector<32x99xf32>
    %12 = arith.mulf %11, %10 : vector<32x99xf32>
    %13 = math.tanh %12 : vector<32x99xf32>
    %cst_7 = arith.constant 1.000000e+00 : f32
    %14 = vector.broadcast %cst_7 : f32 to vector<32x99xf32>
    %15 = arith.addf %14, %13 : vector<32x99xf32>
    %16 = arith.mulf %5, %15 : vector<32x99xf32>
    %c0_8 = arith.constant 0 : index
    %c0_9 = arith.constant 0 : index
    %c0_10 = arith.constant 0 : index
    %17 = vector.load %arg3[%c0_8, %c0_9, %c0_10] : memref<1x32x99xf32, #tpu.memory_space<vmem>>, vector<1x32x99xf32>
    %18 = vector.shape_cast %17 : vector<1x32x99xf32> to vector<32x99xf32>
    %19 = vector.shape_cast %16 : vector<32x99xf32> to vector<1x32x99xf32>
    tpu.vector_store %arg3[%c0_8, %c0_9, %c0_10], %19 {strides = array<i32>} : memref<1x32x99xf32, #tpu.memory_space<vmem>>, vector<1x32x99xf32>,
    return
  }
  func.func @transform_0(%arg0: i32) -> (i32, i32, i32) {
    %c0_i32 = arith.constant 0 : i32
    %c0_i32_0 = arith.constant 0 : i32
    %c0_i32_1 = arith.constant 0 : i32
    return %arg0, %c0_i32, %c0_i32_0 : i32, i32, i32
  }
  func.func @transform_1(%arg0: i32) -> (i32, i32) {
    %c0_i32 = arith.constant 0 : i32
    %c0_i32_0 = arith.constant 0 : i32
    %c0_i32_1 = arith.constant 0 : i32
    return %c0_i32, %c0_i32_0 : i32, i32
  }
  func.func @transform_2(%arg0: i32) -> (i32, i32, i32) {
    %c0_i32 = arith.constant 0 : i32
    %c0_i32_0 = arith.constant 0 : i32
    %c0_i32_1 = arith.constant 0 : i32
    return %arg0, %c0_i32, %c0_i32_0 : i32, i32, i32
  }
}

module attributes {stable_mosaic.version = 11 : i64} {
  func.func @_convT_gelu_kernel(%arg0: i32, %arg1: memref<1x96x49xbf16, #tpu.memory_space<vmem>>, %arg2: memref<32x96xbf16, #tpu.memory_space<vmem>>, %arg3: memref<1x32x49xf32, #tpu.memory_space<vmem>>) attributes {dimension_semantics = [#tpu.dimension_semantics<parallel>], iteration_bounds = array<i64: 2>, scalar_prefetch = 0 : i64, scratch_operands = 0 : i64, tpu.core_type = #tpu.core_type<tc>, window_params = [{transform_indices = @transform_0, window_bounds = array<i64: 1, 96, 49>}, {pipeline_mode = #tpu.pipeline_mode<synchronous>, transform_indices = @transform_1, window_bounds = array<i64: 32, 96>}, {transform_indices = @transform_2, window_bounds = array<i64: 1, 32, 49>}]} {
    %c0 = arith.constant 0 : index
    %c0_0 = arith.constant 0 : index
    %0 = vector.load %arg2[%c0, %c0_0] : memref<32x96xbf16, #tpu.memory_space<vmem>>, vector<32x96xbf16>
    %c0_1 = arith.constant 0 : index
    %c0_2 = arith.constant 0 : index
    %c0_3 = arith.constant 0 : index
    %1 = vector.load %arg1[%c0_1, %c0_2, %c0_3] : memref<1x96x49xbf16, #tpu.memory_space<vmem>>, vector<1x96x49xbf16>
    %2 = vector.shape_cast %1 : vector<1x96x49xbf16> to vector<96x49xbf16>
    %cst = arith.constant dense<0.000000e+00> : vector<32x49xf32>
    %3 = tpu.matmul %0, %2, %cst {dimension_numbers = #tpu.dot_dimension_numbers<[1], [0], [0], [1], [0, 0, 1, 1], [], []>} : vector<32x96xbf16>, vector<96x49xbf16>, vector<32x49xf32> -> vector<32x49xf32>
    %cst_4 = arith.constant 5.000000e-01 : f32
    %4 = vector.broadcast %cst_4 : f32 to vector<32x49xf32>
    %5 = arith.mulf %4, %3 : vector<32x49xf32>
    %cst_5 = arith.constant 4.471500e-02 : f32
    %6 = vector.broadcast %cst_5 : f32 to vector<32x49xf32>
    %7 = arith.mulf %6, %3 : vector<32x49xf32>
    %8 = arith.mulf %7, %3 : vector<32x49xf32>
    %9 = arith.mulf %8, %3 : vector<32x49xf32>
    %10 = arith.addf %3, %9 : vector<32x49xf32>
    %cst_6 = arith.constant 0.797884583 : f32
    %11 = vector.broadcast %cst_6 : f32 to vector<32x49xf32>
    %12 = arith.mulf %11, %10 : vector<32x49xf32>
    %13 = math.tanh %12 : vector<32x49xf32>
    %cst_7 = arith.constant 1.000000e+00 : f32
    %14 = vector.broadcast %cst_7 : f32 to vector<32x49xf32>
    %15 = arith.addf %14, %13 : vector<32x49xf32>
    %16 = arith.mulf %5, %15 : vector<32x49xf32>
    %c0_8 = arith.constant 0 : index
    %c0_9 = arith.constant 0 : index
    %c0_10 = arith.constant 0 : index
    %17 = vector.load %arg3[%c0_8, %c0_9, %c0_10] : memref<1x32x49xf32, #tpu.memory_space<vmem>>, vector<1x32x49xf32>
    %18 = vector.shape_cast %17 : vector<1x32x49xf32> to vector<32x49xf32>
    %19 = vector.shape_cast %16 : vector<32x49xf32> to vector<1x32x49xf32>
    tpu.vector_store %arg3[%c0_8, %c0_9, %c0_10], %19 {strides = array<i32>} : memref<1x32x49xf32, #tpu.memory_space<vmem>>, vector<1x32x49xf32>,
    return
  }
  func.func @transform_0(%arg0: i32) -> (i32, i32, i32) {
    %c0_i32 = arith.constant 0 : i32
    %c0_i32_0 = arith.constant 0 : i32
    %c0_i32_1 = arith.constant 0 : i32
    return %arg0, %c0_i32, %c0_i32_0 : i32, i32, i32
  }
  func.func @transform_1(%arg0: i32) -> (i32, i32) {
    %c0_i32 = arith.constant 0 : i32
    %c0_i32_0 = arith.constant 0 : i32
    %c0_i32_1 = arith.constant 0 : i32
    return %c0_i32, %c0_i32_0 : i32, i32
  }
  func.func @transform_2(%arg0: i32) -> (i32, i32, i32) {
    %c0_i32 = arith.constant 0 : i32
    %c0_i32_0 = arith.constant 0 : i32
    %c0_i32_1 = arith.constant 0 : i32
    return %arg0, %c0_i32, %c0_i32_0 : i32, i32, i32
  }
}

module attributes {stable_mosaic.version = 11 : i64} {
  func.func @_convT_gelu_kernel(%arg0: i32, %arg1: memref<1x96x24xbf16, #tpu.memory_space<vmem>>, %arg2: memref<32x96xbf16, #tpu.memory_space<vmem>>, %arg3: memref<1x32x24xf32, #tpu.memory_space<vmem>>) attributes {dimension_semantics = [#tpu.dimension_semantics<parallel>], iteration_bounds = array<i64: 2>, scalar_prefetch = 0 : i64, scratch_operands = 0 : i64, tpu.core_type = #tpu.core_type<tc>, window_params = [{transform_indices = @transform_0, window_bounds = array<i64: 1, 96, 24>}, {pipeline_mode = #tpu.pipeline_mode<synchronous>, transform_indices = @transform_1, window_bounds = array<i64: 32, 96>}, {transform_indices = @transform_2, window_bounds = array<i64: 1, 32, 24>}]} {
    %c0 = arith.constant 0 : index
    %c0_0 = arith.constant 0 : index
    %0 = vector.load %arg2[%c0, %c0_0] : memref<32x96xbf16, #tpu.memory_space<vmem>>, vector<32x96xbf16>
    %c0_1 = arith.constant 0 : index
    %c0_2 = arith.constant 0 : index
    %c0_3 = arith.constant 0 : index
    %1 = vector.load %arg1[%c0_1, %c0_2, %c0_3] : memref<1x96x24xbf16, #tpu.memory_space<vmem>>, vector<1x96x24xbf16>
    %2 = vector.shape_cast %1 : vector<1x96x24xbf16> to vector<96x24xbf16>
    %cst = arith.constant dense<0.000000e+00> : vector<32x24xf32>
    %3 = tpu.matmul %0, %2, %cst {dimension_numbers = #tpu.dot_dimension_numbers<[1], [0], [0], [1], [0, 0, 1, 1], [], []>} : vector<32x96xbf16>, vector<96x24xbf16>, vector<32x24xf32> -> vector<32x24xf32>
    %cst_4 = arith.constant 5.000000e-01 : f32
    %4 = vector.broadcast %cst_4 : f32 to vector<32x24xf32>
    %5 = arith.mulf %4, %3 : vector<32x24xf32>
    %cst_5 = arith.constant 4.471500e-02 : f32
    %6 = vector.broadcast %cst_5 : f32 to vector<32x24xf32>
    %7 = arith.mulf %6, %3 : vector<32x24xf32>
    %8 = arith.mulf %7, %3 : vector<32x24xf32>
    %9 = arith.mulf %8, %3 : vector<32x24xf32>
    %10 = arith.addf %3, %9 : vector<32x24xf32>
    %cst_6 = arith.constant 0.797884583 : f32
    %11 = vector.broadcast %cst_6 : f32 to vector<32x24xf32>
    %12 = arith.mulf %11, %10 : vector<32x24xf32>
    %13 = math.tanh %12 : vector<32x24xf32>
    %cst_7 = arith.constant 1.000000e+00 : f32
    %14 = vector.broadcast %cst_7 : f32 to vector<32x24xf32>
    %15 = arith.addf %14, %13 : vector<32x24xf32>
    %16 = arith.mulf %5, %15 : vector<32x24xf32>
    %c0_8 = arith.constant 0 : index
    %c0_9 = arith.constant 0 : index
    %c0_10 = arith.constant 0 : index
    %17 = vector.load %arg3[%c0_8, %c0_9, %c0_10] : memref<1x32x24xf32, #tpu.memory_space<vmem>>, vector<1x32x24xf32>
    %18 = vector.shape_cast %17 : vector<1x32x24xf32> to vector<32x24xf32>
    %19 = vector.shape_cast %16 : vector<32x24xf32> to vector<1x32x24xf32>
    tpu.vector_store %arg3[%c0_8, %c0_9, %c0_10], %19 {strides = array<i32>} : memref<1x32x24xf32, #tpu.memory_space<vmem>>, vector<1x32x24xf32>,
    return
  }
  func.func @transform_0(%arg0: i32) -> (i32, i32, i32) {
    %c0_i32 = arith.constant 0 : i32
    %c0_i32_0 = arith.constant 0 : i32
    %c0_i32_1 = arith.constant 0 : i32
    return %arg0, %c0_i32, %c0_i32_0 : i32, i32, i32
  }
  func.func @transform_1(%arg0: i32) -> (i32, i32) {
    %c0_i32 = arith.constant 0 : i32
    %c0_i32_0 = arith.constant 0 : i32
    %c0_i32_1 = arith.constant 0 : i32
    return %c0_i32, %c0_i32_0 : i32, i32
  }
  func.func @transform_2(%arg0: i32) -> (i32, i32, i32) {
    %c0_i32 = arith.constant 0 : i32
    %c0_i32_0 = arith.constant 0 : i32
    %c0_i32_1 = arith.constant 0 : i32
    return %arg0, %c0_i32, %c0_i32_0 : i32, i32, i32
  }
}

module attributes {stable_mosaic.version = 11 : i64} {
  func.func @_convT_gelu_kernel(%arg0: i32, %arg1: memref<1x64x12xbf16, #tpu.memory_space<vmem>>, %arg2: memref<32x64xbf16, #tpu.memory_space<vmem>>, %arg3: memref<1x32x12xf32, #tpu.memory_space<vmem>>) attributes {dimension_semantics = [#tpu.dimension_semantics<parallel>], iteration_bounds = array<i64: 2>, scalar_prefetch = 0 : i64, scratch_operands = 0 : i64, tpu.core_type = #tpu.core_type<tc>, window_params = [{transform_indices = @transform_0, window_bounds = array<i64: 1, 64, 12>}, {pipeline_mode = #tpu.pipeline_mode<synchronous>, transform_indices = @transform_1, window_bounds = array<i64: 32, 64>}, {transform_indices = @transform_2, window_bounds = array<i64: 1, 32, 12>}]} {
    %c0 = arith.constant 0 : index
    %c0_0 = arith.constant 0 : index
    %0 = vector.load %arg2[%c0, %c0_0] : memref<32x64xbf16, #tpu.memory_space<vmem>>, vector<32x64xbf16>
    %c0_1 = arith.constant 0 : index
    %c0_2 = arith.constant 0 : index
    %c0_3 = arith.constant 0 : index
    %1 = vector.load %arg1[%c0_1, %c0_2, %c0_3] : memref<1x64x12xbf16, #tpu.memory_space<vmem>>, vector<1x64x12xbf16>
    %2 = vector.shape_cast %1 : vector<1x64x12xbf16> to vector<64x12xbf16>
    %cst = arith.constant dense<0.000000e+00> : vector<32x12xf32>
    %3 = tpu.matmul %0, %2, %cst {dimension_numbers = #tpu.dot_dimension_numbers<[1], [0], [0], [1], [0, 0, 1, 1], [], []>} : vector<32x64xbf16>, vector<64x12xbf16>, vector<32x12xf32> -> vector<32x12xf32>
    %cst_4 = arith.constant 5.000000e-01 : f32
    %4 = vector.broadcast %cst_4 : f32 to vector<32x12xf32>
    %5 = arith.mulf %4, %3 : vector<32x12xf32>
    %cst_5 = arith.constant 4.471500e-02 : f32
    %6 = vector.broadcast %cst_5 : f32 to vector<32x12xf32>
    %7 = arith.mulf %6, %3 : vector<32x12xf32>
    %8 = arith.mulf %7, %3 : vector<32x12xf32>
    %9 = arith.mulf %8, %3 : vector<32x12xf32>
    %10 = arith.addf %3, %9 : vector<32x12xf32>
    %cst_6 = arith.constant 0.797884583 : f32
    %11 = vector.broadcast %cst_6 : f32 to vector<32x12xf32>
    %12 = arith.mulf %11, %10 : vector<32x12xf32>
    %13 = math.tanh %12 : vector<32x12xf32>
    %cst_7 = arith.constant 1.000000e+00 : f32
    %14 = vector.broadcast %cst_7 : f32 to vector<32x12xf32>
    %15 = arith.addf %14, %13 : vector<32x12xf32>
    %16 = arith.mulf %5, %15 : vector<32x12xf32>
    %c0_8 = arith.constant 0 : index
    %c0_9 = arith.constant 0 : index
    %c0_10 = arith.constant 0 : index
    %17 = vector.load %arg3[%c0_8, %c0_9, %c0_10] : memref<1x32x12xf32, #tpu.memory_space<vmem>>, vector<1x32x12xf32>
    %18 = vector.shape_cast %17 : vector<1x32x12xf32> to vector<32x12xf32>
    %19 = vector.shape_cast %16 : vector<32x12xf32> to vector<1x32x12xf32>
    tpu.vector_store %arg3[%c0_8, %c0_9, %c0_10], %19 {strides = array<i32>} : memref<1x32x12xf32, #tpu.memory_space<vmem>>, vector<1x32x12xf32>,
    return
  }
  func.func @transform_0(%arg0: i32) -> (i32, i32, i32) {
    %c0_i32 = arith.constant 0 : i32
    %c0_i32_0 = arith.constant 0 : i32
    %c0_i32_1 = arith.constant 0 : i32
    return %arg0, %c0_i32, %c0_i32_0 : i32, i32, i32
  }
  func.func @transform_1(%arg0: i32) -> (i32, i32) {
    %c0_i32 = arith.constant 0 : i32
    %c0_i32_0 = arith.constant 0 : i32
    %c0_i32_1 = arith.constant 0 : i32
    return %c0_i32, %c0_i32_0 : i32, i32
  }
  func.func @transform_2(%arg0: i32) -> (i32, i32, i32) {
    %c0_i32 = arith.constant 0 : i32
    %c0_i32_0 = arith.constant 0 : i32
    %c0_i32_1 = arith.constant 0 : i32
    return %arg0, %c0_i32, %c0_i32_0 : i32, i32, i32
  }
}

module attributes {stable_mosaic.version = 11 : i64} {
  func.func @_convT_gelu_kernel(%arg0: i32, %arg1: memref<1x64x6xbf16, #tpu.memory_space<vmem>>, %arg2: memref<32x64xbf16, #tpu.memory_space<vmem>>, %arg3: memref<1x32x6xf32, #tpu.memory_space<vmem>>) attributes {dimension_semantics = [#tpu.dimension_semantics<parallel>], iteration_bounds = array<i64: 2>, scalar_prefetch = 0 : i64, scratch_operands = 0 : i64, tpu.core_type = #tpu.core_type<tc>, window_params = [{transform_indices = @transform_0, window_bounds = array<i64: 1, 64, 6>}, {pipeline_mode = #tpu.pipeline_mode<synchronous>, transform_indices = @transform_1, window_bounds = array<i64: 32, 64>}, {transform_indices = @transform_2, window_bounds = array<i64: 1, 32, 6>}]} {
    %c0 = arith.constant 0 : index
    %c0_0 = arith.constant 0 : index
    %0 = vector.load %arg2[%c0, %c0_0] : memref<32x64xbf16, #tpu.memory_space<vmem>>, vector<32x64xbf16>
    %c0_1 = arith.constant 0 : index
    %c0_2 = arith.constant 0 : index
    %c0_3 = arith.constant 0 : index
    %1 = vector.load %arg1[%c0_1, %c0_2, %c0_3] : memref<1x64x6xbf16, #tpu.memory_space<vmem>>, vector<1x64x6xbf16>
    %2 = vector.shape_cast %1 : vector<1x64x6xbf16> to vector<64x6xbf16>
    %cst = arith.constant dense<0.000000e+00> : vector<32x6xf32>
    %3 = tpu.matmul %0, %2, %cst {dimension_numbers = #tpu.dot_dimension_numbers<[1], [0], [0], [1], [0, 0, 1, 1], [], []>} : vector<32x64xbf16>, vector<64x6xbf16>, vector<32x6xf32> -> vector<32x6xf32>
    %cst_4 = arith.constant 5.000000e-01 : f32
    %4 = vector.broadcast %cst_4 : f32 to vector<32x6xf32>
    %5 = arith.mulf %4, %3 : vector<32x6xf32>
    %cst_5 = arith.constant 4.471500e-02 : f32
    %6 = vector.broadcast %cst_5 : f32 to vector<32x6xf32>
    %7 = arith.mulf %6, %3 : vector<32x6xf32>
    %8 = arith.mulf %7, %3 : vector<32x6xf32>
    %9 = arith.mulf %8, %3 : vector<32x6xf32>
    %10 = arith.addf %3, %9 : vector<32x6xf32>
    %cst_6 = arith.constant 0.797884583 : f32
    %11 = vector.broadcast %cst_6 : f32 to vector<32x6xf32>
    %12 = arith.mulf %11, %10 : vector<32x6xf32>
    %13 = math.tanh %12 : vector<32x6xf32>
    %cst_7 = arith.constant 1.000000e+00 : f32
    %14 = vector.broadcast %cst_7 : f32 to vector<32x6xf32>
    %15 = arith.addf %14, %13 : vector<32x6xf32>
    %16 = arith.mulf %5, %15 : vector<32x6xf32>
    %c0_8 = arith.constant 0 : index
    %c0_9 = arith.constant 0 : index
    %c0_10 = arith.constant 0 : index
    %17 = vector.load %arg3[%c0_8, %c0_9, %c0_10] : memref<1x32x6xf32, #tpu.memory_space<vmem>>, vector<1x32x6xf32>
    %18 = vector.shape_cast %17 : vector<1x32x6xf32> to vector<32x6xf32>
    %19 = vector.shape_cast %16 : vector<32x6xf32> to vector<1x32x6xf32>
    tpu.vector_store %arg3[%c0_8, %c0_9, %c0_10], %19 {strides = array<i32>} : memref<1x32x6xf32, #tpu.memory_space<vmem>>, vector<1x32x6xf32>,
    return
  }
  func.func @transform_0(%arg0: i32) -> (i32, i32, i32) {
    %c0_i32 = arith.constant 0 : i32
    %c0_i32_0 = arith.constant 0 : i32
    %c0_i32_1 = arith.constant 0 : i32
    return %arg0, %c0_i32, %c0_i32_0 : i32, i32, i32
  }
  func.func @transform_1(%arg0: i32) -> (i32, i32) {
    %c0_i32 = arith.constant 0 : i32
    %c0_i32_0 = arith.constant 0 : i32
    %c0_i32_1 = arith.constant 0 : i32
    return %c0_i32, %c0_i32_0 : i32, i32
  }
  func.func @transform_2(%arg0: i32) -> (i32, i32, i32) {
    %c0_i32 = arith.constant 0 : i32
    %c0_i32_0 = arith.constant 0 : i32
    %c0_i32_1 = arith.constant 0 : i32
    return %arg0, %c0_i32, %c0_i32_0 : i32, i32, i32
  }
}

module attributes {stable_mosaic.version = 11 : i64} {
  func.func @_featproj_kernel(%arg0: i32, %arg1: memref<1x6x32xf32, #tpu.memory_space<vmem>>, %arg2: memref<1x32xf32, #tpu.memory_space<vmem>>, %arg3: memref<1x32xf32, #tpu.memory_space<vmem>>, %arg4: memref<32x32xbf16, #tpu.memory_space<vmem>>, %arg5: memref<1x32xf32, #tpu.memory_space<vmem>>, %arg6: memref<1x6x32xf32, #tpu.memory_space<vmem>>) attributes {dimension_semantics = [#tpu.dimension_semantics<parallel>], iteration_bounds = array<i64: 2>, scalar_prefetch = 0 : i64, scratch_operands = 0 : i64, tpu.core_type = #tpu.core_type<tc>, window_params = [{transform_indices = @transform_0, window_bounds = array<i64: 1, 6, 32>}, {pipeline_mode = #tpu.pipeline_mode<synchronous>, transform_indices = @transform_1, window_bounds = array<i64: 1, 32>}, {pipeline_mode = #tpu.pipeline_mode<synchronous>, transform_indices = @transform_2, window_bounds = array<i64: 1, 32>}, {pipeline_mode = #tpu.pipeline_mode<synchronous>, transform_indices = @transform_3, window_bounds = array<i64: 32, 32>}, {pipeline_mode = #tpu.pipeline_mode<synchronous>, transform_indices = @transform_4, window_bounds = array<i64: 1, 32>}, {transform_indices = @transform_5, window_bounds = array<i64: 1, 6, 32>}]} {
    %c0 = arith.constant 0 : index
    %c0_0 = arith.constant 0 : index
    %c0_1 = arith.constant 0 : index
    %0 = vector.load %arg1[%c0, %c0_0, %c0_1] : memref<1x6x32xf32, #tpu.memory_space<vmem>>, vector<1x6x32xf32>
    %1 = vector.shape_cast %0 : vector<1x6x32xf32> to vector<6x32xf32>
    %c0_2 = arith.constant 0 : index
    %c0_3 = arith.constant 0 : index
    %2 = vector.load %arg2[%c0_2, %c0_3] : memref<1x32xf32, #tpu.memory_space<vmem>>, vector<1x32xf32>
    %c0_4 = arith.constant 0 : index
    %c0_5 = arith.constant 0 : index
    %3 = vector.load %arg3[%c0_4, %c0_5] : memref<1x32xf32, #tpu.memory_space<vmem>>, vector<1x32xf32>
    %cst = arith.constant dense<0.000000e+00> : vector<6xf32>
    %4 = vector.multi_reduction <add>, %1, %cst [1] : vector<6x32xf32> to vector<6xf32>
    %5 = vector.shape_cast %4 : vector<6xf32> to vector<6x1xf32>
    %cst_6 = arith.constant 3.200000e+01 : f32
    %6 = vector.broadcast %cst_6 : f32 to vector<6x1xf32>
    %7 = arith.divf %5, %6 : vector<6x1xf32>
    %8 = vector.broadcast %7 : vector<6x1xf32> to vector<6x32xf32>
    %9 = arith.subf %1, %8 : vector<6x32xf32>
    %10 = arith.mulf %9, %9 : vector<6x32xf32>
    %cst_7 = arith.constant dense<0.000000e+00> : vector<6xf32>
    %11 = vector.multi_reduction <add>, %10, %cst_7 [1] : vector<6x32xf32> to vector<6xf32>
    %12 = vector.shape_cast %11 : vector<6xf32> to vector<6x1xf32>
    %cst_8 = arith.constant 3.200000e+01 : f32
    %13 = vector.broadcast %cst_8 : f32 to vector<6x1xf32>
    %14 = arith.divf %12, %13 : vector<6x1xf32>
    %15 = vector.broadcast %7 : vector<6x1xf32> to vector<6x32xf32>
    %16 = arith.subf %1, %15 : vector<6x32xf32>
    %cst_9 = arith.constant 9.99999974E-6 : f32
    %17 = vector.broadcast %cst_9 : f32 to vector<6x1xf32>
    %18 = arith.addf %14, %17 : vector<6x1xf32>
    %19 = math.rsqrt %18 : vector<6x1xf32>
    %20 = vector.broadcast %19 : vector<6x1xf32> to vector<6x32xf32>
    %21 = arith.mulf %16, %20 : vector<6x32xf32>
    %22 = vector.broadcast %2 : vector<1x32xf32> to vector<6x32xf32>
    %23 = arith.mulf %21, %22 : vector<6x32xf32>
    %24 = vector.broadcast %3 : vector<1x32xf32> to vector<6x32xf32>
    %25 = arith.addf %23, %24 : vector<6x32xf32>
    %26 = arith.truncf %25 : vector<6x32xf32> to vector<6x32xbf16>
    %c0_10 = arith.constant 0 : index
    %c0_11 = arith.constant 0 : index
    %27 = vector.load %arg4[%c0_10, %c0_11] : memref<32x32xbf16, #tpu.memory_space<vmem>>, vector<32x32xbf16>
    %cst_12 = arith.constant dense<0.000000e+00> : vector<6x32xf32>
    %28 = tpu.matmul %26, %27, %cst_12 {dimension_numbers = #tpu.dot_dimension_numbers<[1], [0], [0], [1], [0, 0, 1, 1], [], []>} : vector<6x32xbf16>, vector<32x32xbf16>, vector<6x32xf32> -> vector<6x32xf32>
    %c0_13 = arith.constant 0 : index
    %c0_14 = arith.constant 0 : index
    %29 = vector.load %arg5[%c0_13, %c0_14] : memref<1x32xf32, #tpu.memory_space<vmem>>, vector<1x32xf32>
    %30 = vector.broadcast %29 : vector<1x32xf32> to vector<6x32xf32>
    %31 = arith.addf %28, %30 : vector<6x32xf32>
    %c0_15 = arith.constant 0 : index
    %c0_16 = arith.constant 0 : index
    %c0_17 = arith.constant 0 : index
    %32 = vector.load %arg6[%c0_15, %c0_16, %c0_17] : memref<1x6x32xf32, #tpu.memory_space<vmem>>, vector<1x6x32xf32>
    %33 = vector.shape_cast %32 : vector<1x6x32xf32> to vector<6x32xf32>
    %34 = vector.shape_cast %31 : vector<6x32xf32> to vector<1x6x32xf32>
    tpu.vector_store %arg6[%c0_15, %c0_16, %c0_17], %34 {strides = array<i32>} : memref<1x6x32xf32, #tpu.memory_space<vmem>>, vector<1x6x32xf32>,
    return
  }
  func.func @transform_0(%arg0: i32) -> (i32, i32, i32) {
    %c0_i32 = arith.constant 0 : i32
    %c0_i32_0 = arith.constant 0 : i32
    %c0_i32_1 = arith.constant 0 : i32
    return %arg0, %c0_i32, %c0_i32_0 : i32, i32, i32
  }
  func.func @transform_1(%arg0: i32) -> (i32, i32) {
    %c0_i32 = arith.constant 0 : i32
    %c0_i32_0 = arith.constant 0 : i32
    %c0_i32_1 = arith.constant 0 : i32
    return %c0_i32, %c0_i32_0 : i32, i32
  }
  func.func @transform_2(%arg0: i32) -> (i32, i32) {
    %c0_i32 = arith.constant 0 : i32
    %c0_i32_0 = arith.constant 0 : i32
    %c0_i32_1 = arith.constant 0 : i32
    return %c0_i32, %c0_i32_0 : i32, i32
  }
  func.func @transform_3(%arg0: i32) -> (i32, i32) {
    %c0_i32 = arith.constant 0 : i32
    %c0_i32_0 = arith.constant 0 : i32
    %c0_i32_1 = arith.constant 0 : i32
    return %c0_i32, %c0_i32_0 : i32, i32
  }
  func.func @transform_4(%arg0: i32) -> (i32, i32) {
    %c0_i32 = arith.constant 0 : i32
    %c0_i32_0 = arith.constant 0 : i32
    %c0_i32_1 = arith.constant 0 : i32
    return %c0_i32, %c0_i32_0 : i32, i32
  }
  func.func @transform_5(%arg0: i32) -> (i32, i32, i32) {
    %c0_i32 = arith.constant 0 : i32
    %c0_i32_0 = arith.constant 0 : i32
    %c0_i32_1 = arith.constant 0 : i32
    return %arg0, %c0_i32, %c0_i32_0 : i32, i32, i32
  }
}

module attributes {stable_mosaic.version = 11 : i64} {
  func.func @_encoder_kernel(%arg0: i32, %arg1: i32, %arg2: memref<1x6x32xf32, #tpu.memory_space<vmem>>, %arg3: memref<1x6x512xbf16, #tpu.memory_space<vmem>>, %arg4: memref<512x32xbf16, #tpu.memory_space<vmem>>, %arg5: memref<1x32xf32, #tpu.memory_space<vmem>>, %arg6: memref<1x32xf32, #tpu.memory_space<vmem>>, %arg7: memref<1x32xf32, #tpu.memory_space<vmem>>, %arg8: memref<1x32x96xbf16, #tpu.memory_space<vmem>>, %arg9: memref<1x1x96xf32, #tpu.memory_space<vmem>>, %arg10: memref<1x4x8x32xbf16, #tpu.memory_space<vmem>>, %arg11: memref<1x1x32xf32, #tpu.memory_space<vmem>>, %arg12: memref<1x1x32xf32, #tpu.memory_space<vmem>>, %arg13: memref<1x1x32xf32, #tpu.memory_space<vmem>>, %arg14: memref<1x32x64xbf16, #tpu.memory_space<vmem>>, %arg15: memref<1x1x64xf32, #tpu.memory_space<vmem>>, %arg16: memref<1x64x32xbf16, #tpu.memory_space<vmem>>, %arg17: memref<1x1x32xf32, #tpu.memory_space<vmem>>, %arg18: memref<1x1x32xf32, #tpu.memory_space<vmem>>, %arg19: memref<1x1x32xf32, #tpu.memory_space<vmem>>, %arg20: memref<1x1x32xf32, #tpu.memory_space<vmem>>, %arg21: memref<6x32xf32, #tpu.memory_space<vmem>>) attributes {dimension_semantics = [#tpu.dimension_semantics<parallel>, #tpu.dimension_semantics<arbitrary>], iteration_bounds = array<i64: 2, 2>, scalar_prefetch = 0 : i64, scratch_operands = 1 : i64, tpu.core_type = #tpu.core_type<tc>, window_params = [{transform_indices = @transform_0, window_bounds = array<i64: 1, 6, 32>}, {transform_indices = @transform_1, window_bounds = array<i64: 1, 6, 512>}, {pipeline_mode = #tpu.pipeline_mode<synchronous>, transform_indices = @transform_2, window_bounds = array<i64: 512, 32>}, {pipeline_mode = #tpu.pipeline_mode<synchronous>, transform_indices = @transform_3, window_bounds = array<i64: 1, 32>}, {pipeline_mode = #tpu.pipeline_mode<synchronous>, transform_indices = @transform_4, window_bounds = array<i64: 1, 32>}, {pipeline_mode = #tpu.pipeline_mode<synchronous>, transform_indices = @transform_5, window_bounds = array<i64: 1, 32>}, {transform_indices = @transform_6, window_bounds = array<i64: 1, 32, 96>}, {transform_indices = @transform_7, window_bounds = array<i64: 1, 1, 96>}, {transform_indices = @transform_8, window_bounds = array<i64: 1, 4, 8, 32>}, {transform_indices = @transform_9, window_bounds = array<i64: 1, 1, 32>}, {transform_indices = @transform_10, window_bounds = array<i64: 1, 1, 32>}, {transform_indices = @transform_11, window_bounds = array<i64: 1, 1, 32>}, {transform_indices = @transform_12, window_bounds = array<i64: 1, 32, 64>}, {transform_indices = @transform_13, window_bounds = array<i64: 1, 1, 64>}, {transform_indices = @transform_14, window_bounds = array<i64: 1, 64, 32>}, {transform_indices = @transform_15, window_bounds = array<i64: 1, 1, 32>}, {transform_indices = @transform_16, window_bounds = array<i64: 1, 1, 32>}, {transform_indices = @transform_17, window_bounds = array<i64: 1, 1, 32>}, {transform_indices = @transform_18, window_bounds = array<i64: 1, 1, 32>}]} {
    %c0_i32 = arith.constant 0 : i32
    %0 = arith.cmpi eq, %arg1, %c0_i32 : i32
    %1 = arith.extui %0 : i1 to i32
    %c0_i32_0 = arith.constant 0 : i32
    %2 = arith.cmpi ne, %1, %c0_i32_0 : i32
    scf.if %2 {
      %c0_64 = arith.constant 0 : index
      %c0_65 = arith.constant 0 : index
      %c0_66 = arith.constant 0 : index
      %152 = vector.load %arg2[%c0_64, %c0_65, %c0_66] : memref<1x6x32xf32, #tpu.memory_space<vmem>>, vector<1x6x32xf32>
      %153 = vector.shape_cast %152 : vector<1x6x32xf32> to vector<6x32xf32>
      %c0_67 = arith.constant 0 : index
      %c0_68 = arith.constant 0 : index
      %c0_69 = arith.constant 0 : index
      %154 = vector.load %arg3[%c0_67, %c0_68, %c0_69] : memref<1x6x512xbf16, #tpu.memory_space<vmem>>, vector<1x6x512xbf16>
      %155 = vector.shape_cast %154 : vector<1x6x512xbf16> to vector<6x512xbf16>
      %c0_70 = arith.constant 0 : index
      %c0_71 = arith.constant 0 : index
      %156 = vector.load %arg4[%c0_70, %c0_71] : memref<512x32xbf16, #tpu.memory_space<vmem>>, vector<512x32xbf16>
      %cst_72 = arith.constant dense<0.000000e+00> : vector<6x32xf32>
      %157 = tpu.matmul %155, %156, %cst_72 {dimension_numbers = #tpu.dot_dimension_numbers<[1], [0], [0], [1], [0, 0, 1, 1], [], []>} : vector<6x512xbf16>, vector<512x32xbf16>, vector<6x32xf32> -> vector<6x32xf32>
      %c0_73 = arith.constant 0 : index
      %c0_74 = arith.constant 0 : index
      %158 = vector.load %arg5[%c0_73, %c0_74] : memref<1x32xf32, #tpu.memory_space<vmem>>, vector<1x32xf32>
      %159 = vector.broadcast %158 : vector<1x32xf32> to vector<6x32xf32>
      %160 = arith.addf %157, %159 : vector<6x32xf32>
      %cst_75 = arith.constant 5.000000e-01 : f32
      %161 = vector.broadcast %cst_75 : f32 to vector<6x32xf32>
      %162 = arith.mulf %161, %160 : vector<6x32xf32>
      %cst_76 = arith.constant 4.471500e-02 : f32
      %163 = vector.broadcast %cst_76 : f32 to vector<6x32xf32>
      %164 = arith.mulf %163, %160 : vector<6x32xf32>
      %165 = arith.mulf %164, %160 : vector<6x32xf32>
      %166 = arith.mulf %165, %160 : vector<6x32xf32>
      %167 = arith.addf %160, %166 : vector<6x32xf32>
      %cst_77 = arith.constant 0.797884583 : f32
      %168 = vector.broadcast %cst_77 : f32 to vector<6x32xf32>
      %169 = arith.mulf %168, %167 : vector<6x32xf32>
      %170 = math.tanh %169 : vector<6x32xf32>
      %cst_78 = arith.constant 1.000000e+00 : f32
      %171 = vector.broadcast %cst_78 : f32 to vector<6x32xf32>
      %172 = arith.addf %171, %170 : vector<6x32xf32>
      %173 = arith.mulf %162, %172 : vector<6x32xf32>
      %174 = arith.addf %153, %173 : vector<6x32xf32>
      %c0_79 = arith.constant 0 : index
      %c0_80 = arith.constant 0 : index
      %175 = vector.load %arg6[%c0_79, %c0_80] : memref<1x32xf32, #tpu.memory_space<vmem>>, vector<1x32xf32>
      %c0_81 = arith.constant 0 : index
      %c0_82 = arith.constant 0 : index
      %176 = vector.load %arg7[%c0_81, %c0_82] : memref<1x32xf32, #tpu.memory_space<vmem>>, vector<1x32xf32>
      %cst_83 = arith.constant dense<0.000000e+00> : vector<6xf32>
      %177 = vector.multi_reduction <add>, %174, %cst_83 [1] : vector<6x32xf32> to vector<6xf32>
      %178 = vector.shape_cast %177 : vector<6xf32> to vector<6x1xf32>
      %cst_84 = arith.constant 3.200000e+01 : f32
      %179 = vector.broadcast %cst_84 : f32 to vector<6x1xf32>
      %180 = arith.divf %178, %179 : vector<6x1xf32>
      %181 = vector.broadcast %180 : vector<6x1xf32> to vector<6x32xf32>
      %182 = arith.subf %174, %181 : vector<6x32xf32>
      %183 = arith.mulf %182, %182 : vector<6x32xf32>
      %cst_85 = arith.constant dense<0.000000e+00> : vector<6xf32>
      %184 = vector.multi_reduction <add>, %183, %cst_85 [1] : vector<6x32xf32> to vector<6xf32>
      %185 = vector.shape_cast %184 : vector<6xf32> to vector<6x1xf32>
      %cst_86 = arith.constant 3.200000e+01 : f32
      %186 = vector.broadcast %cst_86 : f32 to vector<6x1xf32>
      %187 = arith.divf %185, %186 : vector<6x1xf32>
      %188 = vector.broadcast %180 : vector<6x1xf32> to vector<6x32xf32>
      %189 = arith.subf %174, %188 : vector<6x32xf32>
      %cst_87 = arith.constant 9.99999974E-6 : f32
      %190 = vector.broadcast %cst_87 : f32 to vector<6x1xf32>
      %191 = arith.addf %187, %190 : vector<6x1xf32>
      %192 = math.rsqrt %191 : vector<6x1xf32>
      %193 = vector.broadcast %192 : vector<6x1xf32> to vector<6x32xf32>
      %194 = arith.mulf %189, %193 : vector<6x32xf32>
      %195 = vector.broadcast %175 : vector<1x32xf32> to vector<6x32xf32>
      %196 = arith.mulf %194, %195 : vector<6x32xf32>
      %197 = vector.broadcast %176 : vector<1x32xf32> to vector<6x32xf32>
      %198 = arith.addf %196, %197 : vector<6x32xf32>
      %c0_88 = arith.constant 0 : index
      %c0_89 = arith.constant 0 : index
      %199 = vector.load %arg21[%c0_88, %c0_89] : memref<6x32xf32, #tpu.memory_space<vmem>>, vector<6x32xf32>
      tpu.vector_store %arg21[%c0_88, %c0_89], %198 {strides = array<i32>} : memref<6x32xf32, #tpu.memory_space<vmem>>, vector<6x32xf32>,
    } else {
    }
    %c0 = arith.constant 0 : index
    %c0_1 = arith.constant 0 : index
    %3 = vector.load %arg21[%c0, %c0_1] : memref<6x32xf32, #tpu.memory_space<vmem>>, vector<6x32xf32>
    %4 = arith.truncf %3 : vector<6x32xf32> to vector<6x32xbf16>
    %c0_2 = arith.constant 0 : index
    %c0_3 = arith.constant 0 : index
    %c0_4 = arith.constant 0 : index
    %5 = vector.load %arg8[%c0_2, %c0_3, %c0_4] : memref<1x32x96xbf16, #tpu.memory_space<vmem>>, vector<1x32x96xbf16>
    %6 = vector.shape_cast %5 : vector<1x32x96xbf16> to vector<32x96xbf16>
    %cst = arith.constant dense<0.000000e+00> : vector<6x96xf32>
    %7 = tpu.matmul %4, %6, %cst {dimension_numbers = #tpu.dot_dimension_numbers<[1], [0], [0], [1], [0, 0, 1, 1], [], []>} : vector<6x32xbf16>, vector<32x96xbf16>, vector<6x96xf32> -> vector<6x96xf32>
    %c0_5 = arith.constant 0 : index
    %c0_6 = arith.constant 0 : index
    %c0_7 = arith.constant 0 : index
    %8 = vector.load %arg9[%c0_5, %c0_6, %c0_7] : memref<1x1x96xf32, #tpu.memory_space<vmem>>, vector<1x1x96xf32>
    %9 = vector.shape_cast %8 : vector<1x1x96xf32> to vector<1x96xf32>
    %10 = vector.broadcast %9 : vector<1x96xf32> to vector<6x96xf32>
    %11 = arith.addf %7, %10 : vector<6x96xf32>
    %12 = arith.truncf %11 : vector<6x96xf32> to vector<6x96xbf16>
    %13 = vector.extract_strided_slice %12 {offsets = [0, 0], sizes = [6, 32], strides = [1, 1]} : vector<6x96xbf16> to vector<6x32xbf16>
    %14 = vector.extract_strided_slice %13 {offsets = [0, 0], sizes = [6, 8], strides = [1, 1]} : vector<6x32xbf16> to vector<6x8xbf16>
    %15 = vector.extract_strided_slice %13 {offsets = [0, 8], sizes = [6, 8], strides = [1, 1]} : vector<6x32xbf16> to vector<6x8xbf16>
    %16 = vector.extract_strided_slice %13 {offsets = [0, 16], sizes = [6, 8], strides = [1, 1]} : vector<6x32xbf16> to vector<6x8xbf16>
    %17 = vector.extract_strided_slice %13 {offsets = [0, 24], sizes = [6, 8], strides = [1, 1]} : vector<6x32xbf16> to vector<6x8xbf16>
    %18 = vector.shape_cast %14 : vector<6x8xbf16> to vector<1x6x8xbf16>
    %19 = vector.shape_cast %15 : vector<6x8xbf16> to vector<1x6x8xbf16>
    %20 = vector.shape_cast %16 : vector<6x8xbf16> to vector<1x6x8xbf16>
    %21 = vector.shape_cast %17 : vector<6x8xbf16> to vector<1x6x8xbf16>
    %22 = tpu.concatenate %18, %19, %20, %21 in 0 : vector<1x6x8xbf16>, vector<1x6x8xbf16>, vector<1x6x8xbf16>, vector<1x6x8xbf16> -> vector<4x6x8xbf16>
    %23 = vector.extract_strided_slice %12 {offsets = [0, 32], sizes = [6, 32], strides = [1, 1]} : vector<6x96xbf16> to vector<6x32xbf16>
    %24 = vector.extract_strided_slice %23 {offsets = [0, 0], sizes = [6, 8], strides = [1, 1]} : vector<6x32xbf16> to vector<6x8xbf16>
    %25 = vector.extract_strided_slice %23 {offsets = [0, 8], sizes = [6, 8], strides = [1, 1]} : vector<6x32xbf16> to vector<6x8xbf16>
    %26 = vector.extract_strided_slice %23 {offsets = [0, 16], sizes = [6, 8], strides = [1, 1]} : vector<6x32xbf16> to vector<6x8xbf16>
    %27 = vector.extract_strided_slice %23 {offsets = [0, 24], sizes = [6, 8], strides = [1, 1]} : vector<6x32xbf16> to vector<6x8xbf16>
    %28 = vector.shape_cast %24 : vector<6x8xbf16> to vector<1x6x8xbf16>
    %29 = vector.shape_cast %25 : vector<6x8xbf16> to vector<1x6x8xbf16>
    %30 = vector.shape_cast %26 : vector<6x8xbf16> to vector<1x6x8xbf16>
    %31 = vector.shape_cast %27 : vector<6x8xbf16> to vector<1x6x8xbf16>
    %32 = tpu.concatenate %28, %29, %30, %31 in 0 : vector<1x6x8xbf16>, vector<1x6x8xbf16>, vector<1x6x8xbf16>, vector<1x6x8xbf16> -> vector<4x6x8xbf16>
    %33 = vector.extract_strided_slice %12 {offsets = [0, 64], sizes = [6, 32], strides = [1, 1]} : vector<6x96xbf16> to vector<6x32xbf16>
    %34 = vector.extract_strided_slice %33 {offsets = [0, 0], sizes = [6, 8], strides = [1, 1]} : vector<6x32xbf16> to vector<6x8xbf16>
    %35 = vector.extract_strided_slice %33 {offsets = [0, 8], sizes = [6, 8], strides = [1, 1]} : vector<6x32xbf16> to vector<6x8xbf16>
    %36 = vector.extract_strided_slice %33 {offsets = [0, 16], sizes = [6, 8], strides = [1, 1]} : vector<6x32xbf16> to vector<6x8xbf16>
    %37 = vector.extract_strided_slice %33 {offsets = [0, 24], sizes = [6, 8], strides = [1, 1]} : vector<6x32xbf16> to vector<6x8xbf16>
    %38 = vector.shape_cast %34 : vector<6x8xbf16> to vector<1x6x8xbf16>
    %39 = vector.shape_cast %35 : vector<6x8xbf16> to vector<1x6x8xbf16>
    %40 = vector.shape_cast %36 : vector<6x8xbf16> to vector<1x6x8xbf16>
    %41 = vector.shape_cast %37 : vector<6x8xbf16> to vector<1x6x8xbf16>
    %42 = tpu.concatenate %38, %39, %40, %41 in 0 : vector<1x6x8xbf16>, vector<1x6x8xbf16>, vector<1x6x8xbf16>, vector<1x6x8xbf16> -> vector<4x6x8xbf16>
    "tpu.trace_start"() <{level = 10 : i32, message = "htd,hsd->hts"}> : () -> ()
    %cst_8 = arith.constant dense<0.000000e+00> : vector<4x6x6xf32>
    %43 = tpu.matmul %22, %32, %cst_8 {dimension_numbers = #tpu.dot_dimension_numbers<[2], [2], [1], [1], [0, 0, 0, 1, 1, 1], [0], [0]>} : vector<4x6x8xbf16>, vector<4x6x8xbf16>, vector<4x6x6xf32> -> vector<4x6x6xf32>
    "tpu.trace_stop"() : () -> ()
    %cst_9 = arith.constant dense<0xFF800000> : vector<4x6xf32>
    %44 = vector.multi_reduction <maximumf>, %43, %cst_9 [2] : vector<4x6x6xf32> to vector<4x6xf32>
    %45 = vector.shape_cast %44 : vector<4x6xf32> to vector<4x6x1xf32>
    %46 = vector.broadcast %45 : vector<4x6x1xf32> to vector<4x6x6xf32>
    %47 = arith.subf %43, %46 : vector<4x6x6xf32>
    %48 = math.exp %47 : vector<4x6x6xf32>
    %cst_10 = arith.constant dense<0.000000e+00> : vector<4x6xf32>
    %49 = vector.multi_reduction <add>, %48, %cst_10 [2] : vector<4x6x6xf32> to vector<4x6xf32>
    %50 = vector.shape_cast %49 : vector<4x6xf32> to vector<4x6x1xf32>
    %51 = tpu.reciprocal %50 {approx = true} : vector<4x6x1xf32> -> vector<4x6x1xf32>
    %52 = vector.broadcast %51 : vector<4x6x1xf32> to vector<4x6x6xf32>
    %53 = arith.mulf %48, %52 : vector<4x6x6xf32>
    %54 = arith.truncf %53 : vector<4x6x6xf32> to vector<4x6x6xbf16>
    "tpu.trace_start"() <{level = 10 : i32, message = "hts,hsd->htd"}> : () -> ()
    %cst_11 = arith.constant dense<0.000000e+00> : vector<4x6x8xf32>
    %55 = tpu.matmul %54, %42, %cst_11 {dimension_numbers = #tpu.dot_dimension_numbers<[2], [1], [1], [2], [0, 0, 0, 1, 1, 2], [0], [0]>} : vector<4x6x6xbf16>, vector<4x6x8xbf16>, vector<4x6x8xf32> -> vector<4x6x8xf32>
    "tpu.trace_stop"() : () -> ()
    %56 = arith.truncf %55 : vector<4x6x8xf32> to vector<4x6x8xbf16>
    %c0_12 = arith.constant 0 : index
    %c0_13 = arith.constant 0 : index
    %c0_14 = arith.constant 0 : index
    %c0_15 = arith.constant 0 : index
    %57 = vector.load %arg10[%c0_12, %c0_13, %c0_14, %c0_15] : memref<1x4x8x32xbf16, #tpu.memory_space<vmem>>, vector<1x4x8x32xbf16>
    %58 = vector.shape_cast %57 : vector<1x4x8x32xbf16> to vector<4x8x32xbf16>
    "tpu.trace_start"() <{level = 10 : i32, message = "htd,hdo->hto"}> : () -> ()
    %cst_16 = arith.constant dense<0.000000e+00> : vector<4x6x32xf32>
    %59 = tpu.matmul %56, %58, %cst_16 {dimension_numbers = #tpu.dot_dimension_numbers<[2], [1], [1], [2], [0, 0, 0, 1, 1, 2], [0], [0]>} : vector<4x6x8xbf16>, vector<4x8x32xbf16>, vector<4x6x32xf32> -> vector<4x6x32xf32>
    "tpu.trace_stop"() : () -> ()
    %cst_17 = arith.constant dense<0.000000e+00> : vector<6x32xf32>
    %60 = vector.multi_reduction <add>, %59, %cst_17 [0] : vector<4x6x32xf32> to vector<6x32xf32>
    %c0_18 = arith.constant 0 : index
    %c0_19 = arith.constant 0 : index
    %c0_20 = arith.constant 0 : index
    %61 = vector.load %arg11[%c0_18, %c0_19, %c0_20] : memref<1x1x32xf32, #tpu.memory_space<vmem>>, vector<1x1x32xf32>
    %62 = vector.shape_cast %61 : vector<1x1x32xf32> to vector<1x32xf32>
    %63 = vector.broadcast %62 : vector<1x32xf32> to vector<6x32xf32>
    %64 = arith.addf %60, %63 : vector<6x32xf32>
    %65 = arith.addf %3, %64 : vector<6x32xf32>
    %c0_21 = arith.constant 0 : index
    %c0_22 = arith.constant 0 : index
    %c0_23 = arith.constant 0 : index
    %66 = vector.load %arg12[%c0_21, %c0_22, %c0_23] : memref<1x1x32xf32, #tpu.memory_space<vmem>>, vector<1x1x32xf32>
    %67 = vector.shape_cast %66 : vector<1x1x32xf32> to vector<1x32xf32>
    %c0_24 = arith.constant 0 : index
    %c0_25 = arith.constant 0 : index
    %c0_26 = arith.constant 0 : index
    %68 = vector.load %arg13[%c0_24, %c0_25, %c0_26] : memref<1x1x32xf32, #tpu.memory_space<vmem>>, vector<1x1x32xf32>
    %69 = vector.shape_cast %68 : vector<1x1x32xf32> to vector<1x32xf32>
    %cst_27 = arith.constant dense<0.000000e+00> : vector<6xf32>
    %70 = vector.multi_reduction <add>, %65, %cst_27 [1] : vector<6x32xf32> to vector<6xf32>
    %71 = vector.shape_cast %70 : vector<6xf32> to vector<6x1xf32>
    %cst_28 = arith.constant 3.200000e+01 : f32
    %72 = vector.broadcast %cst_28 : f32 to vector<6x1xf32>
    %73 = arith.divf %71, %72 : vector<6x1xf32>
    %74 = vector.broadcast %73 : vector<6x1xf32> to vector<6x32xf32>
    %75 = arith.subf %65, %74 : vector<6x32xf32>
    %76 = arith.mulf %75, %75 : vector<6x32xf32>
    %cst_29 = arith.constant dense<0.000000e+00> : vector<6xf32>
    %77 = vector.multi_reduction <add>, %76, %cst_29 [1] : vector<6x32xf32> to vector<6xf32>
    %78 = vector.shape_cast %77 : vector<6xf32> to vector<6x1xf32>
    %cst_30 = arith.constant 3.200000e+01 : f32
    %79 = vector.broadcast %cst_30 : f32 to vector<6x1xf32>
    %80 = arith.divf %78, %79 : vector<6x1xf32>
    %81 = vector.broadcast %73 : vector<6x1xf32> to vector<6x32xf32>
    %82 = arith.subf %65, %81 : vector<6x32xf32>
    %cst_31 = arith.constant 9.99999974E-6 : f32
    %83 = vector.broadcast %cst_31 : f32 to vector<6x1xf32>
    %84 = arith.addf %80, %83 : vector<6x1xf32>
    %85 = math.rsqrt %84 : vector<6x1xf32>
    %86 = vector.broadcast %85 : vector<6x1xf32> to vector<6x32xf32>
    %87 = arith.mulf %82, %86 : vector<6x32xf32>
    %88 = vector.broadcast %67 : vector<1x32xf32> to vector<6x32xf32>
    %89 = arith.mulf %87, %88 : vector<6x32xf32>
    %90 = vector.broadcast %69 : vector<1x32xf32> to vector<6x32xf32>
    %91 = arith.addf %89, %90 : vector<6x32xf32>
    %92 = arith.truncf %91 : vector<6x32xf32> to vector<6x32xbf16>
    %c0_32 = arith.constant 0 : index
    %c0_33 = arith.constant 0 : index
    %c0_34 = arith.constant 0 : index
    %93 = vector.load %arg14[%c0_32, %c0_33, %c0_34] : memref<1x32x64xbf16, #tpu.memory_space<vmem>>, vector<1x32x64xbf16>
    %94 = vector.shape_cast %93 : vector<1x32x64xbf16> to vector<32x64xbf16>
    %cst_35 = arith.constant dense<0.000000e+00> : vector<6x64xf32>
    %95 = tpu.matmul %92, %94, %cst_35 {dimension_numbers = #tpu.dot_dimension_numbers<[1], [0], [0], [1], [0, 0, 1, 1], [], []>} : vector<6x32xbf16>, vector<32x64xbf16>, vector<6x64xf32> -> vector<6x64xf32>
    %c0_36 = arith.constant 0 : index
    %c0_37 = arith.constant 0 : index
    %c0_38 = arith.constant 0 : index
    %96 = vector.load %arg15[%c0_36, %c0_37, %c0_38] : memref<1x1x64xf32, #tpu.memory_space<vmem>>, vector<1x1x64xf32>
    %97 = vector.shape_cast %96 : vector<1x1x64xf32> to vector<1x64xf32>
    %98 = vector.broadcast %97 : vector<1x64xf32> to vector<6x64xf32>
    %99 = arith.addf %95, %98 : vector<6x64xf32>
    %cst_39 = arith.constant 5.000000e-01 : f32
    %100 = vector.broadcast %cst_39 : f32 to vector<6x64xf32>
    %101 = arith.mulf %100, %99 : vector<6x64xf32>
    %cst_40 = arith.constant 4.471500e-02 : f32
    %102 = vector.broadcast %cst_40 : f32 to vector<6x64xf32>
    %103 = arith.mulf %102, %99 : vector<6x64xf32>
    %104 = arith.mulf %103, %99 : vector<6x64xf32>
    %105 = arith.mulf %104, %99 : vector<6x64xf32>
    %106 = arith.addf %99, %105 : vector<6x64xf32>
    %cst_41 = arith.constant 0.797884583 : f32
    %107 = vector.broadcast %cst_41 : f32 to vector<6x64xf32>
    %108 = arith.mulf %107, %106 : vector<6x64xf32>
    %109 = math.tanh %108 : vector<6x64xf32>
    %cst_42 = arith.constant 1.000000e+00 : f32
    %110 = vector.broadcast %cst_42 : f32 to vector<6x64xf32>
    %111 = arith.addf %110, %109 : vector<6x64xf32>
    %112 = arith.mulf %101, %111 : vector<6x64xf32>
    %113 = arith.truncf %112 : vector<6x64xf32> to vector<6x64xbf16>
    %c0_43 = arith.constant 0 : index
    %c0_44 = arith.constant 0 : index
    %c0_45 = arith.constant 0 : index
    %114 = vector.load %arg16[%c0_43, %c0_44, %c0_45] : memref<1x64x32xbf16, #tpu.memory_space<vmem>>, vector<1x64x32xbf16>
    %115 = vector.shape_cast %114 : vector<1x64x32xbf16> to vector<64x32xbf16>
    %cst_46 = arith.constant dense<0.000000e+00> : vector<6x32xf32>
    %116 = tpu.matmul %113, %115, %cst_46 {dimension_numbers = #tpu.dot_dimension_numbers<[1], [0], [0], [1], [0, 0, 1, 1], [], []>} : vector<6x64xbf16>, vector<64x32xbf16>, vector<6x32xf32> -> vector<6x32xf32>
    %c0_47 = arith.constant 0 : index
    %c0_48 = arith.constant 0 : index
    %c0_49 = arith.constant 0 : index
    %117 = vector.load %arg17[%c0_47, %c0_48, %c0_49] : memref<1x1x32xf32, #tpu.memory_space<vmem>>, vector<1x1x32xf32>
    %118 = vector.shape_cast %117 : vector<1x1x32xf32> to vector<1x32xf32>
    %119 = vector.broadcast %118 : vector<1x32xf32> to vector<6x32xf32>
    %120 = arith.addf %116, %119 : vector<6x32xf32>
    %121 = arith.addf %91, %120 : vector<6x32xf32>
    %c0_50 = arith.constant 0 : index
    %c0_51 = arith.constant 0 : index
    %c0_52 = arith.constant 0 : index
    %122 = vector.load %arg18[%c0_50, %c0_51, %c0_52] : memref<1x1x32xf32, #tpu.memory_space<vmem>>, vector<1x1x32xf32>
    %123 = vector.shape_cast %122 : vector<1x1x32xf32> to vector<1x32xf32>
    %c0_53 = arith.constant 0 : index
    %c0_54 = arith.constant 0 : index
    %c0_55 = arith.constant 0 : index
    %124 = vector.load %arg19[%c0_53, %c0_54, %c0_55] : memref<1x1x32xf32, #tpu.memory_space<vmem>>, vector<1x1x32xf32>
    %125 = vector.shape_cast %124 : vector<1x1x32xf32> to vector<1x32xf32>
    %cst_56 = arith.constant dense<0.000000e+00> : vector<6xf32>
    %126 = vector.multi_reduction <add>, %121, %cst_56 [1] : vector<6x32xf32> to vector<6xf32>
    %127 = vector.shape_cast %126 : vector<6xf32> to vector<6x1xf32>
    %cst_57 = arith.constant 3.200000e+01 : f32
    %128 = vector.broadcast %cst_57 : f32 to vector<6x1xf32>
    %129 = arith.divf %127, %128 : vector<6x1xf32>
    %130 = vector.broadcast %129 : vector<6x1xf32> to vector<6x32xf32>
    %131 = arith.subf %121, %130 : vector<6x32xf32>
    %132 = arith.mulf %131, %131 : vector<6x32xf32>
    %cst_58 = arith.constant dense<0.000000e+00> : vector<6xf32>
    %133 = vector.multi_reduction <add>, %132, %cst_58 [1] : vector<6x32xf32> to vector<6xf32>
    %134 = vector.shape_cast %133 : vector<6xf32> to vector<6x1xf32>
    %cst_59 = arith.constant 3.200000e+01 : f32
    %135 = vector.broadcast %cst_59 : f32 to vector<6x1xf32>
    %136 = arith.divf %134, %135 : vector<6x1xf32>
    %137 = vector.broadcast %129 : vector<6x1xf32> to vector<6x32xf32>
    %138 = arith.subf %121, %137 : vector<6x32xf32>
    %cst_60 = arith.constant 9.99999974E-6 : f32
    %139 = vector.broadcast %cst_60 : f32 to vector<6x1xf32>
    %140 = arith.addf %136, %139 : vector<6x1xf32>
    %141 = math.rsqrt %140 : vector<6x1xf32>
    %142 = vector.broadcast %141 : vector<6x1xf32> to vector<6x32xf32>
    %143 = arith.mulf %138, %142 : vector<6x32xf32>
    %144 = vector.broadcast %123 : vector<1x32xf32> to vector<6x32xf32>
    %145 = arith.mulf %143, %144 : vector<6x32xf32>
    %146 = vector.broadcast %125 : vector<1x32xf32> to vector<6x32xf32>
    %147 = arith.addf %145, %146 : vector<6x32xf32>
    %c0_61 = arith.constant 0 : index
    %c0_62 = arith.constant 0 : index
    %148 = vector.load %arg21[%c0_61, %c0_62] : memref<6x32xf32, #tpu.memory_space<vmem>>, vector<6x32xf32>
    tpu.vector_store %arg21[%c0_61, %c0_62], %147 {strides = array<i32>} : memref<6x32xf32, #tpu.memory_space<vmem>>, vector<6x32xf32>,
    %c1_i32 = arith.constant 1 : i32
    %149 = arith.cmpi eq, %arg1, %c1_i32 : i32
    %150 = arith.extui %149 : i1 to i32
    %c0_i32_63 = arith.constant 0 : i32
    %151 = arith.cmpi ne, %150, %c0_i32_63 : i32
    scf.if %151 {
      %cst_64 = arith.constant dense<0.000000e+00> : vector<32xf32>
      %152 = vector.multi_reduction <add>, %147, %cst_64 [0] : vector<6x32xf32> to vector<32xf32>
      %153 = vector.shape_cast %152 : vector<32xf32> to vector<1x32xf32>
      %cst_65 = arith.constant 6.000000e+00 : f32
      %154 = vector.broadcast %cst_65 : f32 to vector<1x32xf32>
      %155 = arith.divf %153, %154 : vector<1x32xf32>
      %c0_66 = arith.constant 0 : index
      %c0_67 = arith.constant 0 : index
      %c0_68 = arith.constant 0 : index
      %156 = vector.load %arg20[%c0_66, %c0_67, %c0_68] : memref<1x1x32xf32, #tpu.memory_space<vmem>>, vector<1x1x32xf32>
      %157 = vector.shape_cast %156 : vector<1x1x32xf32> to vector<1x32xf32>
      %158 = vector.shape_cast %155 : vector<1x32xf32> to vector<1x1x32xf32>
      tpu.vector_store %arg20[%c0_66, %c0_67, %c0_68], %158 {strides = array<i32>} : memref<1x1x32xf32, #tpu.memory_space<vmem>>, vector<1x1x32xf32>,
    } else {
    }
    return
  }
  func.func @transform_0(%arg0: i32, %arg1: i32) -> (i32, i32, i32) {
    %c0_i32 = arith.constant 0 : i32
    %c0_i32_0 = arith.constant 0 : i32
    %c0_i32_1 = arith.constant 0 : i32
    return %arg0, %c0_i32, %c0_i32_0 : i32, i32, i32
  }
  func.func @transform_1(%arg0: i32, %arg1: i32) -> (i32, i32, i32) {
    %c0_i32 = arith.constant 0 : i32
    %c0_i32_0 = arith.constant 0 : i32
    %c0_i32_1 = arith.constant 0 : i32
    return %arg0, %c0_i32, %c0_i32_0 : i32, i32, i32
  }
  func.func @transform_2(%arg0: i32, %arg1: i32) -> (i32, i32) {
    %c0_i32 = arith.constant 0 : i32
    %c0_i32_0 = arith.constant 0 : i32
    %c0_i32_1 = arith.constant 0 : i32
    return %c0_i32, %c0_i32_0 : i32, i32
  }
  func.func @transform_3(%arg0: i32, %arg1: i32) -> (i32, i32) {
    %c0_i32 = arith.constant 0 : i32
    %c0_i32_0 = arith.constant 0 : i32
    %c0_i32_1 = arith.constant 0 : i32
    return %c0_i32, %c0_i32_0 : i32, i32
  }
  func.func @transform_4(%arg0: i32, %arg1: i32) -> (i32, i32) {
    %c0_i32 = arith.constant 0 : i32
    %c0_i32_0 = arith.constant 0 : i32
    %c0_i32_1 = arith.constant 0 : i32
    return %c0_i32, %c0_i32_0 : i32, i32
  }
  func.func @transform_5(%arg0: i32, %arg1: i32) -> (i32, i32) {
    %c0_i32 = arith.constant 0 : i32
    %c0_i32_0 = arith.constant 0 : i32
    %c0_i32_1 = arith.constant 0 : i32
    return %c0_i32, %c0_i32_0 : i32, i32
  }
  func.func @transform_6(%arg0: i32, %arg1: i32) -> (i32, i32, i32) {
    %c0_i32 = arith.constant 0 : i32
    %c0_i32_0 = arith.constant 0 : i32
    %c0_i32_1 = arith.constant 0 : i32
    return %arg1, %c0_i32, %c0_i32_0 : i32, i32, i32
  }
  func.func @transform_7(%arg0: i32, %arg1: i32) -> (i32, i32, i32) {
    %c0_i32 = arith.constant 0 : i32
    %c0_i32_0 = arith.constant 0 : i32
    %c0_i32_1 = arith.constant 0 : i32
    return %arg1, %c0_i32, %c0_i32_0 : i32, i32, i32
  }
  func.func @transform_8(%arg0: i32, %arg1: i32) -> (i32, i32, i32, i32) {
    %c0_i32 = arith.constant 0 : i32
    %c0_i32_0 = arith.constant 0 : i32
    %c0_i32_1 = arith.constant 0 : i32
    %c0_i32_2 = arith.constant 0 : i32
    return %arg1, %c0_i32, %c0_i32_0, %c0_i32_1 : i32, i32, i32, i32
  }
  func.func @transform_9(%arg0: i32, %arg1: i32) -> (i32, i32, i32) {
    %c0_i32 = arith.constant 0 : i32
    %c0_i32_0 = arith.constant 0 : i32
    %c0_i32_1 = arith.constant 0 : i32
    return %arg1, %c0_i32, %c0_i32_0 : i32, i32, i32
  }
  func.func @transform_10(%arg0: i32, %arg1: i32) -> (i32, i32, i32) {
    %c0_i32 = arith.constant 0 : i32
    %c0_i32_0 = arith.constant 0 : i32
    %c0_i32_1 = arith.constant 0 : i32
    return %arg1, %c0_i32, %c0_i32_0 : i32, i32, i32
  }
  func.func @transform_11(%arg0: i32, %arg1: i32) -> (i32, i32, i32) {
    %c0_i32 = arith.constant 0 : i32
    %c0_i32_0 = arith.constant 0 : i32
    %c0_i32_1 = arith.constant 0 : i32
    return %arg1, %c0_i32, %c0_i32_0 : i32, i32, i32
  }
  func.func @transform_12(%arg0: i32, %arg1: i32) -> (i32, i32, i32) {
    %c0_i32 = arith.constant 0 : i32
    %c0_i32_0 = arith.constant 0 : i32
    %c0_i32_1 = arith.constant 0 : i32
    return %arg1, %c0_i32, %c0_i32_0 : i32, i32, i32
  }
  func.func @transform_13(%arg0: i32, %arg1: i32) -> (i32, i32, i32) {
    %c0_i32 = arith.constant 0 : i32
    %c0_i32_0 = arith.constant 0 : i32
    %c0_i32_1 = arith.constant 0 : i32
    return %arg1, %c0_i32, %c0_i32_0 : i32, i32, i32
  }
  func.func @transform_14(%arg0: i32, %arg1: i32) -> (i32, i32, i32) {
    %c0_i32 = arith.constant 0 : i32
    %c0_i32_0 = arith.constant 0 : i32
    %c0_i32_1 = arith.constant 0 : i32
    return %arg1, %c0_i32, %c0_i32_0 : i32, i32, i32
  }
  func.func @transform_15(%arg0: i32, %arg1: i32) -> (i32, i32, i32) {
    %c0_i32 = arith.constant 0 : i32
    %c0_i32_0 = arith.constant 0 : i32
    %c0_i32_1 = arith.constant 0 : i32
    return %arg1, %c0_i32, %c0_i32_0 : i32, i32, i32
  }
  func.func @transform_16(%arg0: i32, %arg1: i32) -> (i32, i32, i32) {
    %c0_i32 = arith.constant 0 : i32
    %c0_i32_0 = arith.constant 0 : i32
    %c0_i32_1 = arith.constant 0 : i32
    return %arg1, %c0_i32, %c0_i32_0 : i32, i32, i32
  }
  func.func @transform_17(%arg0: i32, %arg1: i32) -> (i32, i32, i32) {
    %c0_i32 = arith.constant 0 : i32
    %c0_i32_0 = arith.constant 0 : i32
    %c0_i32_1 = arith.constant 0 : i32
    return %arg1, %c0_i32, %c0_i32_0 : i32, i32, i32
  }
  func.func @transform_18(%arg0: i32, %arg1: i32) -> (i32, i32, i32) {
    %c0_i32 = arith.constant 0 : i32
    %c0_i32_0 = arith.constant 0 : i32
    %c0_i32_1 = arith.constant 0 : i32
    return %arg0, %c0_i32, %c0_i32_0 : i32, i32, i32
  }
}

</mosaic_0001>

<llo_original>
// kernel: wav2vec2_forward.9
$region0: #{wav2vec2_forward.9}
  #allocation0 [shape = 'u32[]', space=smem, size = 0x4, offset = 0x4, fixed_abs, tag = 'smem constant byte address 0x4 - core index']
  #allocation1 [shape = 'u32[144,128]{1,0:T(1,128)}', space=vmem, size = 0x12000, scoped, tag = 'internal scratch']
  %s0 = inlined_call_operand.vmem [shape: f32[2,5,400], index: 0, kind: input, shape index: {}]
  %s1 = inlined_call_operand.vmem [shape: bf16[32,5], index: 1, kind: input, shape index: {}]
  %s2 = inlined_call_operand.vmem [shape: bf16[32,5], index: 2, kind: input, shape index: {}]
  %s3 = inlined_call_operand.vmem [shape: f32[32,1], index: 3, kind: input, shape index: {}]
  %s4 = inlined_call_operand.vmem [shape: f32[32,1], index: 4, kind: input, shape index: {}]
  %s5 = inlined_call_operand.vmem [shape: f32[2,32,399], index: 5, kind: output, shape index: {}]
  %s6 = sld [smem:[#allocation0]]
  $region53: #{wav2vec2_forward.9} parent=0
    _
  %s8 = ssub.s32 1, %s6
  %s9 = scalar_select 0, %s8, %s6
  loop: start=0, step=1, limit=4
  $region2: #{wav2vec2_forward.9} parent=0 // loop_pre_header
    _
  $region3: #{wav2vec2_forward.9} parent=0 // loop_header
    %s11 = sphi 0, %s15
    %p12 = scmp.ge.s32.totalorder %s11, 4
    %s21 = sphi 0, %s23
    %s24 = sphi 0, %s21
    %s25 = sphi 0, %s24
    %s41 = sphi 0, %s25
    %s45 = sphi 0, %s45
    %s47 = sphi 0, %s45
    %s48 = sphi 0, %s47
    %s62 = sphi 0, %s48
    %s66 = sphi 0, %s66
    %s68 = sphi 0, %s66
    %s69 = sphi 0, %s68
    %s83 = sphi 0, %s69
    %s87 = sphi 0, %s87
    %s89 = sphi 0, %s87
    %s90 = sphi 0, %s89
    %s104 = sphi 0, %s90
    %s108 = sphi 0, %s108
    %s110 = sphi 0, %s108
    %s111 = sphi 0, %s110
    %s125 = sphi 0, %s111
    %s131 = sphi 0, %s133
    %s134 = sphi 0, %s131
    %s135 = sphi 0, %s134
    %s151 = sphi 0, %s135
  $region4: #{wav2vec2_forward.9} parent=0 // loop_header_branch
    %14 = sbr.rel (%p12) target = $region8
  $region5: #{wav2vec2_forward.9} parent=0 // loop_body
    %s16 = ssub.s32 %s11, 1
    %s17 = ssub.s32 %s11, 2
    %s18 = sadd.s32 %s11, 1
    %s19 = ssub.s32 %s11, %s18
    %p20 = scmp.eq.s32.totalorder %s19, 0
    %s22 = sadd.s32 %s21, 1
    %s23 = scalar_select %p20, %s21, %s22
    %p26 = pneg %p20
    %p27 = scmp.eq.s32.totalorder %s11, 1
    %p28 = por %p26, %p27
    %p29 = scmp.ne.s32.totalorder %s21, %s24
    %p30 = scmp.eq.s32.totalorder %s11, 0
    %p31 = por %p29, %p30
    %p32 = scmp.ne.s32.totalorder %s21, %s24
    %p33 = scmp.eq.s32.totalorder %s16, 1
    %p34 = por %p32, %p33
    %p35 = scmp.ne.s32.totalorder %s24, %s25
    %p36 = scmp.eq.s32.totalorder %s16, 0
    %p37 = por %p35, %p36
    %p38 = scmp.ne.s32.totalorder %s24, %s25
    %p39 = scmp.eq.s32.totalorder %s17, 1
    %p40 = por %p38, %p39
    %p42 = scmp.ne.s32.totalorder %s25, %s41
    %p43 = scmp.eq.s32.totalorder %s17, 0
    %p44 = por %p42, %p43
    %s46 = sadd.s32 %s45, 1
    %p49 = scmp.eq.s32.totalorder %s11, 1
    %p50 = scmp.ne.s32.totalorder %s45, %s47
    %p51 = scmp.eq.s32.totalorder %s11, 0
    %p52 = por %p50, %p51
    %p53 = scmp.ne.s32.totalorder %s45, %s47
    %p54 = scmp.eq.s32.totalorder %s16, 1
    %p55 = por %p53, %p54
    %p56 = scmp.ne.s32.totalorder %s47, %s48
    %p57 = scmp.eq.s32.totalorder %s16, 0
    %p58 = por %p56, %p57
    %p59 = scmp.ne.s32.totalorder %s47, %s48
    %p60 = scmp.eq.s32.totalorder %s17, 1
    %p61 = por %p59, %p60
    %p63 = scmp.ne.s32.totalorder %s48, %s62
    %p64 = scmp.eq.s32.totalorder %s17, 0
    %p65 = por %p63, %p64
    %s67 = sadd.s32 %s66, 1
    %p70 = scmp.eq.s32.totalorder %s11, 1
    %p71 = scmp.ne.s32.totalorder %s66, %s68
    %p72 = scmp.eq.s32.totalorder %s11, 0
    %p73 = por %p71, %p72
    %p74 = scmp.ne.s32.totalorder %s66, %s68
    %p75 = scmp.eq.s32.totalorder %s16, 1
    %p76 = por %p74, %p75
    %p77 = scmp.ne.s32.totalorder %s68, %s69
    %p78 = scmp.eq.s32.totalorder %s16, 0
    %p79 = por %p77, %p78
    %p80 = scmp.ne.s32.totalorder %s68, %s69
    %p81 = scmp.eq.s32.totalorder %s17, 1
    %p82 = por %p80, %p81
    %p84 = scmp.ne.s32.totalorder %s69, %s83
    %p85 = scmp.eq.s32.totalorder %s17, 0
    %p86 = por %p84, %p85
    %s88 = sadd.s32 %s87, 1
    %p91 = scmp.eq.s32.totalorder %s11, 1
    %p92 = scmp.ne.s32.totalorder %s87, %s89
    %p93 = scmp.eq.s32.totalorder %s11, 0
    %p94 = por %p92, %p93
    %p95 = scmp.ne.s32.totalorder %s87, %s89
    %p96 = scmp.eq.s32.totalorder %s16, 1
    %p97 = por %p95, %p96
    %p98 = scmp.ne.s32.totalorder %s89, %s90
    %p99 = scmp.eq.s32.totalorder %s16, 0
    %p100 = por %p98, %p99
    %p101 = scmp.ne.s32.totalorder %s89, %s90
    %p102 = scmp.eq.s32.totalorder %s17, 1
    %p103 = por %p101, %p102
    %p105 = scmp.ne.s32.totalorder %s90, %s104
    %p106 = scmp.eq.s32.totalorder %s17, 0
    %p107 = por %p105, %p106
    %s109 = sadd.s32 %s108, 1
    %p112 = scmp.eq.s32.totalorder %s11, 1
    %p113 = scmp.ne.s32.totalorder %s108, %s110
    %p114 = scmp.eq.s32.totalorder %s11, 0
    %p115 = por %p113, %p114
    %p116 = scmp.ne.s32.totalorder %s108, %s110
    %p117 = scmp.eq.s32.totalorder %s16, 1
    %p118 = por %p116, %p117
    %p119 = scmp.ne.s32.totalorder %s110, %s111
    %p120 = scmp.eq.s32.totalorder %s16, 0
    %p121 = por %p119, %p120
    %p122 = scmp.ne.s32.totalorder %s110, %s111
    %p123 = scmp.eq.s32.totalorder %s17, 1
    %p124 = por %p122, %p123
    %p126 = scmp.ne.s32.totalorder %s111, %s125
    %p127 = scmp.eq.s32.totalorder %s17, 0
    %p128 = por %p126, %p127
    %s129 = ssub.s32 %s11, %s18
    %p130 = scmp.eq.s32.totalorder %s129, 0
    %s132 = sadd.s32 %s131, 1
    %s133 = scalar_select %p130, %s131, %s132
    %p136 = pneg %p130
    %p137 = scmp.eq.s32.totalorder %s11, 1
    %p138 = por %p136, %p137
    %p139 = scmp.ne.s32.totalorder %s131, %s134
    %p140 = scmp.eq.s32.totalorder %s11, 0
    %p141 = por %p139, %p140
    %p142 = scmp.ne.s32.totalorder %s131, %s134
    %p143 = scmp.eq.s32.totalorder %s16, 1
    %p144 = por %p142, %p143
    %p145 = scmp.ne.s32.totalorder %s134, %s135
    %p146 = scmp.eq.s32.totalorder %s16, 0
    %p147 = por %p145, %p146
    %p148 = scmp.ne.s32.totalorder %s134, %s135
    %p149 = scmp.eq.s32.totalorder %s17, 1
    %p150 = por %p148, %p149
    %p152 = scmp.ne.s32.totalorder %s135, %s151
    %p153 = scmp.eq.s32.totalorder %s17, 0
    %p154 = por %p152, %p153
    %p155 = scmp.le.s32.totalorder 1, %s11
    %p156 = scmp.lt.s32.totalorder %s11, 3
    %p157 = pnand %p155, %p156
    %p158 = pneg %p157
    // Predicated region
    $region9: #{wav2vec2_forward.9} parent=5 // pred_check
      _
    $region10: #{wav2vec2_forward.9} parent=5 // pred_check_branch
      %160 = sbr.rel (%p157) target = $region12
    $region11: #{wav2vec2_forward.9} parent=5 // pred_region
      %s161 = ssub.s32 %s11, 1
      // Predicated region
      $region13: #{wav2vec2_forward.9} parent=11 // pred_check
        %p162 = pneg %p58
      $region14: #{wav2vec2_forward.9} parent=11 // pred_check_branch
        %164 = sbr.rel (%p162) target = $region16
      $region15: #{wav2vec2_forward.9} parent=11 // pred_region
        _
      $region16: #{wav2vec2_forward.9} parent=11 // pred_fallthru
        _
      // Predicated region
      $region17: #{wav2vec2_forward.9} parent=11 // pred_check
        %p165 = pneg %p79
      $region18: #{wav2vec2_forward.9} parent=11 // pred_check_branch
        %167 = sbr.rel (%p165) target = $region20
      $region19: #{wav2vec2_forward.9} parent=11 // pred_region
        _
      $region20: #{wav2vec2_forward.9} parent=11 // pred_fallthru
        _
      // Predicated region
      $region21: #{wav2vec2_forward.9} parent=11 // pred_check
        %p168 = pneg %p100
      $region22: #{wav2vec2_forward.9} parent=11 // pred_check_branch
        %170 = sbr.rel (%p168) target = $region24
      $region23: #{wav2vec2_forward.9} parent=11 // pred_region
        _
      $region24: #{wav2vec2_forward.9} parent=11 // pred_fallthru
        _
      // Predicated region
      $region25: #{wav2vec2_forward.9} parent=11 // pred_check
        %p171 = pneg %p121
      $region26: #{wav2vec2_forward.9} parent=11 // pred_check_branch
        %173 = sbr.rel (%p171) target = $region28
      $region27: #{wav2vec2_forward.9} parent=11 // pred_region
        _
      $region28: #{wav2vec2_forward.9} parent=11 // pred_fallthru
        _
    $region12: #{wav2vec2_forward.9} parent=5 // pred_fallthru
      _
    %p174 = scmp.lt.s32.totalorder %s11, 2
    // Predicated region
    $region29: #{wav2vec2_forward.9} parent=5 // pred_check
      %p175 = pneg %p174
    $region30: #{wav2vec2_forward.9} parent=5 // pred_check_branch
      %177 = sbr.rel (%p175) target = $region32
    $region31: #{wav2vec2_forward.9} parent=5 // pred_region
      // Predicated region
      $region33: #{wav2vec2_forward.9} parent=31 // pred_check
        %p178 = pneg %p31
      $region34: #{wav2vec2_forward.9} parent=31 // pred_check_branch
        %180 = sbr.rel (%p178) target = $region36
      $region35: #{wav2vec2_forward.9} parent=31 // pred_region
        %p181 = scmp.lt.s32.totalorder %s11, 1
        %s182 = scalar_select %p181, %s11, 1
        %s183 = smul.addr %s182, 4
        %s184 = smul.addr %s183, 8
        %s185 = scalar_lea.vmem %s0, %s184
      $region36: #{wav2vec2_forward.9} parent=31 // pred_fallthru
        _
    $region32: #{wav2vec2_forward.9} parent=5 // pred_fallthru
      _
    %p186 = scmp.le.s32.totalorder 1, %s11
    %p187 = scmp.lt.s32.totalorder %s11, 3
    %p188 = pnand %p186, %p187
    %p189 = pneg %p188
    // Predicated region
    $region37: #{wav2vec2_forward.9} parent=5 // pred_check
      _
    $region38: #{wav2vec2_forward.9} parent=5 // pred_check_branch
      %191 = sbr.rel (%p188) target = $region40
    $region39: #{wav2vec2_forward.9} parent=5 // pred_region
      %s192 = ssub.s32 %s11, 1
      %p193 = scmp.lt.s32.totalorder %s16, 1
      %s194 = scalar_select %p193, %s16, 1
      %s195 = smul.addr %s194, 4
      %s196 = smul.addr %s195, 8
      %s197 = scalar_lea.vmem %s0, %s196
      %p198 = pneg %p37
      %p199 = pneg %p34
      %p200 = pneg %p58
      %p201 = pneg %p55
      %p202 = pneg %p79
      %p203 = pneg %p76
      %p204 = pneg %p100
      %p205 = pneg %p97
      %p206 = pneg %p121
      %p207 = pneg %p118
      %p208 = pneg %p147
      %p209 = pneg %p144
      %p210 = scmp.lt.s32.totalorder %s16, 1
      %s211 = scalar_select %p210, %s16, 1
      %s212 = smul.addr %s211, 16
      %s213 = smul.addr %s212, 8
      %s214 = scalar_lea.vmem %s5, %s213
      %p215 = scmp.lt.s32.totalorder %s16, 1
      %s216 = scalar_select %p215, %s16, 1
      %s217 = smul.addr %s216, 4
      %s218 = smul.addr %s217, 8
      %s219 = scalar_lea.vmem %s0, %s218
      %p220 = scmp.lt.s32.totalorder %s16, 1
      %s221 = scalar_select %p220, %s16, 1
      %s222 = smul.addr %s221, 16
      %s223 = smul.addr %s222, 8
      %s224 = scalar_lea.vmem %s5, %s223
      %v226 = vld [vmem:[%s219] sm:$0x1f]
      %v227 = vld [vmem:[%s219 + $0x8] sm:$0x1f]
      %v228 = vld [vmem:[%s219 + $0x10] sm:$0x1f]
      %v229 = vld [vmem:[%s219 + $0x18] sm:$0x1f]
      %vm230 = vcmask 1044480
      %v231 = vsel %vm230, %v226, 0.0
      %v232 = vsel %vm230, %v227, 0.0
      %v233 = vadd.f32 %v231, %v232
      %v234 = vsel %vm230, %v228, 0.0
      %v235 = vadd.f32 %v233, %v234
      %vm236 = vcmask 126976
      %v237 = vsel %vm236, %v229, 0.0
      %v238 = vadd.f32 %v235, %v237
      %239 = vadd.xlane.f32.xlu0 %v238
      %v240 = vpop.xlane.xlu0 %239
      %v241 = vrcp.pop 400.0
      %v242 = vmul.f32 %v240, %v241
      %v243 = vsel %vm230, %v242, 0.0
      %v244 = vrot.slane %v243, 4
      %v245 = vadd.f32 %v243, %v244
      %v246 = vrot.slane %v245, 2
      %v247 = vadd.f32 %v245, %v246
      %v248 = vrot.slane %v247, 1
      %v249 = vadd.f32 %v247, %v248
      %v250 = vrcp.pop 5.0
      %v251 = vmul.f32 %v249, %v250
      %v252 = vsub.f32 %v226, %v251
      %v253 = vsub.f32 %v227, %v251
      %v254 = vsub.f32 %v228, %v251
      %v255 = vsub.f32 %v229, %v251
      %v256 = vmul.f32 %v252, %v252
      %v257 = vmul.f32 %v253, %v253
      %v258 = vmul.f32 %v254, %v254
      %v259 = vmul.f32 %v255, %v255
      %v260 = vsel %vm230, %v256, 0.0
      %v261 = vsel %vm230, %v257, 0.0
      %v262 = vadd.f32 %v260, %v261
      %v263 = vsel %vm230, %v258, 0.0
      %v264 = vadd.f32 %v262, %v263
      %v265 = vsel %vm236, %v259, 0.0
      %v266 = vadd.f32 %v264, %v265
      %267 = vadd.xlane.f32.xlu0 %v266
      %v268 = vpop.xlane.xlu0 %267
      %v269 = vmul.f32 %v268, %v241
      %v270 = vsel %vm230, %v269, 0.0
      %v271 = vrot.slane %v270, 4
      %v272 = vadd.f32 %v270, %v271
      %v273 = vrot.slane %v272, 2
      %v274 = vadd.f32 %v272, %v273
      %v275 = vrot.slane %v274, 1
      %v276 = vadd.f32 %v274, %v275
      %v277 = vmul.f32 %v276, %v250
      %v278 = vadd.f32 %v277, 1e-07
      %v279 = vrsqrt.pop %v278
      %v280 = vmul.f32 %v252, %v279
      %v281 = vmul.f32 %v253, %v279
      %v282 = vmul.f32 %v254, %v279
      %v283 = vmul.f32 %v255, %v279
      %v284 = vpack.c.bf16 %v280, %v280
      %v285 = vpack.c.bf16 %v281, %v281
      %v286 = vpack.c.bf16 %v282, %v282
      %v287 = vpack.c.bf16 %v283, %v283
      %v288 = vld [vmem:[%s1] sm:$0xf]
      %v289 = vld [vmem:[%s1 + $0x4] sm:$0xf]
      %v290 = vld [vmem:[%s1 + $0x8] sm:$0xf]
      %v291 = vld [vmem:[%s1 + $0xc] sm:$0xf]
      %v292 = vld [vmem:[%s2] sm:$0xf]
      %v293 = vld [vmem:[%s2 + $0x4] sm:$0xf]
      %v294 = vld [vmem:[%s2 + $0x8] sm:$0xf]
      %v295 = vld [vmem:[%s2 + $0xc] sm:$0xf]
      %v300 = vunpack.c.l.b16 %v292
      %v301 = vunpack.c.l.b16 %v293
      %v302 = vunpack.c.l.b16 %v294
      %v303 = vunpack.c.l.b16 %v295
      %v304 = vpack.c.b16 %v301, %v300
      %v305 = vpack.c.b16 %v303, %v302
      %310 = vrot.lane.b32.xlu0 %v284, 127
      %v311 = vpop.permute.xlu0 %310
      %312 = vrot.lane.b32.xlu0 %v285, 127
      %v313 = vpop.permute.xlu0 %312
      %314 = vrot.lane.b32.xlu0 %v286, 127
      %v315 = vpop.permute.xlu0 %314
      %316 = vrot.lane.b32.xlu0 %v287, 127
      %v317 = vpop.permute.xlu0 %316
      %vm318 = vcmask 1039360
      %v319 = vsel %vm318, %v311, %v313
      %v320 = vsel %vm318, %v313, %v315
      %v321 = vsel %vm318, %v315, %v317
      %vm322 = vcmask 39936
      %v324 = vsel %vm322, %v304, 0
      %v327 = vsel %vm322, %v305, 0
      %vm329 = vcmask 1041408
      %vm330 = vcmask 1042432
      %v331 = vsel %vm329, 4294967295, 65535
      %v332 = vsel %vm330, %v331, 0
      %v334 = vand.u32 %v319, %v332
      %v337 = vand.u32 %v320, %v332
      %v340 = vand.u32 %v321, %v332
      %v343 = vand.u32 %v317, %v332
      %345 = vmatprep.subr.bf16.mxu0 0
      %346 = vmatpush1.bf16.msra.mxu0 0
      %347 = vmatprep.subr.bf16.mxu0 0
      %348 = vmatpush1.bf16.msra.mxu0 0
      %349 = vmatprep.subr.bf16.mxu0 0
      %350 = vmatpush1.bf16.msra.mxu0 0
      %351 = vmatprep.subr.bf16.mxu0 0
      %352 = vmatpush1.bf16.msra.mxu0 0
      %353 = vmatprep.subr.bf16.mxu0 0
      %354 = vmatpush1.bf16.msra.mxu0 0
      %355 = vmatprep.subr.bf16.mxu0 0
      %356 = vmatpush1.bf16.msra.mxu0 0
      %357 = vmatprep.subr.bf16.mxu0 0
      %358 = vmatpush1.bf16.msra.mxu0 0
      %359 = vmatprep.subr.bf16.mxu0 %v337
      %360 = vmatpush1.bf16.msra.mxu0 %v334
      %361 = vmatprep.subr.bf16.mxu0 0
      %362 = vmatpush2.bf16.msra.mxu0 0
      %363 = vmatprep.subr.bf16.mxu0 0
      %364 = vmatpush2.bf16.msra.mxu0 0
      %365 = vmatprep.subr.bf16.mxu0 0
      %366 = vmatpush2.bf16.msra.mxu0 0
      %367 = vmatprep.subr.bf16.mxu0 0
      %368 = vmatpush2.bf16.msra.mxu0 0
      %369 = vmatprep.subr.bf16.mxu0 0
      %370 = vmatpush2.bf16.msra.mxu0 0
      %371 = vmatprep.subr.bf16.mxu0 0
      %372 = vmatpush2.bf16.msra.mxu0 0
      %373 = vmatprep.subr.bf16.mxu0 0
      %374 = vmatpush2.bf16.msra.mxu0 0
      %375 = vmatprep.subr.bf16.mxu0 0
      %376 = vmatpush2.bf16.msra.mxu0 0
      %377 = vmatprep.mubr.bf16.mxu0 0
      %378 = vmatmul.mubr.bf16.gmra.mxu0 %v324
      %v379 = vpop.f32.mrf.mxu0
      %v380 = vadd.f32 0.0, %v379
      %v381 = vpop.f32.mrf.mxu0
      %v382 = vadd.f32 0.0, %v381
      %v383 = vpop.f32.mrf.mxu0
      %v384 = vadd.f32 0.0, %v383
      %v385 = vpop.f32.mrf.mxu0
      %v386 = vadd.f32 0.0, %v385
      %387 = vmatprep.mubr.bf16.mxu0 0
      %388 = vmatmul.mubr.bf16.gmra.mxu0 %v327
      %v389 = vpop.f32.mrf.mxu0
      %v390 = vadd.f32 0.0, %v389
      %v391 = vpop.f32.mrf.mxu0
      %v392 = vadd.f32 0.0, %v391
      %v393 = vpop.f32.mrf.mxu0
      %v394 = vadd.f32 0.0, %v393
      %v395 = vpop.f32.mrf.mxu0
      %v396 = vadd.f32 0.0, %v395
      %397 = vdwg.mxu0
      %398 = vmatprep.subr.bf16.mxu0 0
      %399 = vmatpush1.bf16.msra.mxu0 0
      %400 = vmatprep.subr.bf16.mxu0 0
      %401 = vmatpush1.bf16.msra.mxu0 0
      %402 = vmatprep.subr.bf16.mxu0 0
      %403 = vmatpush1.bf16.msra.mxu0 0
      %404 = vmatprep.subr.bf16.mxu0 0
      %405 = vmatpush1.bf16.msra.mxu0 0
      %406 = vmatprep.subr.bf16.mxu0 0
      %407 = vmatpush1.bf16.msra.mxu0 0
      %408 = vmatprep.subr.bf16.mxu0 0
      %409 = vmatpush1.bf16.msra.mxu0 0
      %410 = vmatprep.subr.bf16.mxu0 0
      %411 = vmatpush1.bf16.msra.mxu0 0
      %412 = vmatprep.subr.bf16.mxu0 %v343
      %413 = vmatpush1.bf16.msra.mxu0 %v340
      %414 = vmatprep.subr.bf16.mxu0 0
      %415 = vmatpush2.bf16.msra.mxu0 0
      %416 = vmatprep.subr.bf16.mxu0 0
      %417 = vmatpush2.bf16.msra.mxu0 0
      %418 = vmatprep.subr.bf16.mxu0 0
      %419 = vmatpush2.bf16.msra.mxu0 0
      %420 = vmatprep.subr.bf16.mxu0 0
      %421 = vmatpush2.bf16.msra.mxu0 0
      %422 = vmatprep.subr.bf16.mxu0 0
      %423 = vmatpush2.bf16.msra.mxu0 0
      %424 = vmatprep.subr.bf16.mxu0 0
      %425 = vmatpush2.bf16.msra.mxu0 0
      %426 = vmatprep.subr.bf16.mxu0 0
      %427 = vmatpush2.bf16.msra.mxu0 0
      %428 = vmatprep.subr.bf16.mxu0 0
      %429 = vmatpush2.bf16.msra.mxu0 0
      %430 = vmatprep.mubr.bf16.mxu0 0
      %431 = vmatmul.mubr.bf16.gmra.mxu0 %v324
      %v432 = vpop.f32.mrf.mxu0
      %v433 = vadd.f32 0.0, %v432
      %v434 = vpop.f32.mrf.mxu0
      %v435 = vadd.f32 0.0, %v434
      %v436 = vpop.f32.mrf.mxu0
      %v437 = vadd.f32 0.0, %v436
      %v438 = vpop.f32.mrf.mxu0
      %v439 = vadd.f32 0.0, %v438
      %440 = vmatprep.mubr.bf16.mxu0 0
      %441 = vmatmul.mubr.bf16.gmra.mxu0 %v327
      %v442 = vpop.f32.mrf.mxu0
      %v443 = vadd.f32 0.0, %v442
      %v444 = vpop.f32.mrf.mxu0
      %v445 = vadd.f32 0.0, %v444
      %v446 = vpop.f32.mrf.mxu0
      %v447 = vadd.f32 0.0, %v446
      %v448 = vpop.f32.mrf.mxu0
      %v449 = vadd.f32 0.0, %v448
      %450 = vdwg.mxu0
      %v455 = vunpack.c.l.b16 %v288
      %v456 = vunpack.c.l.b16 %v289
      %v457 = vunpack.c.l.b16 %v290
      %v458 = vunpack.c.l.b16 %v291
      %v459 = vpack.c.b16 %v456, %v455
      %v460 = vpack.c.b16 %v458, %v457
      %v462 = vsel %vm322, %v459, 0
      %v465 = vsel %vm322, %v460, 0
      %v468 = vand.u32 %v284, %v332
      %v471 = vand.u32 %v285, %v332
      %v474 = vand.u32 %v286, %v332
      %v477 = vand.u32 %v287, %v332
      %479 = vmatprep.subr.bf16.mxu0 0
      %480 = vmatpush1.bf16.msra.mxu0 0
      %481 = vmatprep.subr.bf16.mxu0 0
      %482 = vmatpush1.bf16.msra.mxu0 0
      %483 = vmatprep.subr.bf16.mxu0 0
      %484 = vmatpush1.bf16.msra.mxu0 0
      %485 = vmatprep.subr.bf16.mxu0 0
      %486 = vmatpush1.bf16.msra.mxu0 0
      %487 = vmatprep.subr.bf16.mxu0 0
      %488 = vmatpush1.bf16.msra.mxu0 0
      %489 = vmatprep.subr.bf16.mxu0 0
      %490 = vmatpush1.bf16.msra.mxu0 0
      %491 = vmatprep.subr.bf16.mxu0 0
      %492 = vmatpush1.bf16.msra.mxu0 0
      %493 = vmatprep.subr.bf16.mxu0 %v471
      %494 = vmatpush1.bf16.msra.mxu0 %v468
      %495 = vmatprep.subr.bf16.mxu0 0
      %496 = vmatpush2.bf16.msra.mxu0 0
      %497 = vmatprep.subr.bf16.mxu0 0
      %498 = vmatpush2.bf16.msra.mxu0 0
      %499 = vmatprep.subr.bf16.mxu0 0
      %500 = vmatpush2.bf16.msra.mxu0 0
      %501 = vmatprep.subr.bf16.mxu0 0
      %502 = vmatpush2.bf16.msra.mxu0 0
      %503 = vmatprep.subr.bf16.mxu0 0
      %504 = vmatpush2.bf16.msra.mxu0 0
      %505 = vmatprep.subr.bf16.mxu0 0
      %506 = vmatpush2.bf16.msra.mxu0 0
      %507 = vmatprep.subr.bf16.mxu0 0
      %508 = vmatpush2.bf16.msra.mxu0 0
      %509 = vmatprep.subr.bf16.mxu0 0
      %510 = vmatpush2.bf16.msra.mxu0 0
      %511 = vmatprep.mubr.bf16.mxu0 0
      %512 = vmatmul.mubr.bf16.gmra.mxu0 %v462
      %v513 = vpop.f32.mrf.mxu0
      %v514 = vadd.f32 %v380, %v513
      %v515 = vpop.f32.mrf.mxu0
      %v516 = vadd.f32 %v382, %v515
      %v517 = vpop.f32.mrf.mxu0
      %v518 = vadd.f32 %v384, %v517
      %v519 = vpop.f32.mrf.mxu0
      %v520 = vadd.f32 %v386, %v519
      %521 = vmatprep.mubr.bf16.mxu0 0
      %522 = vmatmul.mubr.bf16.gmra.mxu0 %v465
      %v523 = vpop.f32.mrf.mxu0
      %v524 = vadd.f32 %v390, %v523
      %v525 = vpop.f32.mrf.mxu0
      %v526 = vadd.f32 %v392, %v525
      %v527 = vpop.f32.mrf.mxu0
      %v528 = vadd.f32 %v394, %v527
      %v529 = vpop.f32.mrf.mxu0
      %v530 = vadd.f32 %v396, %v529
      %531 = vdwg.mxu0
      %532 = vmatprep.subr.bf16.mxu0 0
      %533 = vmatpush1.bf16.msra.mxu0 0
      %534 = vmatprep.subr.bf16.mxu0 0
      %535 = vmatpush1.bf16.msra.mxu0 0
      %536 = vmatprep.subr.bf16.mxu0 0
      %537 = vmatpush1.bf16.msra.mxu0 0
      %538 = vmatprep.subr.bf16.mxu0 0
      %539 = vmatpush1.bf16.msra.mxu0 0
      %540 = vmatprep.subr.bf16.mxu0 0
      %541 = vmatpush1.bf16.msra.mxu0 0
      %542 = vmatprep.subr.bf16.mxu0 0
      %543 = vmatpush1.bf16.msra.mxu0 0
      %544 = vmatprep.subr.bf16.mxu0 0
      %545 = vmatpush1.bf16.msra.mxu0 0
      %546 = vmatprep.subr.bf16.mxu0 %v477
      %547 = vmatpush1.bf16.msra.mxu0 %v474
      %548 = vmatprep.subr.bf16.mxu0 0
      %549 = vmatpush2.bf16.msra.mxu0 0
      %550 = vmatprep.subr.bf16.mxu0 0
      %551 = vmatpush2.bf16.msra.mxu0 0
      %552 = vmatprep.subr.bf16.mxu0 0
      %553 = vmatpush2.bf16.msra.mxu0 0
      %554 = vmatprep.subr.bf16.mxu0 0
      %555 = vmatpush2.bf16.msra.mxu0 0
      %556 = vmatprep.subr.bf16.mxu0 0
      %557 = vmatpush2.bf16.msra.mxu0 0
      %558 = vmatprep.subr.bf16.mxu0 0
      %559 = vmatpush2.bf16.msra.mxu0 0
      %560 = vmatprep.subr.bf16.mxu0 0
      %561 = vmatpush2.bf16.msra.mxu0 0
      %562 = vmatprep.subr.bf16.mxu0 0
      %563 = vmatpush2.bf16.msra.mxu0 0
      %564 = vmatprep.mubr.bf16.mxu0 0
      %565 = vmatmul.mubr.bf16.gmra.mxu0 %v462
      %v566 = vpop.f32.mrf.mxu0
      %v567 = vadd.f32 %v433, %v566
      %v568 = vpop.f32.mrf.mxu0
      %v569 = vadd.f32 %v435, %v568
      %v570 = vpop.f32.mrf.mxu0
      %v571 = vadd.f32 %v437, %v570
      %v572 = vpop.f32.mrf.mxu0
      %v573 = vadd.f32 %v439, %v572
      %574 = vmatprep.mubr.bf16.mxu0 0
      %575 = vmatmul.mubr.bf16.gmra.mxu0 %v465
      %v576 = vpop.f32.mrf.mxu0
      %v577 = vadd.f32 %v443, %v576
      %v578 = vpop.f32.mrf.mxu0
      %v579 = vadd.f32 %v445, %v578
      %v580 = vpop.f32.mrf.mxu0
      %v581 = vadd.f32 %v447, %v580
      %v582 = vpop.f32.mrf.mxu0
      %v583 = vadd.f32 %v449, %v582
      %584 = vdwg.mxu0
      %v585 = vadd.f32 %v514, %v516
      %v586 = vadd.f32 %v585, %v567
      %vm587 = vcmask 121856
      %v588 = vsel %vm587, %v569, 0.0
      %v589 = vadd.f32 %v586, %v588
      %590 = vadd.xlane.f32.xlu0 %v589
      %v591 = vpop.xlane.xlu0 %590
      %v592 = vadd.f32 %v518, %v520
      %v593 = vadd.f32 %v592, %v571
      %v594 = vsel %vm587, %v573, 0.0
      %v595 = vadd.f32 %v593, %v594
      %596 = vadd.xlane.f32.xlu0 %v595
      %v597 = vpop.xlane.xlu0 %596
      %v598 = vadd.f32 %v524, %v526
      %v599 = vadd.f32 %v598, %v577
      %v600 = vsel %vm587, %v579, 0.0
      %v601 = vadd.f32 %v599, %v600
      %602 = vadd.xlane.f32.xlu0 %v601
      %v603 = vpop.xlane.xlu0 %602
      %v604 = vadd.f32 %v528, %v530
      %v605 = vadd.f32 %v604, %v581
      %v606 = vsel %vm587, %v583, 0.0
      %v607 = vadd.f32 %v605, %v606
      %608 = vadd.xlane.f32.xlu0 %v607
      %v609 = vpop.xlane.xlu0 %608
      %v610 = vrcp.pop 399.0
      %v611 = vmul.f32 %v591, %v610
      %v612 = vmul.f32 %v597, %v610
      %v613 = vmul.f32 %v603, %v610
      %v614 = vmul.f32 %v609, %v610
      %v615 = vsub.f32 %v514, %v611
      %v616 = vsub.f32 %v516, %v611
      %v617 = vsub.f32 %v567, %v611
      %v618 = vsub.f32 %v569, %v611
      %v619 = vsub.f32 %v518, %v612
      %v620 = vsub.f32 %v520, %v612
      %v621 = vsub.f32 %v571, %v612
      %v622 = vsub.f32 %v573, %v612
      %v623 = vsub.f32 %v524, %v613
      %v624 = vsub.f32 %v526, %v613
      %v625 = vsub.f32 %v577, %v613
      %v626 = vsub.f32 %v579, %v613
      %v627 = vsub.f32 %v528, %v614
      %v628 = vsub.f32 %v530, %v614
      %v629 = vsub.f32 %v581, %v614
      %v630 = vsub.f32 %v583, %v614
      %v631 = vmul.f32 %v615, %v615
      %v632 = vmul.f32 %v616, %v616
      %v633 = vmul.f32 %v617, %v617
      %v634 = vmul.f32 %v618, %v618
      %v635 = vmul.f32 %v619, %v619
      %v636 = vmul.f32 %v620, %v620
      %v637 = vmul.f32 %v621, %v621
      %v638 = vmul.f32 %v622, %v622
      %v639 = vmul.f32 %v623, %v623
      %v640 = vmul.f32 %v624, %v624
      %v641 = vmul.f32 %v625, %v625
      %v642 = vmul.f32 %v626, %v626
      %v643 = vmul.f32 %v627, %v627
      %v644 = vmul.f32 %v628, %v628
      %v645 = vmul.f32 %v629, %v629
      %v646 = vmul.f32 %v630, %v630
      %v647 = vadd.f32 %v631, %v632
      %v648 = vadd.f32 %v647, %v633
      %v649 = vsel %vm587, %v634, 0.0
      %v650 = vadd.f32 %v648, %v649
      %651 = vadd.xlane.f32.xlu0 %v650
      %v652 = vpop.xlane.xlu0 %651
      %v653 = vadd.f32 %v635, %v636
      %v654 = vadd.f32 %v653, %v637
      %v655 = vsel %vm587, %v638, 0.0
      %v656 = vadd.f32 %v654, %v655
      %657 = vadd.xlane.f32.xlu0 %v656
      %v658 = vpop.xlane.xlu0 %657
      %v659 = vadd.f32 %v639, %v640
      %v660 = vadd.f32 %v659, %v641
      %v661 = vsel %vm587, %v642, 0.0
      %v662 = vadd.f32 %v660, %v661
      %663 = vadd.xlane.f32.xlu0 %v662
      %v664 = vpop.xlane.xlu0 %663
      %v665 = vadd.f32 %v643, %v644
      %v666 = vadd.f32 %v665, %v645
      %v667 = vsel %vm587, %v646, 0.0
      %v668 = vadd.f32 %v666, %v667
      %669 = vadd.xlane.f32.xlu0 %v668
      %v670 = vpop.xlane.xlu0 %669
      %v671 = vmul.f32 %v652, %v610
      %v672 = vmul.f32 %v658, %v610
      %v673 = vmul.f32 %v664, %v610
      %v674 = vmul.f32 %v670, %v610
      %v675 = vadd.f32 %v671, 1e-05
      %v676 = vadd.f32 %v672, 1e-05
      %v677 = vadd.f32 %v673, 1e-05
      %v678 = vadd.f32 %v674, 1e-05
      %v679 = vrsqrt.pop %v675
      %v680 = vrsqrt.pop %v676
      %v681 = vrsqrt.pop %v677
      %v682 = vrsqrt.pop %v678
      %v683 = vmul.f32 %v615, %v679
      %v684 = vmul.f32 %v616, %v679
      %v685 = vmul.f32 %v617, %v679
      %v686 = vmul.f32 %v618, %v679
      %v687 = vmul.f32 %v619, %v680
      %v688 = vmul.f32 %v620, %v680
      %v689 = vmul.f32 %v621, %v680
      %v690 = vmul.f32 %v622, %v680
      %v691 = vmul.f32 %v623, %v681
      %v692 = vmul.f32 %v624, %v681
      %v693 = vmul.f32 %v625, %v681
      %v694 = vmul.f32 %v626, %v681
      %v695 = vmul.f32 %v627, %v682
      %v696 = vmul.f32 %v628, %v682
      %v697 = vmul.f32 %v629, %v682
      %v698 = vmul.f32 %v630, %v682
      %v699 = vld [vmem:[%s3] sm:$0xff]
      %v700 = vld [vmem:[%s3 + $0x8] sm:$0xff]
      %v701 = vld [vmem:[%s3 + $0x10] sm:$0xff]
      %v702 = vld [vmem:[%s3 + $0x18] sm:$0xff]
      %704 = vset.pattern.permute.xlu0 0
      %705 = vperm.xlu0 %704, %v699
      %v706 = vpop.permute.xlu0 %705
      %709 = vset.pattern.permute.xlu0 0
      %710 = vperm.xlu0 %709, %v700
      %v711 = vpop.permute.xlu0 %710
      %714 = vset.pattern.permute.xlu0 0
      %715 = vperm.xlu0 %714, %v701
      %v716 = vpop.permute.xlu0 %715
      %719 = vset.pattern.permute.xlu0 0
      %720 = vperm.xlu0 %719, %v702
      %v721 = vpop.permute.xlu0 %720
      %v723 = vmul.f32 %v683, %v706
      %v724 = vmul.f32 %v684, %v706
      %v725 = vmul.f32 %v685, %v706
      %v726 = vmul.f32 %v686, %v706
      %v727 = vmul.f32 %v687, %v711
      %v728 = vmul.f32 %v688, %v711
      %v729 = vmul.f32 %v689, %v711
      %v730 = vmul.f32 %v690, %v711
      %v731 = vmul.f32 %v691, %v716
      %v732 = vmul.f32 %v692, %v716
      %v733 = vmul.f32 %v693, %v716
      %v734 = vmul.f32 %v694, %v716
      %v735 = vmul.f32 %v695, %v721
      %v736 = vmul.f32 %v696, %v721
      %v737 = vmul.f32 %v697, %v721
      %v738 = vmul.f32 %v698, %v721
      %v739 = vld [vmem:[%s4] sm:$0xff]
      %v740 = vld [vmem:[%s4 + $0x8] sm:$0xff]
      %v741 = vld [vmem:[%s4 + $0x10] sm:$0xff]
      %v742 = vld [vmem:[%s4 + $0x18] sm:$0xff]
      %744 = vset.pattern.permute.xlu0 0
      %745 = vperm.xlu0 %744, %v739
      %v746 = vpop.permute.xlu0 %745
      %749 = vset.pattern.permute.xlu0 0
      %750 = vperm.xlu0 %749, %v740
      %v751 = vpop.permute.xlu0 %750
      %754 = vset.pattern.permute.xlu0 0
      %755 = vperm.xlu0 %754, %v741
      %v756 = vpop.permute.xlu0 %755
      %759 = vset.pattern.permute.xlu0 0
      %760 = vperm.xlu0 %759, %v742
      %v761 = vpop.permute.xlu0 %760
      %v763 = vadd.f32 %v723, %v746
      %v764 = vadd.f32 %v724, %v746
      %v765 = vadd.f32 %v725, %v746
      %v766 = vadd.f32 %v726, %v746
      %v767 = vadd.f32 %v727, %v751
      %v768 = vadd.f32 %v728, %v751
      %v769 = vadd.f32 %v729, %v751
      %v770 = vadd.f32 %v730, %v751
      %v771 = vadd.f32 %v731, %v756
      %v772 = vadd.f32 %v732, %v756
      %v773 = vadd.f32 %v733, %v756
      %v774 = vadd.f32 %v734, %v756
      %v775 = vadd.f32 %v735, %v761
      %v776 = vadd.f32 %v736, %v761
      %v777 = vadd.f32 %v737, %v761
      %v778 = vadd.f32 %v738, %v761
      %v779 = vmul.f32 %v763, 0.5
      %v780 = vmul.f32 %v764, 0.5
      %v781 = vmul.f32 %v765, 0.5
      %v782 = vmul.f32 %v766, 0.5
      %v783 = vmul.f32 %v767, 0.5
      %v784 = vmul.f32 %v768, 0.5
      %v785 = vmul.f32 %v769, 0.5
      %v786 = vmul.f32 %v770, 0.5
      %v787 = vmul.f32 %v771, 0.5
      %v788 = vmul.f32 %v772, 0.5
      %v789 = vmul.f32 %v773, 0.5
      %v790 = vmul.f32 %v774, 0.5
      %v791 = vmul.f32 %v775, 0.5
      %v792 = vmul.f32 %v776, 0.5
      %v793 = vmul.f32 %v777, 0.5
      %v794 = vmul.f32 %v778, 0.5
      %v795 = vmul.f32 %v763, 0.044715
      %v796 = vmul.f32 %v764, 0.044715
      %v797 = vmul.f32 %v765, 0.044715
      %v798 = vmul.f32 %v766, 0.044715
      %v799 = vmul.f32 %v767, 0.044715
      %v800 = vmul.f32 %v768, 0.044715
      %v801 = vmul.f32 %v769, 0.044715
      %v802 = vmul.f32 %v770, 0.044715
      %v803 = vmul.f32 %v771, 0.044715
      %v804 = vmul.f32 %v772, 0.044715
      %v805 = vmul.f32 %v773, 0.044715
      %v806 = vmul.f32 %v774, 0.044715
      %v807 = vmul.f32 %v775, 0.044715
      %v808 = vmul.f32 %v776, 0.044715
      %v809 = vmul.f32 %v777, 0.044715
      %v810 = vmul.f32 %v778, 0.044715
      %v811 = vmul.f32 %v795, %v763
      %v812 = vmul.f32 %v796, %v764
      %v813 = vmul.f32 %v797, %v765
      %v814 = vmul.f32 %v798, %v766
      %v815 = vmul.f32 %v799, %v767
      %v816 = vmul.f32 %v800, %v768
      %v817 = vmul.f32 %v801, %v769
      %v818 = vmul.f32 %v802, %v770
      %v819 = vmul.f32 %v803, %v771
      %v820 = vmul.f32 %v804, %v772
      %v821 = vmul.f32 %v805, %v773
      %v822 = vmul.f32 %v806, %v774
      %v823 = vmul.f32 %v807, %v775
      %v824 = vmul.f32 %v808, %v776
      %v825 = vmul.f32 %v809, %v777
      %v826 = vmul.f32 %v810, %v778
      %v827 = vmul.f32 %v811, %v763
      %v828 = vmul.f32 %v812, %v764
      %v829 = vmul.f32 %v813, %v765
      %v830 = vmul.f32 %v814, %v766
      %v831 = vmul.f32 %v815, %v767
      %v832 = vmul.f32 %v816, %v768
      %v833 = vmul.f32 %v817, %v769
      %v834 = vmul.f32 %v818, %v770
      %v835 = vmul.f32 %v819, %v771
      %v836 = vmul.f32 %v820, %v772
      %v837 = vmul.f32 %v821, %v773
      %v838 = vmul.f32 %v822, %v774
      %v839 = vmul.f32 %v823, %v775
      %v840 = vmul.f32 %v824, %v776
      %v841 = vmul.f32 %v825, %v777
      %v842 = vmul.f32 %v826, %v778
      %v843 = vadd.f32 %v763, %v827
      %v844 = vadd.f32 %v764, %v828
      %v845 = vadd.f32 %v765, %v829
      %v846 = vadd.f32 %v766, %v830
      %v847 = vadd.f32 %v767, %v831
      %v848 = vadd.f32 %v768, %v832
      %v849 = vadd.f32 %v769, %v833
      %v850 = vadd.f32 %v770, %v834
      %v851 = vadd.f32 %v771, %v835
      %v852 = vadd.f32 %v772, %v836
      %v853 = vadd.f32 %v773, %v837
      %v854 = vadd.f32 %v774, %v838
      %v855 = vadd.f32 %v775, %v839
      %v856 = vadd.f32 %v776, %v840
      %v857 = vadd.f32 %v777, %v841
      %v858 = vadd.f32 %v778, %v842
      %v859 = vmul.f32 %v843, 0.7978846
      %v860 = vmul.f32 %v844, 0.7978846
      %v861 = vmul.f32 %v845, 0.7978846
      %v862 = vmul.f32 %v846, 0.7978846
      %v863 = vmul.f32 %v847, 0.7978846
      %v864 = vmul.f32 %v848, 0.7978846
      %v865 = vmul.f32 %v849, 0.7978846
      %v866 = vmul.f32 %v850, 0.7978846
      %v867 = vmul.f32 %v851, 0.7978846
      %v868 = vmul.f32 %v852, 0.7978846
      %v869 = vmul.f32 %v853, 0.7978846
      %v870 = vmul.f32 %v854, 0.7978846
      %v871 = vmul.f32 %v855, 0.7978846
      %v872 = vmul.f32 %v856, 0.7978846
      %v873 = vmul.f32 %v857, 0.7978846
      %v874 = vmul.f32 %v858, 0.7978846
      %v875 = vtanh.pop %v859
      %v876 = vtanh.pop %v860
      %v877 = vtanh.pop %v861
      %v878 = vtanh.pop %v862
      %v879 = vtanh.pop %v863
      %v880 = vtanh.pop %v864
      %v881 = vtanh.pop %v865
      %v882 = vtanh.pop %v866
      %v883 = vtanh.pop %v867
      %v884 = vtanh.pop %v868
      %v885 = vtanh.pop %v869
      %v886 = vtanh.pop %v870
      %v887 = vtanh.pop %v871
      %v888 = vtanh.pop %v872
      %v889 = vtanh.pop %v873
      %v890 = vtanh.pop %v874
      %v891 = vadd.f32 %v875, 1.0
      %v892 = vadd.f32 %v876, 1.0
      %v893 = vadd.f32 %v877, 1.0
      %v894 = vadd.f32 %v878, 1.0
      %v895 = vadd.f32 %v879, 1.0
      %v896 = vadd.f32 %v880, 1.0
      %v897 = vadd.f32 %v881, 1.0
      %v898 = vadd.f32 %v882, 1.0
      %v899 = vadd.f32 %v883, 1.0
      %v900 = vadd.f32 %v884, 1.0
      %v901 = vadd.f32 %v885, 1.0
      %v902 = vadd.f32 %v886, 1.0
      %v903 = vadd.f32 %v887, 1.0
      %v904 = vadd.f32 %v888, 1.0
      %v905 = vadd.f32 %v889, 1.0
      %v906 = vadd.f32 %v890, 1.0
      %v907 = vmul.f32 %v779, %v891
      %v908 = vmul.f32 %v780, %v892
      %v909 = vmul.f32 %v781, %v893
      %v910 = vmul.f32 %v782, %v894
      %v911 = vmul.f32 %v783, %v895
      %v912 = vmul.f32 %v784, %v896
      %v913 = vmul.f32 %v785, %v897
      %v914 = vmul.f32 %v786, %v898
      %v915 = vmul.f32 %v787, %v899
      %v916 = vmul.f32 %v788, %v900
      %v917 = vmul.f32 %v789, %v901
      %v918 = vmul.f32 %v790, %v902
      %v919 = vmul.f32 %v791, %v903
      %v920 = vmul.f32 %v792, %v904
      %v921 = vmul.f32 %v793, %v905
      %v922 = vmul.f32 %v794, %v906
      %923 = vst [vmem:[%s224] sm:$0xff] %v907
      %924 = vst [vmem:[%s224 + $0x8] sm:$0xff] %v908
      %925 = vst [vmem:[%s224 + $0x10] sm:$0xff] %v909
      %926 = vst.msk [vmem:[%s224 + $0x18] sm:$0xff] %vm587, %v910
      %927 = vst [vmem:[%s224 + $0x20] sm:$0xff] %v911
      %928 = vst [vmem:[%s224 + $0x28] sm:$0xff] %v912
      %929 = vst [vmem:[%s224 + $0x30] sm:$0xff] %v913
      %930 = vst.msk [vmem:[%s224 + $0x38] sm:$0xff] %vm587, %v914
      %931 = vst [vmem:[%s224 + $0x40] sm:$0xff] %v915
      %932 = vst [vmem:[%s224 + $0x48] sm:$0xff] %v916
      %933 = vst [vmem:[%s224 + $0x50] sm:$0xff] %v917
      %934 = vst.msk [vmem:[%s224 + $0x58] sm:$0xff] %vm587, %v918
      %935 = vst [vmem:[%s224 + $0x60] sm:$0xff] %v919
      %936 = vst [vmem:[%s224 + $0x68] sm:$0xff] %v920
      %937 = vst [vmem:[%s224 + $0x70] sm:$0xff] %v921
      %938 = vst.msk [vmem:[%s224 + $0x78] sm:$0xff] %vm587, %v922
      %p939 = scmp.lt.s32.totalorder %s16, 1
      %s940 = scalar_select %p939, %s16, 1
      %s941 = smul.addr %s940, 16
      %s942 = smul.addr %s941, 8
      %s943 = scalar_lea.vmem %s5, %s942
      // Predicated region
      $region41: #{wav2vec2_forward.9} parent=39 // pred_check
        %p944 = pneg %p144
      $region42: #{wav2vec2_forward.9} parent=39 // pred_check_branch
        %946 = sbr.rel (%p944) target = $region44
      $region43: #{wav2vec2_forward.9} parent=39 // pred_region
        _
      $region44: #{wav2vec2_forward.9} parent=39 // pred_fallthru
        _
    $region40: #{wav2vec2_forward.9} parent=5 // pred_fallthru
      _
    %p947 = scmp.le.s32.totalorder 2, %s11
    // Predicated region
    $region45: #{wav2vec2_forward.9} parent=5 // pred_check
      %p948 = pneg %p947
    $region46: #{wav2vec2_forward.9} parent=5 // pred_check_branch
      %950 = sbr.rel (%p948) target = $region48
    $region47: #{wav2vec2_forward.9} parent=5 // pred_region
      %s951 = ssub.s32 %s11, 2
      // Predicated region
      $region49: #{wav2vec2_forward.9} parent=47 // pred_check
        %p952 = pneg %p150
      $region50: #{wav2vec2_forward.9} parent=47 // pred_check_branch
        %954 = sbr.rel (%p952) target = $region52
      $region51: #{wav2vec2_forward.9} parent=47 // pred_region
        %p955 = scmp.lt.s32.totalorder %s17, 1
        %s956 = scalar_select %p955, %s17, 1
        %s957 = smul.addr %s956, 16
        %s958 = smul.addr %s957, 8
        %s959 = scalar_lea.vmem %s5, %s958
      $region52: #{wav2vec2_forward.9} parent=47 // pred_fallthru
        _
    $region48: #{wav2vec2_forward.9} parent=5 // pred_fallthru
      _
  $region6: #{wav2vec2_forward.9} parent=0 // loop_footer
    %s15 = sadd.s32 1, %s11
  $region7: #{wav2vec2_forward.9} parent=0 // loop_footer_branch
    %10 = sbr.rel target = $region3
  $region8: #{wav2vec2_forward.9} parent=0 // loop_exit
    _

// kernel: wav2vec2_forward.10
$region0: #{wav2vec2_forward.10}
  #allocation0 [shape = 'u32[]', space=smem, size = 0x4, offset = 0x4, fixed_abs, tag = 'smem constant byte address 0x4 - core index']
  #allocation1 [shape = 'u32[144,128]{1,0:T(1,128)}', space=vmem, size = 0x12000, scoped, tag = 'internal scratch']
  %s0 = inlined_call_operand.vmem [shape: bf16[2,96,199], index: 0, kind: input, shape index: {}]
  %s1 = inlined_call_operand.vmem [shape: bf16[32,96], index: 1, kind: input, shape index: {}]
  %s2 = inlined_call_operand.vmem [shape: f32[2,32,199], index: 2, kind: output, shape index: {}]
  %s3 = sld [smem:[#allocation0]]
  $region41: #{wav2vec2_forward.10} parent=0
    _
  %s5 = ssub.s32 1, %s3
  %s6 = scalar_select 0, %s5, %s3
  loop: start=0, step=1, limit=4
  $region2: #{wav2vec2_forward.10} parent=0 // loop_pre_header
    _
  $region3: #{wav2vec2_forward.10} parent=0 // loop_header
    %s8 = sphi 0, %s12
    %p9 = scmp.ge.s32.totalorder %s8, 4
    %s18 = sphi 0, %s20
    %s21 = sphi 0, %s18
    %s22 = sphi 0, %s21
    %s38 = sphi 0, %s22
    %s42 = sphi 0, %s42
    %s44 = sphi 0, %s42
    %s45 = sphi 0, %s44
    %s59 = sphi 0, %s45
    %s65 = sphi 0, %s67
    %s68 = sphi 0, %s65
    %s69 = sphi 0, %s68
    %s85 = sphi 0, %s69
  $region4: #{wav2vec2_forward.10} parent=0 // loop_header_branch
    %11 = sbr.rel (%p9) target = $region8
  $region5: #{wav2vec2_forward.10} parent=0 // loop_body
    %s13 = ssub.s32 %s8, 1
    %s14 = ssub.s32 %s8, 2
    %s15 = sadd.s32 %s8, 1
    %s16 = ssub.s32 %s8, %s15
    %p17 = scmp.eq.s32.totalorder %s16, 0
    %s19 = sadd.s32 %s18, 1
    %s20 = scalar_select %p17, %s18, %s19
    %p23 = pneg %p17
    %p24 = scmp.eq.s32.totalorder %s8, 1
    %p25 = por %p23, %p24
    %p26 = scmp.ne.s32.totalorder %s18, %s21
    %p27 = scmp.eq.s32.totalorder %s8, 0
    %p28 = por %p26, %p27
    %p29 = scmp.ne.s32.totalorder %s18, %s21
    %p30 = scmp.eq.s32.totalorder %s13, 1
    %p31 = por %p29, %p30
    %p32 = scmp.ne.s32.totalorder %s21, %s22
    %p33 = scmp.eq.s32.totalorder %s13, 0
    %p34 = por %p32, %p33
    %p35 = scmp.ne.s32.totalorder %s21, %s22
    %p36 = scmp.eq.s32.totalorder %s14, 1
    %p37 = por %p35, %p36
    %p39 = scmp.ne.s32.totalorder %s22, %s38
    %p40 = scmp.eq.s32.totalorder %s14, 0
    %p41 = por %p39, %p40
    %s43 = sadd.s32 %s42, 1
    %p46 = scmp.eq.s32.totalorder %s8, 1
    %p47 = scmp.ne.s32.totalorder %s42, %s44
    %p48 = scmp.eq.s32.totalorder %s8, 0
    %p49 = por %p47, %p48
    %p50 = scmp.ne.s32.totalorder %s42, %s44
    %p51 = scmp.eq.s32.totalorder %s13, 1
    %p52 = por %p50, %p51
    %p53 = scmp.ne.s32.totalorder %s44, %s45
    %p54 = scmp.eq.s32.totalorder %s13, 0
    %p55 = por %p53, %p54
    %p56 = scmp.ne.s32.totalorder %s44, %s45
    %p57 = scmp.eq.s32.totalorder %s14, 1
    %p58 = por %p56, %p57
    %p60 = scmp.ne.s32.totalorder %s45, %s59
    %p61 = scmp.eq.s32.totalorder %s14, 0
    %p62 = por %p60, %p61
    %s63 = ssub.s32 %s8, %s15
    %p64 = scmp.eq.s32.totalorder %s63, 0
    %s66 = sadd.s32 %s65, 1
    %s67 = scalar_select %p64, %s65, %s66
    %p70 = pneg %p64
    %p71 = scmp.eq.s32.totalorder %s8, 1
    %p72 = por %p70, %p71
    %p73 = scmp.ne.s32.totalorder %s65, %s68
    %p74 = scmp.eq.s32.totalorder %s8, 0
    %p75 = por %p73, %p74
    %p76 = scmp.ne.s32.totalorder %s65, %s68
    %p77 = scmp.eq.s32.totalorder %s13, 1
    %p78 = por %p76, %p77
    %p79 = scmp.ne.s32.totalorder %s68, %s69
    %p80 = scmp.eq.s32.totalorder %s13, 0
    %p81 = por %p79, %p80
    %p82 = scmp.ne.s32.totalorder %s68, %s69
    %p83 = scmp.eq.s32.totalorder %s14, 1
    %p84 = por %p82, %p83
    %p86 = scmp.ne.s32.totalorder %s69, %s85
    %p87 = scmp.eq.s32.totalorder %s14, 0
    %p88 = por %p86, %p87
    %p89 = scmp.le.s32.totalorder 1, %s8
    %p90 = scmp.lt.s32.totalorder %s8, 3
    %p91 = pnand %p89, %p90
    %p92 = pneg %p91
    // Predicated region
    $region9: #{wav2vec2_forward.10} parent=5 // pred_check
      _
    $region10: #{wav2vec2_forward.10} parent=5 // pred_check_branch
      %94 = sbr.rel (%p91) target = $region12
    $region11: #{wav2vec2_forward.10} parent=5 // pred_region
      %s95 = ssub.s32 %s8, 1
      // Predicated region
      $region13: #{wav2vec2_forward.10} parent=11 // pred_check
        %p96 = pneg %p55
      $region14: #{wav2vec2_forward.10} parent=11 // pred_check_branch
        %98 = sbr.rel (%p96) target = $region16
      $region15: #{wav2vec2_forward.10} parent=11 // pred_region
        _
      $region16: #{wav2vec2_forward.10} parent=11 // pred_fallthru
        _
    $region12: #{wav2vec2_forward.10} parent=5 // pred_fallthru
      _
    %p99 = scmp.lt.s32.totalorder %s8, 2
    // Predicated region
    $region17: #{wav2vec2_forward.10} parent=5 // pred_check
      %p100 = pneg %p99
    $region18: #{wav2vec2_forward.10} parent=5 // pred_check_branch
      %102 = sbr.rel (%p100) target = $region20
    $region19: #{wav2vec2_forward.10} parent=5 // pred_region
      // Predicated region
      $region21: #{wav2vec2_forward.10} parent=19 // pred_check
        %p103 = pneg %p28
      $region22: #{wav2vec2_forward.10} parent=19 // pred_check_branch
        %105 = sbr.rel (%p103) target = $region24
      $region23: #{wav2vec2_forward.10} parent=19 // pred_region
        %p106 = scmp.lt.s32.totalorder %s8, 1
        %s107 = scalar_select %p106, %s8, 1
        %s108 = smul.addr %s107, 24
        %s109 = smul.addr %s108, 4
        %s110 = scalar_lea.vmem %s0, %s109
      $region24: #{wav2vec2_forward.10} parent=19 // pred_fallthru
        _
    $region20: #{wav2vec2_forward.10} parent=5 // pred_fallthru
      _
    %p111 = scmp.le.s32.totalorder 1, %s8
    %p112 = scmp.lt.s32.totalorder %s8, 3
    %p113 = pnand %p111, %p112
    %p114 = pneg %p113
    // Predicated region
    $region25: #{wav2vec2_forward.10} parent=5 // pred_check
      _
    $region26: #{wav2vec2_forward.10} parent=5 // pred_check_branch
      %116 = sbr.rel (%p113) target = $region28
    $region27: #{wav2vec2_forward.10} parent=5 // pred_region
      %s117 = ssub.s32 %s8, 1
      %p118 = scmp.lt.s32.totalorder %s13, 1
      %s119 = scalar_select %p118, %s13, 1
      %s120 = smul.addr %s119, 24
      %s121 = smul.addr %s120, 4
      %s122 = scalar_lea.vmem %s0, %s121
      %p123 = pneg %p34
      %p124 = pneg %p31
      %p125 = pneg %p55
      %p126 = pneg %p52
      %p127 = pneg %p81
      %p128 = pneg %p78
      %p129 = scmp.lt.s32.totalorder %s13, 1
      %s130 = scalar_select %p129, %s13, 1
      %s131 = smul.addr %s130, 8
      %s132 = smul.addr %s131, 8
      %s133 = scalar_lea.vmem %s2, %s132
      %p134 = scmp.lt.s32.totalorder %s13, 1
      %s135 = scalar_select %p134, %s13, 1
      %s136 = smul.addr %s135, 24
      %s137 = smul.addr %s136, 4
      %s138 = scalar_lea.vmem %s0, %s137
      %p139 = scmp.lt.s32.totalorder %s13, 1
      %s140 = scalar_select %p139, %s13, 1
      %s141 = smul.addr %s140, 8
      %s142 = smul.addr %s141, 8
      %s143 = scalar_lea.vmem %s2, %s142
      %v145 = vld [vmem:[%s1] sm:$0xf]
      %v146 = vld [vmem:[%s1 + $0x4] sm:$0xf]
      %v147 = vld [vmem:[%s1 + $0x8] sm:$0xf]
      %v148 = vld [vmem:[%s1 + $0xc] sm:$0xf]
      %v149 = vld [vmem:[%s138] sm:$0xff]
      %v150 = vld [vmem:[%s138 + $0x8] sm:$0xff]
      %v151 = vld [vmem:[%s138 + $0x10] sm:$0xff]
      %v152 = vld [vmem:[%s138 + $0x18] sm:$0xff]
      %v153 = vld [vmem:[%s138 + $0x20] sm:$0xff]
      %v154 = vld [vmem:[%s138 + $0x28] sm:$0xff]
      %v155 = vld [vmem:[%s138 + $0x30] sm:$0xff]
      %v156 = vld [vmem:[%s138 + $0x38] sm:$0xff]
      %v157 = vld [vmem:[%s138 + $0x40] sm:$0xff]
      %v158 = vld [vmem:[%s138 + $0x48] sm:$0xff]
      %v159 = vld [vmem:[%s138 + $0x50] sm:$0xff]
      %v160 = vld [vmem:[%s138 + $0x58] sm:$0xff]
      %v165 = vunpack.c.l.b16 %v145
      %v166 = vunpack.c.l.b16 %v146
      %v167 = vunpack.c.l.b16 %v147
      %v168 = vunpack.c.l.b16 %v148
      %v169 = vpack.c.b16 %v166, %v165
      %v170 = vpack.c.b16 %v168, %v167
      %v183 = vunpack.c.l.b16 %v149
      %v184 = vunpack.c.h.b16 %v149
      %v185 = vunpack.c.l.b16 %v150
      %v186 = vunpack.c.h.b16 %v150
      %v187 = vunpack.c.l.b16 %v151
      %v188 = vunpack.c.h.b16 %v151
      %v189 = vunpack.c.l.b16 %v152
      %v190 = vunpack.c.h.b16 %v152
      %v191 = vunpack.c.l.b16 %v153
      %v192 = vunpack.c.h.b16 %v153
      %v193 = vunpack.c.l.b16 %v154
      %v194 = vunpack.c.h.b16 %v154
      %v195 = vunpack.c.l.b16 %v155
      %v196 = vunpack.c.h.b16 %v155
      %v197 = vunpack.c.l.b16 %v156
      %v198 = vunpack.c.h.b16 %v156
      %v199 = vunpack.c.l.b16 %v157
      %v200 = vunpack.c.h.b16 %v157
      %v201 = vunpack.c.l.b16 %v158
      %v202 = vunpack.c.h.b16 %v158
      %v203 = vunpack.c.l.b16 %v159
      %v204 = vunpack.c.h.b16 %v159
      %v205 = vunpack.c.l.b16 %v160
      %v206 = vunpack.c.h.b16 %v160
      %v207 = vpack.c.b16 %v185, %v183
      %v208 = vpack.c.b16 %v186, %v184
      %v209 = vpack.c.b16 %v189, %v187
      %v210 = vpack.c.b16 %v190, %v188
      %v211 = vpack.c.b16 %v193, %v191
      %v212 = vpack.c.b16 %v194, %v192
      %v213 = vpack.c.b16 %v197, %v195
      %v214 = vpack.c.b16 %v198, %v196
      %v215 = vpack.c.b16 %v201, %v199
      %v216 = vpack.c.b16 %v202, %v200
      %v217 = vpack.c.b16 %v205, %v203
      %v218 = vpack.c.b16 %v206, %v204
      %vm231 = vcmask 785408
      %v233 = vsel %vm231, %v169, 0
      %v236 = vsel %vm231, %v170, 0
      %238 = vmatprep.subr.bf16.mxu0 0
      %239 = vmatpush1.bf16.msra.mxu0 0
      %240 = vmatprep.subr.bf16.mxu0 0
      %241 = vmatpush1.bf16.msra.mxu0 0
      %242 = vmatprep.subr.bf16.mxu0 %v218
      %243 = vmatpush1.bf16.msra.mxu0 %v217
      %244 = vmatprep.subr.bf16.mxu0 %v216
      %245 = vmatpush1.bf16.msra.mxu0 %v215
      %246 = vmatprep.subr.bf16.mxu0 %v214
      %247 = vmatpush1.bf16.msra.mxu0 %v213
      %248 = vmatprep.subr.bf16.mxu0 %v212
      %249 = vmatpush1.bf16.msra.mxu0 %v211
      %250 = vmatprep.subr.bf16.mxu0 %v210
      %251 = vmatpush1.bf16.msra.mxu0 %v209
      %252 = vmatprep.subr.bf16.mxu0 %v208
      %253 = vmatpush1.bf16.msra.mxu0 %v207
      %254 = vmatprep.subr.bf16.mxu0 0
      %255 = vmatpush2.bf16.msra.mxu0 0
      %256 = vmatprep.subr.bf16.mxu0 0
      %257 = vmatpush2.bf16.msra.mxu0 0
      %258 = vmatprep.subr.bf16.mxu0 0
      %259 = vmatpush2.bf16.msra.mxu0 0
      %260 = vmatprep.subr.bf16.mxu0 0
      %261 = vmatpush2.bf16.msra.mxu0 0
      %262 = vmatprep.subr.bf16.mxu0 0
      %263 = vmatpush2.bf16.msra.mxu0 0
      %264 = vmatprep.subr.bf16.mxu0 0
      %265 = vmatpush2.bf16.msra.mxu0 0
      %266 = vmatprep.subr.bf16.mxu0 0
      %267 = vmatpush2.bf16.msra.mxu0 0
      %268 = vmatprep.subr.bf16.mxu0 0
      %269 = vmatpush2.bf16.msra.mxu0 0
      %270 = vmatprep.mubr.bf16.mxu0 0
      %271 = vmatmul.mubr.bf16.gmra.mxu0 %v233
      %v272 = vpop.f32.mrf.mxu0
      %v273 = vadd.f32 0.0, %v272
      %v274 = vpop.f32.mrf.mxu0
      %v275 = vadd.f32 0.0, %v274
      %v276 = vpop.f32.mrf.mxu0
      %v277 = vadd.f32 0.0, %v276
      %v278 = vpop.f32.mrf.mxu0
      %v279 = vadd.f32 0.0, %v278
      %280 = vmatprep.mubr.bf16.mxu0 0
      %281 = vmatmul.mubr.bf16.gmra.mxu0 %v236
      %v282 = vpop.f32.mrf.mxu0
      %v283 = vadd.f32 0.0, %v282
      %v284 = vpop.f32.mrf.mxu0
      %v285 = vadd.f32 0.0, %v284
      %v286 = vpop.f32.mrf.mxu0
      %v287 = vadd.f32 0.0, %v286
      %v288 = vpop.f32.mrf.mxu0
      %v289 = vadd.f32 0.0, %v288
      %290 = vdwg.mxu0
      %v291 = vmul.f32 %v273, 0.5
      %v292 = vmul.f32 %v275, 0.5
      %v293 = vmul.f32 %v277, 0.5
      %v294 = vmul.f32 %v279, 0.5
      %v295 = vmul.f32 %v283, 0.5
      %v296 = vmul.f32 %v285, 0.5
      %v297 = vmul.f32 %v287, 0.5
      %v298 = vmul.f32 %v289, 0.5
      %v299 = vmul.f32 %v273, 0.044715
      %v300 = vmul.f32 %v275, 0.044715
      %v301 = vmul.f32 %v277, 0.044715
      %v302 = vmul.f32 %v279, 0.044715
      %v303 = vmul.f32 %v283, 0.044715
      %v304 = vmul.f32 %v285, 0.044715
      %v305 = vmul.f32 %v287, 0.044715
      %v306 = vmul.f32 %v289, 0.044715
      %v307 = vmul.f32 %v299, %v273
      %v308 = vmul.f32 %v300, %v275
      %v309 = vmul.f32 %v301, %v277
      %v310 = vmul.f32 %v302, %v279
      %v311 = vmul.f32 %v303, %v283
      %v312 = vmul.f32 %v304, %v285
      %v313 = vmul.f32 %v305, %v287
      %v314 = vmul.f32 %v306, %v289
      %v315 = vmul.f32 %v307, %v273
      %v316 = vmul.f32 %v308, %v275
      %v317 = vmul.f32 %v309, %v277
      %v318 = vmul.f32 %v310, %v279
      %v319 = vmul.f32 %v311, %v283
      %v320 = vmul.f32 %v312, %v285
      %v321 = vmul.f32 %v313, %v287
      %v322 = vmul.f32 %v314, %v289
      %v323 = vadd.f32 %v273, %v315
      %v324 = vadd.f32 %v275, %v316
      %v325 = vadd.f32 %v277, %v317
      %v326 = vadd.f32 %v279, %v318
      %v327 = vadd.f32 %v283, %v319
      %v328 = vadd.f32 %v285, %v320
      %v329 = vadd.f32 %v287, %v321
      %v330 = vadd.f32 %v289, %v322
      %v331 = vmul.f32 %v323, 0.7978846
      %v332 = vmul.f32 %v324, 0.7978846
      %v333 = vmul.f32 %v325, 0.7978846
      %v334 = vmul.f32 %v326, 0.7978846
      %v335 = vmul.f32 %v327, 0.7978846
      %v336 = vmul.f32 %v328, 0.7978846
      %v337 = vmul.f32 %v329, 0.7978846
      %v338 = vmul.f32 %v330, 0.7978846
      %v339 = vtanh.pop %v331
      %v340 = vtanh.pop %v332
      %v341 = vtanh.pop %v333
      %v342 = vtanh.pop %v334
      %v343 = vtanh.pop %v335
      %v344 = vtanh.pop %v336
      %v345 = vtanh.pop %v337
      %v346 = vtanh.pop %v338
      %v347 = vadd.f32 %v339, 1.0
      %v348 = vadd.f32 %v340, 1.0
      %v349 = vadd.f32 %v341, 1.0
      %v350 = vadd.f32 %v342, 1.0
      %v351 = vadd.f32 %v343, 1.0
      %v352 = vadd.f32 %v344, 1.0
      %v353 = vadd.f32 %v345, 1.0
      %v354 = vadd.f32 %v346, 1.0
      %v355 = vmul.f32 %v291, %v347
      %v356 = vmul.f32 %v292, %v348
      %v357 = vmul.f32 %v293, %v349
      %v358 = vmul.f32 %v294, %v350
      %v359 = vmul.f32 %v295, %v351
      %v360 = vmul.f32 %v296, %v352
      %v361 = vmul.f32 %v297, %v353
      %v362 = vmul.f32 %v298, %v354
      %363 = vst [vmem:[%s143] sm:$0xff] %v355
      %vm364 = vcmask 580608
      %365 = vst.msk [vmem:[%s143 + $0x8] sm:$0xff] %vm364, %v356
      %366 = vst [vmem:[%s143 + $0x10] sm:$0xff] %v357
      %367 = vst.msk [vmem:[%s143 + $0x18] sm:$0xff] %vm364, %v358
      %368 = vst [vmem:[%s143 + $0x20] sm:$0xff] %v359
      %369 = vst.msk [vmem:[%s143 + $0x28] sm:$0xff] %vm364, %v360
      %370 = vst [vmem:[%s143 + $0x30] sm:$0xff] %v361
      %371 = vst.msk [vmem:[%s143 + $0x38] sm:$0xff] %vm364, %v362
      %p372 = scmp.lt.s32.totalorder %s13, 1
      %s373 = scalar_select %p372, %s13, 1
      %s374 = smul.addr %s373, 8
      %s375 = smul.addr %s374, 8
      %s376 = scalar_lea.vmem %s2, %s375
      // Predicated region
      $region29: #{wav2vec2_forward.10} parent=27 // pred_check
        %p377 = pneg %p78
      $region30: #{wav2vec2_forward.10} parent=27 // pred_check_branch
        %379 = sbr.rel (%p377) target = $region32
      $region31: #{wav2vec2_forward.10} parent=27 // pred_region
        _
      $region32: #{wav2vec2_forward.10} parent=27 // pred_fallthru
        _
    $region28: #{wav2vec2_forward.10} parent=5 // pred_fallthru
      _
    %p380 = scmp.le.s32.totalorder 2, %s8
    // Predicated region
    $region33: #{wav2vec2_forward.10} parent=5 // pred_check
      %p381 = pneg %p380
    $region34: #{wav2vec2_forward.10} parent=5 // pred_check_branch
      %383 = sbr.rel (%p381) target = $region36
    $region35: #{wav2vec2_forward.10} parent=5 // pred_region
      %s384 = ssub.s32 %s8, 2
      // Predicated region
      $region37: #{wav2vec2_forward.10} parent=35 // pred_check
        %p385 = pneg %p84
      $region38: #{wav2vec2_forward.10} parent=35 // pred_check_branch
        %387 = sbr.rel (%p385) target = $region40
      $region39: #{wav2vec2_forward.10} parent=35 // pred_region
        %p388 = scmp.lt.s32.totalorder %s14, 1
        %s389 = scalar_select %p388, %s14, 1
        %s390 = smul.addr %s389, 8
        %s391 = smul.addr %s390, 8
        %s392 = scalar_lea.vmem %s2, %s391
      $region40: #{wav2vec2_forward.10} parent=35 // pred_fallthru
        _
    $region36: #{wav2vec2_forward.10} parent=5 // pred_fallthru
      _
  $region6: #{wav2vec2_forward.10} parent=0 // loop_footer
    %s12 = sadd.s32 1, %s8
  $region7: #{wav2vec2_forward.10} parent=0 // loop_footer_branch
    %7 = sbr.rel target = $region3
  $region8: #{wav2vec2_forward.10} parent=0 // loop_exit
    _

// kernel: wav2vec2_forward.11
$region0: #{wav2vec2_forward.11}
  #allocation0 [shape = 'u32[]', space=smem, size = 0x4, offset = 0x4, fixed_abs, tag = 'smem constant byte address 0x4 - core index']
  #allocation1 [shape = 'u32[144,128]{1,0:T(1,128)}', space=vmem, size = 0x12000, scoped, tag = 'internal scratch']
  %s0 = inlined_call_operand.vmem [shape: bf16[2,96,99], index: 0, kind: input, shape index: {}]
  %s1 = inlined_call_operand.vmem [shape: bf16[32,96], index: 1, kind: input, shape index: {}]
  %s2 = inlined_call_operand.vmem [shape: f32[2,32,99], index: 2, kind: output, shape index: {}]
  %s3 = sld [smem:[#allocation0]]
  $region41: #{wav2vec2_forward.11} parent=0
    _
  %s5 = ssub.s32 1, %s3
  %s6 = scalar_select 0, %s5, %s3
  loop: start=0, step=1, limit=4
  $region2: #{wav2vec2_forward.11} parent=0 // loop_pre_header
    _
  $region3: #{wav2vec2_forward.11} parent=0 // loop_header
    %s8 = sphi 0, %s12
    %p9 = scmp.ge.s32.totalorder %s8, 4
    %s18 = sphi 0, %s20
    %s21 = sphi 0, %s18
    %s22 = sphi 0, %s21
    %s38 = sphi 0, %s22
    %s42 = sphi 0, %s42
    %s44 = sphi 0, %s42
    %s45 = sphi 0, %s44
    %s59 = sphi 0, %s45
    %s65 = sphi 0, %s67
    %s68 = sphi 0, %s65
    %s69 = sphi 0, %s68
    %s85 = sphi 0, %s69
  $region4: #{wav2vec2_forward.11} parent=0 // loop_header_branch
    %11 = sbr.rel (%p9) target = $region8
  $region5: #{wav2vec2_forward.11} parent=0 // loop_body
    %s13 = ssub.s32 %s8, 1
    %s14 = ssub.s32 %s8, 2
    %s15 = sadd.s32 %s8, 1
    %s16 = ssub.s32 %s8, %s15
    %p17 = scmp.eq.s32.totalorder %s16, 0
    %s19 = sadd.s32 %s18, 1
    %s20 = scalar_select %p17, %s18, %s19
    %p23 = pneg %p17
    %p24 = scmp.eq.s32.totalorder %s8, 1
    %p25 = por %p23, %p24
    %p26 = scmp.ne.s32.totalorder %s18, %s21
    %p27 = scmp.eq.s32.totalorder %s8, 0
    %p28 = por %p26, %p27
    %p29 = scmp.ne.s32.totalorder %s18, %s21
    %p30 = scmp.eq.s32.totalorder %s13, 1
    %p31 = por %p29, %p30
    %p32 = scmp.ne.s32.totalorder %s21, %s22
    %p33 = scmp.eq.s32.totalorder %s13, 0
    %p34 = por %p32, %p33
    %p35 = scmp.ne.s32.totalorder %s21, %s22
    %p36 = scmp.eq.s32.totalorder %s14, 1
    %p37 = por %p35, %p36
    %p39 = scmp.ne.s32.totalorder %s22, %s38
    %p40 = scmp.eq.s32.totalorder %s14, 0
    %p41 = por %p39, %p40
    %s43 = sadd.s32 %s42, 1
    %p46 = scmp.eq.s32.totalorder %s8, 1
    %p47 = scmp.ne.s32.totalorder %s42, %s44
    %p48 = scmp.eq.s32.totalorder %s8, 0
    %p49 = por %p47, %p48
    %p50 = scmp.ne.s32.totalorder %s42, %s44
    %p51 = scmp.eq.s32.totalorder %s13, 1
    %p52 = por %p50, %p51
    %p53 = scmp.ne.s32.totalorder %s44, %s45
    %p54 = scmp.eq.s32.totalorder %s13, 0
    %p55 = por %p53, %p54
    %p56 = scmp.ne.s32.totalorder %s44, %s45
    %p57 = scmp.eq.s32.totalorder %s14, 1
    %p58 = por %p56, %p57
    %p60 = scmp.ne.s32.totalorder %s45, %s59
    %p61 = scmp.eq.s32.totalorder %s14, 0
    %p62 = por %p60, %p61
    %s63 = ssub.s32 %s8, %s15
    %p64 = scmp.eq.s32.totalorder %s63, 0
    %s66 = sadd.s32 %s65, 1
    %s67 = scalar_select %p64, %s65, %s66
    %p70 = pneg %p64
    %p71 = scmp.eq.s32.totalorder %s8, 1
    %p72 = por %p70, %p71
    %p73 = scmp.ne.s32.totalorder %s65, %s68
    %p74 = scmp.eq.s32.totalorder %s8, 0
    %p75 = por %p73, %p74
    %p76 = scmp.ne.s32.totalorder %s65, %s68
    %p77 = scmp.eq.s32.totalorder %s13, 1
    %p78 = por %p76, %p77
    %p79 = scmp.ne.s32.totalorder %s68, %s69
    %p80 = scmp.eq.s32.totalorder %s13, 0
    %p81 = por %p79, %p80
    %p82 = scmp.ne.s32.totalorder %s68, %s69
    %p83 = scmp.eq.s32.totalorder %s14, 1
    %p84 = por %p82, %p83
    %p86 = scmp.ne.s32.totalorder %s69, %s85
    %p87 = scmp.eq.s32.totalorder %s14, 0
    %p88 = por %p86, %p87
    %p89 = scmp.le.s32.totalorder 1, %s8
    %p90 = scmp.lt.s32.totalorder %s8, 3
    %p91 = pnand %p89, %p90
    %p92 = pneg %p91
    // Predicated region
    $region9: #{wav2vec2_forward.11} parent=5 // pred_check
      _
    $region10: #{wav2vec2_forward.11} parent=5 // pred_check_branch
      %94 = sbr.rel (%p91) target = $region12
    $region11: #{wav2vec2_forward.11} parent=5 // pred_region
      %s95 = ssub.s32 %s8, 1
      // Predicated region
      $region13: #{wav2vec2_forward.11} parent=11 // pred_check
        %p96 = pneg %p55
      $region14: #{wav2vec2_forward.11} parent=11 // pred_check_branch
        %98 = sbr.rel (%p96) target = $region16
      $region15: #{wav2vec2_forward.11} parent=11 // pred_region
        _
      $region16: #{wav2vec2_forward.11} parent=11 // pred_fallthru
        _
    $region12: #{wav2vec2_forward.11} parent=5 // pred_fallthru
      _
    %p99 = scmp.lt.s32.totalorder %s8, 2
    // Predicated region
    $region17: #{wav2vec2_forward.11} parent=5 // pred_check
      %p100 = pneg %p99
    $region18: #{wav2vec2_forward.11} parent=5 // pred_check_branch
      %102 = sbr.rel (%p100) target = $region20
    $region19: #{wav2vec2_forward.11} parent=5 // pred_region
      // Predicated region
      $region21: #{wav2vec2_forward.11} parent=19 // pred_check
        %p103 = pneg %p28
      $region22: #{wav2vec2_forward.11} parent=19 // pred_check_branch
        %105 = sbr.rel (%p103) target = $region24
      $region23: #{wav2vec2_forward.11} parent=19 // pred_region
        %p106 = scmp.lt.s32.totalorder %s8, 1
        %s107 = scalar_select %p106, %s8, 1
        %s108 = smul.addr %s107, 12
        %s109 = smul.addr %s108, 4
        %s110 = scalar_lea.vmem %s0, %s109
      $region24: #{wav2vec2_forward.11} parent=19 // pred_fallthru
        _
    $region20: #{wav2vec2_forward.11} parent=5 // pred_fallthru
      _
    %p111 = scmp.le.s32.totalorder 1, %s8
    %p112 = scmp.lt.s32.totalorder %s8, 3
    %p113 = pnand %p111, %p112
    %p114 = pneg %p113
    // Predicated region
    $region25: #{wav2vec2_forward.11} parent=5 // pred_check
      _
    $region26: #{wav2vec2_forward.11} parent=5 // pred_check_branch
      %116 = sbr.rel (%p113) target = $region28
    $region27: #{wav2vec2_forward.11} parent=5 // pred_region
      %s117 = ssub.s32 %s8, 1
      %p118 = scmp.lt.s32.totalorder %s13, 1
      %s119 = scalar_select %p118, %s13, 1
      %s120 = smul.addr %s119, 12
      %s121 = smul.addr %s120, 4
      %s122 = scalar_lea.vmem %s0, %s121
      %p123 = pneg %p34
      %p124 = pneg %p31
      %p125 = pneg %p55
      %p126 = pneg %p52
      %p127 = pneg %p81
      %p128 = pneg %p78
      %p129 = scmp.lt.s32.totalorder %s13, 1
      %s130 = scalar_select %p129, %s13, 1
      %s131 = smul.addr %s130, 4
      %s132 = smul.addr %s131, 8
      %s133 = scalar_lea.vmem %s2, %s132
      %p134 = scmp.lt.s32.totalorder %s13, 1
      %s135 = scalar_select %p134, %s13, 1
      %s136 = smul.addr %s135, 12
      %s137 = smul.addr %s136, 4
      %s138 = scalar_lea.vmem %s0, %s137
      %p139 = scmp.lt.s32.totalorder %s13, 1
      %s140 = scalar_select %p139, %s13, 1
      %s141 = smul.addr %s140, 4
      %s142 = smul.addr %s141, 8
      %s143 = scalar_lea.vmem %s2, %s142
      %v145 = vld [vmem:[%s1] sm:$0xf]
      %v146 = vld [vmem:[%s1 + $0x4] sm:$0xf]
      %v147 = vld [vmem:[%s1 + $0x8] sm:$0xf]
      %v148 = vld [vmem:[%s1 + $0xc] sm:$0xf]
      %v149 = vld [vmem:[%s138] sm:$0xf]
      %v150 = vld [vmem:[%s138 + $0x4] sm:$0xf]
      %v151 = vld [vmem:[%s138 + $0x8] sm:$0xf]
      %v152 = vld [vmem:[%s138 + $0xc] sm:$0xf]
      %v153 = vld [vmem:[%s138 + $0x10] sm:$0xf]
      %v154 = vld [vmem:[%s138 + $0x14] sm:$0xf]
      %v155 = vld [vmem:[%s138 + $0x18] sm:$0xf]
      %v156 = vld [vmem:[%s138 + $0x1c] sm:$0xf]
      %v157 = vld [vmem:[%s138 + $0x20] sm:$0xf]
      %v158 = vld [vmem:[%s138 + $0x24] sm:$0xf]
      %v159 = vld [vmem:[%s138 + $0x28] sm:$0xf]
      %v160 = vld [vmem:[%s138 + $0x2c] sm:$0xf]
      %v165 = vunpack.c.l.b16 %v145
      %v166 = vunpack.c.l.b16 %v146
      %v167 = vunpack.c.l.b16 %v147
      %v168 = vunpack.c.l.b16 %v148
      %v169 = vpack.c.b16 %v166, %v165
      %v170 = vpack.c.b16 %v168, %v167
      %v183 = vunpack.c.l.b16 %v149
      %v184 = vunpack.c.l.b16 %v150
      %v185 = vunpack.c.l.b16 %v151
      %v186 = vunpack.c.l.b16 %v152
      %v187 = vunpack.c.l.b16 %v153
      %v188 = vunpack.c.l.b16 %v154
      %v189 = vunpack.c.l.b16 %v155
      %v190 = vunpack.c.l.b16 %v156
      %v191 = vunpack.c.l.b16 %v157
      %v192 = vunpack.c.l.b16 %v158
      %v193 = vunpack.c.l.b16 %v159
      %v194 = vunpack.c.l.b16 %v160
      %v195 = vpack.c.b16 %v184, %v183
      %v196 = vpack.c.b16 %v186, %v185
      %v197 = vpack.c.b16 %v188, %v187
      %v198 = vpack.c.b16 %v190, %v189
      %v199 = vpack.c.b16 %v192, %v191
      %v200 = vpack.c.b16 %v194, %v193
      %vm207 = vcmask 785408
      %v209 = vsel %vm207, %v169, 0
      %v212 = vsel %vm207, %v170, 0
      %214 = vmatprep.subr.bf16.mxu0 0
      %215 = vmatpush1.bf16.msra.mxu0 0
      %216 = vmatprep.subr.bf16.mxu0 0
      %217 = vmatpush1.bf16.msra.mxu0 0
      %218 = vmatprep.subr.bf16.mxu0 0
      %219 = vmatpush1.bf16.msra.mxu0 %v200
      %220 = vmatprep.subr.bf16.mxu0 0
      %221 = vmatpush1.bf16.msra.mxu0 %v199
      %222 = vmatprep.subr.bf16.mxu0 0
      %223 = vmatpush1.bf16.msra.mxu0 %v198
      %224 = vmatprep.subr.bf16.mxu0 0
      %225 = vmatpush1.bf16.msra.mxu0 %v197
      %226 = vmatprep.subr.bf16.mxu0 0
      %227 = vmatpush1.bf16.msra.mxu0 %v196
      %228 = vmatprep.subr.bf16.mxu0 0
      %229 = vmatpush1.bf16.msra.mxu0 %v195
      %230 = vmatprep.subr.bf16.mxu0 0
      %231 = vmatpush2.bf16.msra.mxu0 0
      %232 = vmatprep.subr.bf16.mxu0 0
      %233 = vmatpush2.bf16.msra.mxu0 0
      %234 = vmatprep.subr.bf16.mxu0 0
      %235 = vmatpush2.bf16.msra.mxu0 0
      %236 = vmatprep.subr.bf16.mxu0 0
      %237 = vmatpush2.bf16.msra.mxu0 0
      %238 = vmatprep.subr.bf16.mxu0 0
      %239 = vmatpush2.bf16.msra.mxu0 0
      %240 = vmatprep.subr.bf16.mxu0 0
      %241 = vmatpush2.bf16.msra.mxu0 0
      %242 = vmatprep.subr.bf16.mxu0 0
      %243 = vmatpush2.bf16.msra.mxu0 0
      %244 = vmatprep.subr.bf16.mxu0 0
      %245 = vmatpush2.bf16.msra.mxu0 0
      %246 = vmatprep.mubr.bf16.mxu0 0
      %247 = vmatmul.mubr.bf16.gmra.mxu0 %v209
      %v248 = vpop.f32.mrf.mxu0
      %v249 = vadd.f32 0.0, %v248
      %v250 = vpop.f32.mrf.mxu0
      %v251 = vpop.f32.mrf.mxu0
      %v252 = vadd.f32 0.0, %v251
      %v253 = vpop.f32.mrf.mxu0
      %254 = vmatprep.mubr.bf16.mxu0 0
      %255 = vmatmul.mubr.bf16.gmra.mxu0 %v212
      %v256 = vpop.f32.mrf.mxu0
      %v257 = vadd.f32 0.0, %v256
      %v258 = vpop.f32.mrf.mxu0
      %v259 = vpop.f32.mrf.mxu0
      %v260 = vadd.f32 0.0, %v259
      %v261 = vpop.f32.mrf.mxu0
      %262 = vdwg.mxu0
      %v263 = vmul.f32 %v249, 0.5
      %v264 = vmul.f32 %v252, 0.5
      %v265 = vmul.f32 %v257, 0.5
      %v266 = vmul.f32 %v260, 0.5
      %v267 = vmul.f32 %v249, 0.044715
      %v268 = vmul.f32 %v252, 0.044715
      %v269 = vmul.f32 %v257, 0.044715
      %v270 = vmul.f32 %v260, 0.044715
      %v271 = vmul.f32 %v267, %v249
      %v272 = vmul.f32 %v268, %v252
      %v273 = vmul.f32 %v269, %v257
      %v274 = vmul.f32 %v270, %v260
      %v275 = vmul.f32 %v271, %v249
      %v276 = vmul.f32 %v272, %v252
      %v277 = vmul.f32 %v273, %v257
      %v278 = vmul.f32 %v274, %v260
      %v279 = vadd.f32 %v249, %v275
      %v280 = vadd.f32 %v252, %v276
      %v281 = vadd.f32 %v257, %v277
      %v282 = vadd.f32 %v260, %v278
      %v283 = vmul.f32 %v279, 0.7978846
      %v284 = vmul.f32 %v280, 0.7978846
      %v285 = vmul.f32 %v281, 0.7978846
      %v286 = vmul.f32 %v282, 0.7978846
      %v287 = vtanh.pop %v283
      %v288 = vtanh.pop %v284
      %v289 = vtanh.pop %v285
      %v290 = vtanh.pop %v286
      %v291 = vadd.f32 %v287, 1.0
      %v292 = vadd.f32 %v288, 1.0
      %v293 = vadd.f32 %v289, 1.0
      %v294 = vadd.f32 %v290, 1.0
      %v295 = vmul.f32 %v263, %v291
      %v296 = vmul.f32 %v264, %v292
      %v297 = vmul.f32 %v265, %v293
      %v298 = vmul.f32 %v266, %v294
      %vm299 = vcmask 809984
      %300 = vst.msk [vmem:[%s143] sm:$0xff] %vm299, %v295
      %301 = vst.msk [vmem:[%s143 + $0x8] sm:$0xff] %vm299, %v296
      %302 = vst.msk [vmem:[%s143 + $0x10] sm:$0xff] %vm299, %v297
      %303 = vst.msk [vmem:[%s143 + $0x18] sm:$0xff] %vm299, %v298
      %p304 = scmp.lt.s32.totalorder %s13, 1
      %s305 = scalar_select %p304, %s13, 1
      %s306 = smul.addr %s305, 4
      %s307 = smul.addr %s306, 8
      %s308 = scalar_lea.vmem %s2, %s307
      // Predicated region
      $region29: #{wav2vec2_forward.11} parent=27 // pred_check
        %p309 = pneg %p78
      $region30: #{wav2vec2_forward.11} parent=27 // pred_check_branch
        %311 = sbr.rel (%p309) target = $region32
      $region31: #{wav2vec2_forward.11} parent=27 // pred_region
        _
      $region32: #{wav2vec2_forward.11} parent=27 // pred_fallthru
        _
    $region28: #{wav2vec2_forward.11} parent=5 // pred_fallthru
      _
    %p312 = scmp.le.s32.totalorder 2, %s8
    // Predicated region
    $region33: #{wav2vec2_forward.11} parent=5 // pred_check
      %p313 = pneg %p312
    $region34: #{wav2vec2_forward.11} parent=5 // pred_check_branch
      %315 = sbr.rel (%p313) target = $region36
    $region35: #{wav2vec2_forward.11} parent=5 // pred_region
      %s316 = ssub.s32 %s8, 2
      // Predicated region
      $region37: #{wav2vec2_forward.11} parent=35 // pred_check
        %p317 = pneg %p84
      $region38: #{wav2vec2_forward.11} parent=35 // pred_check_branch
        %319 = sbr.rel (%p317) target = $region40
      $region39: #{wav2vec2_forward.11} parent=35 // pred_region
        %p320 = scmp.lt.s32.totalorder %s14, 1
        %s321 = scalar_select %p320, %s14, 1
        %s322 = smul.addr %s321, 4
        %s323 = smul.addr %s322, 8
        %s324 = scalar_lea.vmem %s2, %s323
      $region40: #{wav2vec2_forward.11} parent=35 // pred_fallthru
        _
    $region36: #{wav2vec2_forward.11} parent=5 // pred_fallthru
      _
  $region6: #{wav2vec2_forward.11} parent=0 // loop_footer
    %s12 = sadd.s32 1, %s8
  $region7: #{wav2vec2_forward.11} parent=0 // loop_footer_branch
    %7 = sbr.rel target = $region3
  $region8: #{wav2vec2_forward.11} parent=0 // loop_exit
    _

// kernel: wav2vec2_forward.12
$region0: #{wav2vec2_forward.12}
  #allocation0 [shape = 'u32[]', space=smem, size = 0x4, offset = 0x4, fixed_abs, tag = 'smem constant byte address 0x4 - core index']
  #allocation1 [shape = 'u32[144,128]{1,0:T(1,128)}', space=vmem, size = 0x12000, scoped, tag = 'internal scratch']
  %s0 = inlined_call_operand.vmem [shape: bf16[2,96,49], index: 0, kind: input, shape index: {}]
  %s1 = inlined_call_operand.vmem [shape: bf16[32,96], index: 1, kind: input, shape index: {}]
  %s2 = inlined_call_operand.vmem [shape: f32[2,32,49], index: 2, kind: output, shape index: {}]
  %s3 = sld [smem:[#allocation0]]
  $region41: #{wav2vec2_forward.12} parent=0
    _
  %s5 = ssub.s32 1, %s3
  %s6 = scalar_select 0, %s5, %s3
  loop: start=0, step=1, limit=4
  $region2: #{wav2vec2_forward.12} parent=0 // loop_pre_header
    _
  $region3: #{wav2vec2_forward.12} parent=0 // loop_header
    %s8 = sphi 0, %s12
    %p9 = scmp.ge.s32.totalorder %s8, 4
    %s18 = sphi 0, %s20
    %s21 = sphi 0, %s18
    %s22 = sphi 0, %s21
    %s38 = sphi 0, %s22
    %s42 = sphi 0, %s42
    %s44 = sphi 0, %s42
    %s45 = sphi 0, %s44
    %s59 = sphi 0, %s45
    %s65 = sphi 0, %s67
    %s68 = sphi 0, %s65
    %s69 = sphi 0, %s68
    %s85 = sphi 0, %s69
  $region4: #{wav2vec2_forward.12} parent=0 // loop_header_branch
    %11 = sbr.rel (%p9) target = $region8
  $region5: #{wav2vec2_forward.12} parent=0 // loop_body
    %s13 = ssub.s32 %s8, 1
    %s14 = ssub.s32 %s8, 2
    %s15 = sadd.s32 %s8, 1
    %s16 = ssub.s32 %s8, %s15
    %p17 = scmp.eq.s32.totalorder %s16, 0
    %s19 = sadd.s32 %s18, 1
    %s20 = scalar_select %p17, %s18, %s19
    %p23 = pneg %p17
    %p24 = scmp.eq.s32.totalorder %s8, 1
    %p25 = por %p23, %p24
    %p26 = scmp.ne.s32.totalorder %s18, %s21
    %p27 = scmp.eq.s32.totalorder %s8, 0
    %p28 = por %p26, %p27
    %p29 = scmp.ne.s32.totalorder %s18, %s21
    %p30 = scmp.eq.s32.totalorder %s13, 1
    %p31 = por %p29, %p30
    %p32 = scmp.ne.s32.totalorder %s21, %s22
    %p33 = scmp.eq.s32.totalorder %s13, 0
    %p34 = por %p32, %p33
    %p35 = scmp.ne.s32.totalorder %s21, %s22
    %p36 = scmp.eq.s32.totalorder %s14, 1
    %p37 = por %p35, %p36
    %p39 = scmp.ne.s32.totalorder %s22, %s38
    %p40 = scmp.eq.s32.totalorder %s14, 0
    %p41 = por %p39, %p40
    %s43 = sadd.s32 %s42, 1
    %p46 = scmp.eq.s32.totalorder %s8, 1
    %p47 = scmp.ne.s32.totalorder %s42, %s44
    %p48 = scmp.eq.s32.totalorder %s8, 0
    %p49 = por %p47, %p48
    %p50 = scmp.ne.s32.totalorder %s42, %s44
    %p51 = scmp.eq.s32.totalorder %s13, 1
    %p52 = por %p50, %p51
    %p53 = scmp.ne.s32.totalorder %s44, %s45
    %p54 = scmp.eq.s32.totalorder %s13, 0
    %p55 = por %p53, %p54
    %p56 = scmp.ne.s32.totalorder %s44, %s45
    %p57 = scmp.eq.s32.totalorder %s14, 1
    %p58 = por %p56, %p57
    %p60 = scmp.ne.s32.totalorder %s45, %s59
    %p61 = scmp.eq.s32.totalorder %s14, 0
    %p62 = por %p60, %p61
    %s63 = ssub.s32 %s8, %s15
    %p64 = scmp.eq.s32.totalorder %s63, 0
    %s66 = sadd.s32 %s65, 1
    %s67 = scalar_select %p64, %s65, %s66
    %p70 = pneg %p64
    %p71 = scmp.eq.s32.totalorder %s8, 1
    %p72 = por %p70, %p71
    %p73 = scmp.ne.s32.totalorder %s65, %s68
    %p74 = scmp.eq.s32.totalorder %s8, 0
    %p75 = por %p73, %p74
    %p76 = scmp.ne.s32.totalorder %s65, %s68
    %p77 = scmp.eq.s32.totalorder %s13, 1
    %p78 = por %p76, %p77
    %p79 = scmp.ne.s32.totalorder %s68, %s69
    %p80 = scmp.eq.s32.totalorder %s13, 0
    %p81 = por %p79, %p80
    %p82 = scmp.ne.s32.totalorder %s68, %s69
    %p83 = scmp.eq.s32.totalorder %s14, 1
    %p84 = por %p82, %p83
    %p86 = scmp.ne.s32.totalorder %s69, %s85
    %p87 = scmp.eq.s32.totalorder %s14, 0
    %p88 = por %p86, %p87
    %p89 = scmp.le.s32.totalorder 1, %s8
    %p90 = scmp.lt.s32.totalorder %s8, 3
    %p91 = pnand %p89, %p90
    %p92 = pneg %p91
    // Predicated region
    $region9: #{wav2vec2_forward.12} parent=5 // pred_check
      _
    $region10: #{wav2vec2_forward.12} parent=5 // pred_check_branch
      %94 = sbr.rel (%p91) target = $region12
    $region11: #{wav2vec2_forward.12} parent=5 // pred_region
      %s95 = ssub.s32 %s8, 1
      // Predicated region
      $region13: #{wav2vec2_forward.12} parent=11 // pred_check
        %p96 = pneg %p55
      $region14: #{wav2vec2_forward.12} parent=11 // pred_check_branch
        %98 = sbr.rel (%p96) target = $region16
      $region15: #{wav2vec2_forward.12} parent=11 // pred_region
        _
      $region16: #{wav2vec2_forward.12} parent=11 // pred_fallthru
        _
    $region12: #{wav2vec2_forward.12} parent=5 // pred_fallthru
      _
    %p99 = scmp.lt.s32.totalorder %s8, 2
    // Predicated region
    $region17: #{wav2vec2_forward.12} parent=5 // pred_check
      %p100 = pneg %p99
    $region18: #{wav2vec2_forward.12} parent=5 // pred_check_branch
      %102 = sbr.rel (%p100) target = $region20
    $region19: #{wav2vec2_forward.12} parent=5 // pred_region
      // Predicated region
      $region21: #{wav2vec2_forward.12} parent=19 // pred_check
        %p103 = pneg %p28
      $region22: #{wav2vec2_forward.12} parent=19 // pred_check_branch
        %105 = sbr.rel (%p103) target = $region24
      $region23: #{wav2vec2_forward.12} parent=19 // pred_region
        %p106 = scmp.lt.s32.totalorder %s8, 1
        %s107 = scalar_select %p106, %s8, 1
        %s108 = smul.addr %s107, 12
        %s109 = smul.addr %s108, 4
        %s110 = scalar_lea.vmem %s0, %s109
      $region24: #{wav2vec2_forward.12} parent=19 // pred_fallthru
        _
    $region20: #{wav2vec2_forward.12} parent=5 // pred_fallthru
      _
    %p111 = scmp.le.s32.totalorder 1, %s8
    %p112 = scmp.lt.s32.totalorder %s8, 3
    %p113 = pnand %p111, %p112
    %p114 = pneg %p113
    // Predicated region
    $region25: #{wav2vec2_forward.12} parent=5 // pred_check
      _
    $region26: #{wav2vec2_forward.12} parent=5 // pred_check_branch
      %116 = sbr.rel (%p113) target = $region28
    $region27: #{wav2vec2_forward.12} parent=5 // pred_region
      %s117 = ssub.s32 %s8, 1
      %p118 = scmp.lt.s32.totalorder %s13, 1
      %s119 = scalar_select %p118, %s13, 1
      %s120 = smul.addr %s119, 12
      %s121 = smul.addr %s120, 4
      %s122 = scalar_lea.vmem %s0, %s121
      %p123 = pneg %p34
      %p124 = pneg %p31
      %p125 = pneg %p55
      %p126 = pneg %p52
      %p127 = pneg %p81
      %p128 = pneg %p78
      %p129 = scmp.lt.s32.totalorder %s13, 1
      %s130 = scalar_select %p129, %s13, 1
      %s131 = smul.addr %s130, 4
      %s132 = smul.addr %s131, 8
      %s133 = scalar_lea.vmem %s2, %s132
      %p134 = scmp.lt.s32.totalorder %s13, 1
      %s135 = scalar_select %p134, %s13, 1
      %s136 = smul.addr %s135, 12
      %s137 = smul.addr %s136, 4
      %s138 = scalar_lea.vmem %s0, %s137
      %p139 = scmp.lt.s32.totalorder %s13, 1
      %s140 = scalar_select %p139, %s13, 1
      %s141 = smul.addr %s140, 4
      %s142 = smul.addr %s141, 8
      %s143 = scalar_lea.vmem %s2, %s142
      %v145 = vld [vmem:[%s1] sm:$0xf]
      %v146 = vld [vmem:[%s1 + $0x4] sm:$0xf]
      %v147 = vld [vmem:[%s1 + $0x8] sm:$0xf]
      %v148 = vld [vmem:[%s1 + $0xc] sm:$0xf]
      %v149 = vld [vmem:[%s138] sm:$0xf]
      %v150 = vld [vmem:[%s138 + $0x4] sm:$0xf]
      %v151 = vld [vmem:[%s138 + $0x8] sm:$0xf]
      %v152 = vld [vmem:[%s138 + $0xc] sm:$0xf]
      %v153 = vld [vmem:[%s138 + $0x10] sm:$0xf]
      %v154 = vld [vmem:[%s138 + $0x14] sm:$0xf]
      %v155 = vld [vmem:[%s138 + $0x18] sm:$0xf]
      %v156 = vld [vmem:[%s138 + $0x1c] sm:$0xf]
      %v157 = vld [vmem:[%s138 + $0x20] sm:$0xf]
      %v158 = vld [vmem:[%s138 + $0x24] sm:$0xf]
      %v159 = vld [vmem:[%s138 + $0x28] sm:$0xf]
      %v160 = vld [vmem:[%s138 + $0x2c] sm:$0xf]
      %v165 = vunpack.c.l.b16 %v145
      %v166 = vunpack.c.l.b16 %v146
      %v167 = vunpack.c.l.b16 %v147
      %v168 = vunpack.c.l.b16 %v148
      %v169 = vpack.c.b16 %v166, %v165
      %v170 = vpack.c.b16 %v168, %v167
      %v183 = vunpack.c.l.b16 %v149
      %v184 = vunpack.c.l.b16 %v150
      %v185 = vunpack.c.l.b16 %v151
      %v186 = vunpack.c.l.b16 %v152
      %v187 = vunpack.c.l.b16 %v153
      %v188 = vunpack.c.l.b16 %v154
      %v189 = vunpack.c.l.b16 %v155
      %v190 = vunpack.c.l.b16 %v156
      %v191 = vunpack.c.l.b16 %v157
      %v192 = vunpack.c.l.b16 %v158
      %v193 = vunpack.c.l.b16 %v159
      %v194 = vunpack.c.l.b16 %v160
      %v195 = vpack.c.b16 %v184, %v183
      %v196 = vpack.c.b16 %v186, %v185
      %v197 = vpack.c.b16 %v188, %v187
      %v198 = vpack.c.b16 %v190, %v189
      %v199 = vpack.c.b16 %v192, %v191
      %v200 = vpack.c.b16 %v194, %v193
      %vm207 = vcmask 785408
      %v209 = vsel %vm207, %v169, 0
      %v212 = vsel %vm207, %v170, 0
      %214 = vmatprep.subr.bf16.mxu0 0
      %215 = vmatpush1.bf16.msra.mxu0 0
      %216 = vmatprep.subr.bf16.mxu0 0
      %217 = vmatpush1.bf16.msra.mxu0 0
      %218 = vmatprep.subr.bf16.mxu0 0
      %219 = vmatpush1.bf16.msra.mxu0 %v200
      %220 = vmatprep.subr.bf16.mxu0 0
      %221 = vmatpush1.bf16.msra.mxu0 %v199
      %222 = vmatprep.subr.bf16.mxu0 0
      %223 = vmatpush1.bf16.msra.mxu0 %v198
      %224 = vmatprep.subr.bf16.mxu0 0
      %225 = vmatpush1.bf16.msra.mxu0 %v197
      %226 = vmatprep.subr.bf16.mxu0 0
      %227 = vmatpush1.bf16.msra.mxu0 %v196
      %228 = vmatprep.subr.bf16.mxu0 0
      %229 = vmatpush1.bf16.msra.mxu0 %v195
      %230 = vmatprep.subr.bf16.mxu0 0
      %231 = vmatpush2.bf16.msra.mxu0 0
      %232 = vmatprep.subr.bf16.mxu0 0
      %233 = vmatpush2.bf16.msra.mxu0 0
      %234 = vmatprep.subr.bf16.mxu0 0
      %235 = vmatpush2.bf16.msra.mxu0 0
      %236 = vmatprep.subr.bf16.mxu0 0
      %237 = vmatpush2.bf16.msra.mxu0 0
      %238 = vmatprep.subr.bf16.mxu0 0
      %239 = vmatpush2.bf16.msra.mxu0 0
      %240 = vmatprep.subr.bf16.mxu0 0
      %241 = vmatpush2.bf16.msra.mxu0 0
      %242 = vmatprep.subr.bf16.mxu0 0
      %243 = vmatpush2.bf16.msra.mxu0 0
      %244 = vmatprep.subr.bf16.mxu0 0
      %245 = vmatpush2.bf16.msra.mxu0 0
      %246 = vmatprep.mubr.bf16.mxu0 0
      %247 = vmatmul.mubr.bf16.gmra.mxu0 %v209
      %v248 = vpop.f32.mrf.mxu0
      %v249 = vadd.f32 0.0, %v248
      %v250 = vpop.f32.mrf.mxu0
      %v251 = vpop.f32.mrf.mxu0
      %v252 = vadd.f32 0.0, %v251
      %v253 = vpop.f32.mrf.mxu0
      %254 = vmatprep.mubr.bf16.mxu0 0
      %255 = vmatmul.mubr.bf16.gmra.mxu0 %v212
      %v256 = vpop.f32.mrf.mxu0
      %v257 = vadd.f32 0.0, %v256
      %v258 = vpop.f32.mrf.mxu0
      %v259 = vpop.f32.mrf.mxu0
      %v260 = vadd.f32 0.0, %v259
      %v261 = vpop.f32.mrf.mxu0
      %262 = vdwg.mxu0
      %v263 = vmul.f32 %v249, 0.5
      %v264 = vmul.f32 %v252, 0.5
      %v265 = vmul.f32 %v257, 0.5
      %v266 = vmul.f32 %v260, 0.5
      %v267 = vmul.f32 %v249, 0.044715
      %v268 = vmul.f32 %v252, 0.044715
      %v269 = vmul.f32 %v257, 0.044715
      %v270 = vmul.f32 %v260, 0.044715
      %v271 = vmul.f32 %v267, %v249
      %v272 = vmul.f32 %v268, %v252
      %v273 = vmul.f32 %v269, %v257
      %v274 = vmul.f32 %v270, %v260
      %v275 = vmul.f32 %v271, %v249
      %v276 = vmul.f32 %v272, %v252
      %v277 = vmul.f32 %v273, %v257
      %v278 = vmul.f32 %v274, %v260
      %v279 = vadd.f32 %v249, %v275
      %v280 = vadd.f32 %v252, %v276
      %v281 = vadd.f32 %v257, %v277
      %v282 = vadd.f32 %v260, %v278
      %v283 = vmul.f32 %v279, 0.7978846
      %v284 = vmul.f32 %v280, 0.7978846
      %v285 = vmul.f32 %v281, 0.7978846
      %v286 = vmul.f32 %v282, 0.7978846
      %v287 = vtanh.pop %v283
      %v288 = vtanh.pop %v284
      %v289 = vtanh.pop %v285
      %v290 = vtanh.pop %v286
      %v291 = vadd.f32 %v287, 1.0
      %v292 = vadd.f32 %v288, 1.0
      %v293 = vadd.f32 %v289, 1.0
      %v294 = vadd.f32 %v290, 1.0
      %v295 = vmul.f32 %v263, %v291
      %v296 = vmul.f32 %v264, %v292
      %v297 = vmul.f32 %v265, %v293
      %v298 = vmul.f32 %v266, %v294
      %vm299 = vcmask 400384
      %300 = vst.msk [vmem:[%s143] sm:$0xff] %vm299, %v295
      %301 = vst.msk [vmem:[%s143 + $0x8] sm:$0xff] %vm299, %v296
      %302 = vst.msk [vmem:[%s143 + $0x10] sm:$0xff] %vm299, %v297
      %303 = vst.msk [vmem:[%s143 + $0x18] sm:$0xff] %vm299, %v298
      %p304 = scmp.lt.s32.totalorder %s13, 1
      %s305 = scalar_select %p304, %s13, 1
      %s306 = smul.addr %s305, 4
      %s307 = smul.addr %s306, 8
      %s308 = scalar_lea.vmem %s2, %s307
      // Predicated region
      $region29: #{wav2vec2_forward.12} parent=27 // pred_check
        %p309 = pneg %p78
      $region30: #{wav2vec2_forward.12} parent=27 // pred_check_branch
        %311 = sbr.rel (%p309) target = $region32
      $region31: #{wav2vec2_forward.12} parent=27 // pred_region
        _
      $region32: #{wav2vec2_forward.12} parent=27 // pred_fallthru
        _
    $region28: #{wav2vec2_forward.12} parent=5 // pred_fallthru
      _
    %p312 = scmp.le.s32.totalorder 2, %s8
    // Predicated region
    $region33: #{wav2vec2_forward.12} parent=5 // pred_check
      %p313 = pneg %p312
    $region34: #{wav2vec2_forward.12} parent=5 // pred_check_branch
      %315 = sbr.rel (%p313) target = $region36
    $region35: #{wav2vec2_forward.12} parent=5 // pred_region
      %s316 = ssub.s32 %s8, 2
      // Predicated region
      $region37: #{wav2vec2_forward.12} parent=35 // pred_check
        %p317 = pneg %p84
      $region38: #{wav2vec2_forward.12} parent=35 // pred_check_branch
        %319 = sbr.rel (%p317) target = $region40
      $region39: #{wav2vec2_forward.12} parent=35 // pred_region
        %p320 = scmp.lt.s32.totalorder %s14, 1
        %s321 = scalar_select %p320, %s14, 1
        %s322 = smul.addr %s321, 4
        %s323 = smul.addr %s322, 8
        %s324 = scalar_lea.vmem %s2, %s323
      $region40: #{wav2vec2_forward.12} parent=35 // pred_fallthru
        _
    $region36: #{wav2vec2_forward.12} parent=5 // pred_fallthru
      _
  $region6: #{wav2vec2_forward.12} parent=0 // loop_footer
    %s12 = sadd.s32 1, %s8
  $region7: #{wav2vec2_forward.12} parent=0 // loop_footer_branch
    %7 = sbr.rel target = $region3
  $region8: #{wav2vec2_forward.12} parent=0 // loop_exit
    _

// kernel: wav2vec2_forward.13
$region0: #{wav2vec2_forward.13}
  #allocation0 [shape = 'u32[]', space=smem, size = 0x4, offset = 0x4, fixed_abs, tag = 'smem constant byte address 0x4 - core index']
  #allocation1 [shape = 'u32[144,128]{1,0:T(1,128)}', space=vmem, size = 0x12000, scoped, tag = 'internal scratch']
  %s0 = inlined_call_operand.vmem [shape: bf16[2,96,24], index: 0, kind: input, shape index: {}]
  %s1 = inlined_call_operand.vmem [shape: bf16[32,96], index: 1, kind: input, shape index: {}]
  %s2 = inlined_call_operand.vmem [shape: f32[2,32,24], index: 2, kind: output, shape index: {}]
  %s3 = sld [smem:[#allocation0]]
  $region41: #{wav2vec2_forward.13} parent=0
    _
  %s5 = ssub.s32 1, %s3
  %s6 = scalar_select 0, %s5, %s3
  loop: start=0, step=1, limit=4
  $region2: #{wav2vec2_forward.13} parent=0 // loop_pre_header
    _
  $region3: #{wav2vec2_forward.13} parent=0 // loop_header
    %s8 = sphi 0, %s12
    %p9 = scmp.ge.s32.totalorder %s8, 4
    %s18 = sphi 0, %s20
    %s21 = sphi 0, %s18
    %s22 = sphi 0, %s21
    %s38 = sphi 0, %s22
    %s42 = sphi 0, %s42
    %s44 = sphi 0, %s42
    %s45 = sphi 0, %s44
    %s59 = sphi 0, %s45
    %s65 = sphi 0, %s67
    %s68 = sphi 0, %s65
    %s69 = sphi 0, %s68
    %s85 = sphi 0, %s69
  $region4: #{wav2vec2_forward.13} parent=0 // loop_header_branch
    %11 = sbr.rel (%p9) target = $region8
  $region5: #{wav2vec2_forward.13} parent=0 // loop_body
    %s13 = ssub.s32 %s8, 1
    %s14 = ssub.s32 %s8, 2
    %s15 = sadd.s32 %s8, 1
    %s16 = ssub.s32 %s8, %s15
    %p17 = scmp.eq.s32.totalorder %s16, 0
    %s19 = sadd.s32 %s18, 1
    %s20 = scalar_select %p17, %s18, %s19
    %p23 = pneg %p17
    %p24 = scmp.eq.s32.totalorder %s8, 1
    %p25 = por %p23, %p24
    %p26 = scmp.ne.s32.totalorder %s18, %s21
    %p27 = scmp.eq.s32.totalorder %s8, 0
    %p28 = por %p26, %p27
    %p29 = scmp.ne.s32.totalorder %s18, %s21
    %p30 = scmp.eq.s32.totalorder %s13, 1
    %p31 = por %p29, %p30
    %p32 = scmp.ne.s32.totalorder %s21, %s22
    %p33 = scmp.eq.s32.totalorder %s13, 0
    %p34 = por %p32, %p33
    %p35 = scmp.ne.s32.totalorder %s21, %s22
    %p36 = scmp.eq.s32.totalorder %s14, 1
    %p37 = por %p35, %p36
    %p39 = scmp.ne.s32.totalorder %s22, %s38
    %p40 = scmp.eq.s32.totalorder %s14, 0
    %p41 = por %p39, %p40
    %s43 = sadd.s32 %s42, 1
    %p46 = scmp.eq.s32.totalorder %s8, 1
    %p47 = scmp.ne.s32.totalorder %s42, %s44
    %p48 = scmp.eq.s32.totalorder %s8, 0
    %p49 = por %p47, %p48
    %p50 = scmp.ne.s32.totalorder %s42, %s44
    %p51 = scmp.eq.s32.totalorder %s13, 1
    %p52 = por %p50, %p51
    %p53 = scmp.ne.s32.totalorder %s44, %s45
    %p54 = scmp.eq.s32.totalorder %s13, 0
    %p55 = por %p53, %p54
    %p56 = scmp.ne.s32.totalorder %s44, %s45
    %p57 = scmp.eq.s32.totalorder %s14, 1
    %p58 = por %p56, %p57
    %p60 = scmp.ne.s32.totalorder %s45, %s59
    %p61 = scmp.eq.s32.totalorder %s14, 0
    %p62 = por %p60, %p61
    %s63 = ssub.s32 %s8, %s15
    %p64 = scmp.eq.s32.totalorder %s63, 0
    %s66 = sadd.s32 %s65, 1
    %s67 = scalar_select %p64, %s65, %s66
    %p70 = pneg %p64
    %p71 = scmp.eq.s32.totalorder %s8, 1
    %p72 = por %p70, %p71
    %p73 = scmp.ne.s32.totalorder %s65, %s68
    %p74 = scmp.eq.s32.totalorder %s8, 0
    %p75 = por %p73, %p74
    %p76 = scmp.ne.s32.totalorder %s65, %s68
    %p77 = scmp.eq.s32.totalorder %s13, 1
    %p78 = por %p76, %p77
    %p79 = scmp.ne.s32.totalorder %s68, %s69
    %p80 = scmp.eq.s32.totalorder %s13, 0
    %p81 = por %p79, %p80
    %p82 = scmp.ne.s32.totalorder %s68, %s69
    %p83 = scmp.eq.s32.totalorder %s14, 1
    %p84 = por %p82, %p83
    %p86 = scmp.ne.s32.totalorder %s69, %s85
    %p87 = scmp.eq.s32.totalorder %s14, 0
    %p88 = por %p86, %p87
    %p89 = scmp.le.s32.totalorder 1, %s8
    %p90 = scmp.lt.s32.totalorder %s8, 3
    %p91 = pnand %p89, %p90
    %p92 = pneg %p91
    // Predicated region
    $region9: #{wav2vec2_forward.13} parent=5 // pred_check
      _
    $region10: #{wav2vec2_forward.13} parent=5 // pred_check_branch
      %94 = sbr.rel (%p91) target = $region12
    $region11: #{wav2vec2_forward.13} parent=5 // pred_region
      %s95 = ssub.s32 %s8, 1
      // Predicated region
      $region13: #{wav2vec2_forward.13} parent=11 // pred_check
        %p96 = pneg %p55
      $region14: #{wav2vec2_forward.13} parent=11 // pred_check_branch
        %98 = sbr.rel (%p96) target = $region16
      $region15: #{wav2vec2_forward.13} parent=11 // pred_region
        _
      $region16: #{wav2vec2_forward.13} parent=11 // pred_fallthru
        _
    $region12: #{wav2vec2_forward.13} parent=5 // pred_fallthru
      _
    %p99 = scmp.lt.s32.totalorder %s8, 2
    // Predicated region
    $region17: #{wav2vec2_forward.13} parent=5 // pred_check
      %p100 = pneg %p99
    $region18: #{wav2vec2_forward.13} parent=5 // pred_check_branch
      %102 = sbr.rel (%p100) target = $region20
    $region19: #{wav2vec2_forward.13} parent=5 // pred_region
      // Predicated region
      $region21: #{wav2vec2_forward.13} parent=19 // pred_check
        %p103 = pneg %p28
      $region22: #{wav2vec2_forward.13} parent=19 // pred_check_branch
        %105 = sbr.rel (%p103) target = $region24
      $region23: #{wav2vec2_forward.13} parent=19 // pred_region
        %p106 = scmp.lt.s32.totalorder %s8, 1
        %s107 = scalar_select %p106, %s8, 1
        %s108 = smul.addr %s107, 12
        %s109 = smul.addr %s108, 4
        %s110 = scalar_lea.vmem %s0, %s109
      $region24: #{wav2vec2_forward.13} parent=19 // pred_fallthru
        _
    $region20: #{wav2vec2_forward.13} parent=5 // pred_fallthru
      _
    %p111 = scmp.le.s32.totalorder 1, %s8
    %p112 = scmp.lt.s32.totalorder %s8, 3
    %p113 = pnand %p111, %p112
    %p114 = pneg %p113
    // Predicated region
    $region25: #{wav2vec2_forward.13} parent=5 // pred_check
      _
    $region26: #{wav2vec2_forward.13} parent=5 // pred_check_branch
      %116 = sbr.rel (%p113) target = $region28
    $region27: #{wav2vec2_forward.13} parent=5 // pred_region
      %s117 = ssub.s32 %s8, 1
      %p118 = scmp.lt.s32.totalorder %s13, 1
      %s119 = scalar_select %p118, %s13, 1
      %s120 = smul.addr %s119, 12
      %s121 = smul.addr %s120, 4
      %s122 = scalar_lea.vmem %s0, %s121
      %p123 = pneg %p34
      %p124 = pneg %p31
      %p125 = pneg %p55
      %p126 = pneg %p52
      %p127 = pneg %p81
      %p128 = pneg %p78
      %p129 = scmp.lt.s32.totalorder %s13, 1
      %s130 = scalar_select %p129, %s13, 1
      %s131 = smul.addr %s130, 4
      %s132 = smul.addr %s131, 8
      %s133 = scalar_lea.vmem %s2, %s132
      %p134 = scmp.lt.s32.totalorder %s13, 1
      %s135 = scalar_select %p134, %s13, 1
      %s136 = smul.addr %s135, 12
      %s137 = smul.addr %s136, 4
      %s138 = scalar_lea.vmem %s0, %s137
      %p139 = scmp.lt.s32.totalorder %s13, 1
      %s140 = scalar_select %p139, %s13, 1
      %s141 = smul.addr %s140, 4
      %s142 = smul.addr %s141, 8
      %s143 = scalar_lea.vmem %s2, %s142
      %v145 = vld [vmem:[%s1] sm:$0xf]
      %v146 = vld [vmem:[%s1 + $0x4] sm:$0xf]
      %v147 = vld [vmem:[%s1 + $0x8] sm:$0xf]
      %v148 = vld [vmem:[%s1 + $0xc] sm:$0xf]
      %v149 = vld [vmem:[%s138] sm:$0xf]
      %v150 = vld [vmem:[%s138 + $0x4] sm:$0xf]
      %v151 = vld [vmem:[%s138 + $0x8] sm:$0xf]
      %v152 = vld [vmem:[%s138 + $0xc] sm:$0xf]
      %v153 = vld [vmem:[%s138 + $0x10] sm:$0xf]
      %v154 = vld [vmem:[%s138 + $0x14] sm:$0xf]
      %v155 = vld [vmem:[%s138 + $0x18] sm:$0xf]
      %v156 = vld [vmem:[%s138 + $0x1c] sm:$0xf]
      %v157 = vld [vmem:[%s138 + $0x20] sm:$0xf]
      %v158 = vld [vmem:[%s138 + $0x24] sm:$0xf]
      %v159 = vld [vmem:[%s138 + $0x28] sm:$0xf]
      %v160 = vld [vmem:[%s138 + $0x2c] sm:$0xf]
      %v165 = vunpack.c.l.b16 %v145
      %v166 = vunpack.c.l.b16 %v146
      %v167 = vunpack.c.l.b16 %v147
      %v168 = vunpack.c.l.b16 %v148
      %v169 = vpack.c.b16 %v166, %v165
      %v170 = vpack.c.b16 %v168, %v167
      %v183 = vunpack.c.l.b16 %v149
      %v184 = vunpack.c.l.b16 %v150
      %v185 = vunpack.c.l.b16 %v151
      %v186 = vunpack.c.l.b16 %v152
      %v187 = vunpack.c.l.b16 %v153
      %v188 = vunpack.c.l.b16 %v154
      %v189 = vunpack.c.l.b16 %v155
      %v190 = vunpack.c.l.b16 %v156
      %v191 = vunpack.c.l.b16 %v157
      %v192 = vunpack.c.l.b16 %v158
      %v193 = vunpack.c.l.b16 %v159
      %v194 = vunpack.c.l.b16 %v160
      %v195 = vpack.c.b16 %v184, %v183
      %v196 = vpack.c.b16 %v186, %v185
      %v197 = vpack.c.b16 %v188, %v187
      %v198 = vpack.c.b16 %v190, %v189
      %v199 = vpack.c.b16 %v192, %v191
      %v200 = vpack.c.b16 %v194, %v193
      %vm207 = vcmask 785408
      %v209 = vsel %vm207, %v169, 0
      %v212 = vsel %vm207, %v170, 0
      %214 = vmatprep.subr.bf16.mxu0 0
      %215 = vmatpush1.bf16.msra.mxu0 0
      %216 = vmatprep.subr.bf16.mxu0 0
      %217 = vmatpush1.bf16.msra.mxu0 0
      %218 = vmatprep.subr.bf16.mxu0 0
      %219 = vmatpush1.bf16.msra.mxu0 %v200
      %220 = vmatprep.subr.bf16.mxu0 0
      %221 = vmatpush1.bf16.msra.mxu0 %v199
      %222 = vmatprep.subr.bf16.mxu0 0
      %223 = vmatpush1.bf16.msra.mxu0 %v198
      %224 = vmatprep.subr.bf16.mxu0 0
      %225 = vmatpush1.bf16.msra.mxu0 %v197
      %226 = vmatprep.subr.bf16.mxu0 0
      %227 = vmatpush1.bf16.msra.mxu0 %v196
      %228 = vmatprep.subr.bf16.mxu0 0
      %229 = vmatpush1.bf16.msra.mxu0 %v195
      %230 = vmatprep.subr.bf16.mxu0 0
      %231 = vmatpush2.bf16.msra.mxu0 0
      %232 = vmatprep.subr.bf16.mxu0 0
      %233 = vmatpush2.bf16.msra.mxu0 0
      %234 = vmatprep.subr.bf16.mxu0 0
      %235 = vmatpush2.bf16.msra.mxu0 0
      %236 = vmatprep.subr.bf16.mxu0 0
      %237 = vmatpush2.bf16.msra.mxu0 0
      %238 = vmatprep.subr.bf16.mxu0 0
      %239 = vmatpush2.bf16.msra.mxu0 0
      %240 = vmatprep.subr.bf16.mxu0 0
      %241 = vmatpush2.bf16.msra.mxu0 0
      %242 = vmatprep.subr.bf16.mxu0 0
      %243 = vmatpush2.bf16.msra.mxu0 0
      %244 = vmatprep.subr.bf16.mxu0 0
      %245 = vmatpush2.bf16.msra.mxu0 0
      %246 = vmatprep.mubr.bf16.mxu0 0
      %247 = vmatmul.mubr.bf16.gmra.mxu0 %v209
      %v248 = vpop.f32.mrf.mxu0
      %v249 = vadd.f32 0.0, %v248
      %v250 = vpop.f32.mrf.mxu0
      %v251 = vpop.f32.mrf.mxu0
      %v252 = vadd.f32 0.0, %v251
      %v253 = vpop.f32.mrf.mxu0
      %254 = vmatprep.mubr.bf16.mxu0 0
      %255 = vmatmul.mubr.bf16.gmra.mxu0 %v212
      %v256 = vpop.f32.mrf.mxu0
      %v257 = vadd.f32 0.0, %v256
      %v258 = vpop.f32.mrf.mxu0
      %v259 = vpop.f32.mrf.mxu0
      %v260 = vadd.f32 0.0, %v259
      %v261 = vpop.f32.mrf.mxu0
      %262 = vdwg.mxu0
      %v263 = vmul.f32 %v249, 0.5
      %v264 = vmul.f32 %v252, 0.5
      %v265 = vmul.f32 %v257, 0.5
      %v266 = vmul.f32 %v260, 0.5
      %v267 = vmul.f32 %v249, 0.044715
      %v268 = vmul.f32 %v252, 0.044715
      %v269 = vmul.f32 %v257, 0.044715
      %v270 = vmul.f32 %v260, 0.044715
      %v271 = vmul.f32 %v267, %v249
      %v272 = vmul.f32 %v268, %v252
      %v273 = vmul.f32 %v269, %v257
      %v274 = vmul.f32 %v270, %v260
      %v275 = vmul.f32 %v271, %v249
      %v276 = vmul.f32 %v272, %v252
      %v277 = vmul.f32 %v273, %v257
      %v278 = vmul.f32 %v274, %v260
      %v279 = vadd.f32 %v249, %v275
      %v280 = vadd.f32 %v252, %v276
      %v281 = vadd.f32 %v257, %v277
      %v282 = vadd.f32 %v260, %v278
      %v283 = vmul.f32 %v279, 0.7978846
      %v284 = vmul.f32 %v280, 0.7978846
      %v285 = vmul.f32 %v281, 0.7978846
      %v286 = vmul.f32 %v282, 0.7978846
      %v287 = vtanh.pop %v283
      %v288 = vtanh.pop %v284
      %v289 = vtanh.pop %v285
      %v290 = vtanh.pop %v286
      %v291 = vadd.f32 %v287, 1.0
      %v292 = vadd.f32 %v288, 1.0
      %v293 = vadd.f32 %v289, 1.0
      %v294 = vadd.f32 %v290, 1.0
      %v295 = vmul.f32 %v263, %v291
      %v296 = vmul.f32 %v264, %v292
      %v297 = vmul.f32 %v265, %v293
      %v298 = vmul.f32 %v266, %v294
      %vm299 = vcmask 195584
      %300 = vst.msk [vmem:[%s143] sm:$0xff] %vm299, %v295
      %301 = vst.msk [vmem:[%s143 + $0x8] sm:$0xff] %vm299, %v296
      %302 = vst.msk [vmem:[%s143 + $0x10] sm:$0xff] %vm299, %v297
      %303 = vst.msk [vmem:[%s143 + $0x18] sm:$0xff] %vm299, %v298
      %p304 = scmp.lt.s32.totalorder %s13, 1
      %s305 = scalar_select %p304, %s13, 1
      %s306 = smul.addr %s305, 4
      %s307 = smul.addr %s306, 8
      %s308 = scalar_lea.vmem %s2, %s307
      // Predicated region
      $region29: #{wav2vec2_forward.13} parent=27 // pred_check
        %p309 = pneg %p78
      $region30: #{wav2vec2_forward.13} parent=27 // pred_check_branch
        %311 = sbr.rel (%p309) target = $region32
      $region31: #{wav2vec2_forward.13} parent=27 // pred_region
        _
      $region32: #{wav2vec2_forward.13} parent=27 // pred_fallthru
        _
    $region28: #{wav2vec2_forward.13} parent=5 // pred_fallthru
      _
    %p312 = scmp.le.s32.totalorder 2, %s8
    // Predicated region
    $region33: #{wav2vec2_forward.13} parent=5 // pred_check
      %p313 = pneg %p312
    $region34: #{wav2vec2_forward.13} parent=5 // pred_check_branch
      %315 = sbr.rel (%p313) target = $region36
    $region35: #{wav2vec2_forward.13} parent=5 // pred_region
      %s316 = ssub.s32 %s8, 2
      // Predicated region
      $region37: #{wav2vec2_forward.13} parent=35 // pred_check
        %p317 = pneg %p84
      $region38: #{wav2vec2_forward.13} parent=35 // pred_check_branch
        %319 = sbr.rel (%p317) target = $region40
      $region39: #{wav2vec2_forward.13} parent=35 // pred_region
        %p320 = scmp.lt.s32.totalorder %s14, 1
        %s321 = scalar_select %p320, %s14, 1
        %s322 = smul.addr %s321, 4
        %s323 = smul.addr %s322, 8
        %s324 = scalar_lea.vmem %s2, %s323
      $region40: #{wav2vec2_forward.13} parent=35 // pred_fallthru
        _
    $region36: #{wav2vec2_forward.13} parent=5 // pred_fallthru
      _
  $region6: #{wav2vec2_forward.13} parent=0 // loop_footer
    %s12 = sadd.s32 1, %s8
  $region7: #{wav2vec2_forward.13} parent=0 // loop_footer_branch
    %7 = sbr.rel target = $region3
  $region8: #{wav2vec2_forward.13} parent=0 // loop_exit
    _

// kernel: wav2vec2_forward.14
$region0: #{wav2vec2_forward.14}
  #allocation0 [shape = 'u32[]', space=smem, size = 0x4, offset = 0x4, fixed_abs, tag = 'smem constant byte address 0x4 - core index']
  #allocation1 [shape = 'u32[144,128]{1,0:T(1,128)}', space=vmem, size = 0x12000, scoped, tag = 'internal scratch']
  %s0 = inlined_call_operand.vmem [shape: bf16[2,64,12], index: 0, kind: input, shape index: {}]
  %s1 = inlined_call_operand.vmem [shape: bf16[32,64], index: 1, kind: input, shape index: {}]
  %s2 = inlined_call_operand.vmem [shape: f32[2,32,12], index: 2, kind: output, shape index: {}]
  %s3 = sld [smem:[#allocation0]]
  $region41: #{wav2vec2_forward.14} parent=0
    _
  %s5 = ssub.s32 1, %s3
  %s6 = scalar_select 0, %s5, %s3
  loop: start=0, step=1, limit=4
  $region2: #{wav2vec2_forward.14} parent=0 // loop_pre_header
    _
  $region3: #{wav2vec2_forward.14} parent=0 // loop_header
    %s8 = sphi 0, %s12
    %p9 = scmp.ge.s32.totalorder %s8, 4
    %s18 = sphi 0, %s20
    %s21 = sphi 0, %s18
    %s22 = sphi 0, %s21
    %s38 = sphi 0, %s22
    %s42 = sphi 0, %s42
    %s44 = sphi 0, %s42
    %s45 = sphi 0, %s44
    %s59 = sphi 0, %s45
    %s65 = sphi 0, %s67
    %s68 = sphi 0, %s65
    %s69 = sphi 0, %s68
    %s85 = sphi 0, %s69
  $region4: #{wav2vec2_forward.14} parent=0 // loop_header_branch
    %11 = sbr.rel (%p9) target = $region8
  $region5: #{wav2vec2_forward.14} parent=0 // loop_body
    %s13 = ssub.s32 %s8, 1
    %s14 = ssub.s32 %s8, 2
    %s15 = sadd.s32 %s8, 1
    %s16 = ssub.s32 %s8, %s15
    %p17 = scmp.eq.s32.totalorder %s16, 0
    %s19 = sadd.s32 %s18, 1
    %s20 = scalar_select %p17, %s18, %s19
    %p23 = pneg %p17
    %p24 = scmp.eq.s32.totalorder %s8, 1
    %p25 = por %p23, %p24
    %p26 = scmp.ne.s32.totalorder %s18, %s21
    %p27 = scmp.eq.s32.totalorder %s8, 0
    %p28 = por %p26, %p27
    %p29 = scmp.ne.s32.totalorder %s18, %s21
    %p30 = scmp.eq.s32.totalorder %s13, 1
    %p31 = por %p29, %p30
    %p32 = scmp.ne.s32.totalorder %s21, %s22
    %p33 = scmp.eq.s32.totalorder %s13, 0
    %p34 = por %p32, %p33
    %p35 = scmp.ne.s32.totalorder %s21, %s22
    %p36 = scmp.eq.s32.totalorder %s14, 1
    %p37 = por %p35, %p36
    %p39 = scmp.ne.s32.totalorder %s22, %s38
    %p40 = scmp.eq.s32.totalorder %s14, 0
    %p41 = por %p39, %p40
    %s43 = sadd.s32 %s42, 1
    %p46 = scmp.eq.s32.totalorder %s8, 1
    %p47 = scmp.ne.s32.totalorder %s42, %s44
    %p48 = scmp.eq.s32.totalorder %s8, 0
    %p49 = por %p47, %p48
    %p50 = scmp.ne.s32.totalorder %s42, %s44
    %p51 = scmp.eq.s32.totalorder %s13, 1
    %p52 = por %p50, %p51
    %p53 = scmp.ne.s32.totalorder %s44, %s45
    %p54 = scmp.eq.s32.totalorder %s13, 0
    %p55 = por %p53, %p54
    %p56 = scmp.ne.s32.totalorder %s44, %s45
    %p57 = scmp.eq.s32.totalorder %s14, 1
    %p58 = por %p56, %p57
    %p60 = scmp.ne.s32.totalorder %s45, %s59
    %p61 = scmp.eq.s32.totalorder %s14, 0
    %p62 = por %p60, %p61
    %s63 = ssub.s32 %s8, %s15
    %p64 = scmp.eq.s32.totalorder %s63, 0
    %s66 = sadd.s32 %s65, 1
    %s67 = scalar_select %p64, %s65, %s66
    %p70 = pneg %p64
    %p71 = scmp.eq.s32.totalorder %s8, 1
    %p72 = por %p70, %p71
    %p73 = scmp.ne.s32.totalorder %s65, %s68
    %p74 = scmp.eq.s32.totalorder %s8, 0
    %p75 = por %p73, %p74
    %p76 = scmp.ne.s32.totalorder %s65, %s68
    %p77 = scmp.eq.s32.totalorder %s13, 1
    %p78 = por %p76, %p77
    %p79 = scmp.ne.s32.totalorder %s68, %s69
    %p80 = scmp.eq.s32.totalorder %s13, 0
    %p81 = por %p79, %p80
    %p82 = scmp.ne.s32.totalorder %s68, %s69
    %p83 = scmp.eq.s32.totalorder %s14, 1
    %p84 = por %p82, %p83
    %p86 = scmp.ne.s32.totalorder %s69, %s85
    %p87 = scmp.eq.s32.totalorder %s14, 0
    %p88 = por %p86, %p87
    %p89 = scmp.le.s32.totalorder 1, %s8
    %p90 = scmp.lt.s32.totalorder %s8, 3
    %p91 = pnand %p89, %p90
    %p92 = pneg %p91
    // Predicated region
    $region9: #{wav2vec2_forward.14} parent=5 // pred_check
      _
    $region10: #{wav2vec2_forward.14} parent=5 // pred_check_branch
      %94 = sbr.rel (%p91) target = $region12
    $region11: #{wav2vec2_forward.14} parent=5 // pred_region
      %s95 = ssub.s32 %s8, 1
      // Predicated region
      $region13: #{wav2vec2_forward.14} parent=11 // pred_check
        %p96 = pneg %p55
      $region14: #{wav2vec2_forward.14} parent=11 // pred_check_branch
        %98 = sbr.rel (%p96) target = $region16
      $region15: #{wav2vec2_forward.14} parent=11 // pred_region
        _
      $region16: #{wav2vec2_forward.14} parent=11 // pred_fallthru
        _
    $region12: #{wav2vec2_forward.14} parent=5 // pred_fallthru
      _
    %p99 = scmp.lt.s32.totalorder %s8, 2
    // Predicated region
    $region17: #{wav2vec2_forward.14} parent=5 // pred_check
      %p100 = pneg %p99
    $region18: #{wav2vec2_forward.14} parent=5 // pred_check_branch
      %102 = sbr.rel (%p100) target = $region20
    $region19: #{wav2vec2_forward.14} parent=5 // pred_region
      // Predicated region
      $region21: #{wav2vec2_forward.14} parent=19 // pred_check
        %p103 = pneg %p28
      $region22: #{wav2vec2_forward.14} parent=19 // pred_check_branch
        %105 = sbr.rel (%p103) target = $region24
      $region23: #{wav2vec2_forward.14} parent=19 // pred_region
        %p106 = scmp.lt.s32.totalorder %s8, 1
        %s107 = scalar_select %p106, %s8, 1
        %s108 = smul.addr %s107, 8
        %s109 = smul.addr %s108, 4
        %s110 = scalar_lea.vmem %s0, %s109
      $region24: #{wav2vec2_forward.14} parent=19 // pred_fallthru
        _
    $region20: #{wav2vec2_forward.14} parent=5 // pred_fallthru
      _
    %p111 = scmp.le.s32.totalorder 1, %s8
    %p112 = scmp.lt.s32.totalorder %s8, 3
    %p113 = pnand %p111, %p112
    %p114 = pneg %p113
    // Predicated region
    $region25: #{wav2vec2_forward.14} parent=5 // pred_check
      _
    $region26: #{wav2vec2_forward.14} parent=5 // pred_check_branch
      %116 = sbr.rel (%p113) target = $region28
    $region27: #{wav2vec2_forward.14} parent=5 // pred_region
      %s117 = ssub.s32 %s8, 1
      %p118 = scmp.lt.s32.totalorder %s13, 1
      %s119 = scalar_select %p118, %s13, 1
      %s120 = smul.addr %s119, 8
      %s121 = smul.addr %s120, 4
      %s122 = scalar_lea.vmem %s0, %s121
      %p123 = pneg %p34
      %p124 = pneg %p31
      %p125 = pneg %p55
      %p126 = pneg %p52
      %p127 = pneg %p81
      %p128 = pneg %p78
      %p129 = scmp.lt.s32.totalorder %s13, 1
      %s130 = scalar_select %p129, %s13, 1
      %s131 = smul.addr %s130, 4
      %s132 = smul.addr %s131, 8
      %s133 = scalar_lea.vmem %s2, %s132
      %p134 = scmp.lt.s32.totalorder %s13, 1
      %s135 = scalar_select %p134, %s13, 1
      %s136 = smul.addr %s135, 8
      %s137 = smul.addr %s136, 4
      %s138 = scalar_lea.vmem %s0, %s137
      %p139 = scmp.lt.s32.totalorder %s13, 1
      %s140 = scalar_select %p139, %s13, 1
      %s141 = smul.addr %s140, 4
      %s142 = smul.addr %s141, 8
      %s143 = scalar_lea.vmem %s2, %s142
      %v145 = vld [vmem:[%s1] sm:$0xf]
      %v146 = vld [vmem:[%s1 + $0x4] sm:$0xf]
      %v147 = vld [vmem:[%s1 + $0x8] sm:$0xf]
      %v148 = vld [vmem:[%s1 + $0xc] sm:$0xf]
      %v149 = vld [vmem:[%s138] sm:$0xf]
      %v150 = vld [vmem:[%s138 + $0x4] sm:$0xf]
      %v151 = vld [vmem:[%s138 + $0x8] sm:$0xf]
      %v152 = vld [vmem:[%s138 + $0xc] sm:$0xf]
      %v153 = vld [vmem:[%s138 + $0x10] sm:$0xf]
      %v154 = vld [vmem:[%s138 + $0x14] sm:$0xf]
      %v155 = vld [vmem:[%s138 + $0x18] sm:$0xf]
      %v156 = vld [vmem:[%s138 + $0x1c] sm:$0xf]
      %v161 = vunpack.c.l.b16 %v145
      %v162 = vunpack.c.l.b16 %v146
      %v163 = vunpack.c.l.b16 %v147
      %v164 = vunpack.c.l.b16 %v148
      %v165 = vpack.c.b16 %v162, %v161
      %v166 = vpack.c.b16 %v164, %v163
      %v175 = vunpack.c.l.b16 %v149
      %v176 = vunpack.c.l.b16 %v150
      %v177 = vunpack.c.l.b16 %v151
      %v178 = vunpack.c.l.b16 %v152
      %v179 = vunpack.c.l.b16 %v153
      %v180 = vunpack.c.l.b16 %v154
      %v181 = vunpack.c.l.b16 %v155
      %v182 = vunpack.c.l.b16 %v156
      %v183 = vpack.c.b16 %v176, %v175
      %v184 = vpack.c.b16 %v178, %v177
      %v185 = vpack.c.b16 %v180, %v179
      %v186 = vpack.c.b16 %v182, %v181
      %vm191 = vcmask 523264
      %v193 = vsel %vm191, %v165, 0
      %v196 = vsel %vm191, %v166, 0
      %198 = vmatprep.subr.bf16.mxu0 0
      %199 = vmatpush1.bf16.msra.mxu0 0
      %200 = vmatprep.subr.bf16.mxu0 0
      %201 = vmatpush1.bf16.msra.mxu0 0
      %202 = vmatprep.subr.bf16.mxu0 0
      %203 = vmatpush1.bf16.msra.mxu0 0
      %204 = vmatprep.subr.bf16.mxu0 0
      %205 = vmatpush1.bf16.msra.mxu0 0
      %206 = vmatprep.subr.bf16.mxu0 0
      %207 = vmatpush1.bf16.msra.mxu0 %v186
      %208 = vmatprep.subr.bf16.mxu0 0
      %209 = vmatpush1.bf16.msra.mxu0 %v185
      %210 = vmatprep.subr.bf16.mxu0 0
      %211 = vmatpush1.bf16.msra.mxu0 %v184
      %212 = vmatprep.subr.bf16.mxu0 0
      %213 = vmatpush1.bf16.msra.mxu0 %v183
      %214 = vmatprep.subr.bf16.mxu0 0
      %215 = vmatpush2.bf16.msra.mxu0 0
      %216 = vmatprep.subr.bf16.mxu0 0
      %217 = vmatpush2.bf16.msra.mxu0 0
      %218 = vmatprep.subr.bf16.mxu0 0
      %219 = vmatpush2.bf16.msra.mxu0 0
      %220 = vmatprep.subr.bf16.mxu0 0
      %221 = vmatpush2.bf16.msra.mxu0 0
      %222 = vmatprep.subr.bf16.mxu0 0
      %223 = vmatpush2.bf16.msra.mxu0 0
      %224 = vmatprep.subr.bf16.mxu0 0
      %225 = vmatpush2.bf16.msra.mxu0 0
      %226 = vmatprep.subr.bf16.mxu0 0
      %227 = vmatpush2.bf16.msra.mxu0 0
      %228 = vmatprep.subr.bf16.mxu0 0
      %229 = vmatpush2.bf16.msra.mxu0 0
      %230 = vmatprep.mubr.bf16.mxu0 0
      %231 = vmatmul.mubr.bf16.gmra.mxu0 %v193
      %v232 = vpop.f32.mrf.mxu0
      %v233 = vadd.f32 0.0, %v232
      %v234 = vpop.f32.mrf.mxu0
      %v235 = vpop.f32.mrf.mxu0
      %v236 = vadd.f32 0.0, %v235
      %v237 = vpop.f32.mrf.mxu0
      %238 = vmatprep.mubr.bf16.mxu0 0
      %239 = vmatmul.mubr.bf16.gmra.mxu0 %v196
      %v240 = vpop.f32.mrf.mxu0
      %v241 = vadd.f32 0.0, %v240
      %v242 = vpop.f32.mrf.mxu0
      %v243 = vpop.f32.mrf.mxu0
      %v244 = vadd.f32 0.0, %v243
      %v245 = vpop.f32.mrf.mxu0
      %246 = vdwg.mxu0
      %v247 = vmul.f32 %v233, 0.5
      %v248 = vmul.f32 %v236, 0.5
      %v249 = vmul.f32 %v241, 0.5
      %v250 = vmul.f32 %v244, 0.5
      %v251 = vmul.f32 %v233, 0.044715
      %v252 = vmul.f32 %v236, 0.044715
      %v253 = vmul.f32 %v241, 0.044715
      %v254 = vmul.f32 %v244, 0.044715
      %v255 = vmul.f32 %v251, %v233
      %v256 = vmul.f32 %v252, %v236
      %v257 = vmul.f32 %v253, %v241
      %v258 = vmul.f32 %v254, %v244
      %v259 = vmul.f32 %v255, %v233
      %v260 = vmul.f32 %v256, %v236
      %v261 = vmul.f32 %v257, %v241
      %v262 = vmul.f32 %v258, %v244
      %v263 = vadd.f32 %v233, %v259
      %v264 = vadd.f32 %v236, %v260
      %v265 = vadd.f32 %v241, %v261
      %v266 = vadd.f32 %v244, %v262
      %v267 = vmul.f32 %v263, 0.7978846
      %v268 = vmul.f32 %v264, 0.7978846
      %v269 = vmul.f32 %v265, 0.7978846
      %v270 = vmul.f32 %v266, 0.7978846
      %v271 = vtanh.pop %v267
      %v272 = vtanh.pop %v268
      %v273 = vtanh.pop %v269
      %v274 = vtanh.pop %v270
      %v275 = vadd.f32 %v271, 1.0
      %v276 = vadd.f32 %v272, 1.0
      %v277 = vadd.f32 %v273, 1.0
      %v278 = vadd.f32 %v274, 1.0
      %v279 = vmul.f32 %v247, %v275
      %v280 = vmul.f32 %v248, %v276
      %v281 = vmul.f32 %v249, %v277
      %v282 = vmul.f32 %v250, %v278
      %vm283 = vcmask 97280
      %284 = vst.msk [vmem:[%s143] sm:$0xff] %vm283, %v279
      %285 = vst.msk [vmem:[%s143 + $0x8] sm:$0xff] %vm283, %v280
      %286 = vst.msk [vmem:[%s143 + $0x10] sm:$0xff] %vm283, %v281
      %287 = vst.msk [vmem:[%s143 + $0x18] sm:$0xff] %vm283, %v282
      %p288 = scmp.lt.s32.totalorder %s13, 1
      %s289 = scalar_select %p288, %s13, 1
      %s290 = smul.addr %s289, 4
      %s291 = smul.addr %s290, 8
      %s292 = scalar_lea.vmem %s2, %s291
      // Predicated region
      $region29: #{wav2vec2_forward.14} parent=27 // pred_check
        %p293 = pneg %p78
      $region30: #{wav2vec2_forward.14} parent=27 // pred_check_branch
        %295 = sbr.rel (%p293) target = $region32
      $region31: #{wav2vec2_forward.14} parent=27 // pred_region
        _
      $region32: #{wav2vec2_forward.14} parent=27 // pred_fallthru
        _
    $region28: #{wav2vec2_forward.14} parent=5 // pred_fallthru
      _
    %p296 = scmp.le.s32.totalorder 2, %s8
    // Predicated region
    $region33: #{wav2vec2_forward.14} parent=5 // pred_check
      %p297 = pneg %p296
    $region34: #{wav2vec2_forward.14} parent=5 // pred_check_branch
      %299 = sbr.rel (%p297) target = $region36
    $region35: #{wav2vec2_forward.14} parent=5 // pred_region
      %s300 = ssub.s32 %s8, 2
      // Predicated region
      $region37: #{wav2vec2_forward.14} parent=35 // pred_check
        %p301 = pneg %p84
      $region38: #{wav2vec2_forward.14} parent=35 // pred_check_branch
        %303 = sbr.rel (%p301) target = $region40
      $region39: #{wav2vec2_forward.14} parent=35 // pred_region
        %p304 = scmp.lt.s32.totalorder %s14, 1
        %s305 = scalar_select %p304, %s14, 1
        %s306 = smul.addr %s305, 4
        %s307 = smul.addr %s306, 8
        %s308 = scalar_lea.vmem %s2, %s307
      $region40: #{wav2vec2_forward.14} parent=35 // pred_fallthru
        _
    $region36: #{wav2vec2_forward.14} parent=5 // pred_fallthru
      _
  $region6: #{wav2vec2_forward.14} parent=0 // loop_footer
    %s12 = sadd.s32 1, %s8
  $region7: #{wav2vec2_forward.14} parent=0 // loop_footer_branch
    %7 = sbr.rel target = $region3
  $region8: #{wav2vec2_forward.14} parent=0 // loop_exit
    _

// kernel: wav2vec2_forward.15
$region0: #{wav2vec2_forward.15}
  #allocation0 [shape = 'u32[]', space=smem, size = 0x4, offset = 0x4, fixed_abs, tag = 'smem constant byte address 0x4 - core index']
  #allocation1 [shape = 'u32[144,128]{1,0:T(1,128)}', space=vmem, size = 0x12000, scoped, tag = 'internal scratch']
  %s0 = inlined_call_operand.vmem [shape: bf16[2,64,6], index: 0, kind: input, shape index: {}]
  %s1 = inlined_call_operand.vmem [shape: bf16[32,64], index: 1, kind: input, shape index: {}]
  %s2 = inlined_call_operand.vmem [shape: f32[2,32,6], index: 2, kind: output, shape index: {}]
  %s3 = sld [smem:[#allocation0]]
  $region41: #{wav2vec2_forward.15} parent=0
    _
  %s5 = ssub.s32 1, %s3
  %s6 = scalar_select 0, %s5, %s3
  loop: start=0, step=1, limit=4
  $region2: #{wav2vec2_forward.15} parent=0 // loop_pre_header
    _
  $region3: #{wav2vec2_forward.15} parent=0 // loop_header
    %s8 = sphi 0, %s12
    %p9 = scmp.ge.s32.totalorder %s8, 4
    %s18 = sphi 0, %s20
    %s21 = sphi 0, %s18
    %s22 = sphi 0, %s21
    %s38 = sphi 0, %s22
    %s42 = sphi 0, %s42
    %s44 = sphi 0, %s42
    %s45 = sphi 0, %s44
    %s59 = sphi 0, %s45
    %s65 = sphi 0, %s67
    %s68 = sphi 0, %s65
    %s69 = sphi 0, %s68
    %s85 = sphi 0, %s69
  $region4: #{wav2vec2_forward.15} parent=0 // loop_header_branch
    %11 = sbr.rel (%p9) target = $region8
  $region5: #{wav2vec2_forward.15} parent=0 // loop_body
    %s13 = ssub.s32 %s8, 1
    %s14 = ssub.s32 %s8, 2
    %s15 = sadd.s32 %s8, 1
    %s16 = ssub.s32 %s8, %s15
    %p17 = scmp.eq.s32.totalorder %s16, 0
    %s19 = sadd.s32 %s18, 1
    %s20 = scalar_select %p17, %s18, %s19
    %p23 = pneg %p17
    %p24 = scmp.eq.s32.totalorder %s8, 1
    %p25 = por %p23, %p24
    %p26 = scmp.ne.s32.totalorder %s18, %s21
    %p27 = scmp.eq.s32.totalorder %s8, 0
    %p28 = por %p26, %p27
    %p29 = scmp.ne.s32.totalorder %s18, %s21
    %p30 = scmp.eq.s32.totalorder %s13, 1
    %p31 = por %p29, %p30
    %p32 = scmp.ne.s32.totalorder %s21, %s22
    %p33 = scmp.eq.s32.totalorder %s13, 0
    %p34 = por %p32, %p33
    %p35 = scmp.ne.s32.totalorder %s21, %s22
    %p36 = scmp.eq.s32.totalorder %s14, 1
    %p37 = por %p35, %p36
    %p39 = scmp.ne.s32.totalorder %s22, %s38
    %p40 = scmp.eq.s32.totalorder %s14, 0
    %p41 = por %p39, %p40
    %s43 = sadd.s32 %s42, 1
    %p46 = scmp.eq.s32.totalorder %s8, 1
    %p47 = scmp.ne.s32.totalorder %s42, %s44
    %p48 = scmp.eq.s32.totalorder %s8, 0
    %p49 = por %p47, %p48
    %p50 = scmp.ne.s32.totalorder %s42, %s44
    %p51 = scmp.eq.s32.totalorder %s13, 1
    %p52 = por %p50, %p51
    %p53 = scmp.ne.s32.totalorder %s44, %s45
    %p54 = scmp.eq.s32.totalorder %s13, 0
    %p55 = por %p53, %p54
    %p56 = scmp.ne.s32.totalorder %s44, %s45
    %p57 = scmp.eq.s32.totalorder %s14, 1
    %p58 = por %p56, %p57
    %p60 = scmp.ne.s32.totalorder %s45, %s59
    %p61 = scmp.eq.s32.totalorder %s14, 0
    %p62 = por %p60, %p61
    %s63 = ssub.s32 %s8, %s15
    %p64 = scmp.eq.s32.totalorder %s63, 0
    %s66 = sadd.s32 %s65, 1
    %s67 = scalar_select %p64, %s65, %s66
    %p70 = pneg %p64
    %p71 = scmp.eq.s32.totalorder %s8, 1
    %p72 = por %p70, %p71
    %p73 = scmp.ne.s32.totalorder %s65, %s68
    %p74 = scmp.eq.s32.totalorder %s8, 0
    %p75 = por %p73, %p74
    %p76 = scmp.ne.s32.totalorder %s65, %s68
    %p77 = scmp.eq.s32.totalorder %s13, 1
    %p78 = por %p76, %p77
    %p79 = scmp.ne.s32.totalorder %s68, %s69
    %p80 = scmp.eq.s32.totalorder %s13, 0
    %p81 = por %p79, %p80
    %p82 = scmp.ne.s32.totalorder %s68, %s69
    %p83 = scmp.eq.s32.totalorder %s14, 1
    %p84 = por %p82, %p83
    %p86 = scmp.ne.s32.totalorder %s69, %s85
    %p87 = scmp.eq.s32.totalorder %s14, 0
    %p88 = por %p86, %p87
    %p89 = scmp.le.s32.totalorder 1, %s8
    %p90 = scmp.lt.s32.totalorder %s8, 3
    %p91 = pnand %p89, %p90
    %p92 = pneg %p91
    // Predicated region
    $region9: #{wav2vec2_forward.15} parent=5 // pred_check
      _
    $region10: #{wav2vec2_forward.15} parent=5 // pred_check_branch
      %94 = sbr.rel (%p91) target = $region12
    $region11: #{wav2vec2_forward.15} parent=5 // pred_region
      %s95 = ssub.s32 %s8, 1
      // Predicated region
      $region13: #{wav2vec2_forward.15} parent=11 // pred_check
        %p96 = pneg %p55
      $region14: #{wav2vec2_forward.15} parent=11 // pred_check_branch
        %98 = sbr.rel (%p96) target = $region16
      $region15: #{wav2vec2_forward.15} parent=11 // pred_region
        _
      $region16: #{wav2vec2_forward.15} parent=11 // pred_fallthru
        _
    $region12: #{wav2vec2_forward.15} parent=5 // pred_fallthru
      _
    %p99 = scmp.lt.s32.totalorder %s8, 2
    // Predicated region
    $region17: #{wav2vec2_forward.15} parent=5 // pred_check
      %p100 = pneg %p99
    $region18: #{wav2vec2_forward.15} parent=5 // pred_check_branch
      %102 = sbr.rel (%p100) target = $region20
    $region19: #{wav2vec2_forward.15} parent=5 // pred_region
      // Predicated region
      $region21: #{wav2vec2_forward.15} parent=19 // pred_check
        %p103 = pneg %p28
      $region22: #{wav2vec2_forward.15} parent=19 // pred_check_branch
        %105 = sbr.rel (%p103) target = $region24
      $region23: #{wav2vec2_forward.15} parent=19 // pred_region
        %p106 = scmp.lt.s32.totalorder %s8, 1
        %s107 = scalar_select %p106, %s8, 1
        %s108 = smul.addr %s107, 8
        %s109 = smul.addr %s108, 4
        %s110 = scalar_lea.vmem %s0, %s109
      $region24: #{wav2vec2_forward.15} parent=19 // pred_fallthru
        _
    $region20: #{wav2vec2_forward.15} parent=5 // pred_fallthru
      _
    %p111 = scmp.le.s32.totalorder 1, %s8
    %p112 = scmp.lt.s32.totalorder %s8, 3
    %p113 = pnand %p111, %p112
    %p114 = pneg %p113
    // Predicated region
    $region25: #{wav2vec2_forward.15} parent=5 // pred_check
      _
    $region26: #{wav2vec2_forward.15} parent=5 // pred_check_branch
      %116 = sbr.rel (%p113) target = $region28
    $region27: #{wav2vec2_forward.15} parent=5 // pred_region
      %s117 = ssub.s32 %s8, 1
      %p118 = scmp.lt.s32.totalorder %s13, 1
      %s119 = scalar_select %p118, %s13, 1
      %s120 = smul.addr %s119, 8
      %s121 = smul.addr %s120, 4
      %s122 = scalar_lea.vmem %s0, %s121
      %p123 = pneg %p34
      %p124 = pneg %p31
      %p125 = pneg %p55
      %p126 = pneg %p52
      %p127 = pneg %p81
      %p128 = pneg %p78
      %p129 = scmp.lt.s32.totalorder %s13, 1
      %s130 = scalar_select %p129, %s13, 1
      %s131 = smul.addr %s130, 4
      %s132 = smul.addr %s131, 8
      %s133 = scalar_lea.vmem %s2, %s132
      %p134 = scmp.lt.s32.totalorder %s13, 1
      %s135 = scalar_select %p134, %s13, 1
      %s136 = smul.addr %s135, 8
      %s137 = smul.addr %s136, 4
      %s138 = scalar_lea.vmem %s0, %s137
      %p139 = scmp.lt.s32.totalorder %s13, 1
      %s140 = scalar_select %p139, %s13, 1
      %s141 = smul.addr %s140, 4
      %s142 = smul.addr %s141, 8
      %s143 = scalar_lea.vmem %s2, %s142
      %v145 = vld [vmem:[%s1] sm:$0xf]
      %v146 = vld [vmem:[%s1 + $0x4] sm:$0xf]
      %v147 = vld [vmem:[%s1 + $0x8] sm:$0xf]
      %v148 = vld [vmem:[%s1 + $0xc] sm:$0xf]
      %v149 = vld [vmem:[%s138] sm:$0xf]
      %v150 = vld [vmem:[%s138 + $0x4] sm:$0xf]
      %v151 = vld [vmem:[%s138 + $0x8] sm:$0xf]
      %v152 = vld [vmem:[%s138 + $0xc] sm:$0xf]
      %v153 = vld [vmem:[%s138 + $0x10] sm:$0xf]
      %v154 = vld [vmem:[%s138 + $0x14] sm:$0xf]
      %v155 = vld [vmem:[%s138 + $0x18] sm:$0xf]
      %v156 = vld [vmem:[%s138 + $0x1c] sm:$0xf]
      %v161 = vunpack.c.l.b16 %v145
      %v162 = vunpack.c.l.b16 %v146
      %v163 = vunpack.c.l.b16 %v147
      %v164 = vunpack.c.l.b16 %v148
      %v165 = vpack.c.b16 %v162, %v161
      %v166 = vpack.c.b16 %v164, %v163
      %v175 = vunpack.c.l.b16 %v149
      %v176 = vunpack.c.l.b16 %v150
      %v177 = vunpack.c.l.b16 %v151
      %v178 = vunpack.c.l.b16 %v152
      %v179 = vunpack.c.l.b16 %v153
      %v180 = vunpack.c.l.b16 %v154
      %v181 = vunpack.c.l.b16 %v155
      %v182 = vunpack.c.l.b16 %v156
      %v183 = vpack.c.b16 %v176, %v175
      %v184 = vpack.c.b16 %v178, %v177
      %v185 = vpack.c.b16 %v180, %v179
      %v186 = vpack.c.b16 %v182, %v181
      %vm191 = vcmask 523264
      %v193 = vsel %vm191, %v165, 0
      %v196 = vsel %vm191, %v166, 0
      %198 = vmatprep.subr.bf16.mxu0 0
      %199 = vmatpush1.bf16.msra.mxu0 0
      %200 = vmatprep.subr.bf16.mxu0 0
      %201 = vmatpush1.bf16.msra.mxu0 0
      %202 = vmatprep.subr.bf16.mxu0 0
      %203 = vmatpush1.bf16.msra.mxu0 0
      %204 = vmatprep.subr.bf16.mxu0 0
      %205 = vmatpush1.bf16.msra.mxu0 0
      %206 = vmatprep.subr.bf16.mxu0 0
      %207 = vmatpush1.bf16.msra.mxu0 %v186
      %208 = vmatprep.subr.bf16.mxu0 0
      %209 = vmatpush1.bf16.msra.mxu0 %v185
      %210 = vmatprep.subr.bf16.mxu0 0
      %211 = vmatpush1.bf16.msra.mxu0 %v184
      %212 = vmatprep.subr.bf16.mxu0 0
      %213 = vmatpush1.bf16.msra.mxu0 %v183
      %214 = vmatprep.subr.bf16.mxu0 0
      %215 = vmatpush2.bf16.msra.mxu0 0
      %216 = vmatprep.subr.bf16.mxu0 0
      %217 = vmatpush2.bf16.msra.mxu0 0
      %218 = vmatprep.subr.bf16.mxu0 0
      %219 = vmatpush2.bf16.msra.mxu0 0
      %220 = vmatprep.subr.bf16.mxu0 0
      %221 = vmatpush2.bf16.msra.mxu0 0
      %222 = vmatprep.subr.bf16.mxu0 0
      %223 = vmatpush2.bf16.msra.mxu0 0
      %224 = vmatprep.subr.bf16.mxu0 0
      %225 = vmatpush2.bf16.msra.mxu0 0
      %226 = vmatprep.subr.bf16.mxu0 0
      %227 = vmatpush2.bf16.msra.mxu0 0
      %228 = vmatprep.subr.bf16.mxu0 0
      %229 = vmatpush2.bf16.msra.mxu0 0
      %230 = vmatprep.mubr.bf16.mxu0 0
      %231 = vmatmul.mubr.bf16.gmra.mxu0 %v193
      %v232 = vpop.f32.mrf.mxu0
      %v233 = vadd.f32 0.0, %v232
      %v234 = vpop.f32.mrf.mxu0
      %v235 = vpop.f32.mrf.mxu0
      %v236 = vadd.f32 0.0, %v235
      %v237 = vpop.f32.mrf.mxu0
      %238 = vmatprep.mubr.bf16.mxu0 0
      %239 = vmatmul.mubr.bf16.gmra.mxu0 %v196
      %v240 = vpop.f32.mrf.mxu0
      %v241 = vadd.f32 0.0, %v240
      %v242 = vpop.f32.mrf.mxu0
      %v243 = vpop.f32.mrf.mxu0
      %v244 = vadd.f32 0.0, %v243
      %v245 = vpop.f32.mrf.mxu0
      %246 = vdwg.mxu0
      %v247 = vmul.f32 %v233, 0.5
      %v248 = vmul.f32 %v236, 0.5
      %v249 = vmul.f32 %v241, 0.5
      %v250 = vmul.f32 %v244, 0.5
      %v251 = vmul.f32 %v233, 0.044715
      %v252 = vmul.f32 %v236, 0.044715
      %v253 = vmul.f32 %v241, 0.044715
      %v254 = vmul.f32 %v244, 0.044715
      %v255 = vmul.f32 %v251, %v233
      %v256 = vmul.f32 %v252, %v236
      %v257 = vmul.f32 %v253, %v241
      %v258 = vmul.f32 %v254, %v244
      %v259 = vmul.f32 %v255, %v233
      %v260 = vmul.f32 %v256, %v236
      %v261 = vmul.f32 %v257, %v241
      %v262 = vmul.f32 %v258, %v244
      %v263 = vadd.f32 %v233, %v259
      %v264 = vadd.f32 %v236, %v260
      %v265 = vadd.f32 %v241, %v261
      %v266 = vadd.f32 %v244, %v262
      %v267 = vmul.f32 %v263, 0.7978846
      %v268 = vmul.f32 %v264, 0.7978846
      %v269 = vmul.f32 %v265, 0.7978846
      %v270 = vmul.f32 %v266, 0.7978846
      %v271 = vtanh.pop %v267
      %v272 = vtanh.pop %v268
      %v273 = vtanh.pop %v269
      %v274 = vtanh.pop %v270
      %v275 = vadd.f32 %v271, 1.0
      %v276 = vadd.f32 %v272, 1.0
      %v277 = vadd.f32 %v273, 1.0
      %v278 = vadd.f32 %v274, 1.0
      %v279 = vmul.f32 %v247, %v275
      %v280 = vmul.f32 %v248, %v276
      %v281 = vmul.f32 %v249, %v277
      %v282 = vmul.f32 %v250, %v278
      %vm283 = vcmask 48128
      %284 = vst.msk [vmem:[%s143] sm:$0xff] %vm283, %v279
      %285 = vst.msk [vmem:[%s143 + $0x8] sm:$0xff] %vm283, %v280
      %286 = vst.msk [vmem:[%s143 + $0x10] sm:$0xff] %vm283, %v281
      %287 = vst.msk [vmem:[%s143 + $0x18] sm:$0xff] %vm283, %v282
      %p288 = scmp.lt.s32.totalorder %s13, 1
      %s289 = scalar_select %p288, %s13, 1
      %s290 = smul.addr %s289, 4
      %s291 = smul.addr %s290, 8
      %s292 = scalar_lea.vmem %s2, %s291
      // Predicated region
      $region29: #{wav2vec2_forward.15} parent=27 // pred_check
        %p293 = pneg %p78
      $region30: #{wav2vec2_forward.15} parent=27 // pred_check_branch
        %295 = sbr.rel (%p293) target = $region32
      $region31: #{wav2vec2_forward.15} parent=27 // pred_region
        _
      $region32: #{wav2vec2_forward.15} parent=27 // pred_fallthru
        _
    $region28: #{wav2vec2_forward.15} parent=5 // pred_fallthru
      _
    %p296 = scmp.le.s32.totalorder 2, %s8
    // Predicated region
    $region33: #{wav2vec2_forward.15} parent=5 // pred_check
      %p297 = pneg %p296
    $region34: #{wav2vec2_forward.15} parent=5 // pred_check_branch
      %299 = sbr.rel (%p297) target = $region36
    $region35: #{wav2vec2_forward.15} parent=5 // pred_region
      %s300 = ssub.s32 %s8, 2
      // Predicated region
      $region37: #{wav2vec2_forward.15} parent=35 // pred_check
        %p301 = pneg %p84
      $region38: #{wav2vec2_forward.15} parent=35 // pred_check_branch
        %303 = sbr.rel (%p301) target = $region40
      $region39: #{wav2vec2_forward.15} parent=35 // pred_region
        %p304 = scmp.lt.s32.totalorder %s14, 1
        %s305 = scalar_select %p304, %s14, 1
        %s306 = smul.addr %s305, 4
        %s307 = smul.addr %s306, 8
        %s308 = scalar_lea.vmem %s2, %s307
      $region40: #{wav2vec2_forward.15} parent=35 // pred_fallthru
        _
    $region36: #{wav2vec2_forward.15} parent=5 // pred_fallthru
      _
  $region6: #{wav2vec2_forward.15} parent=0 // loop_footer
    %s12 = sadd.s32 1, %s8
  $region7: #{wav2vec2_forward.15} parent=0 // loop_footer_branch
    %7 = sbr.rel target = $region3
  $region8: #{wav2vec2_forward.15} parent=0 // loop_exit
    _

// kernel: wav2vec2_forward.16
$region0: #{wav2vec2_forward.16}
  #allocation0 [shape = 'u32[]', space=smem, size = 0x4, offset = 0x4, fixed_abs, tag = 'smem constant byte address 0x4 - core index']
  #allocation1 [shape = 'u32[144,128]{1,0:T(1,128)}', space=vmem, size = 0x12000, scoped, tag = 'internal scratch']
  %s0 = inlined_call_operand.vmem [shape: f32[2,6,32], index: 0, kind: input, shape index: {}]
  %s1 = inlined_call_operand.vmem [shape: f32[1,32], index: 1, kind: input, shape index: {}]
  %s2 = inlined_call_operand.vmem [shape: f32[1,32], index: 2, kind: input, shape index: {}]
  %s3 = inlined_call_operand.vmem [shape: bf16[32,32], index: 3, kind: input, shape index: {}]
  %s4 = inlined_call_operand.vmem [shape: f32[1,32], index: 4, kind: input, shape index: {}]
  %s5 = inlined_call_operand.vmem [shape: f32[2,6,32], index: 5, kind: output, shape index: {}]
  %s6 = sld [smem:[#allocation0]]
  $region53: #{wav2vec2_forward.16} parent=0
    _
  %s8 = ssub.s32 1, %s6
  %s9 = scalar_select 0, %s8, %s6
  loop: start=0, step=1, limit=4
  $region2: #{wav2vec2_forward.16} parent=0 // loop_pre_header
    _
  $region3: #{wav2vec2_forward.16} parent=0 // loop_header
    %s11 = sphi 0, %s15
    %p12 = scmp.ge.s32.totalorder %s11, 4
    %s21 = sphi 0, %s23
    %s24 = sphi 0, %s21
    %s25 = sphi 0, %s24
    %s41 = sphi 0, %s25
    %s45 = sphi 0, %s45
    %s47 = sphi 0, %s45
    %s48 = sphi 0, %s47
    %s62 = sphi 0, %s48
    %s66 = sphi 0, %s66
    %s68 = sphi 0, %s66
    %s69 = sphi 0, %s68
    %s83 = sphi 0, %s69
    %s87 = sphi 0, %s87
    %s89 = sphi 0, %s87
    %s90 = sphi 0, %s89
    %s104 = sphi 0, %s90
    %s108 = sphi 0, %s108
    %s110 = sphi 0, %s108
    %s111 = sphi 0, %s110
    %s125 = sphi 0, %s111
    %s131 = sphi 0, %s133
    %s134 = sphi 0, %s131
    %s135 = sphi 0, %s134
    %s151 = sphi 0, %s135
  $region4: #{wav2vec2_forward.16} parent=0 // loop_header_branch
    %14 = sbr.rel (%p12) target = $region8
  $region5: #{wav2vec2_forward.16} parent=0 // loop_body
    %s16 = ssub.s32 %s11, 1
    %s17 = ssub.s32 %s11, 2
    %s18 = sadd.s32 %s11, 1
    %s19 = ssub.s32 %s11, %s18
    %p20 = scmp.eq.s32.totalorder %s19, 0
    %s22 = sadd.s32 %s21, 1
    %s23 = scalar_select %p20, %s21, %s22
    %p26 = pneg %p20
    %p27 = scmp.eq.s32.totalorder %s11, 1
    %p28 = por %p26, %p27
    %p29 = scmp.ne.s32.totalorder %s21, %s24
    %p30 = scmp.eq.s32.totalorder %s11, 0
    %p31 = por %p29, %p30
    %p32 = scmp.ne.s32.totalorder %s21, %s24
    %p33 = scmp.eq.s32.totalorder %s16, 1
    %p34 = por %p32, %p33
    %p35 = scmp.ne.s32.totalorder %s24, %s25
    %p36 = scmp.eq.s32.totalorder %s16, 0
    %p37 = por %p35, %p36
    %p38 = scmp.ne.s32.totalorder %s24, %s25
    %p39 = scmp.eq.s32.totalorder %s17, 1
    %p40 = por %p38, %p39
    %p42 = scmp.ne.s32.totalorder %s25, %s41
    %p43 = scmp.eq.s32.totalorder %s17, 0
    %p44 = por %p42, %p43
    %s46 = sadd.s32 %s45, 1
    %p49 = scmp.eq.s32.totalorder %s11, 1
    %p50 = scmp.ne.s32.totalorder %s45, %s47
    %p51 = scmp.eq.s32.totalorder %s11, 0
    %p52 = por %p50, %p51
    %p53 = scmp.ne.s32.totalorder %s45, %s47
    %p54 = scmp.eq.s32.totalorder %s16, 1
    %p55 = por %p53, %p54
    %p56 = scmp.ne.s32.totalorder %s47, %s48
    %p57 = scmp.eq.s32.totalorder %s16, 0
    %p58 = por %p56, %p57
    %p59 = scmp.ne.s32.totalorder %s47, %s48
    %p60 = scmp.eq.s32.totalorder %s17, 1
    %p61 = por %p59, %p60
    %p63 = scmp.ne.s32.totalorder %s48, %s62
    %p64 = scmp.eq.s32.totalorder %s17, 0
    %p65 = por %p63, %p64
    %s67 = sadd.s32 %s66, 1
    %p70 = scmp.eq.s32.totalorder %s11, 1
    %p71 = scmp.ne.s32.totalorder %s66, %s68
    %p72 = scmp.eq.s32.totalorder %s11, 0
    %p73 = por %p71, %p72
    %p74 = scmp.ne.s32.totalorder %s66, %s68
    %p75 = scmp.eq.s32.totalorder %s16, 1
    %p76 = por %p74, %p75
    %p77 = scmp.ne.s32.totalorder %s68, %s69
    %p78 = scmp.eq.s32.totalorder %s16, 0
    %p79 = por %p77, %p78
    %p80 = scmp.ne.s32.totalorder %s68, %s69
    %p81 = scmp.eq.s32.totalorder %s17, 1
    %p82 = por %p80, %p81
    %p84 = scmp.ne.s32.totalorder %s69, %s83
    %p85 = scmp.eq.s32.totalorder %s17, 0
    %p86 = por %p84, %p85
    %s88 = sadd.s32 %s87, 1
    %p91 = scmp.eq.s32.totalorder %s11, 1
    %p92 = scmp.ne.s32.totalorder %s87, %s89
    %p93 = scmp.eq.s32.totalorder %s11, 0
    %p94 = por %p92, %p93
    %p95 = scmp.ne.s32.totalorder %s87, %s89
    %p96 = scmp.eq.s32.totalorder %s16, 1
    %p97 = por %p95, %p96
    %p98 = scmp.ne.s32.totalorder %s89, %s90
    %p99 = scmp.eq.s32.totalorder %s16, 0
    %p100 = por %p98, %p99
    %p101 = scmp.ne.s32.totalorder %s89, %s90
    %p102 = scmp.eq.s32.totalorder %s17, 1
    %p103 = por %p101, %p102
    %p105 = scmp.ne.s32.totalorder %s90, %s104
    %p106 = scmp.eq.s32.totalorder %s17, 0
    %p107 = por %p105, %p106
    %s109 = sadd.s32 %s108, 1
    %p112 = scmp.eq.s32.totalorder %s11, 1
    %p113 = scmp.ne.s32.totalorder %s108, %s110
    %p114 = scmp.eq.s32.totalorder %s11, 0
    %p115 = por %p113, %p114
    %p116 = scmp.ne.s32.totalorder %s108, %s110
    %p117 = scmp.eq.s32.totalorder %s16, 1
    %p118 = por %p116, %p117
    %p119 = scmp.ne.s32.totalorder %s110, %s111
    %p120 = scmp.eq.s32.totalorder %s16, 0
    %p121 = por %p119, %p120
    %p122 = scmp.ne.s32.totalorder %s110, %s111
    %p123 = scmp.eq.s32.totalorder %s17, 1
    %p124 = por %p122, %p123
    %p126 = scmp.ne.s32.totalorder %s111, %s125
    %p127 = scmp.eq.s32.totalorder %s17, 0
    %p128 = por %p126, %p127
    %s129 = ssub.s32 %s11, %s18
    %p130 = scmp.eq.s32.totalorder %s129, 0
    %s132 = sadd.s32 %s131, 1
    %s133 = scalar_select %p130, %s131, %s132
    %p136 = pneg %p130
    %p137 = scmp.eq.s32.totalorder %s11, 1
    %p138 = por %p136, %p137
    %p139 = scmp.ne.s32.totalorder %s131, %s134
    %p140 = scmp.eq.s32.totalorder %s11, 0
    %p141 = por %p139, %p140
    %p142 = scmp.ne.s32.totalorder %s131, %s134
    %p143 = scmp.eq.s32.totalorder %s16, 1
    %p144 = por %p142, %p143
    %p145 = scmp.ne.s32.totalorder %s134, %s135
    %p146 = scmp.eq.s32.totalorder %s16, 0
    %p147 = por %p145, %p146
    %p148 = scmp.ne.s32.totalorder %s134, %s135
    %p149 = scmp.eq.s32.totalorder %s17, 1
    %p150 = por %p148, %p149
    %p152 = scmp.ne.s32.totalorder %s135, %s151
    %p153 = scmp.eq.s32.totalorder %s17, 0
    %p154 = por %p152, %p153
    %p155 = scmp.le.s32.totalorder 1, %s11
    %p156 = scmp.lt.s32.totalorder %s11, 3
    %p157 = pnand %p155, %p156
    %p158 = pneg %p157
    // Predicated region
    $region9: #{wav2vec2_forward.16} parent=5 // pred_check
      _
    $region10: #{wav2vec2_forward.16} parent=5 // pred_check_branch
      %160 = sbr.rel (%p157) target = $region12
    $region11: #{wav2vec2_forward.16} parent=5 // pred_region
      %s161 = ssub.s32 %s11, 1
      // Predicated region
      $region13: #{wav2vec2_forward.16} parent=11 // pred_check
        %p162 = pneg %p58
      $region14: #{wav2vec2_forward.16} parent=11 // pred_check_branch
        %164 = sbr.rel (%p162) target = $region16
      $region15: #{wav2vec2_forward.16} parent=11 // pred_region
        _
      $region16: #{wav2vec2_forward.16} parent=11 // pred_fallthru
        _
      // Predicated region
      $region17: #{wav2vec2_forward.16} parent=11 // pred_check
        %p165 = pneg %p79
      $region18: #{wav2vec2_forward.16} parent=11 // pred_check_branch
        %167 = sbr.rel (%p165) target = $region20
      $region19: #{wav2vec2_forward.16} parent=11 // pred_region
        _
      $region20: #{wav2vec2_forward.16} parent=11 // pred_fallthru
        _
      // Predicated region
      $region21: #{wav2vec2_forward.16} parent=11 // pred_check
        %p168 = pneg %p100
      $region22: #{wav2vec2_forward.16} parent=11 // pred_check_branch
        %170 = sbr.rel (%p168) target = $region24
      $region23: #{wav2vec2_forward.16} parent=11 // pred_region
        _
      $region24: #{wav2vec2_forward.16} parent=11 // pred_fallthru
        _
      // Predicated region
      $region25: #{wav2vec2_forward.16} parent=11 // pred_check
        %p171 = pneg %p121
      $region26: #{wav2vec2_forward.16} parent=11 // pred_check_branch
        %173 = sbr.rel (%p171) target = $region28
      $region27: #{wav2vec2_forward.16} parent=11 // pred_region
        _
      $region28: #{wav2vec2_forward.16} parent=11 // pred_fallthru
        _
    $region12: #{wav2vec2_forward.16} parent=5 // pred_fallthru
      _
    %p174 = scmp.lt.s32.totalorder %s11, 2
    // Predicated region
    $region29: #{wav2vec2_forward.16} parent=5 // pred_check
      %p175 = pneg %p174
    $region30: #{wav2vec2_forward.16} parent=5 // pred_check_branch
      %177 = sbr.rel (%p175) target = $region32
    $region31: #{wav2vec2_forward.16} parent=5 // pred_region
      // Predicated region
      $region33: #{wav2vec2_forward.16} parent=31 // pred_check
        %p178 = pneg %p31
      $region34: #{wav2vec2_forward.16} parent=31 // pred_check_branch
        %180 = sbr.rel (%p178) target = $region36
      $region35: #{wav2vec2_forward.16} parent=31 // pred_region
        %p181 = scmp.lt.s32.totalorder %s11, 1
        %s182 = scalar_select %p181, %s11, 1
        %s183 = smul.addr %s182, 8
        %s184 = scalar_lea.vmem %s0, %s183
      $region36: #{wav2vec2_forward.16} parent=31 // pred_fallthru
        _
    $region32: #{wav2vec2_forward.16} parent=5 // pred_fallthru
      _
    %p185 = scmp.le.s32.totalorder 1, %s11
    %p186 = scmp.lt.s32.totalorder %s11, 3
    %p187 = pnand %p185, %p186
    %p188 = pneg %p187
    // Predicated region
    $region37: #{wav2vec2_forward.16} parent=5 // pred_check
      _
    $region38: #{wav2vec2_forward.16} parent=5 // pred_check_branch
      %190 = sbr.rel (%p187) target = $region40
    $region39: #{wav2vec2_forward.16} parent=5 // pred_region
      %s191 = ssub.s32 %s11, 1
      %p192 = scmp.lt.s32.totalorder %s16, 1
      %s193 = scalar_select %p192, %s16, 1
      %s194 = smul.addr %s193, 8
      %s195 = scalar_lea.vmem %s0, %s194
      %p196 = pneg %p37
      %p197 = pneg %p34
      %p198 = pneg %p58
      %p199 = pneg %p55
      %p200 = pneg %p79
      %p201 = pneg %p76
      %p202 = pneg %p100
      %p203 = pneg %p97
      %p204 = pneg %p121
      %p205 = pneg %p118
      %p206 = pneg %p147
      %p207 = pneg %p144
      %p208 = scmp.lt.s32.totalorder %s16, 1
      %s209 = scalar_select %p208, %s16, 1
      %s210 = smul.addr %s209, 8
      %s211 = scalar_lea.vmem %s5, %s210
      %p212 = scmp.lt.s32.totalorder %s16, 1
      %s213 = scalar_select %p212, %s16, 1
      %s214 = smul.addr %s213, 8
      %s215 = scalar_lea.vmem %s0, %s214
      %p216 = scmp.lt.s32.totalorder %s16, 1
      %s217 = scalar_select %p216, %s16, 1
      %s218 = smul.addr %s217, 8
      %s219 = scalar_lea.vmem %s5, %s218
      %v221 = vld [vmem:[%s215] sm:$0x3f]
      %v222 = vld [vmem:[%s1] sm:$0x1]
      %v223 = vld [vmem:[%s2] sm:$0x1]
      %vm224 = vcmask 259072
      %v225 = vsel %vm224, %v221, 0.0
      %226 = vadd.xlane.f32.xlu0 %v225
      %v227 = vpop.xlane.xlu0 %226
      %v228 = vrcp.pop 32.0
      %v229 = vmul.f32 %v227, %v228
      %v230 = vsub.f32 %v221, %v229
      %v231 = vmul.f32 %v230, %v230
      %v232 = vsel %vm224, %v231, 0.0
      %233 = vadd.xlane.f32.xlu0 %v232
      %v234 = vpop.xlane.xlu0 %233
      %v235 = vmul.f32 %v234, %v228
      %v236 = vadd.f32 %v235, 1e-05
      %v237 = vrsqrt.pop %v236
      %v238 = vmul.f32 %v230, %v237
      %v240 = vlaneseq
      %v241 = vshrl.u32 %v240, 7
      %v242 = vsub.s32 0, %v241
      %v243 = vrot.slane %v222, %v242
      %v245 = vmul.f32 %v238, %v243
      %v247 = vlaneseq
      %v248 = vshrl.u32 %v247, 7
      %v249 = vsub.s32 0, %v248
      %v250 = vrot.slane %v223, %v249
      %v252 = vadd.f32 %v245, %v250
      %v253 = vpack.c.bf16 %v252, %v252
      %v254 = vld [vmem:[%s3] sm:$0xf]
      %v255 = vld [vmem:[%s3 + $0x4] sm:$0xf]
      %v256 = vld [vmem:[%s3 + $0x8] sm:$0xf]
      %v257 = vld [vmem:[%s3 + $0xc] sm:$0xf]
      %v258 = vld [vmem:[%s4] sm:$0x1]
      %v260 = vlaneseq
      %v261 = vshrl.u32 %v260, 7
      %v262 = vsub.s32 0, %v261
      %v263 = vrot.slane %v258, %v262
      %v269 = vunpack.c.l.b16 %v254
      %v270 = vunpack.c.l.b16 %v255
      %v271 = vunpack.c.l.b16 %v256
      %v272 = vunpack.c.l.b16 %v257
      %v273 = vpack.c.b16 %v270, %v269
      %v274 = vpack.c.b16 %v272, %v271
      %vm277 = vcmask 261120
      %v279 = vsel %vm277, %v253, 0
      %281 = vmatprep.subr.bf16.mxu0 0
      %282 = vmatpush1.bf16.msra.mxu0 0
      %283 = vmatprep.subr.bf16.mxu0 0
      %284 = vmatpush1.bf16.msra.mxu0 0
      %285 = vmatprep.subr.bf16.mxu0 0
      %286 = vmatpush1.bf16.msra.mxu0 0
      %287 = vmatprep.subr.bf16.mxu0 0
      %288 = vmatpush1.bf16.msra.mxu0 0
      %289 = vmatprep.subr.bf16.mxu0 0
      %290 = vmatpush1.bf16.msra.mxu0 0
      %291 = vmatprep.subr.bf16.mxu0 0
      %292 = vmatpush1.bf16.msra.mxu0 0
      %293 = vmatprep.subr.bf16.mxu0 0
      %294 = vmatpush1.bf16.msra.mxu0 %v274
      %295 = vmatprep.subr.bf16.mxu0 0
      %296 = vmatpush1.bf16.msra.mxu0 %v273
      %297 = vmatprep.subr.bf16.mxu0 0
      %298 = vmatpush2.bf16.msra.mxu0 0
      %299 = vmatprep.subr.bf16.mxu0 0
      %300 = vmatpush2.bf16.msra.mxu0 0
      %301 = vmatprep.subr.bf16.mxu0 0
      %302 = vmatpush2.bf16.msra.mxu0 0
      %303 = vmatprep.subr.bf16.mxu0 0
      %304 = vmatpush2.bf16.msra.mxu0 0
      %305 = vmatprep.subr.bf16.mxu0 0
      %306 = vmatpush2.bf16.msra.mxu0 0
      %307 = vmatprep.subr.bf16.mxu0 0
      %308 = vmatpush2.bf16.msra.mxu0 0
      %309 = vmatprep.subr.bf16.mxu0 0
      %310 = vmatpush2.bf16.msra.mxu0 0
      %311 = vmatprep.subr.bf16.mxu0 0
      %312 = vmatpush2.bf16.msra.mxu0 0
      %313 = vmatprep.mubr.bf16.mxu0 0
      %314 = vmatmul.mubr.bf16.gmra.mxu0 %v279
      %v315 = vpop.f32.mrf.mxu0
      %v316 = vadd.f32 %v263, %v315
      %v317 = vpop.f32.mrf.mxu0
      %v318 = vpop.f32.mrf.mxu0
      %v319 = vpop.f32.mrf.mxu0
      %320 = vdwg.mxu0
      %321 = vst.msk [vmem:[%s219] sm:$0x3f] %vm224, %v316
      %p322 = scmp.lt.s32.totalorder %s16, 1
      %s323 = scalar_select %p322, %s16, 1
      %s324 = smul.addr %s323, 8
      %s325 = scalar_lea.vmem %s5, %s324
      // Predicated region
      $region41: #{wav2vec2_forward.16} parent=39 // pred_check
        %p326 = pneg %p144
      $region42: #{wav2vec2_forward.16} parent=39 // pred_check_branch
        %328 = sbr.rel (%p326) target = $region44
      $region43: #{wav2vec2_forward.16} parent=39 // pred_region
        _
      $region44: #{wav2vec2_forward.16} parent=39 // pred_fallthru
        _
    $region40: #{wav2vec2_forward.16} parent=5 // pred_fallthru
      _
    %p329 = scmp.le.s32.totalorder 2, %s11
    // Predicated region
    $region45: #{wav2vec2_forward.16} parent=5 // pred_check
      %p330 = pneg %p329
    $region46: #{wav2vec2_forward.16} parent=5 // pred_check_branch
      %332 = sbr.rel (%p330) target = $region48
    $region47: #{wav2vec2_forward.16} parent=5 // pred_region
      %s333 = ssub.s32 %s11, 2
      // Predicated region
      $region49: #{wav2vec2_forward.16} parent=47 // pred_check
        %p334 = pneg %p150
      $region50: #{wav2vec2_forward.16} parent=47 // pred_check_branch
        %336 = sbr.rel (%p334) target = $region52
      $region51: #{wav2vec2_forward.16} parent=47 // pred_region
        %p337 = scmp.lt.s32.totalorder %s17, 1
        %s338 = scalar_select %p337, %s17, 1
        %s339 = smul.addr %s338, 8
        %s340 = scalar_lea.vmem %s5, %s339
      $region52: #{wav2vec2_forward.16} parent=47 // pred_fallthru
        _
    $region48: #{wav2vec2_forward.16} parent=5 // pred_fallthru
      _
  $region6: #{wav2vec2_forward.16} parent=0 // loop_footer
    %s15 = sadd.s32 1, %s11
  $region7: #{wav2vec2_forward.16} parent=0 // loop_footer_branch
    %10 = sbr.rel target = $region3
  $region8: #{wav2vec2_forward.16} parent=0 // loop_exit
    _

// kernel: wav2vec2_forward.17
$region0: #{wav2vec2_forward.17}
  #allocation0 [shape = 'u32[]', space=smem, size = 0x4, offset = 0x4, fixed_abs, tag = 'smem constant byte address 0x4 - core index']
  #allocation1 [shape = 'u32[144,128]{1,0:T(1,128)}', space=vmem, size = 0x12000, scoped, tag = 'internal scratch']
  #allocation2 [shape = 'f32[6,32]{1,0:T(8,128)}', space=vmem, size = 0x1000, scoped, tag = 'scratch operand']
  %s0 = inlined_call_operand.vmem [shape: f32[2,6,32], index: 0, kind: input, shape index: {}]
  %s1 = inlined_call_operand.vmem [shape: bf16[2,6,512], index: 1, kind: input, shape index: {}]
  %s2 = inlined_call_operand.vmem [shape: bf16[512,32], index: 2, kind: input, shape index: {}]
  %s3 = inlined_call_operand.vmem [shape: f32[1,32], index: 3, kind: input, shape index: {}]
  %s4 = inlined_call_operand.vmem [shape: f32[1,32], index: 4, kind: input, shape index: {}]
  %s5 = inlined_call_operand.vmem [shape: f32[1,32], index: 5, kind: input, shape index: {}]
  %s6 = inlined_call_operand.vmem [shape: bf16[2,32,96], index: 6, kind: input, shape index: {}]
  %s7 = inlined_call_operand.vmem [shape: f32[2,1,96], index: 7, kind: input, shape index: {}]
  %s8 = inlined_call_operand.vmem [shape: bf16[2,4,8,32], index: 8, kind: input, shape index: {}]
  %s9 = inlined_call_operand.vmem [shape: f32[2,1,32], index: 9, kind: input, shape index: {}]
  %s10 = inlined_call_operand.vmem [shape: f32[2,1,32], index: 10, kind: input, shape index: {}]
  %s11 = inlined_call_operand.vmem [shape: f32[2,1,32], index: 11, kind: input, shape index: {}]
  %s12 = inlined_call_operand.vmem [shape: bf16[2,32,64], index: 12, kind: input, shape index: {}]
  %s13 = inlined_call_operand.vmem [shape: f32[2,1,64], index: 13, kind: input, shape index: {}]
  %s14 = inlined_call_operand.vmem [shape: bf16[2,64,32], index: 14, kind: input, shape index: {}]
  %s15 = inlined_call_operand.vmem [shape: f32[2,1,32], index: 15, kind: input, shape index: {}]
  %s16 = inlined_call_operand.vmem [shape: f32[2,1,32], index: 16, kind: input, shape index: {}]
  %s17 = inlined_call_operand.vmem [shape: f32[2,1,32], index: 17, kind: input, shape index: {}]
  %s18 = inlined_call_operand.hbm [shape: f32[2,1,32], index: 18, kind: output, shape index: {}]
  %s19 = sld [smem:[#allocation0]]
  $region113: #{wav2vec2_forward.17} parent=0
    _
  %s21 = ssub.s32 1, %s19
  %s22 = scalar_select 0, %s21, %s19
  $region1: #{wav2vec2_forward.17} parent=0
    #allocation3 [shape = 'u8[1024]{0}', space=vmem, size = 0x400, scoped, tag = 'output window, operand 0']
    #allocation4 [shape = 's32[2]{0}', space=sflag, size = 0x8, scoped, tag = 'scoped memory for wav2vec2_forward.17']
    %23 = vsyncpa [#allocation4], 0
    %s24 = scalar_lea.sflag [#allocation4], 1
    %25 = vsyncpa %s24, 0
    loop: start=0, step=1, limit=6
    $region2: #{wav2vec2_forward.17} parent=1 // loop_pre_header
      _
    $region3: #{wav2vec2_forward.17} parent=1 // loop_header
      %s27 = sphi 0, %s31
      %p28 = scmp.ge.s32.totalorder %s27, 6
      %s34 = sphi 0, %s46
      %s35 = sphi 0, %s42
      %s36 = sphi 0, %s34
      %s37 = sphi 0, %s35
      %s38 = sphi 0, %s36
      %s39 = sphi 0, %s37
      %s49 = sphi 0, %s51
      %s52 = sphi 0, %s49
      %s53 = sphi 0, %s52
      %s69 = sphi 0, %s53
      %s75 = sphi 0, %s77
      %s78 = sphi 0, %s75
      %s79 = sphi 0, %s78
      %s95 = sphi 0, %s79
      %s99 = sphi 0, %s99
      %s101 = sphi 0, %s99
      %s102 = sphi 0, %s101
      %s116 = sphi 0, %s102
      %s120 = sphi 0, %s120
      %s122 = sphi 0, %s120
      %s123 = sphi 0, %s122
      %s137 = sphi 0, %s123
      %s141 = sphi 0, %s141
      %s143 = sphi 0, %s141
      %s144 = sphi 0, %s143
      %s158 = sphi 0, %s144
      %s162 = sphi 0, %s162
      %s164 = sphi 0, %s162
      %s165 = sphi 0, %s164
      %s179 = sphi 0, %s165
      %s185 = sphi 0, %s187
      %s188 = sphi 0, %s185
      %s189 = sphi 0, %s188
      %s205 = sphi 0, %s189
      %s211 = sphi 0, %s213
      %s214 = sphi 0, %s211
      %s215 = sphi 0, %s214
      %s231 = sphi 0, %s215
      %s237 = sphi 0, %s239
      %s240 = sphi 0, %s237
      %s241 = sphi 0, %s240
      %s257 = sphi 0, %s241
      %s263 = sphi 0, %s265
      %s266 = sphi 0, %s263
      %s267 = sphi 0, %s266
      %s283 = sphi 0, %s267
      %s289 = sphi 0, %s291
      %s292 = sphi 0, %s289
      %s293 = sphi 0, %s292
      %s309 = sphi 0, %s293
      %s315 = sphi 0, %s317
      %s318 = sphi 0, %s315
      %s319 = sphi 0, %s318
      %s335 = sphi 0, %s319
      %s341 = sphi 0, %s343
      %s344 = sphi 0, %s341
      %s345 = sphi 0, %s344
      %s361 = sphi 0, %s345
      %s367 = sphi 0, %s369
      %s370 = sphi 0, %s367
      %s371 = sphi 0, %s370
      %s387 = sphi 0, %s371
      %s393 = sphi 0, %s395
      %s396 = sphi 0, %s393
      %s397 = sphi 0, %s396
      %s413 = sphi 0, %s397
      %s419 = sphi 0, %s421
      %s422 = sphi 0, %s419
      %s423 = sphi 0, %s422
      %s439 = sphi 0, %s423
      %s445 = sphi 0, %s447
      %s448 = sphi 0, %s445
      %s449 = sphi 0, %s448
      %s465 = sphi 0, %s449
      %s471 = sphi 0, %s473
      %s474 = sphi 0, %s471
      %s475 = sphi 0, %s474
      %s491 = sphi 0, %s475
      %s497 = sphi 0, %s499
      %s500 = sphi 0, %s497
      %s501 = sphi 0, %s500
      %s517 = sphi 0, %s501
    $region4: #{wav2vec2_forward.17} parent=1 // loop_header_branch
      %30 = sbr.rel (%p28) target = $region8
    $region5: #{wav2vec2_forward.17} parent=1 // loop_body
      %s32 = ssub.s32 %s27, 1
      %s33 = ssub.s32 %s27, 2
      %s40 = sadd.s32 1, %s35
      %p41 = scmp.ge.s32.totalorder %s40, 2
      %s42 = scalar_select %p41, 0, %s40
      %s43 = sadd.s32 1, %s34
      %s44 = scalar_select %p41, %s43, %s34
      %p45 = scmp.ge.s32.totalorder %s44, 2
      %s46 = scalar_select %p45, 0, %s44
      %s47 = ssub.s32 %s34, %s46
      %p48 = scmp.eq.s32.totalorder %s47, 0
      %s50 = sadd.s32 %s49, 1
      %s51 = scalar_select %p48, %s49, %s50
      %p54 = pneg %p48
      %p55 = scmp.eq.s32.totalorder %s27, 3
      %p56 = por %p54, %p55
      %p57 = scmp.ne.s32.totalorder %s49, %s52
      %p58 = scmp.eq.s32.totalorder %s27, 0
      %p59 = por %p57, %p58
      %p60 = scmp.ne.s32.totalorder %s49, %s52
      %p61 = scmp.eq.s32.totalorder %s32, 3
      %p62 = por %p60, %p61
      %p63 = scmp.ne.s32.totalorder %s52, %s53
      %p64 = scmp.eq.s32.totalorder %s32, 0
      %p65 = por %p63, %p64
      %p66 = scmp.ne.s32.totalorder %s52, %s53
      %p67 = scmp.eq.s32.totalorder %s33, 3
      %p68 = por %p66, %p67
      %p70 = scmp.ne.s32.totalorder %s53, %s69
      %p71 = scmp.eq.s32.totalorder %s33, 0
      %p72 = por %p70, %p71
      %s73 = ssub.s32 %s34, %s46
      %p74 = scmp.eq.s32.totalorder %s73, 0
      %s76 = sadd.s32 %s75, 1
      %s77 = scalar_select %p74, %s75, %s76
      %p80 = pneg %p74
      %p81 = scmp.eq.s32.totalorder %s27, 3
      %p82 = por %p80, %p81
      %p83 = scmp.ne.s32.totalorder %s75, %s78
      %p84 = scmp.eq.s32.totalorder %s27, 0
      %p85 = por %p83, %p84
      %p86 = scmp.ne.s32.totalorder %s75, %s78
      %p87 = scmp.eq.s32.totalorder %s32, 3
      %p88 = por %p86, %p87
      %p89 = scmp.ne.s32.totalorder %s78, %s79
      %p90 = scmp.eq.s32.totalorder %s32, 0
      %p91 = por %p89, %p90
      %p92 = scmp.ne.s32.totalorder %s78, %s79
      %p93 = scmp.eq.s32.totalorder %s33, 3
      %p94 = por %p92, %p93
      %p96 = scmp.ne.s32.totalorder %s79, %s95
      %p97 = scmp.eq.s32.totalorder %s33, 0
      %p98 = por %p96, %p97
      %s100 = sadd.s32 %s99, 1
      %p103 = scmp.eq.s32.totalorder %s27, 3
      %p104 = scmp.ne.s32.totalorder %s99, %s101
      %p105 = scmp.eq.s32.totalorder %s27, 0
      %p106 = por %p104, %p105
      %p107 = scmp.ne.s32.totalorder %s99, %s101
      %p108 = scmp.eq.s32.totalorder %s32, 3
      %p109 = por %p107, %p108
      %p110 = scmp.ne.s32.totalorder %s101, %s102
      %p111 = scmp.eq.s32.totalorder %s32, 0
      %p112 = por %p110, %p111
      %p113 = scmp.ne.s32.totalorder %s101, %s102
      %p114 = scmp.eq.s32.totalorder %s33, 3
      %p115 = por %p113, %p114
      %p117 = scmp.ne.s32.totalorder %s102, %s116
      %p118 = scmp.eq.s32.totalorder %s33, 0
      %p119 = por %p117, %p118
      %s121 = sadd.s32 %s120, 1
      %p124 = scmp.eq.s32.totalorder %s27, 3
      %p125 = scmp.ne.s32.totalorder %s120, %s122
      %p126 = scmp.eq.s32.totalorder %s27, 0
      %p127 = por %p125, %p126
      %p128 = scmp.ne.s32.totalorder %s120, %s122
      %p129 = scmp.eq.s32.totalorder %s32, 3
      %p130 = por %p128, %p129
      %p131 = scmp.ne.s32.totalorder %s122, %s123
      %p132 = scmp.eq.s32.totalorder %s32, 0
      %p133 = por %p131, %p132
      %p134 = scmp.ne.s32.totalorder %s122, %s123
      %p135 = scmp.eq.s32.totalorder %s33, 3
      %p136 = por %p134, %p135
      %p138 = scmp.ne.s32.totalorder %s123, %s137
      %p139 = scmp.eq.s32.totalorder %s33, 0
      %p140 = por %p138, %p139
      %s142 = sadd.s32 %s141, 1
      %p145 = scmp.eq.s32.totalorder %s27, 3
      %p146 = scmp.ne.s32.totalorder %s141, %s143
      %p147 = scmp.eq.s32.totalorder %s27, 0
      %p148 = por %p146, %p147
      %p149 = scmp.ne.s32.totalorder %s141, %s143
      %p150 = scmp.eq.s32.totalorder %s32, 3
      %p151 = por %p149, %p150
      %p152 = scmp.ne.s32.totalorder %s143, %s144
      %p153 = scmp.eq.s32.totalorder %s32, 0
      %p154 = por %p152, %p153
      %p155 = scmp.ne.s32.totalorder %s143, %s144
      %p156 = scmp.eq.s32.totalorder %s33, 3
      %p157 = por %p155, %p156
      %p159 = scmp.ne.s32.totalorder %s144, %s158
      %p160 = scmp.eq.s32.totalorder %s33, 0
      %p161 = por %p159, %p160
      %s163 = sadd.s32 %s162, 1
      %p166 = scmp.eq.s32.totalorder %s27, 3
      %p167 = scmp.ne.s32.totalorder %s162, %s164
      %p168 = scmp.eq.s32.totalorder %s27, 0
      %p169 = por %p167, %p168
      %p170 = scmp.ne.s32.totalorder %s162, %s164
      %p171 = scmp.eq.s32.totalorder %s32, 3
      %p172 = por %p170, %p171
      %p173 = scmp.ne.s32.totalorder %s164, %s165
      %p174 = scmp.eq.s32.totalorder %s32, 0
      %p175 = por %p173, %p174
      %p176 = scmp.ne.s32.totalorder %s164, %s165
      %p177 = scmp.eq.s32.totalorder %s33, 3
      %p178 = por %p176, %p177
      %p180 = scmp.ne.s32.totalorder %s165, %s179
      %p181 = scmp.eq.s32.totalorder %s33, 0
      %p182 = por %p180, %p181
      %s183 = ssub.s32 %s35, %s42
      %p184 = scmp.eq.s32.totalorder %s183, 0
      %s186 = sadd.s32 %s185, 1
      %s187 = scalar_select %p184, %s185, %s186
      %p190 = pneg %p184
      %p191 = scmp.eq.s32.totalorder %s27, 3
      %p192 = por %p190, %p191
      %p193 = scmp.ne.s32.totalorder %s185, %s188
      %p194 = scmp.eq.s32.totalorder %s27, 0
      %p195 = por %p193, %p194
      %p196 = scmp.ne.s32.totalorder %s185, %s188
      %p197 = scmp.eq.s32.totalorder %s32, 3
      %p198 = por %p196, %p197
      %p199 = scmp.ne.s32.totalorder %s188, %s189
      %p200 = scmp.eq.s32.totalorder %s32, 0
      %p201 = por %p199, %p200
      %p202 = scmp.ne.s32.totalorder %s188, %s189
      %p203 = scmp.eq.s32.totalorder %s33, 3
      %p204 = por %p202, %p203
      %p206 = scmp.ne.s32.totalorder %s189, %s205
      %p207 = scmp.eq.s32.totalorder %s33, 0
      %p208 = por %p206, %p207
      %s209 = ssub.s32 %s35, %s42
      %p210 = scmp.eq.s32.totalorder %s209, 0
      %s212 = sadd.s32 %s211, 1
      %s213 = scalar_select %p210, %s211, %s212
      %p216 = pneg %p210
      %p217 = scmp.eq.s32.totalorder %s27, 3
      %p218 = por %p216, %p217
      %p219 = scmp.ne.s32.totalorder %s211, %s214
      %p220 = scmp.eq.s32.totalorder %s27, 0
      %p221 = por %p219, %p220
      %p222 = scmp.ne.s32.totalorder %s211, %s214
      %p223 = scmp.eq.s32.totalorder %s32, 3
      %p224 = por %p222, %p223
      %p225 = scmp.ne.s32.totalorder %s214, %s215
      %p226 = scmp.eq.s32.totalorder %s32, 0
      %p227 = por %p225, %p226
      %p228 = scmp.ne.s32.totalorder %s214, %s215
      %p229 = scmp.eq.s32.totalorder %s33, 3
      %p230 = por %p228, %p229
      %p232 = scmp.ne.s32.totalorder %s215, %s231
      %p233 = scmp.eq.s32.totalorder %s33, 0
      %p234 = por %p232, %p233
      %s235 = ssub.s32 %s35, %s42
      %p236 = scmp.eq.s32.totalorder %s235, 0
      %s238 = sadd.s32 %s237, 1
      %s239 = scalar_select %p236, %s237, %s238
      %p242 = pneg %p236
      %p243 = scmp.eq.s32.totalorder %s27, 3
      %p244 = por %p242, %p243
      %p245 = scmp.ne.s32.totalorder %s237, %s240
      %p246 = scmp.eq.s32.totalorder %s27, 0
      %p247 = por %p245, %p246
      %p248 = scmp.ne.s32.totalorder %s237, %s240
      %p249 = scmp.eq.s32.totalorder %s32, 3
      %p250 = por %p248, %p249
      %p251 = scmp.ne.s32.totalorder %s240, %s241
      %p252 = scmp.eq.s32.totalorder %s32, 0
      %p253 = por %p251, %p252
      %p254 = scmp.ne.s32.totalorder %s240, %s241
      %p255 = scmp.eq.s32.totalorder %s33, 3
      %p256 = por %p254, %p255
      %p258 = scmp.ne.s32.totalorder %s241, %s257
      %p259 = scmp.eq.s32.totalorder %s33, 0
      %p260 = por %p258, %p259
      %s261 = ssub.s32 %s35, %s42
      %p262 = scmp.eq.s32.totalorder %s261, 0
      %s264 = sadd.s32 %s263, 1
      %s265 = scalar_select %p262, %s263, %s264
      %p268 = pneg %p262
      %p269 = scmp.eq.s32.totalorder %s27, 3
      %p270 = por %p268, %p269
      %p271 = scmp.ne.s32.totalorder %s263, %s266
      %p272 = scmp.eq.s32.totalorder %s27, 0
      %p273 = por %p271, %p272
      %p274 = scmp.ne.s32.totalorder %s263, %s266
      %p275 = scmp.eq.s32.totalorder %s32, 3
      %p276 = por %p274, %p275
      %p277 = scmp.ne.s32.totalorder %s266, %s267
      %p278 = scmp.eq.s32.totalorder %s32, 0
      %p279 = por %p277, %p278
      %p280 = scmp.ne.s32.totalorder %s266, %s267
      %p281 = scmp.eq.s32.totalorder %s33, 3
      %p282 = por %p280, %p281
      %p284 = scmp.ne.s32.totalorder %s267, %s283
      %p285 = scmp.eq.s32.totalorder %s33, 0
      %p286 = por %p284, %p285
      %s287 = ssub.s32 %s35, %s42
      %p288 = scmp.eq.s32.totalorder %s287, 0
      %s290 = sadd.s32 %s289, 1
      %s291 = scalar_select %p288, %s289, %s290
      %p294 = pneg %p288
      %p295 = scmp.eq.s32.totalorder %s27, 3
      %p296 = por %p294, %p295
      %p297 = scmp.ne.s32.totalorder %s289, %s292
      %p298 = scmp.eq.s32.totalorder %s27, 0
      %p299 = por %p297, %p298
      %p300 = scmp.ne.s32.totalorder %s289, %s292
      %p301 = scmp.eq.s32.totalorder %s32, 3
      %p302 = por %p300, %p301
      %p303 = scmp.ne.s32.totalorder %s292, %s293
      %p304 = scmp.eq.s32.totalorder %s32, 0
      %p305 = por %p303, %p304
      %p306 = scmp.ne.s32.totalorder %s292, %s293
      %p307 = scmp.eq.s32.totalorder %s33, 3
      %p308 = por %p306, %p307
      %p310 = scmp.ne.s32.totalorder %s293, %s309
      %p311 = scmp.eq.s32.totalorder %s33, 0
      %p312 = por %p310, %p311
      %s313 = ssub.s32 %s35, %s42
      %p314 = scmp.eq.s32.totalorder %s313, 0
      %s316 = sadd.s32 %s315, 1
      %s317 = scalar_select %p314, %s315, %s316
      %p320 = pneg %p314
      %p321 = scmp.eq.s32.totalorder %s27, 3
      %p322 = por %p320, %p321
      %p323 = scmp.ne.s32.totalorder %s315, %s318
      %p324 = scmp.eq.s32.totalorder %s27, 0
      %p325 = por %p323, %p324
      %p326 = scmp.ne.s32.totalorder %s315, %s318
      %p327 = scmp.eq.s32.totalorder %s32, 3
      %p328 = por %p326, %p327
      %p329 = scmp.ne.s32.totalorder %s318, %s319
      %p330 = scmp.eq.s32.totalorder %s32, 0
      %p331 = por %p329, %p330
      %p332 = scmp.ne.s32.totalorder %s318, %s319
      %p333 = scmp.eq.s32.totalorder %s33, 3
      %p334 = por %p332, %p333
      %p336 = scmp.ne.s32.totalorder %s319, %s335
      %p337 = scmp.eq.s32.totalorder %s33, 0
      %p338 = por %p336, %p337
      %s339 = ssub.s32 %s35, %s42
      %p340 = scmp.eq.s32.totalorder %s339, 0
      %s342 = sadd.s32 %s341, 1
      %s343 = scalar_select %p340, %s341, %s342
      %p346 = pneg %p340
      %p347 = scmp.eq.s32.totalorder %s27, 3
      %p348 = por %p346, %p347
      %p349 = scmp.ne.s32.totalorder %s341, %s344
      %p350 = scmp.eq.s32.totalorder %s27, 0
      %p351 = por %p349, %p350
      %p352 = scmp.ne.s32.totalorder %s341, %s344
      %p353 = scmp.eq.s32.totalorder %s32, 3
      %p354 = por %p352, %p353
      %p355 = scmp.ne.s32.totalorder %s344, %s345
      %p356 = scmp.eq.s32.totalorder %s32, 0
      %p357 = por %p355, %p356
      %p358 = scmp.ne.s32.totalorder %s344, %s345
      %p359 = scmp.eq.s32.totalorder %s33, 3
      %p360 = por %p358, %p359
      %p362 = scmp.ne.s32.totalorder %s345, %s361
      %p363 = scmp.eq.s32.totalorder %s33, 0
      %p364 = por %p362, %p363
      %s365 = ssub.s32 %s35, %s42
      %p366 = scmp.eq.s32.totalorder %s365, 0
      %s368 = sadd.s32 %s367, 1
      %s369 = scalar_select %p366, %s367, %s368
      %p372 = pneg %p366
      %p373 = scmp.eq.s32.totalorder %s27, 3
      %p374 = por %p372, %p373
      %p375 = scmp.ne.s32.totalorder %s367, %s370
      %p376 = scmp.eq.s32.totalorder %s27, 0
      %p377 = por %p375, %p376
      %p378 = scmp.ne.s32.totalorder %s367, %s370
      %p379 = scmp.eq.s32.totalorder %s32, 3
      %p380 = por %p378, %p379
      %p381 = scmp.ne.s32.totalorder %s370, %s371
      %p382 = scmp.eq.s32.totalorder %s32, 0
      %p383 = por %p381, %p382
      %p384 = scmp.ne.s32.totalorder %s370, %s371
      %p385 = scmp.eq.s32.totalorder %s33, 3
      %p386 = por %p384, %p385
      %p388 = scmp.ne.s32.totalorder %s371, %s387
      %p389 = scmp.eq.s32.totalorder %s33, 0
      %p390 = por %p388, %p389
      %s391 = ssub.s32 %s35, %s42
      %p392 = scmp.eq.s32.totalorder %s391, 0
      %s394 = sadd.s32 %s393, 1
      %s395 = scalar_select %p392, %s393, %s394
      %p398 = pneg %p392
      %p399 = scmp.eq.s32.totalorder %s27, 3
      %p400 = por %p398, %p399
      %p401 = scmp.ne.s32.totalorder %s393, %s396
      %p402 = scmp.eq.s32.totalorder %s27, 0
      %p403 = por %p401, %p402
      %p404 = scmp.ne.s32.totalorder %s393, %s396
      %p405 = scmp.eq.s32.totalorder %s32, 3
      %p406 = por %p404, %p405
      %p407 = scmp.ne.s32.totalorder %s396, %s397
      %p408 = scmp.eq.s32.totalorder %s32, 0
      %p409 = por %p407, %p408
      %p410 = scmp.ne.s32.totalorder %s396, %s397
      %p411 = scmp.eq.s32.totalorder %s33, 3
      %p412 = por %p410, %p411
      %p414 = scmp.ne.s32.totalorder %s397, %s413
      %p415 = scmp.eq.s32.totalorder %s33, 0
      %p416 = por %p414, %p415
      %s417 = ssub.s32 %s35, %s42
      %p418 = scmp.eq.s32.totalorder %s417, 0
      %s420 = sadd.s32 %s419, 1
      %s421 = scalar_select %p418, %s419, %s420
      %p424 = pneg %p418
      %p425 = scmp.eq.s32.totalorder %s27, 3
      %p426 = por %p424, %p425
      %p427 = scmp.ne.s32.totalorder %s419, %s422
      %p428 = scmp.eq.s32.totalorder %s27, 0
      %p429 = por %p427, %p428
      %p430 = scmp.ne.s32.totalorder %s419, %s422
      %p431 = scmp.eq.s32.totalorder %s32, 3
      %p432 = por %p430, %p431
      %p433 = scmp.ne.s32.totalorder %s422, %s423
      %p434 = scmp.eq.s32.totalorder %s32, 0
      %p435 = por %p433, %p434
      %p436 = scmp.ne.s32.totalorder %s422, %s423
      %p437 = scmp.eq.s32.totalorder %s33, 3
      %p438 = por %p436, %p437
      %p440 = scmp.ne.s32.totalorder %s423, %s439
      %p441 = scmp.eq.s32.totalorder %s33, 0
      %p442 = por %p440, %p441
      %s443 = ssub.s32 %s35, %s42
      %p444 = scmp.eq.s32.totalorder %s443, 0
      %s446 = sadd.s32 %s445, 1
      %s447 = scalar_select %p444, %s445, %s446
      %p450 = pneg %p444
      %p451 = scmp.eq.s32.totalorder %s27, 3
      %p452 = por %p450, %p451
      %p453 = scmp.ne.s32.totalorder %s445, %s448
      %p454 = scmp.eq.s32.totalorder %s27, 0
      %p455 = por %p453, %p454
      %p456 = scmp.ne.s32.totalorder %s445, %s448
      %p457 = scmp.eq.s32.totalorder %s32, 3
      %p458 = por %p456, %p457
      %p459 = scmp.ne.s32.totalorder %s448, %s449
      %p460 = scmp.eq.s32.totalorder %s32, 0
      %p461 = por %p459, %p460
      %p462 = scmp.ne.s32.totalorder %s448, %s449
      %p463 = scmp.eq.s32.totalorder %s33, 3
      %p464 = por %p462, %p463
      %p466 = scmp.ne.s32.totalorder %s449, %s465
      %p467 = scmp.eq.s32.totalorder %s33, 0
      %p468 = por %p466, %p467
      %s469 = ssub.s32 %s35, %s42
      %p470 = scmp.eq.s32.totalorder %s469, 0
      %s472 = sadd.s32 %s471, 1
      %s473 = scalar_select %p470, %s471, %s472
      %p476 = pneg %p470
      %p477 = scmp.eq.s32.totalorder %s27, 3
      %p478 = por %p476, %p477
      %p479 = scmp.ne.s32.totalorder %s471, %s474
      %p480 = scmp.eq.s32.totalorder %s27, 0
      %p481 = por %p479, %p480
      %p482 = scmp.ne.s32.totalorder %s471, %s474
      %p483 = scmp.eq.s32.totalorder %s32, 3
      %p484 = por %p482, %p483
      %p485 = scmp.ne.s32.totalorder %s474, %s475
      %p486 = scmp.eq.s32.totalorder %s32, 0
      %p487 = por %p485, %p486
      %p488 = scmp.ne.s32.totalorder %s474, %s475
      %p489 = scmp.eq.s32.totalorder %s33, 3
      %p490 = por %p488, %p489
      %p492 = scmp.ne.s32.totalorder %s475, %s491
      %p493 = scmp.eq.s32.totalorder %s33, 0
      %p494 = por %p492, %p493
      %s495 = ssub.s32 %s34, %s46
      %p496 = scmp.eq.s32.totalorder %s495, 0
      %s498 = sadd.s32 %s497, 1
      %s499 = scalar_select %p496, %s497, %s498
      %p502 = pneg %p496
      %p503 = scmp.eq.s32.totalorder %s27, 3
      %p504 = por %p502, %p503
      %p505 = scmp.ne.s32.totalorder %s497, %s500
      %p506 = scmp.eq.s32.totalorder %s27, 0
      %p507 = por %p505, %p506
      %p508 = scmp.ne.s32.totalorder %s497, %s500
      %p509 = scmp.eq.s32.totalorder %s32, 3
      %p510 = por %p508, %p509
      %p511 = scmp.ne.s32.totalorder %s500, %s501
      %p512 = scmp.eq.s32.totalorder %s32, 0
      %p513 = por %p511, %p512
      %p514 = scmp.ne.s32.totalorder %s500, %s501
      %p515 = scmp.eq.s32.totalorder %s33, 3
      %p516 = por %p514, %p515
      %p518 = scmp.ne.s32.totalorder %s501, %s517
      %p519 = scmp.eq.s32.totalorder %s33, 0
      %p520 = por %p518, %p519
      %p521 = scmp.le.s32.totalorder 1, %s27
      %p522 = scmp.lt.s32.totalorder %s27, 5
      %p523 = pnand %p521, %p522
      %p524 = pneg %p523
      // Predicated region
      $region9: #{wav2vec2_forward.17} parent=5 // pred_check
        _
      $region10: #{wav2vec2_forward.17} parent=5 // pred_check_branch
        %526 = sbr.rel (%p523) target = $region12
      $region11: #{wav2vec2_forward.17} parent=5 // pred_region
        %s527 = ssub.s32 %s27, 1
        // Predicated region
        $region13: #{wav2vec2_forward.17} parent=11 // pred_check
          %p528 = pneg %p112
        $region14: #{wav2vec2_forward.17} parent=11 // pred_check_branch
          %530 = sbr.rel (%p528) target = $region16
        $region15: #{wav2vec2_forward.17} parent=11 // pred_region
          _
        $region16: #{wav2vec2_forward.17} parent=11 // pred_fallthru
          _
        // Predicated region
        $region17: #{wav2vec2_forward.17} parent=11 // pred_check
          %p531 = pneg %p133
        $region18: #{wav2vec2_forward.17} parent=11 // pred_check_branch
          %533 = sbr.rel (%p531) target = $region20
        $region19: #{wav2vec2_forward.17} parent=11 // pred_region
          _
        $region20: #{wav2vec2_forward.17} parent=11 // pred_fallthru
          _
        // Predicated region
        $region21: #{wav2vec2_forward.17} parent=11 // pred_check
          %p534 = pneg %p154
        $region22: #{wav2vec2_forward.17} parent=11 // pred_check_branch
          %536 = sbr.rel (%p534) target = $region24
        $region23: #{wav2vec2_forward.17} parent=11 // pred_region
          _
        $region24: #{wav2vec2_forward.17} parent=11 // pred_fallthru
          _
        // Predicated region
        $region25: #{wav2vec2_forward.17} parent=11 // pred_check
          %p537 = pneg %p175
        $region26: #{wav2vec2_forward.17} parent=11 // pred_check_branch
          %539 = sbr.rel (%p537) target = $region28
        $region27: #{wav2vec2_forward.17} parent=11 // pred_region
          _
        $region28: #{wav2vec2_forward.17} parent=11 // pred_fallthru
          _
      $region12: #{wav2vec2_forward.17} parent=5 // pred_fallthru
        _
      %p540 = scmp.lt.s32.totalorder %s27, 4
      // Predicated region
      $region29: #{wav2vec2_forward.17} parent=5 // pred_check
        %p541 = pneg %p540
      $region30: #{wav2vec2_forward.17} parent=5 // pred_check_branch
        %543 = sbr.rel (%p541) target = $region32
      $region31: #{wav2vec2_forward.17} parent=5 // pred_region
        // Predicated region
        $region33: #{wav2vec2_forward.17} parent=31 // pred_check
          %p544 = pneg %p59
        $region34: #{wav2vec2_forward.17} parent=31 // pred_check_branch
          %546 = sbr.rel (%p544) target = $region36
        $region35: #{wav2vec2_forward.17} parent=31 // pred_region
          %p547 = scmp.lt.s32.totalorder %s34, 1
          %s548 = scalar_select %p547, %s34, 1
          %s549 = smul.addr %s548, 8
          %s550 = scalar_lea.vmem %s0, %s549
        $region36: #{wav2vec2_forward.17} parent=31 // pred_fallthru
          _
        // Predicated region
        $region37: #{wav2vec2_forward.17} parent=31 // pred_check
          %p551 = pneg %p85
        $region38: #{wav2vec2_forward.17} parent=31 // pred_check_branch
          %553 = sbr.rel (%p551) target = $region40
        $region39: #{wav2vec2_forward.17} parent=31 // pred_region
          %p554 = scmp.lt.s32.totalorder %s34, 1
          %s555 = scalar_select %p554, %s34, 1
          %s556 = smul.addr %s555, 4
          %s557 = smul.addr %s556, 4
          %s558 = scalar_lea.vmem %s1, %s557
        $region40: #{wav2vec2_forward.17} parent=31 // pred_fallthru
          _
        // Predicated region
        $region41: #{wav2vec2_forward.17} parent=31 // pred_check
          %p559 = pneg %p195
        $region42: #{wav2vec2_forward.17} parent=31 // pred_check_branch
          %561 = sbr.rel (%p559) target = $region44
        $region43: #{wav2vec2_forward.17} parent=31 // pred_region
          %p562 = scmp.lt.s32.totalorder %s35, 1
          %s563 = scalar_select %p562, %s35, 1
          %s564 = smul.addr %s563, 4
          %s565 = smul.addr %s564, 4
          %s566 = scalar_lea.vmem %s6, %s565
        $region44: #{wav2vec2_forward.17} parent=31 // pred_fallthru
          _
        // Predicated region
        $region45: #{wav2vec2_forward.17} parent=31 // pred_check
          %p567 = pneg %p221
        $region46: #{wav2vec2_forward.17} parent=31 // pred_check_branch
          %569 = sbr.rel (%p567) target = $region48
        $region47: #{wav2vec2_forward.17} parent=31 // pred_region
          %p570 = scmp.lt.s32.totalorder %s35, 1
          %s571 = scalar_select %p570, %s35, 1
          %s572 = scalar_lea.vmem %s7, %s571
        $region48: #{wav2vec2_forward.17} parent=31 // pred_fallthru
          _
        // Predicated region
        $region49: #{wav2vec2_forward.17} parent=31 // pred_check
          %p573 = pneg %p247
        $region50: #{wav2vec2_forward.17} parent=31 // pred_check_branch
          %575 = sbr.rel (%p573) target = $region52
        $region51: #{wav2vec2_forward.17} parent=31 // pred_region
          %p576 = scmp.lt.s32.totalorder %s35, 1
          %s577 = scalar_select %p576, %s35, 1
          %s578 = smul.addr %s577, 4
          %s579 = smul.addr %s578, 4
          %s580 = scalar_lea.vmem %s8, %s579
        $region52: #{wav2vec2_forward.17} parent=31 // pred_fallthru
          _
        // Predicated region
        $region53: #{wav2vec2_forward.17} parent=31 // pred_check
          %p581 = pneg %p273
        $region54: #{wav2vec2_forward.17} parent=31 // pred_check_branch
          %583 = sbr.rel (%p581) target = $region56
        $region55: #{wav2vec2_forward.17} parent=31 // pred_region
          %p584 = scmp.lt.s32.totalorder %s35, 1
          %s585 = scalar_select %p584, %s35, 1
          %s586 = scalar_lea.vmem %s9, %s585
        $region56: #{wav2vec2_forward.17} parent=31 // pred_fallthru
          _
        // Predicated region
        $region57: #{wav2vec2_forward.17} parent=31 // pred_check
          %p587 = pneg %p299
        $region58: #{wav2vec2_forward.17} parent=31 // pred_check_branch
          %589 = sbr.rel (%p587) target = $region60
        $region59: #{wav2vec2_forward.17} parent=31 // pred_region
          %p590 = scmp.lt.s32.totalorder %s35, 1
          %s591 = scalar_select %p590, %s35, 1
          %s592 = scalar_lea.vmem %s10, %s591
        $region60: #{wav2vec2_forward.17} parent=31 // pred_fallthru
          _
        // Predicated region
        $region61: #{wav2vec2_forward.17} parent=31 // pred_check
          %p593 = pneg %p325
        $region62: #{wav2vec2_forward.17} parent=31 // pred_check_branch
          %595 = sbr.rel (%p593) target = $region64
        $region63: #{wav2vec2_forward.17} parent=31 // pred_region
          %p596 = scmp.lt.s32.totalorder %s35, 1
          %s597 = scalar_select %p596, %s35, 1
          %s598 = scalar_lea.vmem %s11, %s597
        $region64: #{wav2vec2_forward.17} parent=31 // pred_fallthru
          _
        // Predicated region
        $region65: #{wav2vec2_forward.17} parent=31 // pred_check
          %p599 = pneg %p351
        $region66: #{wav2vec2_forward.17} parent=31 // pred_check_branch
          %601 = sbr.rel (%p599) target = $region68
        $region67: #{wav2vec2_forward.17} parent=31 // pred_region
          %p602 = scmp.lt.s32.totalorder %s35, 1
          %s603 = scalar_select %p602, %s35, 1
          %s604 = smul.addr %s603, 4
          %s605 = smul.addr %s604, 4
          %s606 = scalar_lea.vmem %s12, %s605
        $region68: #{wav2vec2_forward.17} parent=31 // pred_fallthru
          _
        // Predicated region
        $region69: #{wav2vec2_forward.17} parent=31 // pred_check
          %p607 = pneg %p377
        $region70: #{wav2vec2_forward.17} parent=31 // pred_check_branch
          %609 = sbr.rel (%p607) target = $region72
        $region71: #{wav2vec2_forward.17} parent=31 // pred_region
          %p610 = scmp.lt.s32.totalorder %s35, 1
          %s611 = scalar_select %p610, %s35, 1
          %s612 = scalar_lea.vmem %s13, %s611
        $region72: #{wav2vec2_forward.17} parent=31 // pred_fallthru
          _
        // Predicated region
        $region73: #{wav2vec2_forward.17} parent=31 // pred_check
          %p613 = pneg %p403
        $region74: #{wav2vec2_forward.17} parent=31 // pred_check_branch
          %615 = sbr.rel (%p613) target = $region76
        $region75: #{wav2vec2_forward.17} parent=31 // pred_region
          %p616 = scmp.lt.s32.totalorder %s35, 1
          %s617 = scalar_select %p616, %s35, 1
          %s618 = smul.addr %s617, 8
          %s619 = smul.addr %s618, 4
          %s620 = scalar_lea.vmem %s14, %s619
        $region76: #{wav2vec2_forward.17} parent=31 // pred_fallthru
          _
        // Predicated region
        $region77: #{wav2vec2_forward.17} parent=31 // pred_check
          %p621 = pneg %p429
        $region78: #{wav2vec2_forward.17} parent=31 // pred_check_branch
          %623 = sbr.rel (%p621) target = $region80
        $region79: #{wav2vec2_forward.17} parent=31 // pred_region
          %p624 = scmp.lt.s32.totalorder %s35, 1
          %s625 = scalar_select %p624, %s35, 1
          %s626 = scalar_lea.vmem %s15, %s625
        $region80: #{wav2vec2_forward.17} parent=31 // pred_fallthru
          _
        // Predicated region
        $region81: #{wav2vec2_forward.17} parent=31 // pred_check
          %p627 = pneg %p455
        $region82: #{wav2vec2_forward.17} parent=31 // pred_check_branch
          %629 = sbr.rel (%p627) target = $region84
        $region83: #{wav2vec2_forward.17} parent=31 // pred_region
          %p630 = scmp.lt.s32.totalorder %s35, 1
          %s631 = scalar_select %p630, %s35, 1
          %s632 = scalar_lea.vmem %s16, %s631
        $region84: #{wav2vec2_forward.17} parent=31 // pred_fallthru
          _
        // Predicated region
        $region85: #{wav2vec2_forward.17} parent=31 // pred_check
          %p633 = pneg %p481
        $region86: #{wav2vec2_forward.17} parent=31 // pred_check_branch
          %635 = sbr.rel (%p633) target = $region88
        $region87: #{wav2vec2_forward.17} parent=31 // pred_region
          %p636 = scmp.lt.s32.totalorder %s35, 1
          %s637 = scalar_select %p636, %s35, 1
          %s638 = scalar_lea.vmem %s17, %s637
        $region88: #{wav2vec2_forward.17} parent=31 // pred_fallthru
          _
      $region32: #{wav2vec2_forward.17} parent=5 // pred_fallthru
        _
      %p639 = scmp.le.s32.totalorder 1, %s27
      %p640 = scmp.lt.s32.totalorder %s27, 5
      %p641 = pnand %p639, %p640
      %p642 = pneg %p641
      // Predicated region
      $region89: #{wav2vec2_forward.17} parent=5 // pred_check
        _
      $region90: #{wav2vec2_forward.17} parent=5 // pred_check_branch
        %644 = sbr.rel (%p641) target = $region92
      $region91: #{wav2vec2_forward.17} parent=5 // pred_region
        %s645 = ssub.s32 %s27, 1
        %p646 = scmp.lt.s32.totalorder %s36, 1
        %s647 = scalar_select %p646, %s36, 1
        %s648 = smul.addr %s647, 8
        %s649 = scalar_lea.vmem %s0, %s648
        %p650 = pneg %p65
        %p651 = pneg %p62
        %p652 = scmp.lt.s32.totalorder %s36, 1
        %s653 = scalar_select %p652, %s36, 1
        %s654 = smul.addr %s653, 4
        %s655 = smul.addr %s654, 4
        %s656 = scalar_lea.vmem %s1, %s655
        %p657 = pneg %p91
        %p658 = pneg %p88
        %p659 = pneg %p112
        %p660 = pneg %p109
        %p661 = pneg %p133
        %p662 = pneg %p130
        %p663 = pneg %p154
        %p664 = pneg %p151
        %p665 = pneg %p175
        %p666 = pneg %p172
        %p667 = scmp.lt.s32.totalorder %s37, 1
        %s668 = scalar_select %p667, %s37, 1
        %s669 = smul.addr %s668, 4
        %s670 = smul.addr %s669, 4
        %s671 = scalar_lea.vmem %s6, %s670
        %p672 = pneg %p201
        %p673 = pneg %p198
        %p674 = scmp.lt.s32.totalorder %s37, 1
        %s675 = scalar_select %p674, %s37, 1
        %s676 = scalar_lea.vmem %s7, %s675
        %p677 = pneg %p227
        %p678 = pneg %p224
        %p679 = scmp.lt.s32.totalorder %s37, 1
        %s680 = scalar_select %p679, %s37, 1
        %s681 = smul.addr %s680, 4
        %s682 = smul.addr %s681, 4
        %s683 = scalar_lea.vmem %s8, %s682
        %p684 = pneg %p253
        %p685 = pneg %p250
        %p686 = scmp.lt.s32.totalorder %s37, 1
        %s687 = scalar_select %p686, %s37, 1
        %s688 = scalar_lea.vmem %s9, %s687
        %p689 = pneg %p279
        %p690 = pneg %p276
        %p691 = scmp.lt.s32.totalorder %s37, 1
        %s692 = scalar_select %p691, %s37, 1
        %s693 = scalar_lea.vmem %s10, %s692
        %p694 = pneg %p305
        %p695 = pneg %p302
        %p696 = scmp.lt.s32.totalorder %s37, 1
        %s697 = scalar_select %p696, %s37, 1
        %s698 = scalar_lea.vmem %s11, %s697
        %p699 = pneg %p331
        %p700 = pneg %p328
        %p701 = scmp.lt.s32.totalorder %s37, 1
        %s702 = scalar_select %p701, %s37, 1
        %s703 = smul.addr %s702, 4
        %s704 = smul.addr %s703, 4
        %s705 = scalar_lea.vmem %s12, %s704
        %p706 = pneg %p357
        %p707 = pneg %p354
        %p708 = scmp.lt.s32.totalorder %s37, 1
        %s709 = scalar_select %p708, %s37, 1
        %s710 = scalar_lea.vmem %s13, %s709
        %p711 = pneg %p383
        %p712 = pneg %p380
        %p713 = scmp.lt.s32.totalorder %s37, 1
        %s714 = scalar_select %p713, %s37, 1
        %s715 = smul.addr %s714, 8
        %s716 = smul.addr %s715, 4
        %s717 = scalar_lea.vmem %s14, %s716
        %p718 = pneg %p409
        %p719 = pneg %p406
        %p720 = scmp.lt.s32.totalorder %s37, 1
        %s721 = scalar_select %p720, %s37, 1
        %s722 = scalar_lea.vmem %s15, %s721
        %p723 = pneg %p435
        %p724 = pneg %p432
        %p725 = scmp.lt.s32.totalorder %s37, 1
        %s726 = scalar_select %p725, %s37, 1
        %s727 = scalar_lea.vmem %s16, %s726
        %p728 = pneg %p461
        %p729 = pneg %p458
        %p730 = scmp.lt.s32.totalorder %s37, 1
        %s731 = scalar_select %p730, %s37, 1
        %s732 = scalar_lea.vmem %s17, %s731
        %p733 = pneg %p487
        %p734 = pneg %p484
        %p735 = pneg %p513
        %p736 = pneg %p510
        %s737 = sand.u32 %s500, 1
        %s738 = scalar_lea.sflag [#allocation4], %s737
        %s739 = sand.u32 %s500, 1
        %s740 = scalar_lea.vmem [#allocation3], %s739
        %p741 = scmp.lt.s32.totalorder %s36, 1
        %s742 = scalar_select %p741, %s36, 1
        %s743 = smul.addr %s742, 8
        %s744 = scalar_lea.vmem %s0, %s743
        %p745 = scmp.lt.s32.totalorder %s36, 1
        %s746 = scalar_select %p745, %s36, 1
        %s747 = smul.addr %s746, 4
        %s748 = smul.addr %s747, 4
        %s749 = scalar_lea.vmem %s1, %s748
        %p750 = scmp.lt.s32.totalorder %s37, 1
        %s751 = scalar_select %p750, %s37, 1
        %s752 = smul.addr %s751, 4
        %s753 = smul.addr %s752, 4
        %s754 = scalar_lea.vmem %s6, %s753
        %p755 = scmp.lt.s32.totalorder %s37, 1
        %s756 = scalar_select %p755, %s37, 1
        %s757 = scalar_lea.vmem %s7, %s756
        %p758 = scmp.lt.s32.totalorder %s37, 1
        %s759 = scalar_select %p758, %s37, 1
        %s760 = smul.addr %s759, 4
        %s761 = smul.addr %s760, 4
        %s762 = scalar_lea.vmem %s8, %s761
        %p763 = scmp.lt.s32.totalorder %s37, 1
        %s764 = scalar_select %p763, %s37, 1
        %s765 = scalar_lea.vmem %s9, %s764
        %p766 = scmp.lt.s32.totalorder %s37, 1
        %s767 = scalar_select %p766, %s37, 1
        %s768 = scalar_lea.vmem %s10, %s767
        %p769 = scmp.lt.s32.totalorder %s37, 1
        %s770 = scalar_select %p769, %s37, 1
        %s771 = scalar_lea.vmem %s11, %s770
        %p772 = scmp.lt.s32.totalorder %s37, 1
        %s773 = scalar_select %p772, %s37, 1
        %s774 = smul.addr %s773, 4
        %s775 = smul.addr %s774, 4
        %s776 = scalar_lea.vmem %s12, %s775
        %p777 = scmp.lt.s32.totalorder %s37, 1
        %s778 = scalar_select %p777, %s37, 1
        %s779 = scalar_lea.vmem %s13, %s778
        %p780 = scmp.lt.s32.totalorder %s37, 1
        %s781 = scalar_select %p780, %s37, 1
        %s782 = smul.addr %s781, 8
        %s783 = smul.addr %s782, 4
        %s784 = scalar_lea.vmem %s14, %s783
        %p785 = scmp.lt.s32.totalorder %s37, 1
        %s786 = scalar_select %p785, %s37, 1
        %s787 = scalar_lea.vmem %s15, %s786
        %p788 = scmp.lt.s32.totalorder %s37, 1
        %s789 = scalar_select %p788, %s37, 1
        %s790 = scalar_lea.vmem %s16, %s789
        %p791 = scmp.lt.s32.totalorder %s37, 1
        %s792 = scalar_select %p791, %s37, 1
        %s793 = scalar_lea.vmem %s17, %s792
        %p795 = scmp.eq.s32.totalorder %s37, 0
        // Predicated region
        $region93: #{wav2vec2_forward.17} parent=91 // pred_check
          %p796 = pneg %p795
        $region94: #{wav2vec2_forward.17} parent=91 // pred_check_branch
          %798 = sbr.rel (%p796) target = $region96
        $region95: #{wav2vec2_forward.17} parent=91 // pred_region
          %v799 = vld [vmem:[%s744] sm:$0x3f]
          %v800 = vld [vmem:[%s749] sm:$0x77]
          %v801 = vld [vmem:[%s749 + $0x8] sm:$0x77]
          %v802 = vld [vmem:[%s2] sm:$0xf]
          %v803 = vld [vmem:[%s2 + $0x4] sm:$0xf]
          %v804 = vld [vmem:[%s2 + $0x8] sm:$0xf]
          %v805 = vld [vmem:[%s2 + $0xc] sm:$0xf]
          %v806 = vld [vmem:[%s2 + $0x10] sm:$0xf]
          %v807 = vld [vmem:[%s2 + $0x14] sm:$0xf]
          %v808 = vld [vmem:[%s2 + $0x18] sm:$0xf]
          %v809 = vld [vmem:[%s2 + $0x1c] sm:$0xf]
          %v810 = vld [vmem:[%s2 + $0x20] sm:$0xf]
          %v811 = vld [vmem:[%s2 + $0x24] sm:$0xf]
          %v812 = vld [vmem:[%s2 + $0x28] sm:$0xf]
          %v813 = vld [vmem:[%s2 + $0x2c] sm:$0xf]
          %v814 = vld [vmem:[%s2 + $0x30] sm:$0xf]
          %v815 = vld [vmem:[%s2 + $0x34] sm:$0xf]
          %v816 = vld [vmem:[%s2 + $0x38] sm:$0xf]
          %v817 = vld [vmem:[%s2 + $0x3c] sm:$0xf]
          %v818 = vld [vmem:[%s2 + $0x40] sm:$0xf]
          %v819 = vld [vmem:[%s2 + $0x44] sm:$0xf]
          %v820 = vld [vmem:[%s2 + $0x48] sm:$0xf]
          %v821 = vld [vmem:[%s2 + $0x4c] sm:$0xf]
          %v822 = vld [vmem:[%s2 + $0x50] sm:$0xf]
          %v823 = vld [vmem:[%s2 + $0x54] sm:$0xf]
          %v824 = vld [vmem:[%s2 + $0x58] sm:$0xf]
          %v825 = vld [vmem:[%s2 + $0x5c] sm:$0xf]
          %v826 = vld [vmem:[%s2 + $0x60] sm:$0xf]
          %v827 = vld [vmem:[%s2 + $0x64] sm:$0xf]
          %v828 = vld [vmem:[%s2 + $0x68] sm:$0xf]
          %v829 = vld [vmem:[%s2 + $0x6c] sm:$0xf]
          %v830 = vld [vmem:[%s2 + $0x70] sm:$0xf]
          %v831 = vld [vmem:[%s2 + $0x74] sm:$0xf]
          %v832 = vld [vmem:[%s2 + $0x78] sm:$0xf]
          %v833 = vld [vmem:[%s2 + $0x7c] sm:$0xf]
          %v834 = vld [vmem:[%s2 + $0x80] sm:$0xf]
          %v835 = vld [vmem:[%s2 + $0x84] sm:$0xf]
          %v836 = vld [vmem:[%s2 + $0x88] sm:$0xf]
          %v837 = vld [vmem:[%s2 + $0x8c] sm:$0xf]
          %v838 = vld [vmem:[%s2 + $0x90] sm:$0xf]
          %v839 = vld [vmem:[%s2 + $0x94] sm:$0xf]
          %v840 = vld [vmem:[%s2 + $0x98] sm:$0xf]
          %v841 = vld [vmem:[%s2 + $0x9c] sm:$0xf]
          %v842 = vld [vmem:[%s2 + $0xa0] sm:$0xf]
          %v843 = vld [vmem:[%s2 + $0xa4] sm:$0xf]
          %v844 = vld [vmem:[%s2 + $0xa8] sm:$0xf]
          %v845 = vld [vmem:[%s2 + $0xac] sm:$0xf]
          %v846 = vld [vmem:[%s2 + $0xb0] sm:$0xf]
          %v847 = vld [vmem:[%s2 + $0xb4] sm:$0xf]
          %v848 = vld [vmem:[%s2 + $0xb8] sm:$0xf]
          %v849 = vld [vmem:[%s2 + $0xbc] sm:$0xf]
          %v850 = vld [vmem:[%s2 + $0xc0] sm:$0xf]
          %v851 = vld [vmem:[%s2 + $0xc4] sm:$0xf]
          %v852 = vld [vmem:[%s2 + $0xc8] sm:$0xf]
          %v853 = vld [vmem:[%s2 + $0xcc] sm:$0xf]
          %v854 = vld [vmem:[%s2 + $0xd0] sm:$0xf]
          %v855 = vld [vmem:[%s2 + $0xd4] sm:$0xf]
          %v856 = vld [vmem:[%s2 + $0xd8] sm:$0xf]
          %v857 = vld [vmem:[%s2 + $0xdc] sm:$0xf]
          %v858 = vld [vmem:[%s2 + $0xe0] sm:$0xf]
          %v859 = vld [vmem:[%s2 + $0xe4] sm:$0xf]
          %v860 = vld [vmem:[%s2 + $0xe8] sm:$0xf]
          %v861 = vld [vmem:[%s2 + $0xec] sm:$0xf]
          %v862 = vld [vmem:[%s2 + $0xf0] sm:$0xf]
          %v863 = vld [vmem:[%s2 + $0xf4] sm:$0xf]
          %v864 = vld [vmem:[%s2 + $0xf8] sm:$0xf]
          %v865 = vld [vmem:[%s2 + $0xfc] sm:$0xf]
          %v866 = vld [vmem:[%s3] sm:$0x1]
          %v868 = vlaneseq
          %v869 = vshrl.u32 %v868, 7
          %v870 = vsub.s32 0, %v869
          %v871 = vrot.slane %v866, %v870
          %v875 = vunpack.c.l.b16 %v800
          %v876 = vunpack.c.h.b16 %v800
          %v877 = vunpack.c.l.b16 %v801
          %v878 = vunpack.c.h.b16 %v801
          %v879 = vpack.c.b16 %v875, %v875
          %v880 = vpack.c.b16 %v876, %v876
          %v881 = vpack.c.b16 %v877, %v877
          %v882 = vpack.c.b16 %v878, %v878
          %v951 = vunpack.c.l.b16 %v802
          %v952 = vunpack.c.l.b16 %v803
          %v953 = vunpack.c.l.b16 %v804
          %v954 = vunpack.c.l.b16 %v805
          %v955 = vunpack.c.l.b16 %v806
          %v956 = vunpack.c.l.b16 %v807
          %v957 = vunpack.c.l.b16 %v808
          %v958 = vunpack.c.l.b16 %v809
          %v959 = vunpack.c.l.b16 %v810
          %v960 = vunpack.c.l.b16 %v811
          %v961 = vunpack.c.l.b16 %v812
          %v962 = vunpack.c.l.b16 %v813
          %v963 = vunpack.c.l.b16 %v814
          %v964 = vunpack.c.l.b16 %v815
          %v965 = vunpack.c.l.b16 %v816
          %v966 = vunpack.c.l.b16 %v817
          %v967 = vunpack.c.l.b16 %v818
          %v968 = vunpack.c.l.b16 %v819
          %v969 = vunpack.c.l.b16 %v820
          %v970 = vunpack.c.l.b16 %v821
          %v971 = vunpack.c.l.b16 %v822
          %v972 = vunpack.c.l.b16 %v823
          %v973 = vunpack.c.l.b16 %v824
          %v974 = vunpack.c.l.b16 %v825
          %v975 = vunpack.c.l.b16 %v826
          %v976 = vunpack.c.l.b16 %v827
          %v977 = vunpack.c.l.b16 %v828
          %v978 = vunpack.c.l.b16 %v829
          %v979 = vunpack.c.l.b16 %v830
          %v980 = vunpack.c.l.b16 %v831
          %v981 = vunpack.c.l.b16 %v832
          %v982 = vunpack.c.l.b16 %v833
          %v983 = vunpack.c.l.b16 %v834
          %v984 = vunpack.c.l.b16 %v835
          %v985 = vunpack.c.l.b16 %v836
          %v986 = vunpack.c.l.b16 %v837
          %v987 = vunpack.c.l.b16 %v838
          %v988 = vunpack.c.l.b16 %v839
          %v989 = vunpack.c.l.b16 %v840
          %v990 = vunpack.c.l.b16 %v841
          %v991 = vunpack.c.l.b16 %v842
          %v992 = vunpack.c.l.b16 %v843
          %v993 = vunpack.c.l.b16 %v844
          %v994 = vunpack.c.l.b16 %v845
          %v995 = vunpack.c.l.b16 %v846
          %v996 = vunpack.c.l.b16 %v847
          %v997 = vunpack.c.l.b16 %v848
          %v998 = vunpack.c.l.b16 %v849
          %v999 = vunpack.c.l.b16 %v850
          %v1000 = vunpack.c.l.b16 %v851
          %v1001 = vunpack.c.l.b16 %v852
          %v1002 = vunpack.c.l.b16 %v853
          %v1003 = vunpack.c.l.b16 %v854
          %v1004 = vunpack.c.l.b16 %v855
          %v1005 = vunpack.c.l.b16 %v856
          %v1006 = vunpack.c.l.b16 %v857
          %v1007 = vunpack.c.l.b16 %v858
          %v1008 = vunpack.c.l.b16 %v859
          %v1009 = vunpack.c.l.b16 %v860
          %v1010 = vunpack.c.l.b16 %v861
          %v1011 = vunpack.c.l.b16 %v862
          %v1012 = vunpack.c.l.b16 %v863
          %v1013 = vunpack.c.l.b16 %v864
          %v1014 = vunpack.c.l.b16 %v865
          %v1015 = vpack.c.b16 %v952, %v951
          %v1016 = vpack.c.b16 %v954, %v953
          %v1017 = vpack.c.b16 %v956, %v955
          %v1018 = vpack.c.b16 %v958, %v957
          %v1019 = vpack.c.b16 %v960, %v959
          %v1020 = vpack.c.b16 %v962, %v961
          %v1021 = vpack.c.b16 %v964, %v963
          %v1022 = vpack.c.b16 %v966, %v965
          %v1023 = vpack.c.b16 %v968, %v967
          %v1024 = vpack.c.b16 %v970, %v969
          %v1025 = vpack.c.b16 %v972, %v971
          %v1026 = vpack.c.b16 %v974, %v973
          %v1027 = vpack.c.b16 %v976, %v975
          %v1028 = vpack.c.b16 %v978, %v977
          %v1029 = vpack.c.b16 %v980, %v979
          %v1030 = vpack.c.b16 %v982, %v981
          %v1031 = vpack.c.b16 %v984, %v983
          %v1032 = vpack.c.b16 %v986, %v985
          %v1033 = vpack.c.b16 %v988, %v987
          %v1034 = vpack.c.b16 %v990, %v989
          %v1035 = vpack.c.b16 %v992, %v991
          %v1036 = vpack.c.b16 %v994, %v993
          %v1037 = vpack.c.b16 %v996, %v995
          %v1038 = vpack.c.b16 %v998, %v997
          %v1039 = vpack.c.b16 %v1000, %v999
          %v1040 = vpack.c.b16 %v1002, %v1001
          %v1041 = vpack.c.b16 %v1004, %v1003
          %v1042 = vpack.c.b16 %v1006, %v1005
          %v1043 = vpack.c.b16 %v1008, %v1007
          %v1044 = vpack.c.b16 %v1010, %v1009
          %v1045 = vpack.c.b16 %v1012, %v1011
          %v1046 = vpack.c.b16 %v1014, %v1013
          %1079 = vmatprep.subr.bf16.mxu0 0
          %1080 = vmatpush1.bf16.msra.mxu0 %v1022
          %1081 = vmatprep.subr.bf16.mxu0 0
          %1082 = vmatpush1.bf16.msra.mxu0 %v1021
          %1083 = vmatprep.subr.bf16.mxu0 0
          %1084 = vmatpush1.bf16.msra.mxu0 %v1020
          %1085 = vmatprep.subr.bf16.mxu0 0
          %1086 = vmatpush1.bf16.msra.mxu0 %v1019
          %1087 = vmatprep.subr.bf16.mxu0 0
          %1088 = vmatpush1.bf16.msra.mxu0 %v1018
          %1089 = vmatprep.subr.bf16.mxu0 0
          %1090 = vmatpush1.bf16.msra.mxu0 %v1017
          %1091 = vmatprep.subr.bf16.mxu0 0
          %1092 = vmatpush1.bf16.msra.mxu0 %v1016
          %1093 = vmatprep.subr.bf16.mxu0 0
          %1094 = vmatpush1.bf16.msra.mxu0 %v1015
          %1095 = vmatprep.subr.bf16.mxu0 0
          %1096 = vmatpush2.bf16.msra.mxu0 %v1030
          %1097 = vmatprep.subr.bf16.mxu0 0
          %1098 = vmatpush2.bf16.msra.mxu0 %v1029
          %1099 = vmatprep.subr.bf16.mxu0 0
          %1100 = vmatpush2.bf16.msra.mxu0 %v1028
          %1101 = vmatprep.subr.bf16.mxu0 0
          %1102 = vmatpush2.bf16.msra.mxu0 %v1027
          %1103 = vmatprep.subr.bf16.mxu0 0
          %1104 = vmatpush2.bf16.msra.mxu0 %v1026
          %1105 = vmatprep.subr.bf16.mxu0 0
          %1106 = vmatpush2.bf16.msra.mxu0 %v1025
          %1107 = vmatprep.subr.bf16.mxu0 0
          %1108 = vmatpush2.bf16.msra.mxu0 %v1024
          %1109 = vmatprep.subr.bf16.mxu0 0
          %1110 = vmatpush2.bf16.msra.mxu0 %v1023
          %1111 = vmatprep.mubr.bf16.mxu0 %v880
          %1112 = vmatmul.mubr.bf16.gmra.mxu0 %v879
          %v1113 = vpop.f32.mrf.mxu0
          %v1114 = vadd.f32 %v871, %v1113
          %v1115 = vpop.f32.mrf.mxu0
          %v1116 = vpop.f32.mrf.mxu0
          %v1117 = vpop.f32.mrf.mxu0
          %1118 = vdwg.mxu0
          %1119 = vmatprep.subr.bf16.mxu0 0
          %1120 = vmatpush1.bf16.msra.mxu0 %v1038
          %1121 = vmatprep.subr.bf16.mxu0 0
          %1122 = vmatpush1.bf16.msra.mxu0 %v1037
          %1123 = vmatprep.subr.bf16.mxu0 0
          %1124 = vmatpush1.bf16.msra.mxu0 %v1036
          %1125 = vmatprep.subr.bf16.mxu0 0
          %1126 = vmatpush1.bf16.msra.mxu0 %v1035
          %1127 = vmatprep.subr.bf16.mxu0 0
          %1128 = vmatpush1.bf16.msra.mxu0 %v1034
          %1129 = vmatprep.subr.bf16.mxu0 0
          %1130 = vmatpush1.bf16.msra.mxu0 %v1033
          %1131 = vmatprep.subr.bf16.mxu0 0
          %1132 = vmatpush1.bf16.msra.mxu0 %v1032
          %1133 = vmatprep.subr.bf16.mxu0 0
          %1134 = vmatpush1.bf16.msra.mxu0 %v1031
          %1135 = vmatprep.subr.bf16.mxu0 0
          %1136 = vmatpush2.bf16.msra.mxu0 %v1046
          %1137 = vmatprep.subr.bf16.mxu0 0
          %1138 = vmatpush2.bf16.msra.mxu0 %v1045
          %1139 = vmatprep.subr.bf16.mxu0 0
          %1140 = vmatpush2.bf16.msra.mxu0 %v1044
          %1141 = vmatprep.subr.bf16.mxu0 0
          %1142 = vmatpush2.bf16.msra.mxu0 %v1043
          %1143 = vmatprep.subr.bf16.mxu0 0
          %1144 = vmatpush2.bf16.msra.mxu0 %v1042
          %1145 = vmatprep.subr.bf16.mxu0 0
          %1146 = vmatpush2.bf16.msra.mxu0 %v1041
          %1147 = vmatprep.subr.bf16.mxu0 0
          %1148 = vmatpush2.bf16.msra.mxu0 %v1040
          %1149 = vmatprep.subr.bf16.mxu0 0
          %1150 = vmatpush2.bf16.msra.mxu0 %v1039
          %1151 = vmatprep.mubr.bf16.mxu0 %v882
          %1152 = vmatmul.mubr.bf16.gmra.mxu0 %v881
          %v1153 = vpop.f32.mrf.mxu0
          %v1154 = vadd.f32 %v1114, %v1153
          %v1155 = vpop.f32.mrf.mxu0
          %v1156 = vpop.f32.mrf.mxu0
          %v1157 = vpop.f32.mrf.mxu0
          %1158 = vdwg.mxu0
          %v1159 = vmul.f32 %v1154, 0.5
          %v1160 = vmul.f32 %v1154, 0.044715
          %v1161 = vmul.f32 %v1160, %v1154
          %v1162 = vmul.f32 %v1161, %v1154
          %v1163 = vadd.f32 %v1154, %v1162
          %v1164 = vmul.f32 %v1163, 0.7978846
          %v1165 = vtanh.pop %v1164
          %v1166 = vadd.f32 %v1165, 1.0
          %v1167 = vmul.f32 %v1159, %v1166
          %v1168 = vadd.f32 %v799, %v1167
          %v1169 = vld [vmem:[%s4] sm:$0x1]
          %v1170 = vld [vmem:[%s5] sm:$0x1]
          %vm1171 = vcmask 259072
          %v1172 = vsel %vm1171, %v1168, 0.0
          %1173 = vadd.xlane.f32.xlu0 %v1172
          %v1174 = vpop.xlane.xlu0 %1173
          %v1175 = vrcp.pop 32.0
          %v1176 = vmul.f32 %v1174, %v1175
          %v1177 = vsub.f32 %v1168, %v1176
          %v1178 = vmul.f32 %v1177, %v1177
          %v1179 = vsel %vm1171, %v1178, 0.0
          %1180 = vadd.xlane.f32.xlu0 %v1179
          %v1181 = vpop.xlane.xlu0 %1180
          %v1182 = vmul.f32 %v1181, %v1175
          %v1183 = vadd.f32 %v1182, 1e-05
          %v1184 = vrsqrt.pop %v1183
          %v1185 = vmul.f32 %v1177, %v1184
          %v1187 = vlaneseq
          %v1188 = vshrl.u32 %v1187, 7
          %v1189 = vsub.s32 0, %v1188
          %v1190 = vrot.slane %v1169, %v1189
          %v1192 = vmul.f32 %v1185, %v1190
          %v1194 = vlaneseq
          %v1195 = vshrl.u32 %v1194, 7
          %v1196 = vsub.s32 0, %v1195
          %v1197 = vrot.slane %v1170, %v1196
          %v1199 = vadd.f32 %v1192, %v1197
          %1200 = vst.msk [vmem:[#allocation2] sm:$0x3f] %vm1171, %v1199
        $region96: #{wav2vec2_forward.17} parent=91 // pred_fallthru
          _
        %v1201 = vld [vmem:[#allocation2] sm:$0x3f]
        %v1202 = vpack.c.bf16 %v1201, %v1201
        %v1203 = vld [vmem:[%s754] sm:$0xf]
        %v1204 = vld [vmem:[%s754 + $0x4] sm:$0xf]
        %v1205 = vld [vmem:[%s754 + $0x8] sm:$0xf]
        %v1206 = vld [vmem:[%s754 + $0xc] sm:$0xf]
        %v1207 = vld [vmem:[%s757] sm:$0x1]
        %v1209 = vlaneseq
        %v1210 = vshrl.u32 %v1209, 7
        %v1211 = vsub.s32 0, %v1210
        %v1212 = vrot.slane %v1207, %v1211
        %v1218 = vunpack.c.l.b16 %v1203
        %v1219 = vunpack.c.l.b16 %v1204
        %v1220 = vunpack.c.l.b16 %v1205
        %v1221 = vunpack.c.l.b16 %v1206
        %v1222 = vpack.c.b16 %v1219, %v1218
        %v1223 = vpack.c.b16 %v1221, %v1220
        %vm1226 = vcmask 261120
        %v1228 = vsel %vm1226, %v1202, 0
        %1230 = vmatprep.subr.bf16.mxu0 0
        %1231 = vmatpush1.bf16.msra.mxu0 0
        %1232 = vmatprep.subr.bf16.mxu0 0
        %1233 = vmatpush1.bf16.msra.mxu0 0
        %1234 = vmatprep.subr.bf16.mxu0 0
        %1235 = vmatpush1.bf16.msra.mxu0 0
        %1236 = vmatprep.subr.bf16.mxu0 0
        %1237 = vmatpush1.bf16.msra.mxu0 0
        %1238 = vmatprep.subr.bf16.mxu0 0
        %1239 = vmatpush1.bf16.msra.mxu0 0
        %1240 = vmatprep.subr.bf16.mxu0 0
        %1241 = vmatpush1.bf16.msra.mxu0 0
        %1242 = vmatprep.subr.bf16.mxu0 0
        %1243 = vmatpush1.bf16.msra.mxu0 %v1223
        %1244 = vmatprep.subr.bf16.mxu0 0
        %1245 = vmatpush1.bf16.msra.mxu0 %v1222
        %1246 = vmatprep.subr.bf16.mxu0 0
        %1247 = vmatpush2.bf16.msra.mxu0 0
        %1248 = vmatprep.subr.bf16.mxu0 0
        %1249 = vmatpush2.bf16.msra.mxu0 0
        %1250 = vmatprep.subr.bf16.mxu0 0
        %1251 = vmatpush2.bf16.msra.mxu0 0
        %1252 = vmatprep.subr.bf16.mxu0 0
        %1253 = vmatpush2.bf16.msra.mxu0 0
        %1254 = vmatprep.subr.bf16.mxu0 0
        %1255 = vmatpush2.bf16.msra.mxu0 0
        %1256 = vmatprep.subr.bf16.mxu0 0
        %1257 = vmatpush2.bf16.msra.mxu0 0
        %1258 = vmatprep.subr.bf16.mxu0 0
        %1259 = vmatpush2.bf16.msra.mxu0 0
        %1260 = vmatprep.subr.bf16.mxu0 0
        %1261 = vmatpush2.bf16.msra.mxu0 0
        %1262 = vmatprep.mubr.bf16.mxu0 0
        %1263 = vmatmul.mubr.bf16.gmra.mxu0 %v1228
        %v1264 = vpop.f32.mrf.mxu0
        %v1265 = vadd.f32 %v1212, %v1264
        %v1266 = vpop.f32.mrf.mxu0
        %v1267 = vpop.f32.mrf.mxu0
        %v1268 = vpop.f32.mrf.mxu0
        %1269 = vdwg.mxu0
        %v1270 = vpack.c.bf16 %v1265, %v1265
        %1272 = vrot.lane.b32.xlu0 %v1270, 120
        %v1273 = vpop.permute.xlu0 %1272
        %1274 = vrot.lane.b32.xlu0 %v1270, 112
        %v1275 = vpop.permute.xlu0 %1274
        %1276 = vrot.lane.b32.xlu0 %v1270, 104
        %v1277 = vpop.permute.xlu0 %1276
        %1278 = vrot.lane.b32.xlu0 %v1270, 96
        %v1279 = vpop.permute.xlu0 %1278
        %vm1280 = vcmask 64512
        %v1282 = vsel %vm1280, %v1270, 0
        %v1285 = vsel %vm1280, %v1279, 0
        %1287 = vmatprep.subr.bf16.mxu0 0
        %1288 = vmatpush1.bf16.xpose.msra.mxu0 0
        %1289 = vmatprep.subr.bf16.mxu0 0
        %1290 = vmatpush1.bf16.xpose.msra.mxu0 0
        %1291 = vmatprep.subr.bf16.mxu0 0
        %1292 = vmatpush1.bf16.xpose.msra.mxu0 0
        %1293 = vmatprep.subr.bf16.mxu0 0
        %1294 = vmatpush1.bf16.xpose.msra.mxu0 0
        %1295 = vmatprep.subr.bf16.mxu0 0
        %1296 = vmatpush1.bf16.xpose.msra.mxu0 0
        %1297 = vmatprep.subr.bf16.mxu0 0
        %1298 = vmatpush1.bf16.xpose.msra.mxu0 0
        %1299 = vmatprep.subr.bf16.mxu0 0
        %1300 = vmatpush1.bf16.xpose.msra.mxu0 0
        %1301 = vmatprep.subr.bf16.mxu0 0
        %1302 = vmatpush1.bf16.xpose.msra.mxu0 %v1285
        %1303 = vmatprep.subr.bf16.mxu0 0
        %1304 = vmatpush2.bf16.xpose.msra.mxu0 0
        %1305 = vmatprep.subr.bf16.mxu0 0
        %1306 = vmatpush2.bf16.xpose.msra.mxu0 0
        %1307 = vmatprep.subr.bf16.mxu0 0
        %1308 = vmatpush2.bf16.xpose.msra.mxu0 0
        %1309 = vmatprep.subr.bf16.mxu0 0
        %1310 = vmatpush2.bf16.xpose.msra.mxu0 0
        %1311 = vmatprep.subr.bf16.mxu0 0
        %1312 = vmatpush2.bf16.xpose.msra.mxu0 0
        %1313 = vmatprep.subr.bf16.mxu0 0
        %1314 = vmatpush2.bf16.xpose.msra.mxu0 0
        %1315 = vmatprep.subr.bf16.mxu0 0
        %1316 = vmatpush2.bf16.xpose.msra.mxu0 0
        %1317 = vmatprep.subr.bf16.mxu0 0
        %1318 = vmatpush2.bf16.xpose.msra.mxu0 0
        %1319 = vmatprep.mubr.bf16.mxu0 0
        %1320 = vmatmul.mubr.bf16.gmra.mxu0 %v1282
        %v1321 = vpop.f32.mrf.mxu0
        %v1322 = vadd.f32 0.0, %v1321
        %v1323 = vpop.f32.mrf.mxu0
        %v1324 = vpop.f32.mrf.mxu0
        %v1325 = vpop.f32.mrf.mxu0
        %1326 = vdwg.mxu0
        %1327 = vrot.lane.b32.xlu0 %v1273, 96
        %v1328 = vpop.permute.xlu0 %1327
        %v1330 = vsel %vm1280, %v1273, 0
        %v1333 = vsel %vm1280, %v1328, 0
        %1335 = vmatprep.subr.bf16.mxu0 0
        %1336 = vmatpush1.bf16.xpose.msra.mxu0 0
        %1337 = vmatprep.subr.bf16.mxu0 0
        %1338 = vmatpush1.bf16.xpose.msra.mxu0 0
        %1339 = vmatprep.subr.bf16.mxu0 0
        %1340 = vmatpush1.bf16.xpose.msra.mxu0 0
        %1341 = vmatprep.subr.bf16.mxu0 0
        %1342 = vmatpush1.bf16.xpose.msra.mxu0 0
        %1343 = vmatprep.subr.bf16.mxu0 0
        %1344 = vmatpush1.bf16.xpose.msra.mxu0 0
        %1345 = vmatprep.subr.bf16.mxu0 0
        %1346 = vmatpush1.bf16.xpose.msra.mxu0 0
        %1347 = vmatprep.subr.bf16.mxu0 0
        %1348 = vmatpush1.bf16.xpose.msra.mxu0 0
        %1349 = vmatprep.subr.bf16.mxu0 0
        %1350 = vmatpush1.bf16.xpose.msra.mxu0 %v1333
        %1351 = vmatprep.subr.bf16.mxu0 0
        %1352 = vmatpush2.bf16.xpose.msra.mxu0 0
        %1353 = vmatprep.subr.bf16.mxu0 0
        %1354 = vmatpush2.bf16.xpose.msra.mxu0 0
        %1355 = vmatprep.subr.bf16.mxu0 0
        %1356 = vmatpush2.bf16.xpose.msra.mxu0 0
        %1357 = vmatprep.subr.bf16.mxu0 0
        %1358 = vmatpush2.bf16.xpose.msra.mxu0 0
        %1359 = vmatprep.subr.bf16.mxu0 0
        %1360 = vmatpush2.bf16.xpose.msra.mxu0 0
        %1361 = vmatprep.subr.bf16.mxu0 0
        %1362 = vmatpush2.bf16.xpose.msra.mxu0 0
        %1363 = vmatprep.subr.bf16.mxu0 0
        %1364 = vmatpush2.bf16.xpose.msra.mxu0 0
        %1365 = vmatprep.subr.bf16.mxu0 0
        %1366 = vmatpush2.bf16.xpose.msra.mxu0 0
        %1367 = vmatprep.mubr.bf16.mxu0 0
        %1368 = vmatmul.mubr.bf16.gmra.mxu0 %v1330
        %v1369 = vpop.f32.mrf.mxu0
        %v1370 = vadd.f32 0.0, %v1369
        %v1371 = vpop.f32.mrf.mxu0
        %v1372 = vpop.f32.mrf.mxu0
        %v1373 = vpop.f32.mrf.mxu0
        %1374 = vdwg.mxu0
        %1375 = vrot.lane.b32.xlu0 %v1275, 96
        %v1376 = vpop.permute.xlu0 %1375
        %v1378 = vsel %vm1280, %v1275, 0
        %v1381 = vsel %vm1280, %v1376, 0
        %1383 = vmatprep.subr.bf16.mxu0 0
        %1384 = vmatpush1.bf16.xpose.msra.mxu0 0
        %1385 = vmatprep.subr.bf16.mxu0 0
        %1386 = vmatpush1.bf16.xpose.msra.mxu0 0
        %1387 = vmatprep.subr.bf16.mxu0 0
        %1388 = vmatpush1.bf16.xpose.msra.mxu0 0
        %1389 = vmatprep.subr.bf16.mxu0 0
        %1390 = vmatpush1.bf16.xpose.msra.mxu0 0
        %1391 = vmatprep.subr.bf16.mxu0 0
        %1392 = vmatpush1.bf16.xpose.msra.mxu0 0
        %1393 = vmatprep.subr.bf16.mxu0 0
        %1394 = vmatpush1.bf16.xpose.msra.mxu0 0
        %1395 = vmatprep.subr.bf16.mxu0 0
        %1396 = vmatpush1.bf16.xpose.msra.mxu0 0
        %1397 = vmatprep.subr.bf16.mxu0 0
        %1398 = vmatpush1.bf16.xpose.msra.mxu0 %v1381
        %1399 = vmatprep.subr.bf16.mxu0 0
        %1400 = vmatpush2.bf16.xpose.msra.mxu0 0
        %1401 = vmatprep.subr.bf16.mxu0 0
        %1402 = vmatpush2.bf16.xpose.msra.mxu0 0
        %1403 = vmatprep.subr.bf16.mxu0 0
        %1404 = vmatpush2.bf16.xpose.msra.mxu0 0
        %1405 = vmatprep.subr.bf16.mxu0 0
        %1406 = vmatpush2.bf16.xpose.msra.mxu0 0
        %1407 = vmatprep.subr.bf16.mxu0 0
        %1408 = vmatpush2.bf16.xpose.msra.mxu0 0
        %1409 = vmatprep.subr.bf16.mxu0 0
        %1410 = vmatpush2.bf16.xpose.msra.mxu0 0
        %1411 = vmatprep.subr.bf16.mxu0 0
        %1412 = vmatpush2.bf16.xpose.msra.mxu0 0
        %1413 = vmatprep.subr.bf16.mxu0 0
        %1414 = vmatpush2.bf16.xpose.msra.mxu0 0
        %1415 = vmatprep.mubr.bf16.mxu0 0
        %1416 = vmatmul.mubr.bf16.gmra.mxu0 %v1378
        %v1417 = vpop.f32.mrf.mxu0
        %v1418 = vadd.f32 0.0, %v1417
        %v1419 = vpop.f32.mrf.mxu0
        %v1420 = vpop.f32.mrf.mxu0
        %v1421 = vpop.f32.mrf.mxu0
        %1422 = vdwg.mxu0
        %1423 = vrot.lane.b32.xlu0 %v1277, 96
        %v1424 = vpop.permute.xlu0 %1423
        %v1426 = vsel %vm1280, %v1277, 0
        %v1429 = vsel %vm1280, %v1424, 0
        %1431 = vmatprep.subr.bf16.mxu0 0
        %1432 = vmatpush1.bf16.xpose.msra.mxu0 0
        %1433 = vmatprep.subr.bf16.mxu0 0
        %1434 = vmatpush1.bf16.xpose.msra.mxu0 0
        %1435 = vmatprep.subr.bf16.mxu0 0
        %1436 = vmatpush1.bf16.xpose.msra.mxu0 0
        %1437 = vmatprep.subr.bf16.mxu0 0
        %1438 = vmatpush1.bf16.xpose.msra.mxu0 0
        %1439 = vmatprep.subr.bf16.mxu0 0
        %1440 = vmatpush1.bf16.xpose.msra.mxu0 0
        %1441 = vmatprep.subr.bf16.mxu0 0
        %1442 = vmatpush1.bf16.xpose.msra.mxu0 0
        %1443 = vmatprep.subr.bf16.mxu0 0
        %1444 = vmatpush1.bf16.xpose.msra.mxu0 0
        %1445 = vmatprep.subr.bf16.mxu0 0
        %1446 = vmatpush1.bf16.xpose.msra.mxu0 %v1429
        %1447 = vmatprep.subr.bf16.mxu0 0
        %1448 = vmatpush2.bf16.xpose.msra.mxu0 0
        %1449 = vmatprep.subr.bf16.mxu0 0
        %1450 = vmatpush2.bf16.xpose.msra.mxu0 0
        %1451 = vmatprep.subr.bf16.mxu0 0
        %1452 = vmatpush2.bf16.xpose.msra.mxu0 0
        %1453 = vmatprep.subr.bf16.mxu0 0
        %1454 = vmatpush2.bf16.xpose.msra.mxu0 0
        %1455 = vmatprep.subr.bf16.mxu0 0
        %1456 = vmatpush2.bf16.xpose.msra.mxu0 0
        %1457 = vmatprep.subr.bf16.mxu0 0
        %1458 = vmatpush2.bf16.xpose.msra.mxu0 0
        %1459 = vmatprep.subr.bf16.mxu0 0
        %1460 = vmatpush2.bf16.xpose.msra.mxu0 0
        %1461 = vmatprep.subr.bf16.mxu0 0
        %1462 = vmatpush2.bf16.xpose.msra.mxu0 0
        %1463 = vmatprep.mubr.bf16.mxu0 0
        %1464 = vmatmul.mubr.bf16.gmra.mxu0 %v1426
        %v1465 = vpop.f32.mrf.mxu0
        %v1466 = vadd.f32 0.0, %v1465
        %v1467 = vpop.f32.mrf.mxu0
        %v1468 = vpop.f32.mrf.mxu0
        %v1469 = vpop.f32.mrf.mxu0
        %1470 = vdwg.mxu0
        %vm1471 = vcmask 46080
        %v1472 = vsel %vm1471, %v1322, -inf
        %1473 = vmax.xlane.f32.xlu0 %v1472
        %v1474 = vpop.xlane.xlu0 %1473
        %v1475 = vsel %vm1471, %v1370, -inf
        %1476 = vmax.xlane.f32.xlu0 %v1475
        %v1477 = vpop.xlane.xlu0 %1476
        %v1478 = vsel %vm1471, %v1418, -inf
        %1479 = vmax.xlane.f32.xlu0 %v1478
        %v1480 = vpop.xlane.xlu0 %1479
        %v1481 = vsel %vm1471, %v1466, -inf
        %1482 = vmax.xlane.f32.xlu0 %v1481
        %v1483 = vpop.xlane.xlu0 %1482
        %v1484 = vsub.f32 %v1322, %v1474
        %v1485 = vsub.f32 %v1370, %v1477
        %v1486 = vsub.f32 %v1418, %v1480
        %v1487 = vsub.f32 %v1466, %v1483
        %v1488 = vmul.f32 %v1484, 1.442695
        %v1489 = vpow.pop %v1488
        %v1490 = vmul.f32 %v1485, 1.442695
        %v1491 = vpow.pop %v1490
        %v1492 = vmul.f32 %v1486, 1.442695
        %v1493 = vpow.pop %v1492
        %v1494 = vmul.f32 %v1487, 1.442695
        %v1495 = vpow.pop %v1494
        %v1496 = vsel %vm1471, %v1489, 0.0
        %1497 = vadd.xlane.f32.xlu0 %v1496
        %v1498 = vpop.xlane.xlu0 %1497
        %v1499 = vsel %vm1471, %v1491, 0.0
        %1500 = vadd.xlane.f32.xlu0 %v1499
        %v1501 = vpop.xlane.xlu0 %1500
        %v1502 = vsel %vm1471, %v1493, 0.0
        %1503 = vadd.xlane.f32.xlu0 %v1502
        %v1504 = vpop.xlane.xlu0 %1503
        %v1505 = vsel %vm1471, %v1495, 0.0
        %1506 = vadd.xlane.f32.xlu0 %v1505
        %v1507 = vpop.xlane.xlu0 %1506
        %v1508 = vrcp.pop %v1498
        %v1509 = vrcp.pop %v1501
        %v1510 = vrcp.pop %v1504
        %v1511 = vrcp.pop %v1507
        %v1512 = vmul.f32 %v1489, %v1508
        %v1513 = vmul.f32 %v1491, %v1509
        %v1514 = vmul.f32 %v1493, %v1510
        %v1515 = vmul.f32 %v1495, %v1511
        %v1516 = vpack.c.bf16 %v1512, %v1512
        %v1517 = vpack.c.bf16 %v1513, %v1513
        %v1518 = vpack.c.bf16 %v1514, %v1514
        %v1519 = vpack.c.bf16 %v1515, %v1515
        %1520 = vrot.lane.b32.xlu0 %v1270, 64
        %v1521 = vpop.permute.xlu0 %1520
        %vm1522 = vcmask 48128
        %v1524 = vsel %vm1522, %v1516, 0
        %vm1526 = vcmask 1042432
        %v1528 = vsel %vm1526, %v1521, 0
        %1530 = vmatprep.subr.bf16.mxu0 0
        %1531 = vmatpush1.bf16.msra.mxu0 0
        %1532 = vmatprep.subr.bf16.mxu0 0
        %1533 = vmatpush1.bf16.msra.mxu0 0
        %1534 = vmatprep.subr.bf16.mxu0 0
        %1535 = vmatpush1.bf16.msra.mxu0 0
        %1536 = vmatprep.subr.bf16.mxu0 0
        %1537 = vmatpush1.bf16.msra.mxu0 0
        %1538 = vmatprep.subr.bf16.mxu0 0
        %1539 = vmatpush1.bf16.msra.mxu0 0
        %1540 = vmatprep.subr.bf16.mxu0 0
        %1541 = vmatpush1.bf16.msra.mxu0 0
        %1542 = vmatprep.subr.bf16.mxu0 0
        %1543 = vmatpush1.bf16.msra.mxu0 0
        %1544 = vmatprep.subr.bf16.mxu0 0
        %1545 = vmatpush1.bf16.msra.mxu0 %v1528
        %1546 = vmatprep.subr.bf16.mxu0 0
        %1547 = vmatpush2.bf16.msra.mxu0 0
        %1548 = vmatprep.subr.bf16.mxu0 0
        %1549 = vmatpush2.bf16.msra.mxu0 0
        %1550 = vmatprep.subr.bf16.mxu0 0
        %1551 = vmatpush2.bf16.msra.mxu0 0
        %1552 = vmatprep.subr.bf16.mxu0 0
        %1553 = vmatpush2.bf16.msra.mxu0 0
        %1554 = vmatprep.subr.bf16.mxu0 0
        %1555 = vmatpush2.bf16.msra.mxu0 0
        %1556 = vmatprep.subr.bf16.mxu0 0
        %1557 = vmatpush2.bf16.msra.mxu0 0
        %1558 = vmatprep.subr.bf16.mxu0 0
        %1559 = vmatpush2.bf16.msra.mxu0 0
        %1560 = vmatprep.subr.bf16.mxu0 0
        %1561 = vmatpush2.bf16.msra.mxu0 0
        %1562 = vmatprep.mubr.bf16.mxu0 0
        %1563 = vmatmul.mubr.bf16.gmra.mxu0 %v1524
        %v1564 = vpop.f32.mrf.mxu0
        %v1565 = vadd.f32 0.0, %v1564
        %v1566 = vpop.f32.mrf.mxu0
        %v1567 = vpop.f32.mrf.mxu0
        %v1568 = vpop.f32.mrf.mxu0
        %1569 = vdwg.mxu0
        %1570 = vrot.lane.b32.xlu0 %v1273, 64
        %v1571 = vpop.permute.xlu0 %1570
        %v1573 = vsel %vm1522, %v1517, 0
        %v1576 = vsel %vm1526, %v1571, 0
        %1578 = vmatprep.subr.bf16.mxu0 0
        %1579 = vmatpush1.bf16.msra.mxu0 0
        %1580 = vmatprep.subr.bf16.mxu0 0
        %1581 = vmatpush1.bf16.msra.mxu0 0
        %1582 = vmatprep.subr.bf16.mxu0 0
        %1583 = vmatpush1.bf16.msra.mxu0 0
        %1584 = vmatprep.subr.bf16.mxu0 0
        %1585 = vmatpush1.bf16.msra.mxu0 0
        %1586 = vmatprep.subr.bf16.mxu0 0
        %1587 = vmatpush1.bf16.msra.mxu0 0
        %1588 = vmatprep.subr.bf16.mxu0 0
        %1589 = vmatpush1.bf16.msra.mxu0 0
        %1590 = vmatprep.subr.bf16.mxu0 0
        %1591 = vmatpush1.bf16.msra.mxu0 0
        %1592 = vmatprep.subr.bf16.mxu0 0
        %1593 = vmatpush1.bf16.msra.mxu0 %v1576
        %1594 = vmatprep.subr.bf16.mxu0 0
        %1595 = vmatpush2.bf16.msra.mxu0 0
        %1596 = vmatprep.subr.bf16.mxu0 0
        %1597 = vmatpush2.bf16.msra.mxu0 0
        %1598 = vmatprep.subr.bf16.mxu0 0
        %1599 = vmatpush2.bf16.msra.mxu0 0
        %1600 = vmatprep.subr.bf16.mxu0 0
        %1601 = vmatpush2.bf16.msra.mxu0 0
        %1602 = vmatprep.subr.bf16.mxu0 0
        %1603 = vmatpush2.bf16.msra.mxu0 0
        %1604 = vmatprep.subr.bf16.mxu0 0
        %1605 = vmatpush2.bf16.msra.mxu0 0
        %1606 = vmatprep.subr.bf16.mxu0 0
        %1607 = vmatpush2.bf16.msra.mxu0 0
        %1608 = vmatprep.subr.bf16.mxu0 0
        %1609 = vmatpush2.bf16.msra.mxu0 0
        %1610 = vmatprep.mubr.bf16.mxu0 0
        %1611 = vmatmul.mubr.bf16.gmra.mxu0 %v1573
        %v1612 = vpop.f32.mrf.mxu0
        %v1613 = vadd.f32 0.0, %v1612
        %v1614 = vpop.f32.mrf.mxu0
        %v1615 = vpop.f32.mrf.mxu0
        %v1616 = vpop.f32.mrf.mxu0
        %1617 = vdwg.mxu0
        %1618 = vrot.lane.b32.xlu0 %v1275, 64
        %v1619 = vpop.permute.xlu0 %1618
        %v1621 = vsel %vm1522, %v1518, 0
        %v1624 = vsel %vm1526, %v1619, 0
        %1626 = vmatprep.subr.bf16.mxu0 0
        %1627 = vmatpush1.bf16.msra.mxu0 0
        %1628 = vmatprep.subr.bf16.mxu0 0
        %1629 = vmatpush1.bf16.msra.mxu0 0
        %1630 = vmatprep.subr.bf16.mxu0 0
        %1631 = vmatpush1.bf16.msra.mxu0 0
        %1632 = vmatprep.subr.bf16.mxu0 0
        %1633 = vmatpush1.bf16.msra.mxu0 0
        %1634 = vmatprep.subr.bf16.mxu0 0
        %1635 = vmatpush1.bf16.msra.mxu0 0
        %1636 = vmatprep.subr.bf16.mxu0 0
        %1637 = vmatpush1.bf16.msra.mxu0 0
        %1638 = vmatprep.subr.bf16.mxu0 0
        %1639 = vmatpush1.bf16.msra.mxu0 0
        %1640 = vmatprep.subr.bf16.mxu0 0
        %1641 = vmatpush1.bf16.msra.mxu0 %v1624
        %1642 = vmatprep.subr.bf16.mxu0 0
        %1643 = vmatpush2.bf16.msra.mxu0 0
        %1644 = vmatprep.subr.bf16.mxu0 0
        %1645 = vmatpush2.bf16.msra.mxu0 0
        %1646 = vmatprep.subr.bf16.mxu0 0
        %1647 = vmatpush2.bf16.msra.mxu0 0
        %1648 = vmatprep.subr.bf16.mxu0 0
        %1649 = vmatpush2.bf16.msra.mxu0 0
        %1650 = vmatprep.subr.bf16.mxu0 0
        %1651 = vmatpush2.bf16.msra.mxu0 0
        %1652 = vmatprep.subr.bf16.mxu0 0
        %1653 = vmatpush2.bf16.msra.mxu0 0
        %1654 = vmatprep.subr.bf16.mxu0 0
        %1655 = vmatpush2.bf16.msra.mxu0 0
        %1656 = vmatprep.subr.bf16.mxu0 0
        %1657 = vmatpush2.bf16.msra.mxu0 0
        %1658 = vmatprep.mubr.bf16.mxu0 0
        %1659 = vmatmul.mubr.bf16.gmra.mxu0 %v1621
        %v1660 = vpop.f32.mrf.mxu0
        %v1661 = vadd.f32 0.0, %v1660
        %v1662 = vpop.f32.mrf.mxu0
        %v1663 = vpop.f32.mrf.mxu0
        %v1664 = vpop.f32.mrf.mxu0
        %1665 = vdwg.mxu0
        %1666 = vrot.lane.b32.xlu0 %v1277, 64
        %v1667 = vpop.permute.xlu0 %1666
        %v1669 = vsel %vm1522, %v1519, 0
        %v1672 = vsel %vm1526, %v1667, 0
        %1674 = vmatprep.subr.bf16.mxu0 0
        %1675 = vmatpush1.bf16.msra.mxu0 0
        %1676 = vmatprep.subr.bf16.mxu0 0
        %1677 = vmatpush1.bf16.msra.mxu0 0
        %1678 = vmatprep.subr.bf16.mxu0 0
        %1679 = vmatpush1.bf16.msra.mxu0 0
        %1680 = vmatprep.subr.bf16.mxu0 0
        %1681 = vmatpush1.bf16.msra.mxu0 0
        %1682 = vmatprep.subr.bf16.mxu0 0
        %1683 = vmatpush1.bf16.msra.mxu0 0
        %1684 = vmatprep.subr.bf16.mxu0 0
        %1685 = vmatpush1.bf16.msra.mxu0 0
        %1686 = vmatprep.subr.bf16.mxu0 0
        %1687 = vmatpush1.bf16.msra.mxu0 0
        %1688 = vmatprep.subr.bf16.mxu0 0
        %1689 = vmatpush1.bf16.msra.mxu0 %v1672
        %1690 = vmatprep.subr.bf16.mxu0 0
        %1691 = vmatpush2.bf16.msra.mxu0 0
        %1692 = vmatprep.subr.bf16.mxu0 0
        %1693 = vmatpush2.bf16.msra.mxu0 0
        %1694 = vmatprep.subr.bf16.mxu0 0
        %1695 = vmatpush2.bf16.msra.mxu0 0
        %1696 = vmatprep.subr.bf16.mxu0 0
        %1697 = vmatpush2.bf16.msra.mxu0 0
        %1698 = vmatprep.subr.bf16.mxu0 0
        %1699 = vmatpush2.bf16.msra.mxu0 0
        %1700 = vmatprep.subr.bf16.mxu0 0
        %1701 = vmatpush2.bf16.msra.mxu0 0
        %1702 = vmatprep.subr.bf16.mxu0 0
        %1703 = vmatpush2.bf16.msra.mxu0 0
        %1704 = vmatprep.subr.bf16.mxu0 0
        %1705 = vmatpush2.bf16.msra.mxu0 0
        %1706 = vmatprep.mubr.bf16.mxu0 0
        %1707 = vmatmul.mubr.bf16.gmra.mxu0 %v1669
        %v1708 = vpop.f32.mrf.mxu0
        %v1709 = vadd.f32 0.0, %v1708
        %v1710 = vpop.f32.mrf.mxu0
        %v1711 = vpop.f32.mrf.mxu0
        %v1712 = vpop.f32.mrf.mxu0
        %1713 = vdwg.mxu0
        %v1714 = vpack.c.bf16 %v1565, %v1565
        %v1715 = vpack.c.bf16 %v1613, %v1613
        %v1716 = vpack.c.bf16 %v1661, %v1661
        %v1717 = vpack.c.bf16 %v1709, %v1709
        %v1718 = vld [vmem:[%s762] sm:$0xf]
        %v1719 = vld [vmem:[%s762 + $0x4] sm:$0xf]
        %v1720 = vld [vmem:[%s762 + $0x8] sm:$0xf]
        %v1721 = vld [vmem:[%s762 + $0xc] sm:$0xf]
        %v1723 = vsel %vm1280, %v1714, 0
        %vm1725 = vcmask 1043456
        %v1727 = vsel %vm1725, %v1718, 0
        %1729 = vmatprep.subr.bf16.mxu0 0
        %1730 = vmatpush1.bf16.msra.mxu0 0
        %1731 = vmatprep.subr.bf16.mxu0 0
        %1732 = vmatpush1.bf16.msra.mxu0 0
        %1733 = vmatprep.subr.bf16.mxu0 0
        %1734 = vmatpush1.bf16.msra.mxu0 0
        %1735 = vmatprep.subr.bf16.mxu0 0
        %1736 = vmatpush1.bf16.msra.mxu0 0
        %1737 = vmatprep.subr.bf16.mxu0 0
        %1738 = vmatpush1.bf16.msra.mxu0 0
        %1739 = vmatprep.subr.bf16.mxu0 0
        %1740 = vmatpush1.bf16.msra.mxu0 0
        %1741 = vmatprep.subr.bf16.mxu0 0
        %1742 = vmatpush1.bf16.msra.mxu0 0
        %1743 = vmatprep.subr.bf16.mxu0 0
        %1744 = vmatpush1.bf16.msra.mxu0 %v1727
        %1745 = vmatprep.subr.bf16.mxu0 0
        %1746 = vmatpush2.bf16.msra.mxu0 0
        %1747 = vmatprep.subr.bf16.mxu0 0
        %1748 = vmatpush2.bf16.msra.mxu0 0
        %1749 = vmatprep.subr.bf16.mxu0 0
        %1750 = vmatpush2.bf16.msra.mxu0 0
        %1751 = vmatprep.subr.bf16.mxu0 0
        %1752 = vmatpush2.bf16.msra.mxu0 0
        %1753 = vmatprep.subr.bf16.mxu0 0
        %1754 = vmatpush2.bf16.msra.mxu0 0
        %1755 = vmatprep.subr.bf16.mxu0 0
        %1756 = vmatpush2.bf16.msra.mxu0 0
        %1757 = vmatprep.subr.bf16.mxu0 0
        %1758 = vmatpush2.bf16.msra.mxu0 0
        %1759 = vmatprep.subr.bf16.mxu0 0
        %1760 = vmatpush2.bf16.msra.mxu0 0
        %1761 = vmatprep.mubr.bf16.mxu0 0
        %1762 = vmatmul.mubr.bf16.gmra.mxu0 %v1723
        %v1763 = vpop.f32.mrf.mxu0
        %v1764 = vadd.f32 0.0, %v1763
        %v1765 = vpop.f32.mrf.mxu0
        %v1766 = vpop.f32.mrf.mxu0
        %v1767 = vpop.f32.mrf.mxu0
        %1768 = vdwg.mxu0
        %v1770 = vsel %vm1280, %v1715, 0
        %v1773 = vsel %vm1725, %v1719, 0
        %1775 = vmatprep.subr.bf16.mxu0 0
        %1776 = vmatpush1.bf16.msra.mxu0 0
        %1777 = vmatprep.subr.bf16.mxu0 0
        %1778 = vmatpush1.bf16.msra.mxu0 0
        %1779 = vmatprep.subr.bf16.mxu0 0
        %1780 = vmatpush1.bf16.msra.mxu0 0
        %1781 = vmatprep.subr.bf16.mxu0 0
        %1782 = vmatpush1.bf16.msra.mxu0 0
        %1783 = vmatprep.subr.bf16.mxu0 0
        %1784 = vmatpush1.bf16.msra.mxu0 0
        %1785 = vmatprep.subr.bf16.mxu0 0
        %1786 = vmatpush1.bf16.msra.mxu0 0
        %1787 = vmatprep.subr.bf16.mxu0 0
        %1788 = vmatpush1.bf16.msra.mxu0 0
        %1789 = vmatprep.subr.bf16.mxu0 0
        %1790 = vmatpush1.bf16.msra.mxu0 %v1773
        %1791 = vmatprep.subr.bf16.mxu0 0
        %1792 = vmatpush2.bf16.msra.mxu0 0
        %1793 = vmatprep.subr.bf16.mxu0 0
        %1794 = vmatpush2.bf16.msra.mxu0 0
        %1795 = vmatprep.subr.bf16.mxu0 0
        %1796 = vmatpush2.bf16.msra.mxu0 0
        %1797 = vmatprep.subr.bf16.mxu0 0
        %1798 = vmatpush2.bf16.msra.mxu0 0
        %1799 = vmatprep.subr.bf16.mxu0 0
        %1800 = vmatpush2.bf16.msra.mxu0 0
        %1801 = vmatprep.subr.bf16.mxu0 0
        %1802 = vmatpush2.bf16.msra.mxu0 0
        %1803 = vmatprep.subr.bf16.mxu0 0
        %1804 = vmatpush2.bf16.msra.mxu0 0
        %1805 = vmatprep.subr.bf16.mxu0 0
        %1806 = vmatpush2.bf16.msra.mxu0 0
        %1807 = vmatprep.mubr.bf16.mxu0 0
        %1808 = vmatmul.mubr.bf16.gmra.mxu0 %v1770
        %v1809 = vpop.f32.mrf.mxu0
        %v1810 = vadd.f32 0.0, %v1809
        %v1811 = vpop.f32.mrf.mxu0
        %v1812 = vpop.f32.mrf.mxu0
        %v1813 = vpop.f32.mrf.mxu0
        %1814 = vdwg.mxu0
        %v1816 = vsel %vm1280, %v1716, 0
        %v1819 = vsel %vm1725, %v1720, 0
        %1821 = vmatprep.subr.bf16.mxu0 0
        %1822 = vmatpush1.bf16.msra.mxu0 0
        %1823 = vmatprep.subr.bf16.mxu0 0
        %1824 = vmatpush1.bf16.msra.mxu0 0
        %1825 = vmatprep.subr.bf16.mxu0 0
        %1826 = vmatpush1.bf16.msra.mxu0 0
        %1827 = vmatprep.subr.bf16.mxu0 0
        %1828 = vmatpush1.bf16.msra.mxu0 0
        %1829 = vmatprep.subr.bf16.mxu0 0
        %1830 = vmatpush1.bf16.msra.mxu0 0
        %1831 = vmatprep.subr.bf16.mxu0 0
        %1832 = vmatpush1.bf16.msra.mxu0 0
        %1833 = vmatprep.subr.bf16.mxu0 0
        %1834 = vmatpush1.bf16.msra.mxu0 0
        %1835 = vmatprep.subr.bf16.mxu0 0
        %1836 = vmatpush1.bf16.msra.mxu0 %v1819
        %1837 = vmatprep.subr.bf16.mxu0 0
        %1838 = vmatpush2.bf16.msra.mxu0 0
        %1839 = vmatprep.subr.bf16.mxu0 0
        %1840 = vmatpush2.bf16.msra.mxu0 0
        %1841 = vmatprep.subr.bf16.mxu0 0
        %1842 = vmatpush2.bf16.msra.mxu0 0
        %1843 = vmatprep.subr.bf16.mxu0 0
        %1844 = vmatpush2.bf16.msra.mxu0 0
        %1845 = vmatprep.subr.bf16.mxu0 0
        %1846 = vmatpush2.bf16.msra.mxu0 0
        %1847 = vmatprep.subr.bf16.mxu0 0
        %1848 = vmatpush2.bf16.msra.mxu0 0
        %1849 = vmatprep.subr.bf16.mxu0 0
        %1850 = vmatpush2.bf16.msra.mxu0 0
        %1851 = vmatprep.subr.bf16.mxu0 0
        %1852 = vmatpush2.bf16.msra.mxu0 0
        %1853 = vmatprep.mubr.bf16.mxu0 0
        %1854 = vmatmul.mubr.bf16.gmra.mxu0 %v1816
        %v1855 = vpop.f32.mrf.mxu0
        %v1856 = vadd.f32 0.0, %v1855
        %v1857 = vpop.f32.mrf.mxu0
        %v1858 = vpop.f32.mrf.mxu0
        %v1859 = vpop.f32.mrf.mxu0
        %1860 = vdwg.mxu0
        %v1862 = vsel %vm1280, %v1717, 0
        %v1865 = vsel %vm1725, %v1721, 0
        %1867 = vmatprep.subr.bf16.mxu0 0
        %1868 = vmatpush1.bf16.msra.mxu0 0
        %1869 = vmatprep.subr.bf16.mxu0 0
        %1870 = vmatpush1.bf16.msra.mxu0 0
        %1871 = vmatprep.subr.bf16.mxu0 0
        %1872 = vmatpush1.bf16.msra.mxu0 0
        %1873 = vmatprep.subr.bf16.mxu0 0
        %1874 = vmatpush1.bf16.msra.mxu0 0
        %1875 = vmatprep.subr.bf16.mxu0 0
        %1876 = vmatpush1.bf16.msra.mxu0 0
        %1877 = vmatprep.subr.bf16.mxu0 0
        %1878 = vmatpush1.bf16.msra.mxu0 0
        %1879 = vmatprep.subr.bf16.mxu0 0
        %1880 = vmatpush1.bf16.msra.mxu0 0
        %1881 = vmatprep.subr.bf16.mxu0 0
        %1882 = vmatpush1.bf16.msra.mxu0 %v1865
        %1883 = vmatprep.subr.bf16.mxu0 0
        %1884 = vmatpush2.bf16.msra.mxu0 0
        %1885 = vmatprep.subr.bf16.mxu0 0
        %1886 = vmatpush2.bf16.msra.mxu0 0
        %1887 = vmatprep.subr.bf16.mxu0 0
        %1888 = vmatpush2.bf16.msra.mxu0 0
        %1889 = vmatprep.subr.bf16.mxu0 0
        %1890 = vmatpush2.bf16.msra.mxu0 0
        %1891 = vmatprep.subr.bf16.mxu0 0
        %1892 = vmatpush2.bf16.msra.mxu0 0
        %1893 = vmatprep.subr.bf16.mxu0 0
        %1894 = vmatpush2.bf16.msra.mxu0 0
        %1895 = vmatprep.subr.bf16.mxu0 0
        %1896 = vmatpush2.bf16.msra.mxu0 0
        %1897 = vmatprep.subr.bf16.mxu0 0
        %1898 = vmatpush2.bf16.msra.mxu0 0
        %1899 = vmatprep.mubr.bf16.mxu0 0
        %1900 = vmatmul.mubr.bf16.gmra.mxu0 %v1862
        %v1901 = vpop.f32.mrf.mxu0
        %v1902 = vadd.f32 0.0, %v1901
        %v1903 = vpop.f32.mrf.mxu0
        %v1904 = vpop.f32.mrf.mxu0
        %v1905 = vpop.f32.mrf.mxu0
        %1906 = vdwg.mxu0
        %vm1907 = vcmask 259072
        %v1908 = vsel %vm1907, %v1764, 0.0
        %v1909 = vsel %vm1907, %v1810, 0.0
        %v1910 = vadd.f32 %v1908, %v1909
        %v1911 = vsel %vm1907, %v1856, 0.0
        %v1912 = vadd.f32 %v1910, %v1911
        %v1913 = vsel %vm1907, %v1902, 0.0
        %v1914 = vadd.f32 %v1912, %v1913
        %v1915 = vld [vmem:[%s765] sm:$0x1]
        %v1917 = vlaneseq
        %v1918 = vshrl.u32 %v1917, 7
        %v1919 = vsub.s32 0, %v1918
        %v1920 = vrot.slane %v1915, %v1919
        %v1922 = vadd.f32 %v1914, %v1920
        %v1923 = vadd.f32 %v1201, %v1922
        %v1924 = vld [vmem:[%s768] sm:$0x1]
        %v1925 = vld [vmem:[%s771] sm:$0x1]
        %v1926 = vsel %vm1907, %v1923, 0.0
        %1927 = vadd.xlane.f32.xlu0 %v1926
        %v1928 = vpop.xlane.xlu0 %1927
        %v1929 = vrcp.pop 32.0
        %v1930 = vmul.f32 %v1928, %v1929
        %v1931 = vsub.f32 %v1923, %v1930
        %v1932 = vmul.f32 %v1931, %v1931
        %v1933 = vsel %vm1907, %v1932, 0.0
        %1934 = vadd.xlane.f32.xlu0 %v1933
        %v1935 = vpop.xlane.xlu0 %1934
        %v1936 = vmul.f32 %v1935, %v1929
        %v1937 = vadd.f32 %v1936, 1e-05
        %v1938 = vrsqrt.pop %v1937
        %v1939 = vmul.f32 %v1931, %v1938
        %v1941 = vlaneseq
        %v1942 = vshrl.u32 %v1941, 7
        %v1943 = vsub.s32 0, %v1942
        %v1944 = vrot.slane %v1924, %v1943
        %v1946 = vmul.f32 %v1939, %v1944
        %v1948 = vlaneseq
        %v1949 = vshrl.u32 %v1948, 7
        %v1950 = vsub.s32 0, %v1949
        %v1951 = vrot.slane %v1925, %v1950
        %v1953 = vadd.f32 %v1946, %v1951
        %v1954 = vpack.c.bf16 %v1953, %v1953
        %v1955 = vld [vmem:[%s776] sm:$0xf]
        %v1956 = vld [vmem:[%s776 + $0x4] sm:$0xf]
        %v1957 = vld [vmem:[%s776 + $0x8] sm:$0xf]
        %v1958 = vld [vmem:[%s776 + $0xc] sm:$0xf]
        %v1959 = vld [vmem:[%s779] sm:$0x1]
        %v1961 = vlaneseq
        %v1962 = vshrl.u32 %v1961, 7
        %v1963 = vsub.s32 0, %v1962
        %v1964 = vrot.slane %v1959, %v1963
        %v1970 = vunpack.c.l.b16 %v1955
        %v1971 = vunpack.c.l.b16 %v1956
        %v1972 = vunpack.c.l.b16 %v1957
        %v1973 = vunpack.c.l.b16 %v1958
        %v1974 = vpack.c.b16 %v1971, %v1970
        %v1975 = vpack.c.b16 %v1973, %v1972
        %v1979 = vsel %vm1226, %v1954, 0
        %1981 = vmatprep.subr.bf16.mxu0 0
        %1982 = vmatpush1.bf16.msra.mxu0 0
        %1983 = vmatprep.subr.bf16.mxu0 0
        %1984 = vmatpush1.bf16.msra.mxu0 0
        %1985 = vmatprep.subr.bf16.mxu0 0
        %1986 = vmatpush1.bf16.msra.mxu0 0
        %1987 = vmatprep.subr.bf16.mxu0 0
        %1988 = vmatpush1.bf16.msra.mxu0 0
        %1989 = vmatprep.subr.bf16.mxu0 0
        %1990 = vmatpush1.bf16.msra.mxu0 0
        %1991 = vmatprep.subr.bf16.mxu0 0
        %1992 = vmatpush1.bf16.msra.mxu0 0
        %1993 = vmatprep.subr.bf16.mxu0 0
        %1994 = vmatpush1.bf16.msra.mxu0 %v1975
        %1995 = vmatprep.subr.bf16.mxu0 0
        %1996 = vmatpush1.bf16.msra.mxu0 %v1974
        %1997 = vmatprep.subr.bf16.mxu0 0
        %1998 = vmatpush2.bf16.msra.mxu0 0
        %1999 = vmatprep.subr.bf16.mxu0 0
        %2000 = vmatpush2.bf16.msra.mxu0 0
        %2001 = vmatprep.subr.bf16.mxu0 0
        %2002 = vmatpush2.bf16.msra.mxu0 0
        %2003 = vmatprep.subr.bf16.mxu0 0
        %2004 = vmatpush2.bf16.msra.mxu0 0
        %2005 = vmatprep.subr.bf16.mxu0 0
        %2006 = vmatpush2.bf16.msra.mxu0 0
        %2007 = vmatprep.subr.bf16.mxu0 0
        %2008 = vmatpush2.bf16.msra.mxu0 0
        %2009 = vmatprep.subr.bf16.mxu0 0
        %2010 = vmatpush2.bf16.msra.mxu0 0
        %2011 = vmatprep.subr.bf16.mxu0 0
        %2012 = vmatpush2.bf16.msra.mxu0 0
        %2013 = vmatprep.mubr.bf16.mxu0 0
        %2014 = vmatmul.mubr.bf16.gmra.mxu0 %v1979
        %v2015 = vpop.f32.mrf.mxu0
        %v2016 = vadd.f32 %v1964, %v2015
        %v2017 = vpop.f32.mrf.mxu0
        %v2018 = vpop.f32.mrf.mxu0
        %v2019 = vpop.f32.mrf.mxu0
        %2020 = vdwg.mxu0
        %v2021 = vmul.f32 %v2016, 0.5
        %v2022 = vmul.f32 %v2016, 0.044715
        %v2023 = vmul.f32 %v2022, %v2016
        %v2024 = vmul.f32 %v2023, %v2016
        %v2025 = vadd.f32 %v2016, %v2024
        %v2026 = vmul.f32 %v2025, 0.7978846
        %v2027 = vtanh.pop %v2026
        %v2028 = vadd.f32 %v2027, 1.0
        %v2029 = vmul.f32 %v2021, %v2028
        %v2030 = vpack.c.bf16 %v2029, %v2029
        %v2031 = vld [vmem:[%s784] sm:$0xf]
        %v2032 = vld [vmem:[%s784 + $0x4] sm:$0xf]
        %v2033 = vld [vmem:[%s784 + $0x8] sm:$0xf]
        %v2034 = vld [vmem:[%s784 + $0xc] sm:$0xf]
        %v2035 = vld [vmem:[%s784 + $0x10] sm:$0xf]
        %v2036 = vld [vmem:[%s784 + $0x14] sm:$0xf]
        %v2037 = vld [vmem:[%s784 + $0x18] sm:$0xf]
        %v2038 = vld [vmem:[%s784 + $0x1c] sm:$0xf]
        %v2039 = vld [vmem:[%s787] sm:$0x1]
        %v2041 = vlaneseq
        %v2042 = vshrl.u32 %v2041, 7
        %v2043 = vsub.s32 0, %v2042
        %v2044 = vrot.slane %v2039, %v2043
        %v2054 = vunpack.c.l.b16 %v2031
        %v2055 = vunpack.c.l.b16 %v2032
        %v2056 = vunpack.c.l.b16 %v2033
        %v2057 = vunpack.c.l.b16 %v2034
        %v2058 = vunpack.c.l.b16 %v2035
        %v2059 = vunpack.c.l.b16 %v2036
        %v2060 = vunpack.c.l.b16 %v2037
        %v2061 = vunpack.c.l.b16 %v2038
        %v2062 = vpack.c.b16 %v2055, %v2054
        %v2063 = vpack.c.b16 %v2057, %v2056
        %v2064 = vpack.c.b16 %v2059, %v2058
        %v2065 = vpack.c.b16 %v2061, %v2060
        %vm2070 = vcmask 523264
        %v2072 = vsel %vm2070, %v2030, 0
        %2074 = vmatprep.subr.bf16.mxu0 0
        %2075 = vmatpush1.bf16.msra.mxu0 0
        %2076 = vmatprep.subr.bf16.mxu0 0
        %2077 = vmatpush1.bf16.msra.mxu0 0
        %2078 = vmatprep.subr.bf16.mxu0 0
        %2079 = vmatpush1.bf16.msra.mxu0 0
        %2080 = vmatprep.subr.bf16.mxu0 0
        %2081 = vmatpush1.bf16.msra.mxu0 0
        %2082 = vmatprep.subr.bf16.mxu0 0
        %2083 = vmatpush1.bf16.msra.mxu0 %v2065
        %2084 = vmatprep.subr.bf16.mxu0 0
        %2085 = vmatpush1.bf16.msra.mxu0 %v2064
        %2086 = vmatprep.subr.bf16.mxu0 0
        %2087 = vmatpush1.bf16.msra.mxu0 %v2063
        %2088 = vmatprep.subr.bf16.mxu0 0
        %2089 = vmatpush1.bf16.msra.mxu0 %v2062
        %2090 = vmatprep.subr.bf16.mxu0 0
        %2091 = vmatpush2.bf16.msra.mxu0 0
        %2092 = vmatprep.subr.bf16.mxu0 0
        %2093 = vmatpush2.bf16.msra.mxu0 0
        %2094 = vmatprep.subr.bf16.mxu0 0
        %2095 = vmatpush2.bf16.msra.mxu0 0
        %2096 = vmatprep.subr.bf16.mxu0 0
        %2097 = vmatpush2.bf16.msra.mxu0 0
        %2098 = vmatprep.subr.bf16.mxu0 0
        %2099 = vmatpush2.bf16.msra.mxu0 0
        %2100 = vmatprep.subr.bf16.mxu0 0
        %2101 = vmatpush2.bf16.msra.mxu0 0
        %2102 = vmatprep.subr.bf16.mxu0 0
        %2103 = vmatpush2.bf16.msra.mxu0 0
        %2104 = vmatprep.subr.bf16.mxu0 0
        %2105 = vmatpush2.bf16.msra.mxu0 0
        %2106 = vmatprep.mubr.bf16.mxu0 0
        %2107 = vmatmul.mubr.bf16.gmra.mxu0 %v2072
        %v2108 = vpop.f32.mrf.mxu0
        %v2109 = vadd.f32 %v2044, %v2108
        %v2110 = vpop.f32.mrf.mxu0
        %v2111 = vpop.f32.mrf.mxu0
        %v2112 = vpop.f32.mrf.mxu0
        %2113 = vdwg.mxu0
        %v2114 = vadd.f32 %v1953, %v2109
        %v2115 = vld [vmem:[%s790] sm:$0x1]
        %v2116 = vld [vmem:[%s793] sm:$0x1]
        %v2117 = vsel %vm1907, %v2114, 0.0
        %2118 = vadd.xlane.f32.xlu0 %v2117
        %v2119 = vpop.xlane.xlu0 %2118
        %v2120 = vmul.f32 %v2119, %v1929
        %v2121 = vsub.f32 %v2114, %v2120
        %v2122 = vmul.f32 %v2121, %v2121
        %v2123 = vsel %vm1907, %v2122, 0.0
        %2124 = vadd.xlane.f32.xlu0 %v2123
        %v2125 = vpop.xlane.xlu0 %2124
        %v2126 = vmul.f32 %v2125, %v1929
        %v2127 = vadd.f32 %v2126, 1e-05
        %v2128 = vrsqrt.pop %v2127
        %v2129 = vmul.f32 %v2121, %v2128
        %v2131 = vlaneseq
        %v2132 = vshrl.u32 %v2131, 7
        %v2133 = vsub.s32 0, %v2132
        %v2134 = vrot.slane %v2115, %v2133
        %v2136 = vmul.f32 %v2129, %v2134
        %v2138 = vlaneseq
        %v2139 = vshrl.u32 %v2138, 7
        %v2140 = vsub.s32 0, %v2139
        %v2141 = vrot.slane %v2116, %v2140
        %v2143 = vadd.f32 %v2136, %v2141
        %2144 = vst.msk [vmem:[#allocation2] sm:$0x3f] %vm1907, %v2143
        %p2145 = scmp.eq.s32.totalorder %s37, 1
        // Predicated region
        $region97: #{wav2vec2_forward.17} parent=91 // pred_check
          %p2146 = pneg %p2145
        $region98: #{wav2vec2_forward.17} parent=91 // pred_check_branch
          %2148 = sbr.rel (%p2146) target = $region100
        $region99: #{wav2vec2_forward.17} parent=91 // pred_region
          %v2149 = vsel %vm1907, %v2143, 0.0
          %v2150 = vrot.slane %v2149, 4
          %v2151 = vadd.f32 %v2149, %v2150
          %v2152 = vrot.slane %v2151, 2
          %v2153 = vadd.f32 %v2151, %v2152
          %v2154 = vrot.slane %v2153, 1
          %v2155 = vadd.f32 %v2153, %v2154
          %v2156 = vrcp.pop 6.0
          %v2157 = vmul.f32 %v2155, %v2156
          %vm2158 = vcmask 253952
          %2159 = vst.msk [vmem:[%s740] sm:$0x1] %vm2158, %v2157
        $region100: #{wav2vec2_forward.17} parent=91 // pred_fallthru
          _
        %s2160 = sand.u32 %s500, 1
        %s2161 = scalar_lea.sflag [#allocation4], %s2160
        %s2162 = sand.u32 %s500, 1
        %s2163 = scalar_lea.vmem [#allocation3], %s2162
        // Predicated region
        $region101: #{wav2vec2_forward.17} parent=91 // pred_check
          %p2164 = pneg %p510
        $region102: #{wav2vec2_forward.17} parent=91 // pred_check_branch
          %2166 = sbr.rel (%p2164) target = $region104
        $region103: #{wav2vec2_forward.17} parent=91 // pred_region
          %s2168 = ssub.s32 16, 16
          %2169 = vsyncadd %s2161, %s2168
          %s2170 = smul.addr %s36, 16
          %s2171 = scalar_lea.hbm %s18, %s2170
          %s2173 = sshll.u32 %s2163, 4
          %s2174 = int_to_ptr.vmem [resolvable:$true] %s2173
          %2176 = dma.vmem_to_hbm [thread:$0]  %s2174, 16, %s2171, %s2161
        $region104: #{wav2vec2_forward.17} parent=91 // pred_fallthru
          _
      $region92: #{wav2vec2_forward.17} parent=5 // pred_fallthru
        _
      %p2177 = scmp.le.s32.totalorder 2, %s27
      // Predicated region
      $region105: #{wav2vec2_forward.17} parent=5 // pred_check
        %p2178 = pneg %p2177
      $region106: #{wav2vec2_forward.17} parent=5 // pred_check_branch
        %2180 = sbr.rel (%p2178) target = $region108
      $region107: #{wav2vec2_forward.17} parent=5 // pred_region
        %s2181 = ssub.s32 %s27, 2
        // Predicated region
        $region109: #{wav2vec2_forward.17} parent=107 // pred_check
          %p2182 = pneg %p516
        $region110: #{wav2vec2_forward.17} parent=107 // pred_check_branch
          %2184 = sbr.rel (%p2182) target = $region112
        $region111: #{wav2vec2_forward.17} parent=107 // pred_region
          %s2185 = sand.u32 %s501, 1
          %s2186 = scalar_lea.sflag [#allocation4], %s2185
          %s2187 = sand.u32 %s501, 1
          %s2188 = scalar_lea.vmem [#allocation3], %s2187
          %2189 = dma.done %s2186, 16
        $region112: #{wav2vec2_forward.17} parent=107 // pred_fallthru
          _
      $region108: #{wav2vec2_forward.17} parent=5 // pred_fallthru
        _
    $region6: #{wav2vec2_forward.17} parent=1 // loop_footer
      %s31 = sadd.s32 1, %s27
    $region7: #{wav2vec2_forward.17} parent=1 // loop_footer_branch
      %26 = sbr.rel target = $region3
    $region8: #{wav2vec2_forward.17} parent=1 // loop_exit
      _
    %2190 = vsyncpa [#allocation4], 1
    %s2191 = scalar_lea.sflag [#allocation4], 1
    %2192 = vsyncpa %s2191, 1

</llo_original>
